<compile_context>
chip_gen: v5e
topology: v5e:2x2
jax: 0.10.0
libtpu: 0.0.40
codegen_flags: <defaults>
</compile_context>

<pallas_src>
import jax
import jax.numpy as jnp
import numpy as np
from jax import lax
from jax.experimental import pallas as pl
from jax.experimental.pallas import tpu as pltpu

INPUT_SIZE = 4      # tamanho_da_entrada
HIDDEN = 150        # neuronios_camada_oculta
OUTPUT_SIZE = 1     # tamanho_da_saida
HIDDEN_PAD = 256    # H padded to a lane-aligned width (2 vregs per gate)


def lstm_stack_kernel(xproj_ref,   # (T, B, 4*HP)  layer-1 x-projection + bias
                      w1h_ref,     # (HP, 4*HP)    layer-1 fused recurrent weight
                      w2_ref,      # (2*HP, 4*HP)  layer-2 [W_x ; W_h] stacked
                      b2_ref,      # (1, 4*HP)     layer-2 fused bias
                      wfc_ref,     # (HP, O)
                      bfc_ref,     # (1, O)
                      out_ref):    # (B, O)
    T, B, G = xproj_ref.shape
    HP = G // 4

    def act(gates, c):
        # PyTorch gate order i, f, g, o — every slice is lane-aligned (HP=256).
        i = jax.nn.sigmoid(gates[:, 0 * HP:1 * HP])
        f = jax.nn.sigmoid(gates[:, 1 * HP:2 * HP])
        g = jnp.tanh(gates[:, 2 * HP:3 * HP])
        o = jax.nn.sigmoid(gates[:, 3 * HP:4 * HP])
        c_new = f * c + i * g
        h_new = o * jnp.tanh(c_new)
        return h_new, c_new

    def step(t, carry):
        h1, c1, h2, c2 = carry
        # layer 1: input projection precomputed; single fused recurrent matmul.
        g1 = xproj_ref[t] + jnp.dot(h1, w1h_ref[...],
                                    preferred_element_type=jnp.float32)
        h1, c1 = act(g1, c1)
        # layer 2: x-path and h-path merged into one (B, 2*HP) @ (2*HP, 4*HP).
        hh = jnp.concatenate([h1, h2], axis=1)
        g2 = jnp.dot(hh, w2_ref[...],
                     preferred_element_type=jnp.float32) + b2_ref[...]
        h2, c2 = act(g2, c2)
        return (h1, c1, h2, c2)

    z = jnp.zeros((B, HP), jnp.float32)                  # h0 = c0 = zeros
    _, _, h2_last, _ = lax.fori_loop(0, T, step, (z, z, z, z), unroll=True)

    # fc(out[:, -1, :]); padded rows of wfc are zero so padded lanes drop out.
    out_ref[...] = (jnp.dot(h2_last, wfc_ref[...],
                            preferred_element_type=jnp.float32)
                    + bfc_ref[...]).astype(out_ref.dtype)


def lstm_pred_forward(x, pk):
    """x: (B, T, I) float32 (batch_first, like the PyTorch module).
    pk: fused/padded params from pack_params()."""
    B, T, _ = x.shape
    O = pk["wfc"].shape[1]

    # Hoist the K=4 input projection (with fused bias) out of the recurrence.
    xproj = jnp.einsum("bti,ig->btg", x, pk["w1x"]) + pk["b1"]    # (B, T, 4*HP)
    xproj = jnp.transpose(xproj, (1, 0, 2))                       # (T, B, 4*HP)

    vmem = pl.BlockSpec(memory_space=pltpu.MemorySpace.VMEM)
    return pl.pallas_call(
        lstm_stack_kernel,
        out_shape=jax.ShapeDtypeStruct((B, O), jnp.float32),
        in_specs=[vmem] * 6,
        out_specs=vmem,
    )(xproj, pk["w1h"], pk["w2"], pk["b2"], pk["wfc"], pk["bfc"])


def init_params(key, I, H, O):
    """Raw per-gate params matching PyTorch shapes (uniform +-1/sqrt(H)),
    pre-transposed so every matmul is (B, K) @ (K, H)."""
    k = 1.0 / float(np.sqrt(H))
    keys = jax.random.split(key, 10)

    def u(kk, shape):
        return jax.random.uniform(kk, shape, jnp.float32, -k, k)

    return dict(
        w1x=u(keys[0], (4, I, H)),
        w1h=u(keys[1], (4, H, H)),
        b1=u(keys[2], (4, 1, H)) + u(keys[3], (4, 1, H)),   # b_ih + b_hh
        w2x=u(keys[4], (4, H, H)),
        w2h=u(keys[5], (4, H, H)),
        b2=u(keys[6], (4, 1, H)) + u(keys[7], (4, 1, H)),
        wfc=jax.random.uniform(keys[8], (H, O), jnp.float32, -k, k),
        bfc=jax.random.uniform(keys[9], (1, O), jnp.float32, -k, k),
    )


def pack_params(raw, HP):
    """Build fused, lane-aligned, zero-padded weights for the kernel."""
    H = raw["w1h"].shape[1]
    ph = HP - H

    def fuse_cols(w):            # (4, K, H) -> (K, 4*HP), zero-padded per gate
        wp = jnp.pad(w, ((0, 0), (0, 0), (0, ph)))
        return jnp.transpose(wp, (1, 0, 2)).reshape(w.shape[1], 4 * HP)

    def fuse_rows_cols(w):       # (4, H, H) -> (HP, 4*HP)
        wp = jnp.pad(w, ((0, 0), (0, ph), (0, ph)))
        return jnp.transpose(wp, (1, 0, 2)).reshape(HP, 4 * HP)

    def fuse_bias(b):            # (4, 1, H) -> (1, 4*HP)
        bp = jnp.pad(b, ((0, 0), (0, 0), (0, ph)))
        return jnp.transpose(bp, (1, 0, 2)).reshape(1, 4 * HP)

    w2 = jnp.concatenate([fuse_rows_cols(raw["w2x"]),
                          fuse_rows_cols(raw["w2h"])], axis=0)   # (2*HP, 4*HP)
    return dict(
        w1x=fuse_cols(raw["w1x"]),          # (I, 4*HP)
        w1h=fuse_rows_cols(raw["w1h"]),     # (HP, 4*HP)
        b1=fuse_bias(raw["b1"]),            # (1, 4*HP)
        w2=w2,                              # (2*HP, 4*HP)
        b2=fuse_bias(raw["b2"]),            # (1, 4*HP)
        wfc=jnp.pad(raw["wfc"], ((0, ph), (0, 0))),   # (HP, O)
        bfc=raw["bfc"],                     # (1, O)
    )


def reference_forward(x, p):
    """Pure-JAX reference with identical semantics to the PyTorch forward."""
    B, T, _ = x.shape
    H = p["w1h"].shape[1]

    def cell(x_t, h, c, wx, wh, b):
        def gate(k):
            return x_t @ wx[k] + h @ wh[k] + b[k]
        i = jax.nn.sigmoid(gate(0))
        f = jax.nn.sigmoid(gate(1))
        g = jnp.tanh(gate(2))
        o = jax.nn.sigmoid(gate(3))
        c = f * c + i * g
        h = o * jnp.tanh(c)
        return h, c

    h1 = c1 = h2 = c2 = jnp.zeros((B, H), jnp.float32)
    for t in range(T):
        h1, c1 = cell(x[:, t, :], h1, c1, p["w1x"], p["w1h"], p["b1"])
        h2, c2 = cell(h1, h2, c2, p["w2x"], p["w2h"], p["b2"])
    return h2 @ p["wfc"] + p["bfc"]


if __name__ == "__main__":
    key = jax.random.PRNGKey(0)
    kx, kp = jax.random.split(key)

    B, T = 2, 8
    x = jax.random.normal(kx, (B, T, INPUT_SIZE), jnp.float32)
    raw = init_params(kp, INPUT_SIZE, HIDDEN, OUTPUT_SIZE)
    packed = pack_params(raw, HIDDEN_PAD)

    out = lstm_pred_forward(x, packed)
    jax.block_until_ready(out)

    assert out.shape == (B, OUTPUT_SIZE)
    ref = reference_forward(x, raw)
    np.testing.assert_allclose(np.asarray(out), np.asarray(ref),
                               rtol=1e-4, atol=1e-4)
    print("KERNEL_OK")
</pallas_src>

<mosaic_0001>
module attributes {stable_mosaic.version = 11 : i64} {
  func.func @lstm_stack_kernel(%arg0: memref<8x2x1024xf32, #tpu.memory_space<vmem>>, %arg1: memref<256x1024xf32, #tpu.memory_space<vmem>>, %arg2: memref<512x1024xf32, #tpu.memory_space<vmem>>, %arg3: memref<1x1024xf32, #tpu.memory_space<vmem>>, %arg4: memref<256x1xf32, #tpu.memory_space<vmem>>, %arg5: memref<1x1xf32, #tpu.memory_space<vmem>>, %arg6: memref<2x1xf32, #tpu.memory_space<vmem>>) attributes {dimension_semantics = [], scalar_prefetch = 0 : i64, scratch_operands = 0 : i64, tpu.core_type = #tpu.core_type<tc>} {
    %cst = arith.constant 0.000000e+00 : f32
    %0 = vector.broadcast %cst : f32 to vector<2x256xf32>
    %c0_i32 = arith.constant 0 : i32
    %1 = arith.index_cast %c0_i32 : i32 to index
    %c0 = arith.constant 0 : index
    %c0_0 = arith.constant 0 : index
    %2 = vector.load %arg0[%1, %c0, %c0_0] : memref<8x2x1024xf32, #tpu.memory_space<vmem>>, vector<1x2x1024xf32>
    %3 = vector.shape_cast %2 : vector<1x2x1024xf32> to vector<2x1024xf32>
    %c0_1 = arith.constant 0 : index
    %c0_2 = arith.constant 0 : index
    %4 = vector.load %arg1[%c0_1, %c0_2] : memref<256x1024xf32, #tpu.memory_space<vmem>>, vector<256x1024xf32>
    %cst_3 = arith.constant dense<0.000000e+00> : vector<2x1024xf32>
    %5 = tpu.matmul %0, %4, %cst_3 {dimension_numbers = #tpu.dot_dimension_numbers<[1], [0], [0], [1], [0, 0, 1, 1], [], []>} : vector<2x256xf32>, vector<256x1024xf32>, vector<2x1024xf32> -> vector<2x1024xf32>
    %6 = arith.addf %3, %5 : vector<2x1024xf32>
    %7 = vector.extract_strided_slice %6 {offsets = [0, 0], sizes = [2, 256], strides = [1, 1]} : vector<2x1024xf32> to vector<2x256xf32>
    %8 = arith.negf %7 : vector<2x256xf32>
    %9 = math.exp %8 : vector<2x256xf32>
    %cst_4 = arith.constant 1.000000e+00 : f32
    %10 = vector.broadcast %cst_4 : f32 to vector<2x256xf32>
    %11 = arith.addf %10, %9 : vector<2x256xf32>
    %12 = arith.divf %10, %11 : vector<2x256xf32>
    %13 = vector.extract_strided_slice %6 {offsets = [0, 256], sizes = [2, 256], strides = [1, 1]} : vector<2x1024xf32> to vector<2x256xf32>
    %14 = arith.negf %13 : vector<2x256xf32>
    %15 = math.exp %14 : vector<2x256xf32>
    %cst_5 = arith.constant 1.000000e+00 : f32
    %16 = vector.broadcast %cst_5 : f32 to vector<2x256xf32>
    %17 = arith.addf %16, %15 : vector<2x256xf32>
    %18 = arith.divf %16, %17 : vector<2x256xf32>
    %19 = vector.extract_strided_slice %6 {offsets = [0, 512], sizes = [2, 256], strides = [1, 1]} : vector<2x1024xf32> to vector<2x256xf32>
    %20 = math.tanh %19 : vector<2x256xf32>
    %21 = vector.extract_strided_slice %6 {offsets = [0, 768], sizes = [2, 256], strides = [1, 1]} : vector<2x1024xf32> to vector<2x256xf32>
    %22 = arith.negf %21 : vector<2x256xf32>
    %23 = math.exp %22 : vector<2x256xf32>
    %cst_6 = arith.constant 1.000000e+00 : f32
    %24 = vector.broadcast %cst_6 : f32 to vector<2x256xf32>
    %25 = arith.addf %24, %23 : vector<2x256xf32>
    %26 = arith.divf %24, %25 : vector<2x256xf32>
    %27 = arith.mulf %18, %0 : vector<2x256xf32>
    %28 = arith.mulf %12, %20 : vector<2x256xf32>
    %29 = arith.addf %27, %28 : vector<2x256xf32>
    %30 = math.tanh %29 : vector<2x256xf32>
    %31 = arith.mulf %26, %30 : vector<2x256xf32>
    %32 = tpu.concatenate %31, %0 in 1 : vector<2x256xf32>, vector<2x256xf32> -> vector<2x512xf32>
    %c0_7 = arith.constant 0 : index
    %c0_8 = arith.constant 0 : index
    %33 = vector.load %arg2[%c0_7, %c0_8] : memref<512x1024xf32, #tpu.memory_space<vmem>>, vector<512x1024xf32>
    %cst_9 = arith.constant dense<0.000000e+00> : vector<2x1024xf32>
    %34 = tpu.matmul %32, %33, %cst_9 {dimension_numbers = #tpu.dot_dimension_numbers<[1], [0], [0], [1], [0, 0, 1, 1], [], []>} : vector<2x512xf32>, vector<512x1024xf32>, vector<2x1024xf32> -> vector<2x1024xf32>
    %c0_10 = arith.constant 0 : index
    %c0_11 = arith.constant 0 : index
    %35 = vector.load %arg3[%c0_10, %c0_11] : memref<1x1024xf32, #tpu.memory_space<vmem>>, vector<1x1024xf32>
    %36 = vector.broadcast %35 : vector<1x1024xf32> to vector<2x1024xf32>
    %37 = arith.addf %34, %36 : vector<2x1024xf32>
    %38 = vector.extract_strided_slice %37 {offsets = [0, 0], sizes = [2, 256], strides = [1, 1]} : vector<2x1024xf32> to vector<2x256xf32>
    %39 = arith.negf %38 : vector<2x256xf32>
    %40 = math.exp %39 : vector<2x256xf32>
    %cst_12 = arith.constant 1.000000e+00 : f32
    %41 = vector.broadcast %cst_12 : f32 to vector<2x256xf32>
    %42 = arith.addf %41, %40 : vector<2x256xf32>
    %43 = arith.divf %41, %42 : vector<2x256xf32>
    %44 = vector.extract_strided_slice %37 {offsets = [0, 256], sizes = [2, 256], strides = [1, 1]} : vector<2x1024xf32> to vector<2x256xf32>
    %45 = arith.negf %44 : vector<2x256xf32>
    %46 = math.exp %45 : vector<2x256xf32>
    %cst_13 = arith.constant 1.000000e+00 : f32
    %47 = vector.broadcast %cst_13 : f32 to vector<2x256xf32>
    %48 = arith.addf %47, %46 : vector<2x256xf32>
    %49 = arith.divf %47, %48 : vector<2x256xf32>
    %50 = vector.extract_strided_slice %37 {offsets = [0, 512], sizes = [2, 256], strides = [1, 1]} : vector<2x1024xf32> to vector<2x256xf32>
    %51 = math.tanh %50 : vector<2x256xf32>
    %52 = vector.extract_strided_slice %37 {offsets = [0, 768], sizes = [2, 256], strides = [1, 1]} : vector<2x1024xf32> to vector<2x256xf32>
    %53 = arith.negf %52 : vector<2x256xf32>
    %54 = math.exp %53 : vector<2x256xf32>
    %cst_14 = arith.constant 1.000000e+00 : f32
    %55 = vector.broadcast %cst_14 : f32 to vector<2x256xf32>
    %56 = arith.addf %55, %54 : vector<2x256xf32>
    %57 = arith.divf %55, %56 : vector<2x256xf32>
    %58 = arith.mulf %49, %0 : vector<2x256xf32>
    %59 = arith.mulf %43, %51 : vector<2x256xf32>
    %60 = arith.addf %58, %59 : vector<2x256xf32>
    %61 = math.tanh %60 : vector<2x256xf32>
    %62 = arith.mulf %57, %61 : vector<2x256xf32>
    %c1_i32 = arith.constant 1 : i32
    %63 = arith.index_cast %c1_i32 : i32 to index
    %c0_15 = arith.constant 0 : index
    %c0_16 = arith.constant 0 : index
    %64 = vector.load %arg0[%63, %c0_15, %c0_16] : memref<8x2x1024xf32, #tpu.memory_space<vmem>>, vector<1x2x1024xf32>
    %65 = vector.shape_cast %64 : vector<1x2x1024xf32> to vector<2x1024xf32>
    %c0_17 = arith.constant 0 : index
    %c0_18 = arith.constant 0 : index
    %66 = vector.load %arg1[%c0_17, %c0_18] : memref<256x1024xf32, #tpu.memory_space<vmem>>, vector<256x1024xf32>
    %cst_19 = arith.constant dense<0.000000e+00> : vector<2x1024xf32>
    %67 = tpu.matmul %31, %66, %cst_19 {dimension_numbers = #tpu.dot_dimension_numbers<[1], [0], [0], [1], [0, 0, 1, 1], [], []>} : vector<2x256xf32>, vector<256x1024xf32>, vector<2x1024xf32> -> vector<2x1024xf32>
    %68 = arith.addf %65, %67 : vector<2x1024xf32>
    %69 = vector.extract_strided_slice %68 {offsets = [0, 0], sizes = [2, 256], strides = [1, 1]} : vector<2x1024xf32> to vector<2x256xf32>
    %70 = arith.negf %69 : vector<2x256xf32>
    %71 = math.exp %70 : vector<2x256xf32>
    %cst_20 = arith.constant 1.000000e+00 : f32
    %72 = vector.broadcast %cst_20 : f32 to vector<2x256xf32>
    %73 = arith.addf %72, %71 : vector<2x256xf32>
    %74 = arith.divf %72, %73 : vector<2x256xf32>
    %75 = vector.extract_strided_slice %68 {offsets = [0, 256], sizes = [2, 256], strides = [1, 1]} : vector<2x1024xf32> to vector<2x256xf32>
    %76 = arith.negf %75 : vector<2x256xf32>
    %77 = math.exp %76 : vector<2x256xf32>
    %cst_21 = arith.constant 1.000000e+00 : f32
    %78 = vector.broadcast %cst_21 : f32 to vector<2x256xf32>
    %79 = arith.addf %78, %77 : vector<2x256xf32>
    %80 = arith.divf %78, %79 : vector<2x256xf32>
    %81 = vector.extract_strided_slice %68 {offsets = [0, 512], sizes = [2, 256], strides = [1, 1]} : vector<2x1024xf32> to vector<2x256xf32>
    %82 = math.tanh %81 : vector<2x256xf32>
    %83 = vector.extract_strided_slice %68 {offsets = [0, 768], sizes = [2, 256], strides = [1, 1]} : vector<2x1024xf32> to vector<2x256xf32>
    %84 = arith.negf %83 : vector<2x256xf32>
    %85 = math.exp %84 : vector<2x256xf32>
    %cst_22 = arith.constant 1.000000e+00 : f32
    %86 = vector.broadcast %cst_22 : f32 to vector<2x256xf32>
    %87 = arith.addf %86, %85 : vector<2x256xf32>
    %88 = arith.divf %86, %87 : vector<2x256xf32>
    %89 = arith.mulf %80, %29 : vector<2x256xf32>
    %90 = arith.mulf %74, %82 : vector<2x256xf32>
    %91 = arith.addf %89, %90 : vector<2x256xf32>
    %92 = math.tanh %91 : vector<2x256xf32>
    %93 = arith.mulf %88, %92 : vector<2x256xf32>
    %94 = tpu.concatenate %93, %62 in 1 : vector<2x256xf32>, vector<2x256xf32> -> vector<2x512xf32>
    %c0_23 = arith.constant 0 : index
    %c0_24 = arith.constant 0 : index
    %95 = vector.load %arg2[%c0_23, %c0_24] : memref<512x1024xf32, #tpu.memory_space<vmem>>, vector<512x1024xf32>
    %cst_25 = arith.constant dense<0.000000e+00> : vector<2x1024xf32>
    %96 = tpu.matmul %94, %95, %cst_25 {dimension_numbers = #tpu.dot_dimension_numbers<[1], [0], [0], [1], [0, 0, 1, 1], [], []>} : vector<2x512xf32>, vector<512x1024xf32>, vector<2x1024xf32> -> vector<2x1024xf32>
    %c0_26 = arith.constant 0 : index
    %c0_27 = arith.constant 0 : index
    %97 = vector.load %arg3[%c0_26, %c0_27] : memref<1x1024xf32, #tpu.memory_space<vmem>>, vector<1x1024xf32>
    %98 = vector.broadcast %97 : vector<1x1024xf32> to vector<2x1024xf32>
    %99 = arith.addf %96, %98 : vector<2x1024xf32>
    %100 = vector.extract_strided_slice %99 {offsets = [0, 0], sizes = [2, 256], strides = [1, 1]} : vector<2x1024xf32> to vector<2x256xf32>
    %101 = arith.negf %100 : vector<2x256xf32>
    %102 = math.exp %101 : vector<2x256xf32>
    %cst_28 = arith.constant 1.000000e+00 : f32
    %103 = vector.broadcast %cst_28 : f32 to vector<2x256xf32>
    %104 = arith.addf %103, %102 : vector<2x256xf32>
    %105 = arith.divf %103, %104 : vector<2x256xf32>
    %106 = vector.extract_strided_slice %99 {offsets = [0, 256], sizes = [2, 256], strides = [1, 1]} : vector<2x1024xf32> to vector<2x256xf32>
    %107 = arith.negf %106 : vector<2x256xf32>
    %108 = math.exp %107 : vector<2x256xf32>
    %cst_29 = arith.constant 1.000000e+00 : f32
    %109 = vector.broadcast %cst_29 : f32 to vector<2x256xf32>
    %110 = arith.addf %109, %108 : vector<2x256xf32>
    %111 = arith.divf %109, %110 : vector<2x256xf32>
    %112 = vector.extract_strided_slice %99 {offsets = [0, 512], sizes = [2, 256], strides = [1, 1]} : vector<2x1024xf32> to vector<2x256xf32>
    %113 = math.tanh %112 : vector<2x256xf32>
    %114 = vector.extract_strided_slice %99 {offsets = [0, 768], sizes = [2, 256], strides = [1, 1]} : vector<2x1024xf32> to vector<2x256xf32>
    %115 = arith.negf %114 : vector<2x256xf32>
    %116 = math.exp %115 : vector<2x256xf32>
    %cst_30 = arith.constant 1.000000e+00 : f32
    %117 = vector.broadcast %cst_30 : f32 to vector<2x256xf32>
    %118 = arith.addf %117, %116 : vector<2x256xf32>
    %119 = arith.divf %117, %118 : vector<2x256xf32>
    %120 = arith.mulf %111, %60 : vector<2x256xf32>
    %121 = arith.mulf %105, %113 : vector<2x256xf32>
    %122 = arith.addf %120, %121 : vector<2x256xf32>
    %123 = math.tanh %122 : vector<2x256xf32>
    %124 = arith.mulf %119, %123 : vector<2x256xf32>
    %c2_i32 = arith.constant 2 : i32
    %125 = arith.index_cast %c2_i32 : i32 to index
    %c0_31 = arith.constant 0 : index
    %c0_32 = arith.constant 0 : index
    %126 = vector.load %arg0[%125, %c0_31, %c0_32] : memref<8x2x1024xf32, #tpu.memory_space<vmem>>, vector<1x2x1024xf32>
    %127 = vector.shape_cast %126 : vector<1x2x1024xf32> to vector<2x1024xf32>
    %c0_33 = arith.constant 0 : index
    %c0_34 = arith.constant 0 : index
    %128 = vector.load %arg1[%c0_33, %c0_34] : memref<256x1024xf32, #tpu.memory_space<vmem>>, vector<256x1024xf32>
    %cst_35 = arith.constant dense<0.000000e+00> : vector<2x1024xf32>
    %129 = tpu.matmul %93, %128, %cst_35 {dimension_numbers = #tpu.dot_dimension_numbers<[1], [0], [0], [1], [0, 0, 1, 1], [], []>} : vector<2x256xf32>, vector<256x1024xf32>, vector<2x1024xf32> -> vector<2x1024xf32>
    %130 = arith.addf %127, %129 : vector<2x1024xf32>
    %131 = vector.extract_strided_slice %130 {offsets = [0, 0], sizes = [2, 256], strides = [1, 1]} : vector<2x1024xf32> to vector<2x256xf32>
    %132 = arith.negf %131 : vector<2x256xf32>
    %133 = math.exp %132 : vector<2x256xf32>
    %cst_36 = arith.constant 1.000000e+00 : f32
    %134 = vector.broadcast %cst_36 : f32 to vector<2x256xf32>
    %135 = arith.addf %134, %133 : vector<2x256xf32>
    %136 = arith.divf %134, %135 : vector<2x256xf32>
    %137 = vector.extract_strided_slice %130 {offsets = [0, 256], sizes = [2, 256], strides = [1, 1]} : vector<2x1024xf32> to vector<2x256xf32>
    %138 = arith.negf %137 : vector<2x256xf32>
    %139 = math.exp %138 : vector<2x256xf32>
    %cst_37 = arith.constant 1.000000e+00 : f32
    %140 = vector.broadcast %cst_37 : f32 to vector<2x256xf32>
    %141 = arith.addf %140, %139 : vector<2x256xf32>
    %142 = arith.divf %140, %141 : vector<2x256xf32>
    %143 = vector.extract_strided_slice %130 {offsets = [0, 512], sizes = [2, 256], strides = [1, 1]} : vector<2x1024xf32> to vector<2x256xf32>
    %144 = math.tanh %143 : vector<2x256xf32>
    %145 = vector.extract_strided_slice %130 {offsets = [0, 768], sizes = [2, 256], strides = [1, 1]} : vector<2x1024xf32> to vector<2x256xf32>
    %146 = arith.negf %145 : vector<2x256xf32>
    %147 = math.exp %146 : vector<2x256xf32>
    %cst_38 = arith.constant 1.000000e+00 : f32
    %148 = vector.broadcast %cst_38 : f32 to vector<2x256xf32>
    %149 = arith.addf %148, %147 : vector<2x256xf32>
    %150 = arith.divf %148, %149 : vector<2x256xf32>
    %151 = arith.mulf %142, %91 : vector<2x256xf32>
    %152 = arith.mulf %136, %144 : vector<2x256xf32>
    %153 = arith.addf %151, %152 : vector<2x256xf32>
    %154 = math.tanh %153 : vector<2x256xf32>
    %155 = arith.mulf %150, %154 : vector<2x256xf32>
    %156 = tpu.concatenate %155, %124 in 1 : vector<2x256xf32>, vector<2x256xf32> -> vector<2x512xf32>
    %c0_39 = arith.constant 0 : index
    %c0_40 = arith.constant 0 : index
    %157 = vector.load %arg2[%c0_39, %c0_40] : memref<512x1024xf32, #tpu.memory_space<vmem>>, vector<512x1024xf32>
    %cst_41 = arith.constant dense<0.000000e+00> : vector<2x1024xf32>
    %158 = tpu.matmul %156, %157, %cst_41 {dimension_numbers = #tpu.dot_dimension_numbers<[1], [0], [0], [1], [0, 0, 1, 1], [], []>} : vector<2x512xf32>, vector<512x1024xf32>, vector<2x1024xf32> -> vector<2x1024xf32>
    %c0_42 = arith.constant 0 : index
    %c0_43 = arith.constant 0 : index
    %159 = vector.load %arg3[%c0_42, %c0_43] : memref<1x1024xf32, #tpu.memory_space<vmem>>, vector<1x1024xf32>
    %160 = vector.broadcast %159 : vector<1x1024xf32> to vector<2x1024xf32>
    %161 = arith.addf %158, %160 : vector<2x1024xf32>
    %162 = vector.extract_strided_slice %161 {offsets = [0, 0], sizes = [2, 256], strides = [1, 1]} : vector<2x1024xf32> to vector<2x256xf32>
    %163 = arith.negf %162 : vector<2x256xf32>
    %164 = math.exp %163 : vector<2x256xf32>
    %cst_44 = arith.constant 1.000000e+00 : f32
    %165 = vector.broadcast %cst_44 : f32 to vector<2x256xf32>
    %166 = arith.addf %165, %164 : vector<2x256xf32>
    %167 = arith.divf %165, %166 : vector<2x256xf32>
    %168 = vector.extract_strided_slice %161 {offsets = [0, 256], sizes = [2, 256], strides = [1, 1]} : vector<2x1024xf32> to vector<2x256xf32>
    %169 = arith.negf %168 : vector<2x256xf32>
    %170 = math.exp %169 : vector<2x256xf32>
    %cst_45 = arith.constant 1.000000e+00 : f32
    %171 = vector.broadcast %cst_45 : f32 to vector<2x256xf32>
    %172 = arith.addf %171, %170 : vector<2x256xf32>
    %173 = arith.divf %171, %172 : vector<2x256xf32>
    %174 = vector.extract_strided_slice %161 {offsets = [0, 512], sizes = [2, 256], strides = [1, 1]} : vector<2x1024xf32> to vector<2x256xf32>
    %175 = math.tanh %174 : vector<2x256xf32>
    %176 = vector.extract_strided_slice %161 {offsets = [0, 768], sizes = [2, 256], strides = [1, 1]} : vector<2x1024xf32> to vector<2x256xf32>
    %177 = arith.negf %176 : vector<2x256xf32>
    %178 = math.exp %177 : vector<2x256xf32>
    %cst_46 = arith.constant 1.000000e+00 : f32
    %179 = vector.broadcast %cst_46 : f32 to vector<2x256xf32>
    %180 = arith.addf %179, %178 : vector<2x256xf32>
    %181 = arith.divf %179, %180 : vector<2x256xf32>
    %182 = arith.mulf %173, %122 : vector<2x256xf32>
    %183 = arith.mulf %167, %175 : vector<2x256xf32>
    %184 = arith.addf %182, %183 : vector<2x256xf32>
    %185 = math.tanh %184 : vector<2x256xf32>
    %186 = arith.mulf %181, %185 : vector<2x256xf32>
    %c3_i32 = arith.constant 3 : i32
    %187 = arith.index_cast %c3_i32 : i32 to index
    %c0_47 = arith.constant 0 : index
    %c0_48 = arith.constant 0 : index
    %188 = vector.load %arg0[%187, %c0_47, %c0_48] : memref<8x2x1024xf32, #tpu.memory_space<vmem>>, vector<1x2x1024xf32>
    %189 = vector.shape_cast %188 : vector<1x2x1024xf32> to vector<2x1024xf32>
    %c0_49 = arith.constant 0 : index
    %c0_50 = arith.constant 0 : index
    %190 = vector.load %arg1[%c0_49, %c0_50] : memref<256x1024xf32, #tpu.memory_space<vmem>>, vector<256x1024xf32>
    %cst_51 = arith.constant dense<0.000000e+00> : vector<2x1024xf32>
    %191 = tpu.matmul %155, %190, %cst_51 {dimension_numbers = #tpu.dot_dimension_numbers<[1], [0], [0], [1], [0, 0, 1, 1], [], []>} : vector<2x256xf32>, vector<256x1024xf32>, vector<2x1024xf32> -> vector<2x1024xf32>
    %192 = arith.addf %189, %191 : vector<2x1024xf32>
    %193 = vector.extract_strided_slice %192 {offsets = [0, 0], sizes = [2, 256], strides = [1, 1]} : vector<2x1024xf32> to vector<2x256xf32>
    %194 = arith.negf %193 : vector<2x256xf32>
    %195 = math.exp %194 : vector<2x256xf32>
    %cst_52 = arith.constant 1.000000e+00 : f32
    %196 = vector.broadcast %cst_52 : f32 to vector<2x256xf32>
    %197 = arith.addf %196, %195 : vector<2x256xf32>
    %198 = arith.divf %196, %197 : vector<2x256xf32>
    %199 = vector.extract_strided_slice %192 {offsets = [0, 256], sizes = [2, 256], strides = [1, 1]} : vector<2x1024xf32> to vector<2x256xf32>
    %200 = arith.negf %199 : vector<2x256xf32>
    %201 = math.exp %200 : vector<2x256xf32>
    %cst_53 = arith.constant 1.000000e+00 : f32
    %202 = vector.broadcast %cst_53 : f32 to vector<2x256xf32>
    %203 = arith.addf %202, %201 : vector<2x256xf32>
    %204 = arith.divf %202, %203 : vector<2x256xf32>
    %205 = vector.extract_strided_slice %192 {offsets = [0, 512], sizes = [2, 256], strides = [1, 1]} : vector<2x1024xf32> to vector<2x256xf32>
    %206 = math.tanh %205 : vector<2x256xf32>
    %207 = vector.extract_strided_slice %192 {offsets = [0, 768], sizes = [2, 256], strides = [1, 1]} : vector<2x1024xf32> to vector<2x256xf32>
    %208 = arith.negf %207 : vector<2x256xf32>
    %209 = math.exp %208 : vector<2x256xf32>
    %cst_54 = arith.constant 1.000000e+00 : f32
    %210 = vector.broadcast %cst_54 : f32 to vector<2x256xf32>
    %211 = arith.addf %210, %209 : vector<2x256xf32>
    %212 = arith.divf %210, %211 : vector<2x256xf32>
    %213 = arith.mulf %204, %153 : vector<2x256xf32>
    %214 = arith.mulf %198, %206 : vector<2x256xf32>
    %215 = arith.addf %213, %214 : vector<2x256xf32>
    %216 = math.tanh %215 : vector<2x256xf32>
    %217 = arith.mulf %212, %216 : vector<2x256xf32>
    %218 = tpu.concatenate %217, %186 in 1 : vector<2x256xf32>, vector<2x256xf32> -> vector<2x512xf32>
    %c0_55 = arith.constant 0 : index
    %c0_56 = arith.constant 0 : index
    %219 = vector.load %arg2[%c0_55, %c0_56] : memref<512x1024xf32, #tpu.memory_space<vmem>>, vector<512x1024xf32>
    %cst_57 = arith.constant dense<0.000000e+00> : vector<2x1024xf32>
    %220 = tpu.matmul %218, %219, %cst_57 {dimension_numbers = #tpu.dot_dimension_numbers<[1], [0], [0], [1], [0, 0, 1, 1], [], []>} : vector<2x512xf32>, vector<512x1024xf32>, vector<2x1024xf32> -> vector<2x1024xf32>
    %c0_58 = arith.constant 0 : index
    %c0_59 = arith.constant 0 : index
    %221 = vector.load %arg3[%c0_58, %c0_59] : memref<1x1024xf32, #tpu.memory_space<vmem>>, vector<1x1024xf32>
    %222 = vector.broadcast %221 : vector<1x1024xf32> to vector<2x1024xf32>
    %223 = arith.addf %220, %222 : vector<2x1024xf32>
    %224 = vector.extract_strided_slice %223 {offsets = [0, 0], sizes = [2, 256], strides = [1, 1]} : vector<2x1024xf32> to vector<2x256xf32>
    %225 = arith.negf %224 : vector<2x256xf32>
    %226 = math.exp %225 : vector<2x256xf32>
    %cst_60 = arith.constant 1.000000e+00 : f32
    %227 = vector.broadcast %cst_60 : f32 to vector<2x256xf32>
    %228 = arith.addf %227, %226 : vector<2x256xf32>
    %229 = arith.divf %227, %228 : vector<2x256xf32>
    %230 = vector.extract_strided_slice %223 {offsets = [0, 256], sizes = [2, 256], strides = [1, 1]} : vector<2x1024xf32> to vector<2x256xf32>
    %231 = arith.negf %230 : vector<2x256xf32>
    %232 = math.exp %231 : vector<2x256xf32>
    %cst_61 = arith.constant 1.000000e+00 : f32
    %233 = vector.broadcast %cst_61 : f32 to vector<2x256xf32>
    %234 = arith.addf %233, %232 : vector<2x256xf32>
    %235 = arith.divf %233, %234 : vector<2x256xf32>
    %236 = vector.extract_strided_slice %223 {offsets = [0, 512], sizes = [2, 256], strides = [1, 1]} : vector<2x1024xf32> to vector<2x256xf32>
    %237 = math.tanh %236 : vector<2x256xf32>
    %238 = vector.extract_strided_slice %223 {offsets = [0, 768], sizes = [2, 256], strides = [1, 1]} : vector<2x1024xf32> to vector<2x256xf32>
    %239 = arith.negf %238 : vector<2x256xf32>
    %240 = math.exp %239 : vector<2x256xf32>
    %cst_62 = arith.constant 1.000000e+00 : f32
    %241 = vector.broadcast %cst_62 : f32 to vector<2x256xf32>
    %242 = arith.addf %241, %240 : vector<2x256xf32>
    %243 = arith.divf %241, %242 : vector<2x256xf32>
    %244 = arith.mulf %235, %184 : vector<2x256xf32>
    %245 = arith.mulf %229, %237 : vector<2x256xf32>
    %246 = arith.addf %244, %245 : vector<2x256xf32>
    %247 = math.tanh %246 : vector<2x256xf32>
    %248 = arith.mulf %243, %247 : vector<2x256xf32>
    %c4_i32 = arith.constant 4 : i32
    %249 = arith.index_cast %c4_i32 : i32 to index
    %c0_63 = arith.constant 0 : index
    %c0_64 = arith.constant 0 : index
    %250 = vector.load %arg0[%249, %c0_63, %c0_64] : memref<8x2x1024xf32, #tpu.memory_space<vmem>>, vector<1x2x1024xf32>
    %251 = vector.shape_cast %250 : vector<1x2x1024xf32> to vector<2x1024xf32>
    %c0_65 = arith.constant 0 : index
    %c0_66 = arith.constant 0 : index
    %252 = vector.load %arg1[%c0_65, %c0_66] : memref<256x1024xf32, #tpu.memory_space<vmem>>, vector<256x1024xf32>
    %cst_67 = arith.constant dense<0.000000e+00> : vector<2x1024xf32>
    %253 = tpu.matmul %217, %252, %cst_67 {dimension_numbers = #tpu.dot_dimension_numbers<[1], [0], [0], [1], [0, 0, 1, 1], [], []>} : vector<2x256xf32>, vector<256x1024xf32>, vector<2x1024xf32> -> vector<2x1024xf32>
    %254 = arith.addf %251, %253 : vector<2x1024xf32>
    %255 = vector.extract_strided_slice %254 {offsets = [0, 0], sizes = [2, 256], strides = [1, 1]} : vector<2x1024xf32> to vector<2x256xf32>
    %256 = arith.negf %255 : vector<2x256xf32>
    %257 = math.exp %256 : vector<2x256xf32>
    %cst_68 = arith.constant 1.000000e+00 : f32
    %258 = vector.broadcast %cst_68 : f32 to vector<2x256xf32>
    %259 = arith.addf %258, %257 : vector<2x256xf32>
    %260 = arith.divf %258, %259 : vector<2x256xf32>
    %261 = vector.extract_strided_slice %254 {offsets = [0, 256], sizes = [2, 256], strides = [1, 1]} : vector<2x1024xf32> to vector<2x256xf32>
    %262 = arith.negf %261 : vector<2x256xf32>
    %263 = math.exp %262 : vector<2x256xf32>
    %cst_69 = arith.constant 1.000000e+00 : f32
    %264 = vector.broadcast %cst_69 : f32 to vector<2x256xf32>
    %265 = arith.addf %264, %263 : vector<2x256xf32>
    %266 = arith.divf %264, %265 : vector<2x256xf32>
    %267 = vector.extract_strided_slice %254 {offsets = [0, 512], sizes = [2, 256], strides = [1, 1]} : vector<2x1024xf32> to vector<2x256xf32>
    %268 = math.tanh %267 : vector<2x256xf32>
    %269 = vector.extract_strided_slice %254 {offsets = [0, 768], sizes = [2, 256], strides = [1, 1]} : vector<2x1024xf32> to vector<2x256xf32>
    %270 = arith.negf %269 : vector<2x256xf32>
    %271 = math.exp %270 : vector<2x256xf32>
    %cst_70 = arith.constant 1.000000e+00 : f32
    %272 = vector.broadcast %cst_70 : f32 to vector<2x256xf32>
    %273 = arith.addf %272, %271 : vector<2x256xf32>
    %274 = arith.divf %272, %273 : vector<2x256xf32>
    %275 = arith.mulf %266, %215 : vector<2x256xf32>
    %276 = arith.mulf %260, %268 : vector<2x256xf32>
    %277 = arith.addf %275, %276 : vector<2x256xf32>
    %278 = math.tanh %277 : vector<2x256xf32>
    %279 = arith.mulf %274, %278 : vector<2x256xf32>
    %280 = tpu.concatenate %279, %248 in 1 : vector<2x256xf32>, vector<2x256xf32> -> vector<2x512xf32>
    %c0_71 = arith.constant 0 : index
    %c0_72 = arith.constant 0 : index
    %281 = vector.load %arg2[%c0_71, %c0_72] : memref<512x1024xf32, #tpu.memory_space<vmem>>, vector<512x1024xf32>
    %cst_73 = arith.constant dense<0.000000e+00> : vector<2x1024xf32>
    %282 = tpu.matmul %280, %281, %cst_73 {dimension_numbers = #tpu.dot_dimension_numbers<[1], [0], [0], [1], [0, 0, 1, 1], [], []>} : vector<2x512xf32>, vector<512x1024xf32>, vector<2x1024xf32> -> vector<2x1024xf32>
    %c0_74 = arith.constant 0 : index
    %c0_75 = arith.constant 0 : index
    %283 = vector.load %arg3[%c0_74, %c0_75] : memref<1x1024xf32, #tpu.memory_space<vmem>>, vector<1x1024xf32>
    %284 = vector.broadcast %283 : vector<1x1024xf32> to vector<2x1024xf32>
    %285 = arith.addf %282, %284 : vector<2x1024xf32>
    %286 = vector.extract_strided_slice %285 {offsets = [0, 0], sizes = [2, 256], strides = [1, 1]} : vector<2x1024xf32> to vector<2x256xf32>
    %287 = arith.negf %286 : vector<2x256xf32>
    %288 = math.exp %287 : vector<2x256xf32>
    %cst_76 = arith.constant 1.000000e+00 : f32
    %289 = vector.broadcast %cst_76 : f32 to vector<2x256xf32>
    %290 = arith.addf %289, %288 : vector<2x256xf32>
    %291 = arith.divf %289, %290 : vector<2x256xf32>
    %292 = vector.extract_strided_slice %285 {offsets = [0, 256], sizes = [2, 256], strides = [1, 1]} : vector<2x1024xf32> to vector<2x256xf32>
    %293 = arith.negf %292 : vector<2x256xf32>
    %294 = math.exp %293 : vector<2x256xf32>
    %cst_77 = arith.constant 1.000000e+00 : f32
    %295 = vector.broadcast %cst_77 : f32 to vector<2x256xf32>
    %296 = arith.addf %295, %294 : vector<2x256xf32>
    %297 = arith.divf %295, %296 : vector<2x256xf32>
    %298 = vector.extract_strided_slice %285 {offsets = [0, 512], sizes = [2, 256], strides = [1, 1]} : vector<2x1024xf32> to vector<2x256xf32>
    %299 = math.tanh %298 : vector<2x256xf32>
    %300 = vector.extract_strided_slice %285 {offsets = [0, 768], sizes = [2, 256], strides = [1, 1]} : vector<2x1024xf32> to vector<2x256xf32>
    %301 = arith.negf %300 : vector<2x256xf32>
    %302 = math.exp %301 : vector<2x256xf32>
    %cst_78 = arith.constant 1.000000e+00 : f32
    %303 = vector.broadcast %cst_78 : f32 to vector<2x256xf32>
    %304 = arith.addf %303, %302 : vector<2x256xf32>
    %305 = arith.divf %303, %304 : vector<2x256xf32>
    %306 = arith.mulf %297, %246 : vector<2x256xf32>
    %307 = arith.mulf %291, %299 : vector<2x256xf32>
    %308 = arith.addf %306, %307 : vector<2x256xf32>
    %309 = math.tanh %308 : vector<2x256xf32>
    %310 = arith.mulf %305, %309 : vector<2x256xf32>
    %c5_i32 = arith.constant 5 : i32
    %311 = arith.index_cast %c5_i32 : i32 to index
    %c0_79 = arith.constant 0 : index
    %c0_80 = arith.constant 0 : index
    %312 = vector.load %arg0[%311, %c0_79, %c0_80] : memref<8x2x1024xf32, #tpu.memory_space<vmem>>, vector<1x2x1024xf32>
    %313 = vector.shape_cast %312 : vector<1x2x1024xf32> to vector<2x1024xf32>
    %c0_81 = arith.constant 0 : index
    %c0_82 = arith.constant 0 : index
    %314 = vector.load %arg1[%c0_81, %c0_82] : memref<256x1024xf32, #tpu.memory_space<vmem>>, vector<256x1024xf32>
    %cst_83 = arith.constant dense<0.000000e+00> : vector<2x1024xf32>
    %315 = tpu.matmul %279, %314, %cst_83 {dimension_numbers = #tpu.dot_dimension_numbers<[1], [0], [0], [1], [0, 0, 1, 1], [], []>} : vector<2x256xf32>, vector<256x1024xf32>, vector<2x1024xf32> -> vector<2x1024xf32>
    %316 = arith.addf %313, %315 : vector<2x1024xf32>
    %317 = vector.extract_strided_slice %316 {offsets = [0, 0], sizes = [2, 256], strides = [1, 1]} : vector<2x1024xf32> to vector<2x256xf32>
    %318 = arith.negf %317 : vector<2x256xf32>
    %319 = math.exp %318 : vector<2x256xf32>
    %cst_84 = arith.constant 1.000000e+00 : f32
    %320 = vector.broadcast %cst_84 : f32 to vector<2x256xf32>
    %321 = arith.addf %320, %319 : vector<2x256xf32>
    %322 = arith.divf %320, %321 : vector<2x256xf32>
    %323 = vector.extract_strided_slice %316 {offsets = [0, 256], sizes = [2, 256], strides = [1, 1]} : vector<2x1024xf32> to vector<2x256xf32>
    %324 = arith.negf %323 : vector<2x256xf32>
    %325 = math.exp %324 : vector<2x256xf32>
    %cst_85 = arith.constant 1.000000e+00 : f32
    %326 = vector.broadcast %cst_85 : f32 to vector<2x256xf32>
    %327 = arith.addf %326, %325 : vector<2x256xf32>
    %328 = arith.divf %326, %327 : vector<2x256xf32>
    %329 = vector.extract_strided_slice %316 {offsets = [0, 512], sizes = [2, 256], strides = [1, 1]} : vector<2x1024xf32> to vector<2x256xf32>
    %330 = math.tanh %329 : vector<2x256xf32>
    %331 = vector.extract_strided_slice %316 {offsets = [0, 768], sizes = [2, 256], strides = [1, 1]} : vector<2x1024xf32> to vector<2x256xf32>
    %332 = arith.negf %331 : vector<2x256xf32>
    %333 = math.exp %332 : vector<2x256xf32>
    %cst_86 = arith.constant 1.000000e+00 : f32
    %334 = vector.broadcast %cst_86 : f32 to vector<2x256xf32>
    %335 = arith.addf %334, %333 : vector<2x256xf32>
    %336 = arith.divf %334, %335 : vector<2x256xf32>
    %337 = arith.mulf %328, %277 : vector<2x256xf32>
    %338 = arith.mulf %322, %330 : vector<2x256xf32>
    %339 = arith.addf %337, %338 : vector<2x256xf32>
    %340 = math.tanh %339 : vector<2x256xf32>
    %341 = arith.mulf %336, %340 : vector<2x256xf32>
    %342 = tpu.concatenate %341, %310 in 1 : vector<2x256xf32>, vector<2x256xf32> -> vector<2x512xf32>
    %c0_87 = arith.constant 0 : index
    %c0_88 = arith.constant 0 : index
    %343 = vector.load %arg2[%c0_87, %c0_88] : memref<512x1024xf32, #tpu.memory_space<vmem>>, vector<512x1024xf32>
    %cst_89 = arith.constant dense<0.000000e+00> : vector<2x1024xf32>
    %344 = tpu.matmul %342, %343, %cst_89 {dimension_numbers = #tpu.dot_dimension_numbers<[1], [0], [0], [1], [0, 0, 1, 1], [], []>} : vector<2x512xf32>, vector<512x1024xf32>, vector<2x1024xf32> -> vector<2x1024xf32>
    %c0_90 = arith.constant 0 : index
    %c0_91 = arith.constant 0 : index
    %345 = vector.load %arg3[%c0_90, %c0_91] : memref<1x1024xf32, #tpu.memory_space<vmem>>, vector<1x1024xf32>
    %346 = vector.broadcast %345 : vector<1x1024xf32> to vector<2x1024xf32>
    %347 = arith.addf %344, %346 : vector<2x1024xf32>
    %348 = vector.extract_strided_slice %347 {offsets = [0, 0], sizes = [2, 256], strides = [1, 1]} : vector<2x1024xf32> to vector<2x256xf32>
    %349 = arith.negf %348 : vector<2x256xf32>
    %350 = math.exp %349 : vector<2x256xf32>
    %cst_92 = arith.constant 1.000000e+00 : f32
    %351 = vector.broadcast %cst_92 : f32 to vector<2x256xf32>
    %352 = arith.addf %351, %350 : vector<2x256xf32>
    %353 = arith.divf %351, %352 : vector<2x256xf32>
    %354 = vector.extract_strided_slice %347 {offsets = [0, 256], sizes = [2, 256], strides = [1, 1]} : vector<2x1024xf32> to vector<2x256xf32>
    %355 = arith.negf %354 : vector<2x256xf32>
    %356 = math.exp %355 : vector<2x256xf32>
    %cst_93 = arith.constant 1.000000e+00 : f32
    %357 = vector.broadcast %cst_93 : f32 to vector<2x256xf32>
    %358 = arith.addf %357, %356 : vector<2x256xf32>
    %359 = arith.divf %357, %358 : vector<2x256xf32>
    %360 = vector.extract_strided_slice %347 {offsets = [0, 512], sizes = [2, 256], strides = [1, 1]} : vector<2x1024xf32> to vector<2x256xf32>
    %361 = math.tanh %360 : vector<2x256xf32>
    %362 = vector.extract_strided_slice %347 {offsets = [0, 768], sizes = [2, 256], strides = [1, 1]} : vector<2x1024xf32> to vector<2x256xf32>
    %363 = arith.negf %362 : vector<2x256xf32>
    %364 = math.exp %363 : vector<2x256xf32>
    %cst_94 = arith.constant 1.000000e+00 : f32
    %365 = vector.broadcast %cst_94 : f32 to vector<2x256xf32>
    %366 = arith.addf %365, %364 : vector<2x256xf32>
    %367 = arith.divf %365, %366 : vector<2x256xf32>
    %368 = arith.mulf %359, %308 : vector<2x256xf32>
    %369 = arith.mulf %353, %361 : vector<2x256xf32>
    %370 = arith.addf %368, %369 : vector<2x256xf32>
    %371 = math.tanh %370 : vector<2x256xf32>
    %372 = arith.mulf %367, %371 : vector<2x256xf32>
    %c6_i32 = arith.constant 6 : i32
    %373 = arith.index_cast %c6_i32 : i32 to index
    %c0_95 = arith.constant 0 : index
    %c0_96 = arith.constant 0 : index
    %374 = vector.load %arg0[%373, %c0_95, %c0_96] : memref<8x2x1024xf32, #tpu.memory_space<vmem>>, vector<1x2x1024xf32>
    %375 = vector.shape_cast %374 : vector<1x2x1024xf32> to vector<2x1024xf32>
    %c0_97 = arith.constant 0 : index
    %c0_98 = arith.constant 0 : index
    %376 = vector.load %arg1[%c0_97, %c0_98] : memref<256x1024xf32, #tpu.memory_space<vmem>>, vector<256x1024xf32>
    %cst_99 = arith.constant dense<0.000000e+00> : vector<2x1024xf32>
    %377 = tpu.matmul %341, %376, %cst_99 {dimension_numbers = #tpu.dot_dimension_numbers<[1], [0], [0], [1], [0, 0, 1, 1], [], []>} : vector<2x256xf32>, vector<256x1024xf32>, vector<2x1024xf32> -> vector<2x1024xf32>
    %378 = arith.addf %375, %377 : vector<2x1024xf32>
    %379 = vector.extract_strided_slice %378 {offsets = [0, 0], sizes = [2, 256], strides = [1, 1]} : vector<2x1024xf32> to vector<2x256xf32>
    %380 = arith.negf %379 : vector<2x256xf32>
    %381 = math.exp %380 : vector<2x256xf32>
    %cst_100 = arith.constant 1.000000e+00 : f32
    %382 = vector.broadcast %cst_100 : f32 to vector<2x256xf32>
    %383 = arith.addf %382, %381 : vector<2x256xf32>
    %384 = arith.divf %382, %383 : vector<2x256xf32>
    %385 = vector.extract_strided_slice %378 {offsets = [0, 256], sizes = [2, 256], strides = [1, 1]} : vector<2x1024xf32> to vector<2x256xf32>
    %386 = arith.negf %385 : vector<2x256xf32>
    %387 = math.exp %386 : vector<2x256xf32>
    %cst_101 = arith.constant 1.000000e+00 : f32
    %388 = vector.broadcast %cst_101 : f32 to vector<2x256xf32>
    %389 = arith.addf %388, %387 : vector<2x256xf32>
    %390 = arith.divf %388, %389 : vector<2x256xf32>
    %391 = vector.extract_strided_slice %378 {offsets = [0, 512], sizes = [2, 256], strides = [1, 1]} : vector<2x1024xf32> to vector<2x256xf32>
    %392 = math.tanh %391 : vector<2x256xf32>
    %393 = vector.extract_strided_slice %378 {offsets = [0, 768], sizes = [2, 256], strides = [1, 1]} : vector<2x1024xf32> to vector<2x256xf32>
    %394 = arith.negf %393 : vector<2x256xf32>
    %395 = math.exp %394 : vector<2x256xf32>
    %cst_102 = arith.constant 1.000000e+00 : f32
    %396 = vector.broadcast %cst_102 : f32 to vector<2x256xf32>
    %397 = arith.addf %396, %395 : vector<2x256xf32>
    %398 = arith.divf %396, %397 : vector<2x256xf32>
    %399 = arith.mulf %390, %339 : vector<2x256xf32>
    %400 = arith.mulf %384, %392 : vector<2x256xf32>
    %401 = arith.addf %399, %400 : vector<2x256xf32>
    %402 = math.tanh %401 : vector<2x256xf32>
    %403 = arith.mulf %398, %402 : vector<2x256xf32>
    %404 = tpu.concatenate %403, %372 in 1 : vector<2x256xf32>, vector<2x256xf32> -> vector<2x512xf32>
    %c0_103 = arith.constant 0 : index
    %c0_104 = arith.constant 0 : index
    %405 = vector.load %arg2[%c0_103, %c0_104] : memref<512x1024xf32, #tpu.memory_space<vmem>>, vector<512x1024xf32>
    %cst_105 = arith.constant dense<0.000000e+00> : vector<2x1024xf32>
    %406 = tpu.matmul %404, %405, %cst_105 {dimension_numbers = #tpu.dot_dimension_numbers<[1], [0], [0], [1], [0, 0, 1, 1], [], []>} : vector<2x512xf32>, vector<512x1024xf32>, vector<2x1024xf32> -> vector<2x1024xf32>
    %c0_106 = arith.constant 0 : index
    %c0_107 = arith.constant 0 : index
    %407 = vector.load %arg3[%c0_106, %c0_107] : memref<1x1024xf32, #tpu.memory_space<vmem>>, vector<1x1024xf32>
    %408 = vector.broadcast %407 : vector<1x1024xf32> to vector<2x1024xf32>
    %409 = arith.addf %406, %408 : vector<2x1024xf32>
    %410 = vector.extract_strided_slice %409 {offsets = [0, 0], sizes = [2, 256], strides = [1, 1]} : vector<2x1024xf32> to vector<2x256xf32>
    %411 = arith.negf %410 : vector<2x256xf32>
    %412 = math.exp %411 : vector<2x256xf32>
    %cst_108 = arith.constant 1.000000e+00 : f32
    %413 = vector.broadcast %cst_108 : f32 to vector<2x256xf32>
    %414 = arith.addf %413, %412 : vector<2x256xf32>
    %415 = arith.divf %413, %414 : vector<2x256xf32>
    %416 = vector.extract_strided_slice %409 {offsets = [0, 256], sizes = [2, 256], strides = [1, 1]} : vector<2x1024xf32> to vector<2x256xf32>
    %417 = arith.negf %416 : vector<2x256xf32>
    %418 = math.exp %417 : vector<2x256xf32>
    %cst_109 = arith.constant 1.000000e+00 : f32
    %419 = vector.broadcast %cst_109 : f32 to vector<2x256xf32>
    %420 = arith.addf %419, %418 : vector<2x256xf32>
    %421 = arith.divf %419, %420 : vector<2x256xf32>
    %422 = vector.extract_strided_slice %409 {offsets = [0, 512], sizes = [2, 256], strides = [1, 1]} : vector<2x1024xf32> to vector<2x256xf32>
    %423 = math.tanh %422 : vector<2x256xf32>
    %424 = vector.extract_strided_slice %409 {offsets = [0, 768], sizes = [2, 256], strides = [1, 1]} : vector<2x1024xf32> to vector<2x256xf32>
    %425 = arith.negf %424 : vector<2x256xf32>
    %426 = math.exp %425 : vector<2x256xf32>
    %cst_110 = arith.constant 1.000000e+00 : f32
    %427 = vector.broadcast %cst_110 : f32 to vector<2x256xf32>
    %428 = arith.addf %427, %426 : vector<2x256xf32>
    %429 = arith.divf %427, %428 : vector<2x256xf32>
    %430 = arith.mulf %421, %370 : vector<2x256xf32>
    %431 = arith.mulf %415, %423 : vector<2x256xf32>
    %432 = arith.addf %430, %431 : vector<2x256xf32>
    %433 = math.tanh %432 : vector<2x256xf32>
    %434 = arith.mulf %429, %433 : vector<2x256xf32>
    %c7_i32 = arith.constant 7 : i32
    %435 = arith.index_cast %c7_i32 : i32 to index
    %c0_111 = arith.constant 0 : index
    %c0_112 = arith.constant 0 : index
    %436 = vector.load %arg0[%435, %c0_111, %c0_112] : memref<8x2x1024xf32, #tpu.memory_space<vmem>>, vector<1x2x1024xf32>
    %437 = vector.shape_cast %436 : vector<1x2x1024xf32> to vector<2x1024xf32>
    %c0_113 = arith.constant 0 : index
    %c0_114 = arith.constant 0 : index
    %438 = vector.load %arg1[%c0_113, %c0_114] : memref<256x1024xf32, #tpu.memory_space<vmem>>, vector<256x1024xf32>
    %cst_115 = arith.constant dense<0.000000e+00> : vector<2x1024xf32>
    %439 = tpu.matmul %403, %438, %cst_115 {dimension_numbers = #tpu.dot_dimension_numbers<[1], [0], [0], [1], [0, 0, 1, 1], [], []>} : vector<2x256xf32>, vector<256x1024xf32>, vector<2x1024xf32> -> vector<2x1024xf32>
    %440 = arith.addf %437, %439 : vector<2x1024xf32>
    %441 = vector.extract_strided_slice %440 {offsets = [0, 0], sizes = [2, 256], strides = [1, 1]} : vector<2x1024xf32> to vector<2x256xf32>
    %442 = arith.negf %441 : vector<2x256xf32>
    %443 = math.exp %442 : vector<2x256xf32>
    %cst_116 = arith.constant 1.000000e+00 : f32
    %444 = vector.broadcast %cst_116 : f32 to vector<2x256xf32>
    %445 = arith.addf %444, %443 : vector<2x256xf32>
    %446 = arith.divf %444, %445 : vector<2x256xf32>
    %447 = vector.extract_strided_slice %440 {offsets = [0, 256], sizes = [2, 256], strides = [1, 1]} : vector<2x1024xf32> to vector<2x256xf32>
    %448 = arith.negf %447 : vector<2x256xf32>
    %449 = math.exp %448 : vector<2x256xf32>
    %cst_117 = arith.constant 1.000000e+00 : f32
    %450 = vector.broadcast %cst_117 : f32 to vector<2x256xf32>
    %451 = arith.addf %450, %449 : vector<2x256xf32>
    %452 = arith.divf %450, %451 : vector<2x256xf32>
    %453 = vector.extract_strided_slice %440 {offsets = [0, 512], sizes = [2, 256], strides = [1, 1]} : vector<2x1024xf32> to vector<2x256xf32>
    %454 = math.tanh %453 : vector<2x256xf32>
    %455 = vector.extract_strided_slice %440 {offsets = [0, 768], sizes = [2, 256], strides = [1, 1]} : vector<2x1024xf32> to vector<2x256xf32>
    %456 = arith.negf %455 : vector<2x256xf32>
    %457 = math.exp %456 : vector<2x256xf32>
    %cst_118 = arith.constant 1.000000e+00 : f32
    %458 = vector.broadcast %cst_118 : f32 to vector<2x256xf32>
    %459 = arith.addf %458, %457 : vector<2x256xf32>
    %460 = arith.divf %458, %459 : vector<2x256xf32>
    %461 = arith.mulf %452, %401 : vector<2x256xf32>
    %462 = arith.mulf %446, %454 : vector<2x256xf32>
    %463 = arith.addf %461, %462 : vector<2x256xf32>
    %464 = math.tanh %463 : vector<2x256xf32>
    %465 = arith.mulf %460, %464 : vector<2x256xf32>
    %466 = tpu.concatenate %465, %434 in 1 : vector<2x256xf32>, vector<2x256xf32> -> vector<2x512xf32>
    %c0_119 = arith.constant 0 : index
    %c0_120 = arith.constant 0 : index
    %467 = vector.load %arg2[%c0_119, %c0_120] : memref<512x1024xf32, #tpu.memory_space<vmem>>, vector<512x1024xf32>
    %cst_121 = arith.constant dense<0.000000e+00> : vector<2x1024xf32>
    %468 = tpu.matmul %466, %467, %cst_121 {dimension_numbers = #tpu.dot_dimension_numbers<[1], [0], [0], [1], [0, 0, 1, 1], [], []>} : vector<2x512xf32>, vector<512x1024xf32>, vector<2x1024xf32> -> vector<2x1024xf32>
    %c0_122 = arith.constant 0 : index
    %c0_123 = arith.constant 0 : index
    %469 = vector.load %arg3[%c0_122, %c0_123] : memref<1x1024xf32, #tpu.memory_space<vmem>>, vector<1x1024xf32>
    %470 = vector.broadcast %469 : vector<1x1024xf32> to vector<2x1024xf32>
    %471 = arith.addf %468, %470 : vector<2x1024xf32>
    %472 = vector.extract_strided_slice %471 {offsets = [0, 0], sizes = [2, 256], strides = [1, 1]} : vector<2x1024xf32> to vector<2x256xf32>
    %473 = arith.negf %472 : vector<2x256xf32>
    %474 = math.exp %473 : vector<2x256xf32>
    %cst_124 = arith.constant 1.000000e+00 : f32
    %475 = vector.broadcast %cst_124 : f32 to vector<2x256xf32>
    %476 = arith.addf %475, %474 : vector<2x256xf32>
    %477 = arith.divf %475, %476 : vector<2x256xf32>
    %478 = vector.extract_strided_slice %471 {offsets = [0, 256], sizes = [2, 256], strides = [1, 1]} : vector<2x1024xf32> to vector<2x256xf32>
    %479 = arith.negf %478 : vector<2x256xf32>
    %480 = math.exp %479 : vector<2x256xf32>
    %cst_125 = arith.constant 1.000000e+00 : f32
    %481 = vector.broadcast %cst_125 : f32 to vector<2x256xf32>
    %482 = arith.addf %481, %480 : vector<2x256xf32>
    %483 = arith.divf %481, %482 : vector<2x256xf32>
    %484 = vector.extract_strided_slice %471 {offsets = [0, 512], sizes = [2, 256], strides = [1, 1]} : vector<2x1024xf32> to vector<2x256xf32>
    %485 = math.tanh %484 : vector<2x256xf32>
    %486 = vector.extract_strided_slice %471 {offsets = [0, 768], sizes = [2, 256], strides = [1, 1]} : vector<2x1024xf32> to vector<2x256xf32>
    %487 = arith.negf %486 : vector<2x256xf32>
    %488 = math.exp %487 : vector<2x256xf32>
    %cst_126 = arith.constant 1.000000e+00 : f32
    %489 = vector.broadcast %cst_126 : f32 to vector<2x256xf32>
    %490 = arith.addf %489, %488 : vector<2x256xf32>
    %491 = arith.divf %489, %490 : vector<2x256xf32>
    %492 = arith.mulf %483, %432 : vector<2x256xf32>
    %493 = arith.mulf %477, %485 : vector<2x256xf32>
    %494 = arith.addf %492, %493 : vector<2x256xf32>
    %495 = math.tanh %494 : vector<2x256xf32>
    %496 = arith.mulf %491, %495 : vector<2x256xf32>
    %c8_i32 = arith.constant 8 : i32
    %c0_127 = arith.constant 0 : index
    %c0_128 = arith.constant 0 : index
    %497 = vector.load %arg4[%c0_127, %c0_128] : memref<256x1xf32, #tpu.memory_space<vmem>>, vector<256x1xf32>
    %cst_129 = arith.constant dense<0.000000e+00> : vector<2x1xf32>
    %498 = tpu.matmul %496, %497, %cst_129 {dimension_numbers = #tpu.dot_dimension_numbers<[1], [0], [0], [1], [0, 0, 1, 1], [], []>} : vector<2x256xf32>, vector<256x1xf32>, vector<2x1xf32> -> vector<2x1xf32>
    %c0_130 = arith.constant 0 : index
    %c0_131 = arith.constant 0 : index
    %499 = vector.load %arg5[%c0_130, %c0_131] : memref<1x1xf32, #tpu.memory_space<vmem>>, vector<1x1xf32>
    %500 = vector.broadcast %499 : vector<1x1xf32> to vector<2x1xf32>
    %501 = arith.addf %498, %500 : vector<2x1xf32>
    %c0_132 = arith.constant 0 : index
    %c0_133 = arith.constant 0 : index
    %502 = vector.load %arg6[%c0_132, %c0_133] : memref<2x1xf32, #tpu.memory_space<vmem>>, vector<2x1xf32>
    tpu.vector_store %arg6[%c0_132, %c0_133], %501 {strides = array<i32>} : memref<2x1xf32, #tpu.memory_space<vmem>>, vector<2x1xf32>,
    return
  }
}

</mosaic_0001>

<llo_original>
// kernel: tpu_custom_call.1
$region0: #{tpu_custom_call.1}
  #allocation0 [shape = 'u32[]', space=smem, size = 0x4, offset = 0x4, fixed_abs, tag = 'smem constant byte address 0x4 - core index']
  #allocation1 [shape = 'u32[72,128]{1,0:T(1,128)}', space=vmem, size = 0x9000, scoped, tag = 'internal scratch']
  #allocation2 [shape = 'f32[1,1]{1,0:T(1,128)S(1)}', space=vmem, size = 0x200, scoped, tag = 'scoped memory for tpu_custom_call.1']
  %s0 = inlined_call_operand.hbm [shape: f32[8,2,1024], index: 0, kind: input, shape index: {}]
  %s1 = inlined_call_operand.hbm [shape: f32[256,1024], index: 1, kind: input, shape index: {}]
  %s2 = inlined_call_operand.hbm [shape: f32[512,1024], index: 2, kind: input, shape index: {}]
  %s3 = inlined_call_operand.hbm [shape: f32[1,1024], index: 3, kind: input, shape index: {}]
  %s4 = inlined_call_operand.vmem [shape: f32[256,1], index: 4, kind: input, shape index: {}]
  %s5 = inlined_call_operand.<no memory space> [shape: f32[1,1], index: 5, kind: input, shape index: {}]
  %s6 = inlined_call_operand.vmem [shape: f32[2,1], index: 6, kind: output, shape index: {}]
  %s7 = sld [smem:[#allocation0]]
  $region50: #{tpu_custom_call.1} parent=0
    _
  %s9 = ssub.s32 1, %s7
  %s10 = scalar_select 0, %s9, %s7
  %v11 = vstv %s5
  %12 = vst [vmem:[#allocation2] sm:$0x1] %v11
  $region1: #{tpu_custom_call.1} parent=0
    #allocation3 [shape = 'u8[65536]{0}', space=vmem, size = 0x10000, scoped, tag = 'input window, operand 0, single buffered']
    #allocation4 [shape = 's32[1]{0}', space=sflag, size = 0x4, scoped, tag = 'scoped memory for tpu_custom_call.1']
    #allocation5 [shape = 'u8[1048576]{0}', space=vmem, size = 0x100000, scoped, tag = 'input window, operand 1, single buffered']
    #allocation6 [shape = 's32[1]{0}', space=sflag, size = 0x4, scoped, tag = 'scoped memory for tpu_custom_call.1']
    #allocation7 [shape = 'u8[2097152]{0}', space=vmem, size = 0x200000, scoped, tag = 'input window, operand 2, single buffered']
    #allocation8 [shape = 'u8[4096]{0}', space=vmem, size = 0x1000, scoped, tag = 'input window, operand 3, single buffered']
    #allocation9 [shape = 's32[1]{0}', space=sflag, size = 0x4, scoped, tag = 'scoped memory for tpu_custom_call.1']
    %13 = vsyncpa [#allocation4], 0
    %14 = vsyncpa [#allocation6], 0
    %15 = vsyncpa [#allocation9], 0
    // Predicated region
    $region2: #{tpu_custom_call.1} parent=1 // pred_check
      _
    $region3: #{tpu_custom_call.1} parent=1 // pred_check_branch
      %17 = sbr.rel (0) target = $region5
    $region4: #{tpu_custom_call.1} parent=1 // pred_region
      %19 = vsyncadd [#allocation4], 0
      %s20 = sshll.u32 %s0, 4
      %s21 = int_to_ptr.hbm [resolvable:$true] %s20
      %s22 = sshll.u32 [#allocation3], 4
      %s23 = int_to_ptr.vmem [resolvable:$true] %s22
      %28 = dma.hbm_to_vmem [thread:$0]  %s21, 2048, %s23, [#allocation4], 256, 256, 16
    $region5: #{tpu_custom_call.1} parent=1 // pred_fallthru
      _
    // Predicated region
    $region6: #{tpu_custom_call.1} parent=1 // pred_check
      _
    $region7: #{tpu_custom_call.1} parent=1 // pred_check_branch
      %30 = sbr.rel (0) target = $region9
    $region8: #{tpu_custom_call.1} parent=1 // pred_region
      %32 = vsyncadd [#allocation6], 0
      %s33 = sshll.u32 %s1, 4
      %s34 = int_to_ptr.hbm [resolvable:$true] %s33
      %s35 = sshll.u32 [#allocation5], 4
      %s36 = int_to_ptr.vmem [resolvable:$true] %s35
      %41 = dma.hbm_to_vmem [thread:$0]  %s34, 32768, %s36, [#allocation6], 1024, 1024, 64
    $region9: #{tpu_custom_call.1} parent=1 // pred_fallthru
      _
    // Predicated region
    $region10: #{tpu_custom_call.1} parent=1 // pred_check
      _
    $region11: #{tpu_custom_call.1} parent=1 // pred_check_branch
      %43 = sbr.rel (0) target = $region13
    $region12: #{tpu_custom_call.1} parent=1 // pred_region
      %45 = vsyncadd [#allocation6], 0
      %s46 = sshll.u32 %s2, 4
      %s47 = int_to_ptr.hbm [resolvable:$true] %s46
      %s48 = sshll.u32 [#allocation7], 4
      %s49 = int_to_ptr.vmem [resolvable:$true] %s48
      %54 = dma.hbm_to_vmem [thread:$0]  %s47, 65536, %s49, [#allocation6], 1024, 1024, 64
    $region13: #{tpu_custom_call.1} parent=1 // pred_fallthru
      _
    // Predicated region
    $region14: #{tpu_custom_call.1} parent=1 // pred_check
      _
    $region15: #{tpu_custom_call.1} parent=1 // pred_check_branch
      %56 = sbr.rel (0) target = $region17
    $region16: #{tpu_custom_call.1} parent=1 // pred_region
      %58 = vsyncadd [#allocation9], 0
      %s60 = sshll.u32 %s3, 4
      %s61 = int_to_ptr.hbm [resolvable:$true] %s60
      %s62 = sshll.u32 [#allocation8], 4
      %s63 = int_to_ptr.vmem [resolvable:$true] %s62
      %65 = dma.hbm_to_vmem [thread:$0]  %s61, 128, %s63, [#allocation9]
    $region17: #{tpu_custom_call.1} parent=1 // pred_fallthru
      _
    // Predicated region
    $region18: #{tpu_custom_call.1} parent=1 // pred_check
      _
    $region19: #{tpu_custom_call.1} parent=1 // pred_check_branch
      %67 = sbr.rel (0) target = $region21
    $region20: #{tpu_custom_call.1} parent=1 // pred_region
      _
    $region21: #{tpu_custom_call.1} parent=1 // pred_fallthru
      _
    // Predicated region
    $region22: #{tpu_custom_call.1} parent=1 // pred_check
      _
    $region23: #{tpu_custom_call.1} parent=1 // pred_check_branch
      %69 = sbr.rel (0) target = $region25
    $region24: #{tpu_custom_call.1} parent=1 // pred_region
      _
    $region25: #{tpu_custom_call.1} parent=1 // pred_fallthru
      _
    // Predicated region
    $region26: #{tpu_custom_call.1} parent=1 // pred_check
      _
    $region27: #{tpu_custom_call.1} parent=1 // pred_check_branch
      %71 = sbr.rel (0) target = $region29
    $region28: #{tpu_custom_call.1} parent=1 // pred_region
      %73 = dma.done [#allocation4], 2048
    $region29: #{tpu_custom_call.1} parent=1 // pred_fallthru
      _
    // Predicated region
    $region30: #{tpu_custom_call.1} parent=1 // pred_check
      _
    $region31: #{tpu_custom_call.1} parent=1 // pred_check_branch
      %75 = sbr.rel (0) target = $region33
    $region32: #{tpu_custom_call.1} parent=1 // pred_region
      %77 = dma.done [#allocation6], 32768
    $region33: #{tpu_custom_call.1} parent=1 // pred_fallthru
      _
    // Predicated region
    $region34: #{tpu_custom_call.1} parent=1 // pred_check
      _
    $region35: #{tpu_custom_call.1} parent=1 // pred_check_branch
      %79 = sbr.rel (0) target = $region37
    $region36: #{tpu_custom_call.1} parent=1 // pred_region
      %81 = dma.done [#allocation6], 65536
    $region37: #{tpu_custom_call.1} parent=1 // pred_fallthru
      _
    // Predicated region
    $region38: #{tpu_custom_call.1} parent=1 // pred_check
      _
    $region39: #{tpu_custom_call.1} parent=1 // pred_check_branch
      %83 = sbr.rel (0) target = $region41
    $region40: #{tpu_custom_call.1} parent=1 // pred_region
      %85 = dma.done [#allocation9], 128
    $region41: #{tpu_custom_call.1} parent=1 // pred_fallthru
      _
    %v86 = vld [vmem:[#allocation3] sm:$0xff]
    %v87 = vld [vmem:[#allocation3 + $0x8] sm:$0xff]
    %v88 = vld [vmem:[#allocation5] sm:$0xff]
    %v89 = vld [vmem:[#allocation5 + $0x8] sm:$0xff]
    %v90 = vld [vmem:[#allocation5 + $0x10] sm:$0xff]
    %v91 = vld [vmem:[#allocation5 + $0x18] sm:$0xff]
    %v92 = vld [vmem:[#allocation5 + $0x20] sm:$0xff]
    %v93 = vld [vmem:[#allocation5 + $0x28] sm:$0xff]
    %v94 = vld [vmem:[#allocation5 + $0x30] sm:$0xff]
    %v95 = vld [vmem:[#allocation5 + $0x38] sm:$0xff]
    %v96 = vld [vmem:[#allocation5 + $0x40] sm:$0xff]
    %v97 = vld [vmem:[#allocation5 + $0x48] sm:$0xff]
    %v98 = vld [vmem:[#allocation5 + $0x50] sm:$0xff]
    %v99 = vld [vmem:[#allocation5 + $0x58] sm:$0xff]
    %v100 = vld [vmem:[#allocation5 + $0x60] sm:$0xff]
    %v101 = vld [vmem:[#allocation5 + $0x68] sm:$0xff]
    %v102 = vld [vmem:[#allocation5 + $0x70] sm:$0xff]
    %v103 = vld [vmem:[#allocation5 + $0x78] sm:$0xff]
    %v104 = vld [vmem:[#allocation5 + $0x80] sm:$0xff]
    %v105 = vld [vmem:[#allocation5 + $0x88] sm:$0xff]
    %v106 = vld [vmem:[#allocation5 + $0x90] sm:$0xff]
    %v107 = vld [vmem:[#allocation5 + $0x98] sm:$0xff]
    %v108 = vld [vmem:[#allocation5 + $0xa0] sm:$0xff]
    %v109 = vld [vmem:[#allocation5 + $0xa8] sm:$0xff]
    %v110 = vld [vmem:[#allocation5 + $0xb0] sm:$0xff]
    %v111 = vld [vmem:[#allocation5 + $0xb8] sm:$0xff]
    %v112 = vld [vmem:[#allocation5 + $0xc0] sm:$0xff]
    %v113 = vld [vmem:[#allocation5 + $0xc8] sm:$0xff]
    %v114 = vld [vmem:[#allocation5 + $0xd0] sm:$0xff]
    %v115 = vld [vmem:[#allocation5 + $0xd8] sm:$0xff]
    %v116 = vld [vmem:[#allocation5 + $0xe0] sm:$0xff]
    %v117 = vld [vmem:[#allocation5 + $0xe8] sm:$0xff]
    %v118 = vld [vmem:[#allocation5 + $0xf0] sm:$0xff]
    %v119 = vld [vmem:[#allocation5 + $0xf8] sm:$0xff]
    %v120 = vld [vmem:[#allocation5 + $0x100] sm:$0xff]
    %v121 = vld [vmem:[#allocation5 + $0x108] sm:$0xff]
    %v122 = vld [vmem:[#allocation5 + $0x110] sm:$0xff]
    %v123 = vld [vmem:[#allocation5 + $0x118] sm:$0xff]
    %v124 = vld [vmem:[#allocation5 + $0x120] sm:$0xff]
    %v125 = vld [vmem:[#allocation5 + $0x128] sm:$0xff]
    %v126 = vld [vmem:[#allocation5 + $0x130] sm:$0xff]
    %v127 = vld [vmem:[#allocation5 + $0x138] sm:$0xff]
    %v128 = vld [vmem:[#allocation5 + $0x140] sm:$0xff]
    %v129 = vld [vmem:[#allocation5 + $0x148] sm:$0xff]
    %v130 = vld [vmem:[#allocation5 + $0x150] sm:$0xff]
    %v131 = vld [vmem:[#allocation5 + $0x158] sm:$0xff]
    %v132 = vld [vmem:[#allocation5 + $0x160] sm:$0xff]
    %v133 = vld [vmem:[#allocation5 + $0x168] sm:$0xff]
    %v134 = vld [vmem:[#allocation5 + $0x170] sm:$0xff]
    %v135 = vld [vmem:[#allocation5 + $0x178] sm:$0xff]
    %v136 = vld [vmem:[#allocation5 + $0x180] sm:$0xff]
    %v137 = vld [vmem:[#allocation5 + $0x188] sm:$0xff]
    %v138 = vld [vmem:[#allocation5 + $0x190] sm:$0xff]
    %v139 = vld [vmem:[#allocation5 + $0x198] sm:$0xff]
    %v140 = vld [vmem:[#allocation5 + $0x1a0] sm:$0xff]
    %v141 = vld [vmem:[#allocation5 + $0x1a8] sm:$0xff]
    %v142 = vld [vmem:[#allocation5 + $0x1b0] sm:$0xff]
    %v143 = vld [vmem:[#allocation5 + $0x1b8] sm:$0xff]
    %v144 = vld [vmem:[#allocation5 + $0x1c0] sm:$0xff]
    %v145 = vld [vmem:[#allocation5 + $0x1c8] sm:$0xff]
    %v146 = vld [vmem:[#allocation5 + $0x1d0] sm:$0xff]
    %v147 = vld [vmem:[#allocation5 + $0x1d8] sm:$0xff]
    %v148 = vld [vmem:[#allocation5 + $0x1e0] sm:$0xff]
    %v149 = vld [vmem:[#allocation5 + $0x1e8] sm:$0xff]
    %v150 = vld [vmem:[#allocation5 + $0x1f0] sm:$0xff]
    %v151 = vld [vmem:[#allocation5 + $0x1f8] sm:$0xff]
    %v152 = vld [vmem:[#allocation5 + $0x200] sm:$0xff]
    %v153 = vld [vmem:[#allocation5 + $0x208] sm:$0xff]
    %v154 = vld [vmem:[#allocation5 + $0x210] sm:$0xff]
    %v155 = vld [vmem:[#allocation5 + $0x218] sm:$0xff]
    %v156 = vld [vmem:[#allocation5 + $0x220] sm:$0xff]
    %v157 = vld [vmem:[#allocation5 + $0x228] sm:$0xff]
    %v158 = vld [vmem:[#allocation5 + $0x230] sm:$0xff]
    %v159 = vld [vmem:[#allocation5 + $0x238] sm:$0xff]
    %v160 = vld [vmem:[#allocation5 + $0x240] sm:$0xff]
    %v161 = vld [vmem:[#allocation5 + $0x248] sm:$0xff]
    %v162 = vld [vmem:[#allocation5 + $0x250] sm:$0xff]
    %v163 = vld [vmem:[#allocation5 + $0x258] sm:$0xff]
    %v164 = vld [vmem:[#allocation5 + $0x260] sm:$0xff]
    %v165 = vld [vmem:[#allocation5 + $0x268] sm:$0xff]
    %v166 = vld [vmem:[#allocation5 + $0x270] sm:$0xff]
    %v167 = vld [vmem:[#allocation5 + $0x278] sm:$0xff]
    %v168 = vld [vmem:[#allocation5 + $0x280] sm:$0xff]
    %v169 = vld [vmem:[#allocation5 + $0x288] sm:$0xff]
    %v170 = vld [vmem:[#allocation5 + $0x290] sm:$0xff]
    %v171 = vld [vmem:[#allocation5 + $0x298] sm:$0xff]
    %v172 = vld [vmem:[#allocation5 + $0x2a0] sm:$0xff]
    %v173 = vld [vmem:[#allocation5 + $0x2a8] sm:$0xff]
    %v174 = vld [vmem:[#allocation5 + $0x2b0] sm:$0xff]
    %v175 = vld [vmem:[#allocation5 + $0x2b8] sm:$0xff]
    %v176 = vld [vmem:[#allocation5 + $0x2c0] sm:$0xff]
    %v177 = vld [vmem:[#allocation5 + $0x2c8] sm:$0xff]
    %v178 = vld [vmem:[#allocation5 + $0x2d0] sm:$0xff]
    %v179 = vld [vmem:[#allocation5 + $0x2d8] sm:$0xff]
    %v180 = vld [vmem:[#allocation5 + $0x2e0] sm:$0xff]
    %v181 = vld [vmem:[#allocation5 + $0x2e8] sm:$0xff]
    %v182 = vld [vmem:[#allocation5 + $0x2f0] sm:$0xff]
    %v183 = vld [vmem:[#allocation5 + $0x2f8] sm:$0xff]
    %v184 = vld [vmem:[#allocation5 + $0x300] sm:$0xff]
    %v185 = vld [vmem:[#allocation5 + $0x308] sm:$0xff]
    %v186 = vld [vmem:[#allocation5 + $0x310] sm:$0xff]
    %v187 = vld [vmem:[#allocation5 + $0x318] sm:$0xff]
    %v188 = vld [vmem:[#allocation5 + $0x320] sm:$0xff]
    %v189 = vld [vmem:[#allocation5 + $0x328] sm:$0xff]
    %v190 = vld [vmem:[#allocation5 + $0x330] sm:$0xff]
    %v191 = vld [vmem:[#allocation5 + $0x338] sm:$0xff]
    %v192 = vld [vmem:[#allocation5 + $0x340] sm:$0xff]
    %v193 = vld [vmem:[#allocation5 + $0x348] sm:$0xff]
    %v194 = vld [vmem:[#allocation5 + $0x350] sm:$0xff]
    %v195 = vld [vmem:[#allocation5 + $0x358] sm:$0xff]
    %v196 = vld [vmem:[#allocation5 + $0x360] sm:$0xff]
    %v197 = vld [vmem:[#allocation5 + $0x368] sm:$0xff]
    %v198 = vld [vmem:[#allocation5 + $0x370] sm:$0xff]
    %v199 = vld [vmem:[#allocation5 + $0x378] sm:$0xff]
    %v200 = vld [vmem:[#allocation5 + $0x380] sm:$0xff]
    %v201 = vld [vmem:[#allocation5 + $0x388] sm:$0xff]
    %v202 = vld [vmem:[#allocation5 + $0x390] sm:$0xff]
    %v203 = vld [vmem:[#allocation5 + $0x398] sm:$0xff]
    %v204 = vld [vmem:[#allocation5 + $0x3a0] sm:$0xff]
    %v205 = vld [vmem:[#allocation5 + $0x3a8] sm:$0xff]
    %v206 = vld [vmem:[#allocation5 + $0x3b0] sm:$0xff]
    %v207 = vld [vmem:[#allocation5 + $0x3b8] sm:$0xff]
    %v208 = vld [vmem:[#allocation5 + $0x3c0] sm:$0xff]
    %v209 = vld [vmem:[#allocation5 + $0x3c8] sm:$0xff]
    %v210 = vld [vmem:[#allocation5 + $0x3d0] sm:$0xff]
    %v211 = vld [vmem:[#allocation5 + $0x3d8] sm:$0xff]
    %v212 = vld [vmem:[#allocation5 + $0x3e0] sm:$0xff]
    %v213 = vld [vmem:[#allocation5 + $0x3e8] sm:$0xff]
    %v214 = vld [vmem:[#allocation5 + $0x3f0] sm:$0xff]
    %v215 = vld [vmem:[#allocation5 + $0x3f8] sm:$0xff]
    %v216 = vld [vmem:[#allocation5 + $0x400] sm:$0xff]
    %v217 = vld [vmem:[#allocation5 + $0x408] sm:$0xff]
    %v218 = vld [vmem:[#allocation5 + $0x410] sm:$0xff]
    %v219 = vld [vmem:[#allocation5 + $0x418] sm:$0xff]
    %v220 = vld [vmem:[#allocation5 + $0x420] sm:$0xff]
    %v221 = vld [vmem:[#allocation5 + $0x428] sm:$0xff]
    %v222 = vld [vmem:[#allocation5 + $0x430] sm:$0xff]
    %v223 = vld [vmem:[#allocation5 + $0x438] sm:$0xff]
    %v224 = vld [vmem:[#allocation5 + $0x440] sm:$0xff]
    %v225 = vld [vmem:[#allocation5 + $0x448] sm:$0xff]
    %v226 = vld [vmem:[#allocation5 + $0x450] sm:$0xff]
    %v227 = vld [vmem:[#allocation5 + $0x458] sm:$0xff]
    %v228 = vld [vmem:[#allocation5 + $0x460] sm:$0xff]
    %v229 = vld [vmem:[#allocation5 + $0x468] sm:$0xff]
    %v230 = vld [vmem:[#allocation5 + $0x470] sm:$0xff]
    %v231 = vld [vmem:[#allocation5 + $0x478] sm:$0xff]
    %v232 = vld [vmem:[#allocation5 + $0x480] sm:$0xff]
    %v233 = vld [vmem:[#allocation5 + $0x488] sm:$0xff]
    %v234 = vld [vmem:[#allocation5 + $0x490] sm:$0xff]
    %v235 = vld [vmem:[#allocation5 + $0x498] sm:$0xff]
    %v236 = vld [vmem:[#allocation5 + $0x4a0] sm:$0xff]
    %v237 = vld [vmem:[#allocation5 + $0x4a8] sm:$0xff]
    %v238 = vld [vmem:[#allocation5 + $0x4b0] sm:$0xff]
    %v239 = vld [vmem:[#allocation5 + $0x4b8] sm:$0xff]
    %v240 = vld [vmem:[#allocation5 + $0x4c0] sm:$0xff]
    %v241 = vld [vmem:[#allocation5 + $0x4c8] sm:$0xff]
    %v242 = vld [vmem:[#allocation5 + $0x4d0] sm:$0xff]
    %v243 = vld [vmem:[#allocation5 + $0x4d8] sm:$0xff]
    %v244 = vld [vmem:[#allocation5 + $0x4e0] sm:$0xff]
    %v245 = vld [vmem:[#allocation5 + $0x4e8] sm:$0xff]
    %v246 = vld [vmem:[#allocation5 + $0x4f0] sm:$0xff]
    %v247 = vld [vmem:[#allocation5 + $0x4f8] sm:$0xff]
    %v248 = vld [vmem:[#allocation5 + $0x500] sm:$0xff]
    %v249 = vld [vmem:[#allocation5 + $0x508] sm:$0xff]
    %v250 = vld [vmem:[#allocation5 + $0x510] sm:$0xff]
    %v251 = vld [vmem:[#allocation5 + $0x518] sm:$0xff]
    %v252 = vld [vmem:[#allocation5 + $0x520] sm:$0xff]
    %v253 = vld [vmem:[#allocation5 + $0x528] sm:$0xff]
    %v254 = vld [vmem:[#allocation5 + $0x530] sm:$0xff]
    %v255 = vld [vmem:[#allocation5 + $0x538] sm:$0xff]
    %v256 = vld [vmem:[#allocation5 + $0x540] sm:$0xff]
    %v257 = vld [vmem:[#allocation5 + $0x548] sm:$0xff]
    %v258 = vld [vmem:[#allocation5 + $0x550] sm:$0xff]
    %v259 = vld [vmem:[#allocation5 + $0x558] sm:$0xff]
    %v260 = vld [vmem:[#allocation5 + $0x560] sm:$0xff]
    %v261 = vld [vmem:[#allocation5 + $0x568] sm:$0xff]
    %v262 = vld [vmem:[#allocation5 + $0x570] sm:$0xff]
    %v263 = vld [vmem:[#allocation5 + $0x578] sm:$0xff]
    %v264 = vld [vmem:[#allocation5 + $0x580] sm:$0xff]
    %v265 = vld [vmem:[#allocation5 + $0x588] sm:$0xff]
    %v266 = vld [vmem:[#allocation5 + $0x590] sm:$0xff]
    %v267 = vld [vmem:[#allocation5 + $0x598] sm:$0xff]
    %v268 = vld [vmem:[#allocation5 + $0x5a0] sm:$0xff]
    %v269 = vld [vmem:[#allocation5 + $0x5a8] sm:$0xff]
    %v270 = vld [vmem:[#allocation5 + $0x5b0] sm:$0xff]
    %v271 = vld [vmem:[#allocation5 + $0x5b8] sm:$0xff]
    %v272 = vld [vmem:[#allocation5 + $0x5c0] sm:$0xff]
    %v273 = vld [vmem:[#allocation5 + $0x5c8] sm:$0xff]
    %v274 = vld [vmem:[#allocation5 + $0x5d0] sm:$0xff]
    %v275 = vld [vmem:[#allocation5 + $0x5d8] sm:$0xff]
    %v276 = vld [vmem:[#allocation5 + $0x5e0] sm:$0xff]
    %v277 = vld [vmem:[#allocation5 + $0x5e8] sm:$0xff]
    %v278 = vld [vmem:[#allocation5 + $0x5f0] sm:$0xff]
    %v279 = vld [vmem:[#allocation5 + $0x5f8] sm:$0xff]
    %v280 = vld [vmem:[#allocation5 + $0x600] sm:$0xff]
    %v281 = vld [vmem:[#allocation5 + $0x608] sm:$0xff]
    %v282 = vld [vmem:[#allocation5 + $0x610] sm:$0xff]
    %v283 = vld [vmem:[#allocation5 + $0x618] sm:$0xff]
    %v284 = vld [vmem:[#allocation5 + $0x620] sm:$0xff]
    %v285 = vld [vmem:[#allocation5 + $0x628] sm:$0xff]
    %v286 = vld [vmem:[#allocation5 + $0x630] sm:$0xff]
    %v287 = vld [vmem:[#allocation5 + $0x638] sm:$0xff]
    %v288 = vld [vmem:[#allocation5 + $0x640] sm:$0xff]
    %v289 = vld [vmem:[#allocation5 + $0x648] sm:$0xff]
    %v290 = vld [vmem:[#allocation5 + $0x650] sm:$0xff]
    %v291 = vld [vmem:[#allocation5 + $0x658] sm:$0xff]
    %v292 = vld [vmem:[#allocation5 + $0x660] sm:$0xff]
    %v293 = vld [vmem:[#allocation5 + $0x668] sm:$0xff]
    %v294 = vld [vmem:[#allocation5 + $0x670] sm:$0xff]
    %v295 = vld [vmem:[#allocation5 + $0x678] sm:$0xff]
    %v296 = vld [vmem:[#allocation5 + $0x680] sm:$0xff]
    %v297 = vld [vmem:[#allocation5 + $0x688] sm:$0xff]
    %v298 = vld [vmem:[#allocation5 + $0x690] sm:$0xff]
    %v299 = vld [vmem:[#allocation5 + $0x698] sm:$0xff]
    %v300 = vld [vmem:[#allocation5 + $0x6a0] sm:$0xff]
    %v301 = vld [vmem:[#allocation5 + $0x6a8] sm:$0xff]
    %v302 = vld [vmem:[#allocation5 + $0x6b0] sm:$0xff]
    %v303 = vld [vmem:[#allocation5 + $0x6b8] sm:$0xff]
    %v304 = vld [vmem:[#allocation5 + $0x6c0] sm:$0xff]
    %v305 = vld [vmem:[#allocation5 + $0x6c8] sm:$0xff]
    %v306 = vld [vmem:[#allocation5 + $0x6d0] sm:$0xff]
    %v307 = vld [vmem:[#allocation5 + $0x6d8] sm:$0xff]
    %v308 = vld [vmem:[#allocation5 + $0x6e0] sm:$0xff]
    %v309 = vld [vmem:[#allocation5 + $0x6e8] sm:$0xff]
    %v310 = vld [vmem:[#allocation5 + $0x6f0] sm:$0xff]
    %v311 = vld [vmem:[#allocation5 + $0x6f8] sm:$0xff]
    %v312 = vld [vmem:[#allocation5 + $0x700] sm:$0xff]
    %v313 = vld [vmem:[#allocation5 + $0x708] sm:$0xff]
    %v314 = vld [vmem:[#allocation5 + $0x710] sm:$0xff]
    %v315 = vld [vmem:[#allocation5 + $0x718] sm:$0xff]
    %v316 = vld [vmem:[#allocation5 + $0x720] sm:$0xff]
    %v317 = vld [vmem:[#allocation5 + $0x728] sm:$0xff]
    %v318 = vld [vmem:[#allocation5 + $0x730] sm:$0xff]
    %v319 = vld [vmem:[#allocation5 + $0x738] sm:$0xff]
    %v320 = vld [vmem:[#allocation5 + $0x740] sm:$0xff]
    %v321 = vld [vmem:[#allocation5 + $0x748] sm:$0xff]
    %v322 = vld [vmem:[#allocation5 + $0x750] sm:$0xff]
    %v323 = vld [vmem:[#allocation5 + $0x758] sm:$0xff]
    %v324 = vld [vmem:[#allocation5 + $0x760] sm:$0xff]
    %v325 = vld [vmem:[#allocation5 + $0x768] sm:$0xff]
    %v326 = vld [vmem:[#allocation5 + $0x770] sm:$0xff]
    %v327 = vld [vmem:[#allocation5 + $0x778] sm:$0xff]
    %v328 = vld [vmem:[#allocation5 + $0x780] sm:$0xff]
    %v329 = vld [vmem:[#allocation5 + $0x788] sm:$0xff]
    %v330 = vld [vmem:[#allocation5 + $0x790] sm:$0xff]
    %v331 = vld [vmem:[#allocation5 + $0x798] sm:$0xff]
    %v332 = vld [vmem:[#allocation5 + $0x7a0] sm:$0xff]
    %v333 = vld [vmem:[#allocation5 + $0x7a8] sm:$0xff]
    %v334 = vld [vmem:[#allocation5 + $0x7b0] sm:$0xff]
    %v335 = vld [vmem:[#allocation5 + $0x7b8] sm:$0xff]
    %v336 = vld [vmem:[#allocation5 + $0x7c0] sm:$0xff]
    %v337 = vld [vmem:[#allocation5 + $0x7c8] sm:$0xff]
    %v338 = vld [vmem:[#allocation5 + $0x7d0] sm:$0xff]
    %v339 = vld [vmem:[#allocation5 + $0x7d8] sm:$0xff]
    %v340 = vld [vmem:[#allocation5 + $0x7e0] sm:$0xff]
    %v341 = vld [vmem:[#allocation5 + $0x7e8] sm:$0xff]
    %v342 = vld [vmem:[#allocation5 + $0x7f0] sm:$0xff]
    %v343 = vld [vmem:[#allocation5 + $0x7f8] sm:$0xff]
    %344 = vmatpush.msra.mxu0 %v208
    %345 = vmatpush.msra.mxu0 %v200
    %346 = vmatpush.msra.mxu0 %v192
    %347 = vmatpush.msra.mxu0 %v184
    %348 = vmatpush.msra.mxu0 %v176
    %349 = vmatpush.msra.mxu0 %v168
    %350 = vmatpush.msra.mxu0 %v160
    %351 = vmatpush.msra.mxu0 %v152
    %352 = vmatpush.msra.mxu0 %v144
    %353 = vmatpush.msra.mxu0 %v136
    %354 = vmatpush.msra.mxu0 %v128
    %355 = vmatpush.msra.mxu0 %v120
    %356 = vmatpush.msra.mxu0 %v112
    %357 = vmatpush.msra.mxu0 %v104
    %358 = vmatpush.msra.mxu0 %v96
    %359 = vmatpush.msra.mxu0 %v88
    %360 = vmatmul.f32.gmra.mxu0 0.0
    %v361 = vpop.f32.mrf.mxu0
    %v362 = vadd.f32 0.0, %v361
    %363 = vdwg.mxu0
    %364 = vmatpush.msra.mxu0 %v336
    %365 = vmatpush.msra.mxu0 %v328
    %366 = vmatpush.msra.mxu0 %v320
    %367 = vmatpush.msra.mxu0 %v312
    %368 = vmatpush.msra.mxu0 %v304
    %369 = vmatpush.msra.mxu0 %v296
    %370 = vmatpush.msra.mxu0 %v288
    %371 = vmatpush.msra.mxu0 %v280
    %372 = vmatpush.msra.mxu0 %v272
    %373 = vmatpush.msra.mxu0 %v264
    %374 = vmatpush.msra.mxu0 %v256
    %375 = vmatpush.msra.mxu0 %v248
    %376 = vmatpush.msra.mxu0 %v240
    %377 = vmatpush.msra.mxu0 %v232
    %378 = vmatpush.msra.mxu0 %v224
    %379 = vmatpush.msra.mxu0 %v216
    %380 = vmatmul.f32.gmra.mxu0 0.0
    %v381 = vpop.f32.mrf.mxu0
    %v382 = vadd.f32 %v362, %v381
    %383 = vdwg.mxu0
    %384 = vmatpush.msra.mxu0 %v209
    %385 = vmatpush.msra.mxu0 %v201
    %386 = vmatpush.msra.mxu0 %v193
    %387 = vmatpush.msra.mxu0 %v185
    %388 = vmatpush.msra.mxu0 %v177
    %389 = vmatpush.msra.mxu0 %v169
    %390 = vmatpush.msra.mxu0 %v161
    %391 = vmatpush.msra.mxu0 %v153
    %392 = vmatpush.msra.mxu0 %v145
    %393 = vmatpush.msra.mxu0 %v137
    %394 = vmatpush.msra.mxu0 %v129
    %395 = vmatpush.msra.mxu0 %v121
    %396 = vmatpush.msra.mxu0 %v113
    %397 = vmatpush.msra.mxu0 %v105
    %398 = vmatpush.msra.mxu0 %v97
    %399 = vmatpush.msra.mxu0 %v89
    %400 = vmatmul.f32.gmra.mxu0 0.0
    %v401 = vpop.f32.mrf.mxu0
    %v402 = vadd.f32 0.0, %v401
    %403 = vdwg.mxu0
    %404 = vmatpush.msra.mxu0 %v337
    %405 = vmatpush.msra.mxu0 %v329
    %406 = vmatpush.msra.mxu0 %v321
    %407 = vmatpush.msra.mxu0 %v313
    %408 = vmatpush.msra.mxu0 %v305
    %409 = vmatpush.msra.mxu0 %v297
    %410 = vmatpush.msra.mxu0 %v289
    %411 = vmatpush.msra.mxu0 %v281
    %412 = vmatpush.msra.mxu0 %v273
    %413 = vmatpush.msra.mxu0 %v265
    %414 = vmatpush.msra.mxu0 %v257
    %415 = vmatpush.msra.mxu0 %v249
    %416 = vmatpush.msra.mxu0 %v241
    %417 = vmatpush.msra.mxu0 %v233
    %418 = vmatpush.msra.mxu0 %v225
    %419 = vmatpush.msra.mxu0 %v217
    %420 = vmatmul.f32.gmra.mxu0 0.0
    %v421 = vpop.f32.mrf.mxu0
    %v422 = vadd.f32 %v402, %v421
    %423 = vdwg.mxu0
    %424 = vmatpush.msra.mxu0 %v210
    %425 = vmatpush.msra.mxu0 %v202
    %426 = vmatpush.msra.mxu0 %v194
    %427 = vmatpush.msra.mxu0 %v186
    %428 = vmatpush.msra.mxu0 %v178
    %429 = vmatpush.msra.mxu0 %v170
    %430 = vmatpush.msra.mxu0 %v162
    %431 = vmatpush.msra.mxu0 %v154
    %432 = vmatpush.msra.mxu0 %v146
    %433 = vmatpush.msra.mxu0 %v138
    %434 = vmatpush.msra.mxu0 %v130
    %435 = vmatpush.msra.mxu0 %v122
    %436 = vmatpush.msra.mxu0 %v114
    %437 = vmatpush.msra.mxu0 %v106
    %438 = vmatpush.msra.mxu0 %v98
    %439 = vmatpush.msra.mxu0 %v90
    %440 = vmatmul.f32.gmra.mxu0 0.0
    %v441 = vpop.f32.mrf.mxu0
    %v442 = vadd.f32 0.0, %v441
    %443 = vdwg.mxu0
    %444 = vmatpush.msra.mxu0 %v338
    %445 = vmatpush.msra.mxu0 %v330
    %446 = vmatpush.msra.mxu0 %v322
    %447 = vmatpush.msra.mxu0 %v314
    %448 = vmatpush.msra.mxu0 %v306
    %449 = vmatpush.msra.mxu0 %v298
    %450 = vmatpush.msra.mxu0 %v290
    %451 = vmatpush.msra.mxu0 %v282
    %452 = vmatpush.msra.mxu0 %v274
    %453 = vmatpush.msra.mxu0 %v266
    %454 = vmatpush.msra.mxu0 %v258
    %455 = vmatpush.msra.mxu0 %v250
    %456 = vmatpush.msra.mxu0 %v242
    %457 = vmatpush.msra.mxu0 %v234
    %458 = vmatpush.msra.mxu0 %v226
    %459 = vmatpush.msra.mxu0 %v218
    %460 = vmatmul.f32.gmra.mxu0 0.0
    %v461 = vpop.f32.mrf.mxu0
    %v462 = vadd.f32 %v442, %v461
    %463 = vdwg.mxu0
    %464 = vmatpush.msra.mxu0 %v211
    %465 = vmatpush.msra.mxu0 %v203
    %466 = vmatpush.msra.mxu0 %v195
    %467 = vmatpush.msra.mxu0 %v187
    %468 = vmatpush.msra.mxu0 %v179
    %469 = vmatpush.msra.mxu0 %v171
    %470 = vmatpush.msra.mxu0 %v163
    %471 = vmatpush.msra.mxu0 %v155
    %472 = vmatpush.msra.mxu0 %v147
    %473 = vmatpush.msra.mxu0 %v139
    %474 = vmatpush.msra.mxu0 %v131
    %475 = vmatpush.msra.mxu0 %v123
    %476 = vmatpush.msra.mxu0 %v115
    %477 = vmatpush.msra.mxu0 %v107
    %478 = vmatpush.msra.mxu0 %v99
    %479 = vmatpush.msra.mxu0 %v91
    %480 = vmatmul.f32.gmra.mxu0 0.0
    %v481 = vpop.f32.mrf.mxu0
    %v482 = vadd.f32 0.0, %v481
    %483 = vdwg.mxu0
    %484 = vmatpush.msra.mxu0 %v339
    %485 = vmatpush.msra.mxu0 %v331
    %486 = vmatpush.msra.mxu0 %v323
    %487 = vmatpush.msra.mxu0 %v315
    %488 = vmatpush.msra.mxu0 %v307
    %489 = vmatpush.msra.mxu0 %v299
    %490 = vmatpush.msra.mxu0 %v291
    %491 = vmatpush.msra.mxu0 %v283
    %492 = vmatpush.msra.mxu0 %v275
    %493 = vmatpush.msra.mxu0 %v267
    %494 = vmatpush.msra.mxu0 %v259
    %495 = vmatpush.msra.mxu0 %v251
    %496 = vmatpush.msra.mxu0 %v243
    %497 = vmatpush.msra.mxu0 %v235
    %498 = vmatpush.msra.mxu0 %v227
    %499 = vmatpush.msra.mxu0 %v219
    %500 = vmatmul.f32.gmra.mxu0 0.0
    %v501 = vpop.f32.mrf.mxu0
    %v502 = vadd.f32 %v482, %v501
    %503 = vdwg.mxu0
    %504 = vmatpush.msra.mxu0 %v212
    %505 = vmatpush.msra.mxu0 %v204
    %506 = vmatpush.msra.mxu0 %v196
    %507 = vmatpush.msra.mxu0 %v188
    %508 = vmatpush.msra.mxu0 %v180
    %509 = vmatpush.msra.mxu0 %v172
    %510 = vmatpush.msra.mxu0 %v164
    %511 = vmatpush.msra.mxu0 %v156
    %512 = vmatpush.msra.mxu0 %v148
    %513 = vmatpush.msra.mxu0 %v140
    %514 = vmatpush.msra.mxu0 %v132
    %515 = vmatpush.msra.mxu0 %v124
    %516 = vmatpush.msra.mxu0 %v116
    %517 = vmatpush.msra.mxu0 %v108
    %518 = vmatpush.msra.mxu0 %v100
    %519 = vmatpush.msra.mxu0 %v92
    %520 = vmatmul.f32.gmra.mxu0 0.0
    %v521 = vpop.f32.mrf.mxu0
    %v522 = vadd.f32 0.0, %v521
    %523 = vdwg.mxu0
    %524 = vmatpush.msra.mxu0 %v340
    %525 = vmatpush.msra.mxu0 %v332
    %526 = vmatpush.msra.mxu0 %v324
    %527 = vmatpush.msra.mxu0 %v316
    %528 = vmatpush.msra.mxu0 %v308
    %529 = vmatpush.msra.mxu0 %v300
    %530 = vmatpush.msra.mxu0 %v292
    %531 = vmatpush.msra.mxu0 %v284
    %532 = vmatpush.msra.mxu0 %v276
    %533 = vmatpush.msra.mxu0 %v268
    %534 = vmatpush.msra.mxu0 %v260
    %535 = vmatpush.msra.mxu0 %v252
    %536 = vmatpush.msra.mxu0 %v244
    %537 = vmatpush.msra.mxu0 %v236
    %538 = vmatpush.msra.mxu0 %v228
    %539 = vmatpush.msra.mxu0 %v220
    %540 = vmatmul.f32.gmra.mxu0 0.0
    %v541 = vpop.f32.mrf.mxu0
    %v542 = vadd.f32 %v522, %v541
    %543 = vdwg.mxu0
    %544 = vmatpush.msra.mxu0 %v213
    %545 = vmatpush.msra.mxu0 %v205
    %546 = vmatpush.msra.mxu0 %v197
    %547 = vmatpush.msra.mxu0 %v189
    %548 = vmatpush.msra.mxu0 %v181
    %549 = vmatpush.msra.mxu0 %v173
    %550 = vmatpush.msra.mxu0 %v165
    %551 = vmatpush.msra.mxu0 %v157
    %552 = vmatpush.msra.mxu0 %v149
    %553 = vmatpush.msra.mxu0 %v141
    %554 = vmatpush.msra.mxu0 %v133
    %555 = vmatpush.msra.mxu0 %v125
    %556 = vmatpush.msra.mxu0 %v117
    %557 = vmatpush.msra.mxu0 %v109
    %558 = vmatpush.msra.mxu0 %v101
    %559 = vmatpush.msra.mxu0 %v93
    %560 = vmatmul.f32.gmra.mxu0 0.0
    %v561 = vpop.f32.mrf.mxu0
    %v562 = vadd.f32 0.0, %v561
    %563 = vdwg.mxu0
    %564 = vmatpush.msra.mxu0 %v341
    %565 = vmatpush.msra.mxu0 %v333
    %566 = vmatpush.msra.mxu0 %v325
    %567 = vmatpush.msra.mxu0 %v317
    %568 = vmatpush.msra.mxu0 %v309
    %569 = vmatpush.msra.mxu0 %v301
    %570 = vmatpush.msra.mxu0 %v293
    %571 = vmatpush.msra.mxu0 %v285
    %572 = vmatpush.msra.mxu0 %v277
    %573 = vmatpush.msra.mxu0 %v269
    %574 = vmatpush.msra.mxu0 %v261
    %575 = vmatpush.msra.mxu0 %v253
    %576 = vmatpush.msra.mxu0 %v245
    %577 = vmatpush.msra.mxu0 %v237
    %578 = vmatpush.msra.mxu0 %v229
    %579 = vmatpush.msra.mxu0 %v221
    %580 = vmatmul.f32.gmra.mxu0 0.0
    %v581 = vpop.f32.mrf.mxu0
    %v582 = vadd.f32 %v562, %v581
    %583 = vdwg.mxu0
    %584 = vmatpush.msra.mxu0 %v214
    %585 = vmatpush.msra.mxu0 %v206
    %586 = vmatpush.msra.mxu0 %v198
    %587 = vmatpush.msra.mxu0 %v190
    %588 = vmatpush.msra.mxu0 %v182
    %589 = vmatpush.msra.mxu0 %v174
    %590 = vmatpush.msra.mxu0 %v166
    %591 = vmatpush.msra.mxu0 %v158
    %592 = vmatpush.msra.mxu0 %v150
    %593 = vmatpush.msra.mxu0 %v142
    %594 = vmatpush.msra.mxu0 %v134
    %595 = vmatpush.msra.mxu0 %v126
    %596 = vmatpush.msra.mxu0 %v118
    %597 = vmatpush.msra.mxu0 %v110
    %598 = vmatpush.msra.mxu0 %v102
    %599 = vmatpush.msra.mxu0 %v94
    %600 = vmatmul.f32.gmra.mxu0 0.0
    %v601 = vpop.f32.mrf.mxu0
    %v602 = vadd.f32 0.0, %v601
    %603 = vdwg.mxu0
    %604 = vmatpush.msra.mxu0 %v342
    %605 = vmatpush.msra.mxu0 %v334
    %606 = vmatpush.msra.mxu0 %v326
    %607 = vmatpush.msra.mxu0 %v318
    %608 = vmatpush.msra.mxu0 %v310
    %609 = vmatpush.msra.mxu0 %v302
    %610 = vmatpush.msra.mxu0 %v294
    %611 = vmatpush.msra.mxu0 %v286
    %612 = vmatpush.msra.mxu0 %v278
    %613 = vmatpush.msra.mxu0 %v270
    %614 = vmatpush.msra.mxu0 %v262
    %615 = vmatpush.msra.mxu0 %v254
    %616 = vmatpush.msra.mxu0 %v246
    %617 = vmatpush.msra.mxu0 %v238
    %618 = vmatpush.msra.mxu0 %v230
    %619 = vmatpush.msra.mxu0 %v222
    %620 = vmatmul.f32.gmra.mxu0 0.0
    %v621 = vpop.f32.mrf.mxu0
    %v622 = vadd.f32 %v602, %v621
    %623 = vdwg.mxu0
    %624 = vmatpush.msra.mxu0 %v215
    %625 = vmatpush.msra.mxu0 %v207
    %626 = vmatpush.msra.mxu0 %v199
    %627 = vmatpush.msra.mxu0 %v191
    %628 = vmatpush.msra.mxu0 %v183
    %629 = vmatpush.msra.mxu0 %v175
    %630 = vmatpush.msra.mxu0 %v167
    %631 = vmatpush.msra.mxu0 %v159
    %632 = vmatpush.msra.mxu0 %v151
    %633 = vmatpush.msra.mxu0 %v143
    %634 = vmatpush.msra.mxu0 %v135
    %635 = vmatpush.msra.mxu0 %v127
    %636 = vmatpush.msra.mxu0 %v119
    %637 = vmatpush.msra.mxu0 %v111
    %638 = vmatpush.msra.mxu0 %v103
    %639 = vmatpush.msra.mxu0 %v95
    %640 = vmatmul.f32.gmra.mxu0 0.0
    %v641 = vpop.f32.mrf.mxu0
    %v642 = vadd.f32 0.0, %v641
    %643 = vdwg.mxu0
    %644 = vmatpush.msra.mxu0 %v343
    %645 = vmatpush.msra.mxu0 %v335
    %646 = vmatpush.msra.mxu0 %v327
    %647 = vmatpush.msra.mxu0 %v319
    %648 = vmatpush.msra.mxu0 %v311
    %649 = vmatpush.msra.mxu0 %v303
    %650 = vmatpush.msra.mxu0 %v295
    %651 = vmatpush.msra.mxu0 %v287
    %652 = vmatpush.msra.mxu0 %v279
    %653 = vmatpush.msra.mxu0 %v271
    %654 = vmatpush.msra.mxu0 %v263
    %655 = vmatpush.msra.mxu0 %v255
    %656 = vmatpush.msra.mxu0 %v247
    %657 = vmatpush.msra.mxu0 %v239
    %658 = vmatpush.msra.mxu0 %v231
    %659 = vmatpush.msra.mxu0 %v223
    %660 = vmatmul.f32.gmra.mxu0 0.0
    %v661 = vpop.f32.mrf.mxu0
    %v662 = vadd.f32 %v642, %v661
    %663 = vdwg.mxu0
    %v672 = vrot.slane %v422, 6
    %v673 = vrot.slane %v462, 4
    %v674 = vrot.slane %v502, 2
    %v675 = vrot.slane %v582, 6
    %v676 = vrot.slane %v622, 4
    %v677 = vrot.slane %v662, 2
    %vm678 = vcmask 1041408
    %v679 = vsel %vm678, %v382, %v672
    %vm680 = vcmask 1045508
    %v681 = vsel %vm680, %v673, %v674
    %vm682 = vcmask 1043456
    %v683 = vsel %vm682, %v679, %v681
    %v684 = vsel %vm678, %v542, %v675
    %v685 = vsel %vm680, %v676, %v677
    %v686 = vsel %vm682, %v684, %v685
    %v689 = vadd.f32 %v86, %v683
    %v690 = vadd.f32 %v87, %v686
    %v691 = vxor.u32 %v689, 2147483648
    %v692 = vmul.f32 %v691, 1.442695
    %v693 = vpow.pop %v692
    %v694 = vadd.f32 %v693, 1.0
    %v695 = vrcp.pop %v694
    %v696 = vmul.f32 %v694, %v695
    %v697 = vsub.f32 1.0, %v696
    %v698 = vmul.f32 %v695, %v697
    %v699 = vadd.f32 %v695, %v698
    %vm700 = vweird.f32 %v694
    %vm701 = vweird.f32 %v695
    %vm702 = vmor %vm700, %vm701
    %v703 = vsel %vm702, %v695, %v699
    %v704 = vand.u32 2147483647, %v694
    %vm705 = vcmp.eq.f32.partialorder %v704, 8.507059e+37
    %v706 = vand.u32 %v694, 2147483648
    %v707 = vor.u32 1.1754944e-38, %v706
    %v708 = vsel %vm705, %v707, %v703
    %v709 = vmul.f32 1.0, %v708
    %v711 = vrot.slane %v689, 4
    %v713 = vxor.u32 %v711, 2147483648
    %v714 = vmul.f32 %v713, 1.442695
    %v715 = vpow.pop %v714
    %v716 = vadd.f32 %v715, 1.0
    %v717 = vrcp.pop %v716
    %v718 = vmul.f32 %v716, %v717
    %v719 = vsub.f32 1.0, %v718
    %v720 = vmul.f32 %v717, %v719
    %v721 = vadd.f32 %v717, %v720
    %vm722 = vweird.f32 %v716
    %vm723 = vweird.f32 %v717
    %vm724 = vmor %vm722, %vm723
    %v725 = vsel %vm724, %v717, %v721
    %v726 = vand.u32 2147483647, %v716
    %vm727 = vcmp.eq.f32.partialorder %v726, 8.507059e+37
    %v728 = vand.u32 %v716, 2147483648
    %v729 = vor.u32 1.1754944e-38, %v728
    %v730 = vsel %vm727, %v729, %v725
    %v731 = vmul.f32 1.0, %v730
    %v732 = vtanh.pop %v690
    %v734 = vrot.slane %v690, 4
    %v736 = vxor.u32 %v734, 2147483648
    %v737 = vmul.f32 %v736, 1.442695
    %v738 = vpow.pop %v737
    %v739 = vadd.f32 %v738, 1.0
    %v740 = vrcp.pop %v739
    %v741 = vmul.f32 %v739, %v740
    %v742 = vsub.f32 1.0, %v741
    %v743 = vmul.f32 %v740, %v742
    %v744 = vadd.f32 %v740, %v743
    %vm745 = vweird.f32 %v739
    %vm746 = vweird.f32 %v740
    %vm747 = vmor %vm745, %vm746
    %v748 = vsel %vm747, %v740, %v744
    %v749 = vand.u32 2147483647, %v739
    %vm750 = vcmp.eq.f32.partialorder %v749, 8.507059e+37
    %v751 = vand.u32 %v739, 2147483648
    %v752 = vor.u32 1.1754944e-38, %v751
    %v753 = vsel %vm750, %v752, %v748
    %v754 = vmul.f32 1.0, %v753
    %v755 = vmul.f32 %v731, 0.0
    %v756 = vmul.f32 %v709, %v732
    %v757 = vadd.f32 %v755, %v756
    %v758 = vtanh.pop %v757
    %v759 = vmul.f32 %v754, %v758
    %761 = vst [vmem:[#allocation1] ss:$4 sm:$0xff] %v759
    %v762 = vld.sshfl [vmem:[#allocation1] sm:$0xff pattern:$0x73625140]
    %v763 = vld.sshfl [vmem:[#allocation1 + $0x8] sm:$0xff pattern:$0x73625140]
    %v766 = vld [vmem:[#allocation7] sm:$0xff]
    %v767 = vld [vmem:[#allocation7 + $0x8] sm:$0xff]
    %v768 = vld [vmem:[#allocation7 + $0x10] sm:$0xff]
    %v769 = vld [vmem:[#allocation7 + $0x18] sm:$0xff]
    %v770 = vld [vmem:[#allocation7 + $0x20] sm:$0xff]
    %v771 = vld [vmem:[#allocation7 + $0x28] sm:$0xff]
    %v772 = vld [vmem:[#allocation7 + $0x30] sm:$0xff]
    %v773 = vld [vmem:[#allocation7 + $0x38] sm:$0xff]
    %v774 = vld [vmem:[#allocation7 + $0x40] sm:$0xff]
    %v775 = vld [vmem:[#allocation7 + $0x48] sm:$0xff]
    %v776 = vld [vmem:[#allocation7 + $0x50] sm:$0xff]
    %v777 = vld [vmem:[#allocation7 + $0x58] sm:$0xff]
    %v778 = vld [vmem:[#allocation7 + $0x60] sm:$0xff]
    %v779 = vld [vmem:[#allocation7 + $0x68] sm:$0xff]
    %v780 = vld [vmem:[#allocation7 + $0x70] sm:$0xff]
    %v781 = vld [vmem:[#allocation7 + $0x78] sm:$0xff]
    %v782 = vld [vmem:[#allocation7 + $0x80] sm:$0xff]
    %v783 = vld [vmem:[#allocation7 + $0x88] sm:$0xff]
    %v784 = vld [vmem:[#allocation7 + $0x90] sm:$0xff]
    %v785 = vld [vmem:[#allocation7 + $0x98] sm:$0xff]
    %v786 = vld [vmem:[#allocation7 + $0xa0] sm:$0xff]
    %v787 = vld [vmem:[#allocation7 + $0xa8] sm:$0xff]
    %v788 = vld [vmem:[#allocation7 + $0xb0] sm:$0xff]
    %v789 = vld [vmem:[#allocation7 + $0xb8] sm:$0xff]
    %v790 = vld [vmem:[#allocation7 + $0xc0] sm:$0xff]
    %v791 = vld [vmem:[#allocation7 + $0xc8] sm:$0xff]
    %v792 = vld [vmem:[#allocation7 + $0xd0] sm:$0xff]
    %v793 = vld [vmem:[#allocation7 + $0xd8] sm:$0xff]
    %v794 = vld [vmem:[#allocation7 + $0xe0] sm:$0xff]
    %v795 = vld [vmem:[#allocation7 + $0xe8] sm:$0xff]
    %v796 = vld [vmem:[#allocation7 + $0xf0] sm:$0xff]
    %v797 = vld [vmem:[#allocation7 + $0xf8] sm:$0xff]
    %v798 = vld [vmem:[#allocation7 + $0x100] sm:$0xff]
    %v799 = vld [vmem:[#allocation7 + $0x108] sm:$0xff]
    %v800 = vld [vmem:[#allocation7 + $0x110] sm:$0xff]
    %v801 = vld [vmem:[#allocation7 + $0x118] sm:$0xff]
    %v802 = vld [vmem:[#allocation7 + $0x120] sm:$0xff]
    %v803 = vld [vmem:[#allocation7 + $0x128] sm:$0xff]
    %v804 = vld [vmem:[#allocation7 + $0x130] sm:$0xff]
    %v805 = vld [vmem:[#allocation7 + $0x138] sm:$0xff]
    %v806 = vld [vmem:[#allocation7 + $0x140] sm:$0xff]
    %v807 = vld [vmem:[#allocation7 + $0x148] sm:$0xff]
    %v808 = vld [vmem:[#allocation7 + $0x150] sm:$0xff]
    %v809 = vld [vmem:[#allocation7 + $0x158] sm:$0xff]
    %v810 = vld [vmem:[#allocation7 + $0x160] sm:$0xff]
    %v811 = vld [vmem:[#allocation7 + $0x168] sm:$0xff]
    %v812 = vld [vmem:[#allocation7 + $0x170] sm:$0xff]
    %v813 = vld [vmem:[#allocation7 + $0x178] sm:$0xff]
    %v814 = vld [vmem:[#allocation7 + $0x180] sm:$0xff]
    %v815 = vld [vmem:[#allocation7 + $0x188] sm:$0xff]
    %v816 = vld [vmem:[#allocation7 + $0x190] sm:$0xff]
    %v817 = vld [vmem:[#allocation7 + $0x198] sm:$0xff]
    %v818 = vld [vmem:[#allocation7 + $0x1a0] sm:$0xff]
    %v819 = vld [vmem:[#allocation7 + $0x1a8] sm:$0xff]
    %v820 = vld [vmem:[#allocation7 + $0x1b0] sm:$0xff]
    %v821 = vld [vmem:[#allocation7 + $0x1b8] sm:$0xff]
    %v822 = vld [vmem:[#allocation7 + $0x1c0] sm:$0xff]
    %v823 = vld [vmem:[#allocation7 + $0x1c8] sm:$0xff]
    %v824 = vld [vmem:[#allocation7 + $0x1d0] sm:$0xff]
    %v825 = vld [vmem:[#allocation7 + $0x1d8] sm:$0xff]
    %v826 = vld [vmem:[#allocation7 + $0x1e0] sm:$0xff]
    %v827 = vld [vmem:[#allocation7 + $0x1e8] sm:$0xff]
    %v828 = vld [vmem:[#allocation7 + $0x1f0] sm:$0xff]
    %v829 = vld [vmem:[#allocation7 + $0x1f8] sm:$0xff]
    %v830 = vld [vmem:[#allocation7 + $0x200] sm:$0xff]
    %v831 = vld [vmem:[#allocation7 + $0x208] sm:$0xff]
    %v832 = vld [vmem:[#allocation7 + $0x210] sm:$0xff]
    %v833 = vld [vmem:[#allocation7 + $0x218] sm:$0xff]
    %v834 = vld [vmem:[#allocation7 + $0x220] sm:$0xff]
    %v835 = vld [vmem:[#allocation7 + $0x228] sm:$0xff]
    %v836 = vld [vmem:[#allocation7 + $0x230] sm:$0xff]
    %v837 = vld [vmem:[#allocation7 + $0x238] sm:$0xff]
    %v838 = vld [vmem:[#allocation7 + $0x240] sm:$0xff]
    %v839 = vld [vmem:[#allocation7 + $0x248] sm:$0xff]
    %v840 = vld [vmem:[#allocation7 + $0x250] sm:$0xff]
    %v841 = vld [vmem:[#allocation7 + $0x258] sm:$0xff]
    %v842 = vld [vmem:[#allocation7 + $0x260] sm:$0xff]
    %v843 = vld [vmem:[#allocation7 + $0x268] sm:$0xff]
    %v844 = vld [vmem:[#allocation7 + $0x270] sm:$0xff]
    %v845 = vld [vmem:[#allocation7 + $0x278] sm:$0xff]
    %v846 = vld [vmem:[#allocation7 + $0x280] sm:$0xff]
    %v847 = vld [vmem:[#allocation7 + $0x288] sm:$0xff]
    %v848 = vld [vmem:[#allocation7 + $0x290] sm:$0xff]
    %v849 = vld [vmem:[#allocation7 + $0x298] sm:$0xff]
    %v850 = vld [vmem:[#allocation7 + $0x2a0] sm:$0xff]
    %v851 = vld [vmem:[#allocation7 + $0x2a8] sm:$0xff]
    %v852 = vld [vmem:[#allocation7 + $0x2b0] sm:$0xff]
    %v853 = vld [vmem:[#allocation7 + $0x2b8] sm:$0xff]
    %v854 = vld [vmem:[#allocation7 + $0x2c0] sm:$0xff]
    %v855 = vld [vmem:[#allocation7 + $0x2c8] sm:$0xff]
    %v856 = vld [vmem:[#allocation7 + $0x2d0] sm:$0xff]
    %v857 = vld [vmem:[#allocation7 + $0x2d8] sm:$0xff]
    %v858 = vld [vmem:[#allocation7 + $0x2e0] sm:$0xff]
    %v859 = vld [vmem:[#allocation7 + $0x2e8] sm:$0xff]
    %v860 = vld [vmem:[#allocation7 + $0x2f0] sm:$0xff]
    %v861 = vld [vmem:[#allocation7 + $0x2f8] sm:$0xff]
    %v862 = vld [vmem:[#allocation7 + $0x300] sm:$0xff]
    %v863 = vld [vmem:[#allocation7 + $0x308] sm:$0xff]
    %v864 = vld [vmem:[#allocation7 + $0x310] sm:$0xff]
    %v865 = vld [vmem:[#allocation7 + $0x318] sm:$0xff]
    %v866 = vld [vmem:[#allocation7 + $0x320] sm:$0xff]
    %v867 = vld [vmem:[#allocation7 + $0x328] sm:$0xff]
    %v868 = vld [vmem:[#allocation7 + $0x330] sm:$0xff]
    %v869 = vld [vmem:[#allocation7 + $0x338] sm:$0xff]
    %v870 = vld [vmem:[#allocation7 + $0x340] sm:$0xff]
    %v871 = vld [vmem:[#allocation7 + $0x348] sm:$0xff]
    %v872 = vld [vmem:[#allocation7 + $0x350] sm:$0xff]
    %v873 = vld [vmem:[#allocation7 + $0x358] sm:$0xff]
    %v874 = vld [vmem:[#allocation7 + $0x360] sm:$0xff]
    %v875 = vld [vmem:[#allocation7 + $0x368] sm:$0xff]
    %v876 = vld [vmem:[#allocation7 + $0x370] sm:$0xff]
    %v877 = vld [vmem:[#allocation7 + $0x378] sm:$0xff]
    %v878 = vld [vmem:[#allocation7 + $0x380] sm:$0xff]
    %v879 = vld [vmem:[#allocation7 + $0x388] sm:$0xff]
    %v880 = vld [vmem:[#allocation7 + $0x390] sm:$0xff]
    %v881 = vld [vmem:[#allocation7 + $0x398] sm:$0xff]
    %v882 = vld [vmem:[#allocation7 + $0x3a0] sm:$0xff]
    %v883 = vld [vmem:[#allocation7 + $0x3a8] sm:$0xff]
    %v884 = vld [vmem:[#allocation7 + $0x3b0] sm:$0xff]
    %v885 = vld [vmem:[#allocation7 + $0x3b8] sm:$0xff]
    %v886 = vld [vmem:[#allocation7 + $0x3c0] sm:$0xff]
    %v887 = vld [vmem:[#allocation7 + $0x3c8] sm:$0xff]
    %v888 = vld [vmem:[#allocation7 + $0x3d0] sm:$0xff]
    %v889 = vld [vmem:[#allocation7 + $0x3d8] sm:$0xff]
    %v890 = vld [vmem:[#allocation7 + $0x3e0] sm:$0xff]
    %v891 = vld [vmem:[#allocation7 + $0x3e8] sm:$0xff]
    %v892 = vld [vmem:[#allocation7 + $0x3f0] sm:$0xff]
    %v893 = vld [vmem:[#allocation7 + $0x3f8] sm:$0xff]
    %v894 = vld [vmem:[#allocation7 + $0x400] sm:$0xff]
    %v895 = vld [vmem:[#allocation7 + $0x408] sm:$0xff]
    %v896 = vld [vmem:[#allocation7 + $0x410] sm:$0xff]
    %v897 = vld [vmem:[#allocation7 + $0x418] sm:$0xff]
    %v898 = vld [vmem:[#allocation7 + $0x420] sm:$0xff]
    %v899 = vld [vmem:[#allocation7 + $0x428] sm:$0xff]
    %v900 = vld [vmem:[#allocation7 + $0x430] sm:$0xff]
    %v901 = vld [vmem:[#allocation7 + $0x438] sm:$0xff]
    %v902 = vld [vmem:[#allocation7 + $0x440] sm:$0xff]
    %v903 = vld [vmem:[#allocation7 + $0x448] sm:$0xff]
    %v904 = vld [vmem:[#allocation7 + $0x450] sm:$0xff]
    %v905 = vld [vmem:[#allocation7 + $0x458] sm:$0xff]
    %v906 = vld [vmem:[#allocation7 + $0x460] sm:$0xff]
    %v907 = vld [vmem:[#allocation7 + $0x468] sm:$0xff]
    %v908 = vld [vmem:[#allocation7 + $0x470] sm:$0xff]
    %v909 = vld [vmem:[#allocation7 + $0x478] sm:$0xff]
    %v910 = vld [vmem:[#allocation7 + $0x480] sm:$0xff]
    %v911 = vld [vmem:[#allocation7 + $0x488] sm:$0xff]
    %v912 = vld [vmem:[#allocation7 + $0x490] sm:$0xff]
    %v913 = vld [vmem:[#allocation7 + $0x498] sm:$0xff]
    %v914 = vld [vmem:[#allocation7 + $0x4a0] sm:$0xff]
    %v915 = vld [vmem:[#allocation7 + $0x4a8] sm:$0xff]
    %v916 = vld [vmem:[#allocation7 + $0x4b0] sm:$0xff]
    %v917 = vld [vmem:[#allocation7 + $0x4b8] sm:$0xff]
    %v918 = vld [vmem:[#allocation7 + $0x4c0] sm:$0xff]
    %v919 = vld [vmem:[#allocation7 + $0x4c8] sm:$0xff]
    %v920 = vld [vmem:[#allocation7 + $0x4d0] sm:$0xff]
    %v921 = vld [vmem:[#allocation7 + $0x4d8] sm:$0xff]
    %v922 = vld [vmem:[#allocation7 + $0x4e0] sm:$0xff]
    %v923 = vld [vmem:[#allocation7 + $0x4e8] sm:$0xff]
    %v924 = vld [vmem:[#allocation7 + $0x4f0] sm:$0xff]
    %v925 = vld [vmem:[#allocation7 + $0x4f8] sm:$0xff]
    %v926 = vld [vmem:[#allocation7 + $0x500] sm:$0xff]
    %v927 = vld [vmem:[#allocation7 + $0x508] sm:$0xff]
    %v928 = vld [vmem:[#allocation7 + $0x510] sm:$0xff]
    %v929 = vld [vmem:[#allocation7 + $0x518] sm:$0xff]
    %v930 = vld [vmem:[#allocation7 + $0x520] sm:$0xff]
    %v931 = vld [vmem:[#allocation7 + $0x528] sm:$0xff]
    %v932 = vld [vmem:[#allocation7 + $0x530] sm:$0xff]
    %v933 = vld [vmem:[#allocation7 + $0x538] sm:$0xff]
    %v934 = vld [vmem:[#allocation7 + $0x540] sm:$0xff]
    %v935 = vld [vmem:[#allocation7 + $0x548] sm:$0xff]
    %v936 = vld [vmem:[#allocation7 + $0x550] sm:$0xff]
    %v937 = vld [vmem:[#allocation7 + $0x558] sm:$0xff]
    %v938 = vld [vmem:[#allocation7 + $0x560] sm:$0xff]
    %v939 = vld [vmem:[#allocation7 + $0x568] sm:$0xff]
    %v940 = vld [vmem:[#allocation7 + $0x570] sm:$0xff]
    %v941 = vld [vmem:[#allocation7 + $0x578] sm:$0xff]
    %v942 = vld [vmem:[#allocation7 + $0x580] sm:$0xff]
    %v943 = vld [vmem:[#allocation7 + $0x588] sm:$0xff]
    %v944 = vld [vmem:[#allocation7 + $0x590] sm:$0xff]
    %v945 = vld [vmem:[#allocation7 + $0x598] sm:$0xff]
    %v946 = vld [vmem:[#allocation7 + $0x5a0] sm:$0xff]
    %v947 = vld [vmem:[#allocation7 + $0x5a8] sm:$0xff]
    %v948 = vld [vmem:[#allocation7 + $0x5b0] sm:$0xff]
    %v949 = vld [vmem:[#allocation7 + $0x5b8] sm:$0xff]
    %v950 = vld [vmem:[#allocation7 + $0x5c0] sm:$0xff]
    %v951 = vld [vmem:[#allocation7 + $0x5c8] sm:$0xff]
    %v952 = vld [vmem:[#allocation7 + $0x5d0] sm:$0xff]
    %v953 = vld [vmem:[#allocation7 + $0x5d8] sm:$0xff]
    %v954 = vld [vmem:[#allocation7 + $0x5e0] sm:$0xff]
    %v955 = vld [vmem:[#allocation7 + $0x5e8] sm:$0xff]
    %v956 = vld [vmem:[#allocation7 + $0x5f0] sm:$0xff]
    %v957 = vld [vmem:[#allocation7 + $0x5f8] sm:$0xff]
    %v958 = vld [vmem:[#allocation7 + $0x600] sm:$0xff]
    %v959 = vld [vmem:[#allocation7 + $0x608] sm:$0xff]
    %v960 = vld [vmem:[#allocation7 + $0x610] sm:$0xff]
    %v961 = vld [vmem:[#allocation7 + $0x618] sm:$0xff]
    %v962 = vld [vmem:[#allocation7 + $0x620] sm:$0xff]
    %v963 = vld [vmem:[#allocation7 + $0x628] sm:$0xff]
    %v964 = vld [vmem:[#allocation7 + $0x630] sm:$0xff]
    %v965 = vld [vmem:[#allocation7 + $0x638] sm:$0xff]
    %v966 = vld [vmem:[#allocation7 + $0x640] sm:$0xff]
    %v967 = vld [vmem:[#allocation7 + $0x648] sm:$0xff]
    %v968 = vld [vmem:[#allocation7 + $0x650] sm:$0xff]
    %v969 = vld [vmem:[#allocation7 + $0x658] sm:$0xff]
    %v970 = vld [vmem:[#allocation7 + $0x660] sm:$0xff]
    %v971 = vld [vmem:[#allocation7 + $0x668] sm:$0xff]
    %v972 = vld [vmem:[#allocation7 + $0x670] sm:$0xff]
    %v973 = vld [vmem:[#allocation7 + $0x678] sm:$0xff]
    %v974 = vld [vmem:[#allocation7 + $0x680] sm:$0xff]
    %v975 = vld [vmem:[#allocation7 + $0x688] sm:$0xff]
    %v976 = vld [vmem:[#allocation7 + $0x690] sm:$0xff]
    %v977 = vld [vmem:[#allocation7 + $0x698] sm:$0xff]
    %v978 = vld [vmem:[#allocation7 + $0x6a0] sm:$0xff]
    %v979 = vld [vmem:[#allocation7 + $0x6a8] sm:$0xff]
    %v980 = vld [vmem:[#allocation7 + $0x6b0] sm:$0xff]
    %v981 = vld [vmem:[#allocation7 + $0x6b8] sm:$0xff]
    %v982 = vld [vmem:[#allocation7 + $0x6c0] sm:$0xff]
    %v983 = vld [vmem:[#allocation7 + $0x6c8] sm:$0xff]
    %v984 = vld [vmem:[#allocation7 + $0x6d0] sm:$0xff]
    %v985 = vld [vmem:[#allocation7 + $0x6d8] sm:$0xff]
    %v986 = vld [vmem:[#allocation7 + $0x6e0] sm:$0xff]
    %v987 = vld [vmem:[#allocation7 + $0x6e8] sm:$0xff]
    %v988 = vld [vmem:[#allocation7 + $0x6f0] sm:$0xff]
    %v989 = vld [vmem:[#allocation7 + $0x6f8] sm:$0xff]
    %v990 = vld [vmem:[#allocation7 + $0x700] sm:$0xff]
    %v991 = vld [vmem:[#allocation7 + $0x708] sm:$0xff]
    %v992 = vld [vmem:[#allocation7 + $0x710] sm:$0xff]
    %v993 = vld [vmem:[#allocation7 + $0x718] sm:$0xff]
    %v994 = vld [vmem:[#allocation7 + $0x720] sm:$0xff]
    %v995 = vld [vmem:[#allocation7 + $0x728] sm:$0xff]
    %v996 = vld [vmem:[#allocation7 + $0x730] sm:$0xff]
    %v997 = vld [vmem:[#allocation7 + $0x738] sm:$0xff]
    %v998 = vld [vmem:[#allocation7 + $0x740] sm:$0xff]
    %v999 = vld [vmem:[#allocation7 + $0x748] sm:$0xff]
    %v1000 = vld [vmem:[#allocation7 + $0x750] sm:$0xff]
    %v1001 = vld [vmem:[#allocation7 + $0x758] sm:$0xff]
    %v1002 = vld [vmem:[#allocation7 + $0x760] sm:$0xff]
    %v1003 = vld [vmem:[#allocation7 + $0x768] sm:$0xff]
    %v1004 = vld [vmem:[#allocation7 + $0x770] sm:$0xff]
    %v1005 = vld [vmem:[#allocation7 + $0x778] sm:$0xff]
    %v1006 = vld [vmem:[#allocation7 + $0x780] sm:$0xff]
    %v1007 = vld [vmem:[#allocation7 + $0x788] sm:$0xff]
    %v1008 = vld [vmem:[#allocation7 + $0x790] sm:$0xff]
    %v1009 = vld [vmem:[#allocation7 + $0x798] sm:$0xff]
    %v1010 = vld [vmem:[#allocation7 + $0x7a0] sm:$0xff]
    %v1011 = vld [vmem:[#allocation7 + $0x7a8] sm:$0xff]
    %v1012 = vld [vmem:[#allocation7 + $0x7b0] sm:$0xff]
    %v1013 = vld [vmem:[#allocation7 + $0x7b8] sm:$0xff]
    %v1014 = vld [vmem:[#allocation7 + $0x7c0] sm:$0xff]
    %v1015 = vld [vmem:[#allocation7 + $0x7c8] sm:$0xff]
    %v1016 = vld [vmem:[#allocation7 + $0x7d0] sm:$0xff]
    %v1017 = vld [vmem:[#allocation7 + $0x7d8] sm:$0xff]
    %v1018 = vld [vmem:[#allocation7 + $0x7e0] sm:$0xff]
    %v1019 = vld [vmem:[#allocation7 + $0x7e8] sm:$0xff]
    %v1020 = vld [vmem:[#allocation7 + $0x7f0] sm:$0xff]
    %v1021 = vld [vmem:[#allocation7 + $0x7f8] sm:$0xff]
    %v1022 = vld [vmem:[#allocation7 + $0x800] sm:$0xff]
    %v1023 = vld [vmem:[#allocation7 + $0x808] sm:$0xff]
    %v1024 = vld [vmem:[#allocation7 + $0x810] sm:$0xff]
    %v1025 = vld [vmem:[#allocation7 + $0x818] sm:$0xff]
    %v1026 = vld [vmem:[#allocation7 + $0x820] sm:$0xff]
    %v1027 = vld [vmem:[#allocation7 + $0x828] sm:$0xff]
    %v1028 = vld [vmem:[#allocation7 + $0x830] sm:$0xff]
    %v1029 = vld [vmem:[#allocation7 + $0x838] sm:$0xff]
    %v1030 = vld [vmem:[#allocation7 + $0x840] sm:$0xff]
    %v1031 = vld [vmem:[#allocation7 + $0x848] sm:$0xff]
    %v1032 = vld [vmem:[#allocation7 + $0x850] sm:$0xff]
    %v1033 = vld [vmem:[#allocation7 + $0x858] sm:$0xff]
    %v1034 = vld [vmem:[#allocation7 + $0x860] sm:$0xff]
    %v1035 = vld [vmem:[#allocation7 + $0x868] sm:$0xff]
    %v1036 = vld [vmem:[#allocation7 + $0x870] sm:$0xff]
    %v1037 = vld [vmem:[#allocation7 + $0x878] sm:$0xff]
    %v1038 = vld [vmem:[#allocation7 + $0x880] sm:$0xff]
    %v1039 = vld [vmem:[#allocation7 + $0x888] sm:$0xff]
    %v1040 = vld [vmem:[#allocation7 + $0x890] sm:$0xff]
    %v1041 = vld [vmem:[#allocation7 + $0x898] sm:$0xff]
    %v1042 = vld [vmem:[#allocation7 + $0x8a0] sm:$0xff]
    %v1043 = vld [vmem:[#allocation7 + $0x8a8] sm:$0xff]
    %v1044 = vld [vmem:[#allocation7 + $0x8b0] sm:$0xff]
    %v1045 = vld [vmem:[#allocation7 + $0x8b8] sm:$0xff]
    %v1046 = vld [vmem:[#allocation7 + $0x8c0] sm:$0xff]
    %v1047 = vld [vmem:[#allocation7 + $0x8c8] sm:$0xff]
    %v1048 = vld [vmem:[#allocation7 + $0x8d0] sm:$0xff]
    %v1049 = vld [vmem:[#allocation7 + $0x8d8] sm:$0xff]
    %v1050 = vld [vmem:[#allocation7 + $0x8e0] sm:$0xff]
    %v1051 = vld [vmem:[#allocation7 + $0x8e8] sm:$0xff]
    %v1052 = vld [vmem:[#allocation7 + $0x8f0] sm:$0xff]
    %v1053 = vld [vmem:[#allocation7 + $0x8f8] sm:$0xff]
    %v1054 = vld [vmem:[#allocation7 + $0x900] sm:$0xff]
    %v1055 = vld [vmem:[#allocation7 + $0x908] sm:$0xff]
    %v1056 = vld [vmem:[#allocation7 + $0x910] sm:$0xff]
    %v1057 = vld [vmem:[#allocation7 + $0x918] sm:$0xff]
    %v1058 = vld [vmem:[#allocation7 + $0x920] sm:$0xff]
    %v1059 = vld [vmem:[#allocation7 + $0x928] sm:$0xff]
    %v1060 = vld [vmem:[#allocation7 + $0x930] sm:$0xff]
    %v1061 = vld [vmem:[#allocation7 + $0x938] sm:$0xff]
    %v1062 = vld [vmem:[#allocation7 + $0x940] sm:$0xff]
    %v1063 = vld [vmem:[#allocation7 + $0x948] sm:$0xff]
    %v1064 = vld [vmem:[#allocation7 + $0x950] sm:$0xff]
    %v1065 = vld [vmem:[#allocation7 + $0x958] sm:$0xff]
    %v1066 = vld [vmem:[#allocation7 + $0x960] sm:$0xff]
    %v1067 = vld [vmem:[#allocation7 + $0x968] sm:$0xff]
    %v1068 = vld [vmem:[#allocation7 + $0x970] sm:$0xff]
    %v1069 = vld [vmem:[#allocation7 + $0x978] sm:$0xff]
    %v1070 = vld [vmem:[#allocation7 + $0x980] sm:$0xff]
    %v1071 = vld [vmem:[#allocation7 + $0x988] sm:$0xff]
    %v1072 = vld [vmem:[#allocation7 + $0x990] sm:$0xff]
    %v1073 = vld [vmem:[#allocation7 + $0x998] sm:$0xff]
    %v1074 = vld [vmem:[#allocation7 + $0x9a0] sm:$0xff]
    %v1075 = vld [vmem:[#allocation7 + $0x9a8] sm:$0xff]
    %v1076 = vld [vmem:[#allocation7 + $0x9b0] sm:$0xff]
    %v1077 = vld [vmem:[#allocation7 + $0x9b8] sm:$0xff]
    %v1078 = vld [vmem:[#allocation7 + $0x9c0] sm:$0xff]
    %v1079 = vld [vmem:[#allocation7 + $0x9c8] sm:$0xff]
    %v1080 = vld [vmem:[#allocation7 + $0x9d0] sm:$0xff]
    %v1081 = vld [vmem:[#allocation7 + $0x9d8] sm:$0xff]
    %v1082 = vld [vmem:[#allocation7 + $0x9e0] sm:$0xff]
    %v1083 = vld [vmem:[#allocation7 + $0x9e8] sm:$0xff]
    %v1084 = vld [vmem:[#allocation7 + $0x9f0] sm:$0xff]
    %v1085 = vld [vmem:[#allocation7 + $0x9f8] sm:$0xff]
    %v1086 = vld [vmem:[#allocation7 + $0xa00] sm:$0xff]
    %v1087 = vld [vmem:[#allocation7 + $0xa08] sm:$0xff]
    %v1088 = vld [vmem:[#allocation7 + $0xa10] sm:$0xff]
    %v1089 = vld [vmem:[#allocation7 + $0xa18] sm:$0xff]
    %v1090 = vld [vmem:[#allocation7 + $0xa20] sm:$0xff]
    %v1091 = vld [vmem:[#allocation7 + $0xa28] sm:$0xff]
    %v1092 = vld [vmem:[#allocation7 + $0xa30] sm:$0xff]
    %v1093 = vld [vmem:[#allocation7 + $0xa38] sm:$0xff]
    %v1094 = vld [vmem:[#allocation7 + $0xa40] sm:$0xff]
    %v1095 = vld [vmem:[#allocation7 + $0xa48] sm:$0xff]
    %v1096 = vld [vmem:[#allocation7 + $0xa50] sm:$0xff]
    %v1097 = vld [vmem:[#allocation7 + $0xa58] sm:$0xff]
    %v1098 = vld [vmem:[#allocation7 + $0xa60] sm:$0xff]
    %v1099 = vld [vmem:[#allocation7 + $0xa68] sm:$0xff]
    %v1100 = vld [vmem:[#allocation7 + $0xa70] sm:$0xff]
    %v1101 = vld [vmem:[#allocation7 + $0xa78] sm:$0xff]
    %v1102 = vld [vmem:[#allocation7 + $0xa80] sm:$0xff]
    %v1103 = vld [vmem:[#allocation7 + $0xa88] sm:$0xff]
    %v1104 = vld [vmem:[#allocation7 + $0xa90] sm:$0xff]
    %v1105 = vld [vmem:[#allocation7 + $0xa98] sm:$0xff]
    %v1106 = vld [vmem:[#allocation7 + $0xaa0] sm:$0xff]
    %v1107 = vld [vmem:[#allocation7 + $0xaa8] sm:$0xff]
    %v1108 = vld [vmem:[#allocation7 + $0xab0] sm:$0xff]
    %v1109 = vld [vmem:[#allocation7 + $0xab8] sm:$0xff]
    %v1110 = vld [vmem:[#allocation7 + $0xac0] sm:$0xff]
    %v1111 = vld [vmem:[#allocation7 + $0xac8] sm:$0xff]
    %v1112 = vld [vmem:[#allocation7 + $0xad0] sm:$0xff]
    %v1113 = vld [vmem:[#allocation7 + $0xad8] sm:$0xff]
    %v1114 = vld [vmem:[#allocation7 + $0xae0] sm:$0xff]
    %v1115 = vld [vmem:[#allocation7 + $0xae8] sm:$0xff]
    %v1116 = vld [vmem:[#allocation7 + $0xaf0] sm:$0xff]
    %v1117 = vld [vmem:[#allocation7 + $0xaf8] sm:$0xff]
    %v1118 = vld [vmem:[#allocation7 + $0xb00] sm:$0xff]
    %v1119 = vld [vmem:[#allocation7 + $0xb08] sm:$0xff]
    %v1120 = vld [vmem:[#allocation7 + $0xb10] sm:$0xff]
    %v1121 = vld [vmem:[#allocation7 + $0xb18] sm:$0xff]
    %v1122 = vld [vmem:[#allocation7 + $0xb20] sm:$0xff]
    %v1123 = vld [vmem:[#allocation7 + $0xb28] sm:$0xff]
    %v1124 = vld [vmem:[#allocation7 + $0xb30] sm:$0xff]
    %v1125 = vld [vmem:[#allocation7 + $0xb38] sm:$0xff]
    %v1126 = vld [vmem:[#allocation7 + $0xb40] sm:$0xff]
    %v1127 = vld [vmem:[#allocation7 + $0xb48] sm:$0xff]
    %v1128 = vld [vmem:[#allocation7 + $0xb50] sm:$0xff]
    %v1129 = vld [vmem:[#allocation7 + $0xb58] sm:$0xff]
    %v1130 = vld [vmem:[#allocation7 + $0xb60] sm:$0xff]
    %v1131 = vld [vmem:[#allocation7 + $0xb68] sm:$0xff]
    %v1132 = vld [vmem:[#allocation7 + $0xb70] sm:$0xff]
    %v1133 = vld [vmem:[#allocation7 + $0xb78] sm:$0xff]
    %v1134 = vld [vmem:[#allocation7 + $0xb80] sm:$0xff]
    %v1135 = vld [vmem:[#allocation7 + $0xb88] sm:$0xff]
    %v1136 = vld [vmem:[#allocation7 + $0xb90] sm:$0xff]
    %v1137 = vld [vmem:[#allocation7 + $0xb98] sm:$0xff]
    %v1138 = vld [vmem:[#allocation7 + $0xba0] sm:$0xff]
    %v1139 = vld [vmem:[#allocation7 + $0xba8] sm:$0xff]
    %v1140 = vld [vmem:[#allocation7 + $0xbb0] sm:$0xff]
    %v1141 = vld [vmem:[#allocation7 + $0xbb8] sm:$0xff]
    %v1142 = vld [vmem:[#allocation7 + $0xbc0] sm:$0xff]
    %v1143 = vld [vmem:[#allocation7 + $0xbc8] sm:$0xff]
    %v1144 = vld [vmem:[#allocation7 + $0xbd0] sm:$0xff]
    %v1145 = vld [vmem:[#allocation7 + $0xbd8] sm:$0xff]
    %v1146 = vld [vmem:[#allocation7 + $0xbe0] sm:$0xff]
    %v1147 = vld [vmem:[#allocation7 + $0xbe8] sm:$0xff]
    %v1148 = vld [vmem:[#allocation7 + $0xbf0] sm:$0xff]
    %v1149 = vld [vmem:[#allocation7 + $0xbf8] sm:$0xff]
    %v1150 = vld [vmem:[#allocation7 + $0xc00] sm:$0xff]
    %v1151 = vld [vmem:[#allocation7 + $0xc08] sm:$0xff]
    %v1152 = vld [vmem:[#allocation7 + $0xc10] sm:$0xff]
    %v1153 = vld [vmem:[#allocation7 + $0xc18] sm:$0xff]
    %v1154 = vld [vmem:[#allocation7 + $0xc20] sm:$0xff]
    %v1155 = vld [vmem:[#allocation7 + $0xc28] sm:$0xff]
    %v1156 = vld [vmem:[#allocation7 + $0xc30] sm:$0xff]
    %v1157 = vld [vmem:[#allocation7 + $0xc38] sm:$0xff]
    %v1158 = vld [vmem:[#allocation7 + $0xc40] sm:$0xff]
    %v1159 = vld [vmem:[#allocation7 + $0xc48] sm:$0xff]
    %v1160 = vld [vmem:[#allocation7 + $0xc50] sm:$0xff]
    %v1161 = vld [vmem:[#allocation7 + $0xc58] sm:$0xff]
    %v1162 = vld [vmem:[#allocation7 + $0xc60] sm:$0xff]
    %v1163 = vld [vmem:[#allocation7 + $0xc68] sm:$0xff]
    %v1164 = vld [vmem:[#allocation7 + $0xc70] sm:$0xff]
    %v1165 = vld [vmem:[#allocation7 + $0xc78] sm:$0xff]
    %v1166 = vld [vmem:[#allocation7 + $0xc80] sm:$0xff]
    %v1167 = vld [vmem:[#allocation7 + $0xc88] sm:$0xff]
    %v1168 = vld [vmem:[#allocation7 + $0xc90] sm:$0xff]
    %v1169 = vld [vmem:[#allocation7 + $0xc98] sm:$0xff]
    %v1170 = vld [vmem:[#allocation7 + $0xca0] sm:$0xff]
    %v1171 = vld [vmem:[#allocation7 + $0xca8] sm:$0xff]
    %v1172 = vld [vmem:[#allocation7 + $0xcb0] sm:$0xff]
    %v1173 = vld [vmem:[#allocation7 + $0xcb8] sm:$0xff]
    %v1174 = vld [vmem:[#allocation7 + $0xcc0] sm:$0xff]
    %v1175 = vld [vmem:[#allocation7 + $0xcc8] sm:$0xff]
    %v1176 = vld [vmem:[#allocation7 + $0xcd0] sm:$0xff]
    %v1177 = vld [vmem:[#allocation7 + $0xcd8] sm:$0xff]
    %v1178 = vld [vmem:[#allocation7 + $0xce0] sm:$0xff]
    %v1179 = vld [vmem:[#allocation7 + $0xce8] sm:$0xff]
    %v1180 = vld [vmem:[#allocation7 + $0xcf0] sm:$0xff]
    %v1181 = vld [vmem:[#allocation7 + $0xcf8] sm:$0xff]
    %v1182 = vld [vmem:[#allocation7 + $0xd00] sm:$0xff]
    %v1183 = vld [vmem:[#allocation7 + $0xd08] sm:$0xff]
    %v1184 = vld [vmem:[#allocation7 + $0xd10] sm:$0xff]
    %v1185 = vld [vmem:[#allocation7 + $0xd18] sm:$0xff]
    %v1186 = vld [vmem:[#allocation7 + $0xd20] sm:$0xff]
    %v1187 = vld [vmem:[#allocation7 + $0xd28] sm:$0xff]
    %v1188 = vld [vmem:[#allocation7 + $0xd30] sm:$0xff]
    %v1189 = vld [vmem:[#allocation7 + $0xd38] sm:$0xff]
    %v1190 = vld [vmem:[#allocation7 + $0xd40] sm:$0xff]
    %v1191 = vld [vmem:[#allocation7 + $0xd48] sm:$0xff]
    %v1192 = vld [vmem:[#allocation7 + $0xd50] sm:$0xff]
    %v1193 = vld [vmem:[#allocation7 + $0xd58] sm:$0xff]
    %v1194 = vld [vmem:[#allocation7 + $0xd60] sm:$0xff]
    %v1195 = vld [vmem:[#allocation7 + $0xd68] sm:$0xff]
    %v1196 = vld [vmem:[#allocation7 + $0xd70] sm:$0xff]
    %v1197 = vld [vmem:[#allocation7 + $0xd78] sm:$0xff]
    %v1198 = vld [vmem:[#allocation7 + $0xd80] sm:$0xff]
    %v1199 = vld [vmem:[#allocation7 + $0xd88] sm:$0xff]
    %v1200 = vld [vmem:[#allocation7 + $0xd90] sm:$0xff]
    %v1201 = vld [vmem:[#allocation7 + $0xd98] sm:$0xff]
    %v1202 = vld [vmem:[#allocation7 + $0xda0] sm:$0xff]
    %v1203 = vld [vmem:[#allocation7 + $0xda8] sm:$0xff]
    %v1204 = vld [vmem:[#allocation7 + $0xdb0] sm:$0xff]
    %v1205 = vld [vmem:[#allocation7 + $0xdb8] sm:$0xff]
    %v1206 = vld [vmem:[#allocation7 + $0xdc0] sm:$0xff]
    %v1207 = vld [vmem:[#allocation7 + $0xdc8] sm:$0xff]
    %v1208 = vld [vmem:[#allocation7 + $0xdd0] sm:$0xff]
    %v1209 = vld [vmem:[#allocation7 + $0xdd8] sm:$0xff]
    %v1210 = vld [vmem:[#allocation7 + $0xde0] sm:$0xff]
    %v1211 = vld [vmem:[#allocation7 + $0xde8] sm:$0xff]
    %v1212 = vld [vmem:[#allocation7 + $0xdf0] sm:$0xff]
    %v1213 = vld [vmem:[#allocation7 + $0xdf8] sm:$0xff]
    %v1214 = vld [vmem:[#allocation7 + $0xe00] sm:$0xff]
    %v1215 = vld [vmem:[#allocation7 + $0xe08] sm:$0xff]
    %v1216 = vld [vmem:[#allocation7 + $0xe10] sm:$0xff]
    %v1217 = vld [vmem:[#allocation7 + $0xe18] sm:$0xff]
    %v1218 = vld [vmem:[#allocation7 + $0xe20] sm:$0xff]
    %v1219 = vld [vmem:[#allocation7 + $0xe28] sm:$0xff]
    %v1220 = vld [vmem:[#allocation7 + $0xe30] sm:$0xff]
    %v1221 = vld [vmem:[#allocation7 + $0xe38] sm:$0xff]
    %v1222 = vld [vmem:[#allocation7 + $0xe40] sm:$0xff]
    %v1223 = vld [vmem:[#allocation7 + $0xe48] sm:$0xff]
    %v1224 = vld [vmem:[#allocation7 + $0xe50] sm:$0xff]
    %v1225 = vld [vmem:[#allocation7 + $0xe58] sm:$0xff]
    %v1226 = vld [vmem:[#allocation7 + $0xe60] sm:$0xff]
    %v1227 = vld [vmem:[#allocation7 + $0xe68] sm:$0xff]
    %v1228 = vld [vmem:[#allocation7 + $0xe70] sm:$0xff]
    %v1229 = vld [vmem:[#allocation7 + $0xe78] sm:$0xff]
    %v1230 = vld [vmem:[#allocation7 + $0xe80] sm:$0xff]
    %v1231 = vld [vmem:[#allocation7 + $0xe88] sm:$0xff]
    %v1232 = vld [vmem:[#allocation7 + $0xe90] sm:$0xff]
    %v1233 = vld [vmem:[#allocation7 + $0xe98] sm:$0xff]
    %v1234 = vld [vmem:[#allocation7 + $0xea0] sm:$0xff]
    %v1235 = vld [vmem:[#allocation7 + $0xea8] sm:$0xff]
    %v1236 = vld [vmem:[#allocation7 + $0xeb0] sm:$0xff]
    %v1237 = vld [vmem:[#allocation7 + $0xeb8] sm:$0xff]
    %v1238 = vld [vmem:[#allocation7 + $0xec0] sm:$0xff]
    %v1239 = vld [vmem:[#allocation7 + $0xec8] sm:$0xff]
    %v1240 = vld [vmem:[#allocation7 + $0xed0] sm:$0xff]
    %v1241 = vld [vmem:[#allocation7 + $0xed8] sm:$0xff]
    %v1242 = vld [vmem:[#allocation7 + $0xee0] sm:$0xff]
    %v1243 = vld [vmem:[#allocation7 + $0xee8] sm:$0xff]
    %v1244 = vld [vmem:[#allocation7 + $0xef0] sm:$0xff]
    %v1245 = vld [vmem:[#allocation7 + $0xef8] sm:$0xff]
    %v1246 = vld [vmem:[#allocation7 + $0xf00] sm:$0xff]
    %v1247 = vld [vmem:[#allocation7 + $0xf08] sm:$0xff]
    %v1248 = vld [vmem:[#allocation7 + $0xf10] sm:$0xff]
    %v1249 = vld [vmem:[#allocation7 + $0xf18] sm:$0xff]
    %v1250 = vld [vmem:[#allocation7 + $0xf20] sm:$0xff]
    %v1251 = vld [vmem:[#allocation7 + $0xf28] sm:$0xff]
    %v1252 = vld [vmem:[#allocation7 + $0xf30] sm:$0xff]
    %v1253 = vld [vmem:[#allocation7 + $0xf38] sm:$0xff]
    %v1254 = vld [vmem:[#allocation7 + $0xf40] sm:$0xff]
    %v1255 = vld [vmem:[#allocation7 + $0xf48] sm:$0xff]
    %v1256 = vld [vmem:[#allocation7 + $0xf50] sm:$0xff]
    %v1257 = vld [vmem:[#allocation7 + $0xf58] sm:$0xff]
    %v1258 = vld [vmem:[#allocation7 + $0xf60] sm:$0xff]
    %v1259 = vld [vmem:[#allocation7 + $0xf68] sm:$0xff]
    %v1260 = vld [vmem:[#allocation7 + $0xf70] sm:$0xff]
    %v1261 = vld [vmem:[#allocation7 + $0xf78] sm:$0xff]
    %v1262 = vld [vmem:[#allocation7 + $0xf80] sm:$0xff]
    %v1263 = vld [vmem:[#allocation7 + $0xf88] sm:$0xff]
    %v1264 = vld [vmem:[#allocation7 + $0xf90] sm:$0xff]
    %v1265 = vld [vmem:[#allocation7 + $0xf98] sm:$0xff]
    %v1266 = vld [vmem:[#allocation7 + $0xfa0] sm:$0xff]
    %v1267 = vld [vmem:[#allocation7 + $0xfa8] sm:$0xff]
    %v1268 = vld [vmem:[#allocation7 + $0xfb0] sm:$0xff]
    %v1269 = vld [vmem:[#allocation7 + $0xfb8] sm:$0xff]
    %v1270 = vld [vmem:[#allocation7 + $0xfc0] sm:$0xff]
    %v1271 = vld [vmem:[#allocation7 + $0xfc8] sm:$0xff]
    %v1272 = vld [vmem:[#allocation7 + $0xfd0] sm:$0xff]
    %v1273 = vld [vmem:[#allocation7 + $0xfd8] sm:$0xff]
    %v1274 = vld [vmem:[#allocation7 + $0xfe0] sm:$0xff]
    %v1275 = vld [vmem:[#allocation7 + $0xfe8] sm:$0xff]
    %v1276 = vld [vmem:[#allocation7 + $0xff0] sm:$0xff]
    %v1277 = vld [vmem:[#allocation7 + $0xff8] sm:$0xff]
    %v1278 = vld [vmem:[#allocation8] sm:$0xff]
    %v1280 = vperm.slane %v1278, 0
    %v1281 = vperm.slane %v1278, 1
    %v1282 = vperm.slane %v1278, 2
    %v1283 = vperm.slane %v1278, 3
    %v1284 = vperm.slane %v1278, 4
    %v1285 = vperm.slane %v1278, 5
    %v1286 = vperm.slane %v1278, 6
    %v1287 = vperm.slane %v1278, 7
    %1296 = vmatpush.msra.mxu0 %v886
    %1297 = vmatpush.msra.mxu0 %v878
    %1298 = vmatpush.msra.mxu0 %v870
    %1299 = vmatpush.msra.mxu0 %v862
    %1300 = vmatpush.msra.mxu0 %v854
    %1301 = vmatpush.msra.mxu0 %v846
    %1302 = vmatpush.msra.mxu0 %v838
    %1303 = vmatpush.msra.mxu0 %v830
    %1304 = vmatpush.msra.mxu0 %v822
    %1305 = vmatpush.msra.mxu0 %v814
    %1306 = vmatpush.msra.mxu0 %v806
    %1307 = vmatpush.msra.mxu0 %v798
    %1308 = vmatpush.msra.mxu0 %v790
    %1309 = vmatpush.msra.mxu0 %v782
    %1310 = vmatpush.msra.mxu0 %v774
    %1311 = vmatpush.msra.mxu0 %v766
    %1312 = vmatmul.f32.gmra.mxu0 %v762
    %v1313 = vpop.f32.mrf.mxu0
    %v1314 = vadd.f32 %v1280, %v1313
    %1315 = vdwg.mxu0
    %1316 = vmatpush.msra.mxu0 %v1014
    %1317 = vmatpush.msra.mxu0 %v1006
    %1318 = vmatpush.msra.mxu0 %v998
    %1319 = vmatpush.msra.mxu0 %v990
    %1320 = vmatpush.msra.mxu0 %v982
    %1321 = vmatpush.msra.mxu0 %v974
    %1322 = vmatpush.msra.mxu0 %v966
    %1323 = vmatpush.msra.mxu0 %v958
    %1324 = vmatpush.msra.mxu0 %v950
    %1325 = vmatpush.msra.mxu0 %v942
    %1326 = vmatpush.msra.mxu0 %v934
    %1327 = vmatpush.msra.mxu0 %v926
    %1328 = vmatpush.msra.mxu0 %v918
    %1329 = vmatpush.msra.mxu0 %v910
    %1330 = vmatpush.msra.mxu0 %v902
    %1331 = vmatpush.msra.mxu0 %v894
    %1332 = vmatmul.f32.gmra.mxu0 %v763
    %v1333 = vpop.f32.mrf.mxu0
    %v1334 = vadd.f32 %v1314, %v1333
    %1335 = vdwg.mxu0
    %1336 = vmatpush.msra.mxu0 %v1142
    %1337 = vmatpush.msra.mxu0 %v1134
    %1338 = vmatpush.msra.mxu0 %v1126
    %1339 = vmatpush.msra.mxu0 %v1118
    %1340 = vmatpush.msra.mxu0 %v1110
    %1341 = vmatpush.msra.mxu0 %v1102
    %1342 = vmatpush.msra.mxu0 %v1094
    %1343 = vmatpush.msra.mxu0 %v1086
    %1344 = vmatpush.msra.mxu0 %v1078
    %1345 = vmatpush.msra.mxu0 %v1070
    %1346 = vmatpush.msra.mxu0 %v1062
    %1347 = vmatpush.msra.mxu0 %v1054
    %1348 = vmatpush.msra.mxu0 %v1046
    %1349 = vmatpush.msra.mxu0 %v1038
    %1350 = vmatpush.msra.mxu0 %v1030
    %1351 = vmatpush.msra.mxu0 %v1022
    %1352 = vmatmul.f32.gmra.mxu0 0.0
    %v1353 = vpop.f32.mrf.mxu0
    %v1354 = vadd.f32 %v1334, %v1353
    %1355 = vdwg.mxu0
    %1356 = vmatpush.msra.mxu0 %v1270
    %1357 = vmatpush.msra.mxu0 %v1262
    %1358 = vmatpush.msra.mxu0 %v1254
    %1359 = vmatpush.msra.mxu0 %v1246
    %1360 = vmatpush.msra.mxu0 %v1238
    %1361 = vmatpush.msra.mxu0 %v1230
    %1362 = vmatpush.msra.mxu0 %v1222
    %1363 = vmatpush.msra.mxu0 %v1214
    %1364 = vmatpush.msra.mxu0 %v1206
    %1365 = vmatpush.msra.mxu0 %v1198
    %1366 = vmatpush.msra.mxu0 %v1190
    %1367 = vmatpush.msra.mxu0 %v1182
    %1368 = vmatpush.msra.mxu0 %v1174
    %1369 = vmatpush.msra.mxu0 %v1166
    %1370 = vmatpush.msra.mxu0 %v1158
    %1371 = vmatpush.msra.mxu0 %v1150
    %1372 = vmatmul.f32.gmra.mxu0 0.0
    %v1373 = vpop.f32.mrf.mxu0
    %v1374 = vadd.f32 %v1354, %v1373
    %1375 = vdwg.mxu0
    %1376 = vmatpush.msra.mxu0 %v887
    %1377 = vmatpush.msra.mxu0 %v879
    %1378 = vmatpush.msra.mxu0 %v871
    %1379 = vmatpush.msra.mxu0 %v863
    %1380 = vmatpush.msra.mxu0 %v855
    %1381 = vmatpush.msra.mxu0 %v847
    %1382 = vmatpush.msra.mxu0 %v839
    %1383 = vmatpush.msra.mxu0 %v831
    %1384 = vmatpush.msra.mxu0 %v823
    %1385 = vmatpush.msra.mxu0 %v815
    %1386 = vmatpush.msra.mxu0 %v807
    %1387 = vmatpush.msra.mxu0 %v799
    %1388 = vmatpush.msra.mxu0 %v791
    %1389 = vmatpush.msra.mxu0 %v783
    %1390 = vmatpush.msra.mxu0 %v775
    %1391 = vmatpush.msra.mxu0 %v767
    %1392 = vmatmul.f32.gmra.mxu0 %v762
    %v1393 = vpop.f32.mrf.mxu0
    %v1394 = vadd.f32 %v1281, %v1393
    %1395 = vdwg.mxu0
    %1396 = vmatpush.msra.mxu0 %v1015
    %1397 = vmatpush.msra.mxu0 %v1007
    %1398 = vmatpush.msra.mxu0 %v999
    %1399 = vmatpush.msra.mxu0 %v991
    %1400 = vmatpush.msra.mxu0 %v983
    %1401 = vmatpush.msra.mxu0 %v975
    %1402 = vmatpush.msra.mxu0 %v967
    %1403 = vmatpush.msra.mxu0 %v959
    %1404 = vmatpush.msra.mxu0 %v951
    %1405 = vmatpush.msra.mxu0 %v943
    %1406 = vmatpush.msra.mxu0 %v935
    %1407 = vmatpush.msra.mxu0 %v927
    %1408 = vmatpush.msra.mxu0 %v919
    %1409 = vmatpush.msra.mxu0 %v911
    %1410 = vmatpush.msra.mxu0 %v903
    %1411 = vmatpush.msra.mxu0 %v895
    %1412 = vmatmul.f32.gmra.mxu0 %v763
    %v1413 = vpop.f32.mrf.mxu0
    %v1414 = vadd.f32 %v1394, %v1413
    %1415 = vdwg.mxu0
    %1416 = vmatpush.msra.mxu0 %v1143
    %1417 = vmatpush.msra.mxu0 %v1135
    %1418 = vmatpush.msra.mxu0 %v1127
    %1419 = vmatpush.msra.mxu0 %v1119
    %1420 = vmatpush.msra.mxu0 %v1111
    %1421 = vmatpush.msra.mxu0 %v1103
    %1422 = vmatpush.msra.mxu0 %v1095
    %1423 = vmatpush.msra.mxu0 %v1087
    %1424 = vmatpush.msra.mxu0 %v1079
    %1425 = vmatpush.msra.mxu0 %v1071
    %1426 = vmatpush.msra.mxu0 %v1063
    %1427 = vmatpush.msra.mxu0 %v1055
    %1428 = vmatpush.msra.mxu0 %v1047
    %1429 = vmatpush.msra.mxu0 %v1039
    %1430 = vmatpush.msra.mxu0 %v1031
    %1431 = vmatpush.msra.mxu0 %v1023
    %1432 = vmatmul.f32.gmra.mxu0 0.0
    %v1433 = vpop.f32.mrf.mxu0
    %v1434 = vadd.f32 %v1414, %v1433
    %1435 = vdwg.mxu0
    %1436 = vmatpush.msra.mxu0 %v1271
    %1437 = vmatpush.msra.mxu0 %v1263
    %1438 = vmatpush.msra.mxu0 %v1255
    %1439 = vmatpush.msra.mxu0 %v1247
    %1440 = vmatpush.msra.mxu0 %v1239
    %1441 = vmatpush.msra.mxu0 %v1231
    %1442 = vmatpush.msra.mxu0 %v1223
    %1443 = vmatpush.msra.mxu0 %v1215
    %1444 = vmatpush.msra.mxu0 %v1207
    %1445 = vmatpush.msra.mxu0 %v1199
    %1446 = vmatpush.msra.mxu0 %v1191
    %1447 = vmatpush.msra.mxu0 %v1183
    %1448 = vmatpush.msra.mxu0 %v1175
    %1449 = vmatpush.msra.mxu0 %v1167
    %1450 = vmatpush.msra.mxu0 %v1159
    %1451 = vmatpush.msra.mxu0 %v1151
    %1452 = vmatmul.f32.gmra.mxu0 0.0
    %v1453 = vpop.f32.mrf.mxu0
    %v1454 = vadd.f32 %v1434, %v1453
    %1455 = vdwg.mxu0
    %1456 = vmatpush.msra.mxu0 %v888
    %1457 = vmatpush.msra.mxu0 %v880
    %1458 = vmatpush.msra.mxu0 %v872
    %1459 = vmatpush.msra.mxu0 %v864
    %1460 = vmatpush.msra.mxu0 %v856
    %1461 = vmatpush.msra.mxu0 %v848
    %1462 = vmatpush.msra.mxu0 %v840
    %1463 = vmatpush.msra.mxu0 %v832
    %1464 = vmatpush.msra.mxu0 %v824
    %1465 = vmatpush.msra.mxu0 %v816
    %1466 = vmatpush.msra.mxu0 %v808
    %1467 = vmatpush.msra.mxu0 %v800
    %1468 = vmatpush.msra.mxu0 %v792
    %1469 = vmatpush.msra.mxu0 %v784
    %1470 = vmatpush.msra.mxu0 %v776
    %1471 = vmatpush.msra.mxu0 %v768
    %1472 = vmatmul.f32.gmra.mxu0 %v762
    %v1473 = vpop.f32.mrf.mxu0
    %v1474 = vadd.f32 %v1282, %v1473
    %1475 = vdwg.mxu0
    %1476 = vmatpush.msra.mxu0 %v1016
    %1477 = vmatpush.msra.mxu0 %v1008
    %1478 = vmatpush.msra.mxu0 %v1000
    %1479 = vmatpush.msra.mxu0 %v992
    %1480 = vmatpush.msra.mxu0 %v984
    %1481 = vmatpush.msra.mxu0 %v976
    %1482 = vmatpush.msra.mxu0 %v968
    %1483 = vmatpush.msra.mxu0 %v960
    %1484 = vmatpush.msra.mxu0 %v952
    %1485 = vmatpush.msra.mxu0 %v944
    %1486 = vmatpush.msra.mxu0 %v936
    %1487 = vmatpush.msra.mxu0 %v928
    %1488 = vmatpush.msra.mxu0 %v920
    %1489 = vmatpush.msra.mxu0 %v912
    %1490 = vmatpush.msra.mxu0 %v904
    %1491 = vmatpush.msra.mxu0 %v896
    %1492 = vmatmul.f32.gmra.mxu0 %v763
    %v1493 = vpop.f32.mrf.mxu0
    %v1494 = vadd.f32 %v1474, %v1493
    %1495 = vdwg.mxu0
    %1496 = vmatpush.msra.mxu0 %v1144
    %1497 = vmatpush.msra.mxu0 %v1136
    %1498 = vmatpush.msra.mxu0 %v1128
    %1499 = vmatpush.msra.mxu0 %v1120
    %1500 = vmatpush.msra.mxu0 %v1112
    %1501 = vmatpush.msra.mxu0 %v1104
    %1502 = vmatpush.msra.mxu0 %v1096
    %1503 = vmatpush.msra.mxu0 %v1088
    %1504 = vmatpush.msra.mxu0 %v1080
    %1505 = vmatpush.msra.mxu0 %v1072
    %1506 = vmatpush.msra.mxu0 %v1064
    %1507 = vmatpush.msra.mxu0 %v1056
    %1508 = vmatpush.msra.mxu0 %v1048
    %1509 = vmatpush.msra.mxu0 %v1040
    %1510 = vmatpush.msra.mxu0 %v1032
    %1511 = vmatpush.msra.mxu0 %v1024
    %1512 = vmatmul.f32.gmra.mxu0 0.0
    %v1513 = vpop.f32.mrf.mxu0
    %v1514 = vadd.f32 %v1494, %v1513
    %1515 = vdwg.mxu0
    %1516 = vmatpush.msra.mxu0 %v1272
    %1517 = vmatpush.msra.mxu0 %v1264
    %1518 = vmatpush.msra.mxu0 %v1256
    %1519 = vmatpush.msra.mxu0 %v1248
    %1520 = vmatpush.msra.mxu0 %v1240
    %1521 = vmatpush.msra.mxu0 %v1232
    %1522 = vmatpush.msra.mxu0 %v1224
    %1523 = vmatpush.msra.mxu0 %v1216
    %1524 = vmatpush.msra.mxu0 %v1208
    %1525 = vmatpush.msra.mxu0 %v1200
    %1526 = vmatpush.msra.mxu0 %v1192
    %1527 = vmatpush.msra.mxu0 %v1184
    %1528 = vmatpush.msra.mxu0 %v1176
    %1529 = vmatpush.msra.mxu0 %v1168
    %1530 = vmatpush.msra.mxu0 %v1160
    %1531 = vmatpush.msra.mxu0 %v1152
    %1532 = vmatmul.f32.gmra.mxu0 0.0
    %v1533 = vpop.f32.mrf.mxu0
    %v1534 = vadd.f32 %v1514, %v1533
    %1535 = vdwg.mxu0
    %1536 = vmatpush.msra.mxu0 %v889
    %1537 = vmatpush.msra.mxu0 %v881
    %1538 = vmatpush.msra.mxu0 %v873
    %1539 = vmatpush.msra.mxu0 %v865
    %1540 = vmatpush.msra.mxu0 %v857
    %1541 = vmatpush.msra.mxu0 %v849
    %1542 = vmatpush.msra.mxu0 %v841
    %1543 = vmatpush.msra.mxu0 %v833
    %1544 = vmatpush.msra.mxu0 %v825
    %1545 = vmatpush.msra.mxu0 %v817
    %1546 = vmatpush.msra.mxu0 %v809
    %1547 = vmatpush.msra.mxu0 %v801
    %1548 = vmatpush.msra.mxu0 %v793
    %1549 = vmatpush.msra.mxu0 %v785
    %1550 = vmatpush.msra.mxu0 %v777
    %1551 = vmatpush.msra.mxu0 %v769
    %1552 = vmatmul.f32.gmra.mxu0 %v762
    %v1553 = vpop.f32.mrf.mxu0
    %v1554 = vadd.f32 %v1283, %v1553
    %1555 = vdwg.mxu0
    %1556 = vmatpush.msra.mxu0 %v1017
    %1557 = vmatpush.msra.mxu0 %v1009
    %1558 = vmatpush.msra.mxu0 %v1001
    %1559 = vmatpush.msra.mxu0 %v993
    %1560 = vmatpush.msra.mxu0 %v985
    %1561 = vmatpush.msra.mxu0 %v977
    %1562 = vmatpush.msra.mxu0 %v969
    %1563 = vmatpush.msra.mxu0 %v961
    %1564 = vmatpush.msra.mxu0 %v953
    %1565 = vmatpush.msra.mxu0 %v945
    %1566 = vmatpush.msra.mxu0 %v937
    %1567 = vmatpush.msra.mxu0 %v929
    %1568 = vmatpush.msra.mxu0 %v921
    %1569 = vmatpush.msra.mxu0 %v913
    %1570 = vmatpush.msra.mxu0 %v905
    %1571 = vmatpush.msra.mxu0 %v897
    %1572 = vmatmul.f32.gmra.mxu0 %v763
    %v1573 = vpop.f32.mrf.mxu0
    %v1574 = vadd.f32 %v1554, %v1573
    %1575 = vdwg.mxu0
    %1576 = vmatpush.msra.mxu0 %v1145
    %1577 = vmatpush.msra.mxu0 %v1137
    %1578 = vmatpush.msra.mxu0 %v1129
    %1579 = vmatpush.msra.mxu0 %v1121
    %1580 = vmatpush.msra.mxu0 %v1113
    %1581 = vmatpush.msra.mxu0 %v1105
    %1582 = vmatpush.msra.mxu0 %v1097
    %1583 = vmatpush.msra.mxu0 %v1089
    %1584 = vmatpush.msra.mxu0 %v1081
    %1585 = vmatpush.msra.mxu0 %v1073
    %1586 = vmatpush.msra.mxu0 %v1065
    %1587 = vmatpush.msra.mxu0 %v1057
    %1588 = vmatpush.msra.mxu0 %v1049
    %1589 = vmatpush.msra.mxu0 %v1041
    %1590 = vmatpush.msra.mxu0 %v1033
    %1591 = vmatpush.msra.mxu0 %v1025
    %1592 = vmatmul.f32.gmra.mxu0 0.0
    %v1593 = vpop.f32.mrf.mxu0
    %v1594 = vadd.f32 %v1574, %v1593
    %1595 = vdwg.mxu0
    %1596 = vmatpush.msra.mxu0 %v1273
    %1597 = vmatpush.msra.mxu0 %v1265
    %1598 = vmatpush.msra.mxu0 %v1257
    %1599 = vmatpush.msra.mxu0 %v1249
    %1600 = vmatpush.msra.mxu0 %v1241
    %1601 = vmatpush.msra.mxu0 %v1233
    %1602 = vmatpush.msra.mxu0 %v1225
    %1603 = vmatpush.msra.mxu0 %v1217
    %1604 = vmatpush.msra.mxu0 %v1209
    %1605 = vmatpush.msra.mxu0 %v1201
    %1606 = vmatpush.msra.mxu0 %v1193
    %1607 = vmatpush.msra.mxu0 %v1185
    %1608 = vmatpush.msra.mxu0 %v1177
    %1609 = vmatpush.msra.mxu0 %v1169
    %1610 = vmatpush.msra.mxu0 %v1161
    %1611 = vmatpush.msra.mxu0 %v1153
    %1612 = vmatmul.f32.gmra.mxu0 0.0
    %v1613 = vpop.f32.mrf.mxu0
    %v1614 = vadd.f32 %v1594, %v1613
    %1615 = vdwg.mxu0
    %1616 = vmatpush.msra.mxu0 %v890
    %1617 = vmatpush.msra.mxu0 %v882
    %1618 = vmatpush.msra.mxu0 %v874
    %1619 = vmatpush.msra.mxu0 %v866
    %1620 = vmatpush.msra.mxu0 %v858
    %1621 = vmatpush.msra.mxu0 %v850
    %1622 = vmatpush.msra.mxu0 %v842
    %1623 = vmatpush.msra.mxu0 %v834
    %1624 = vmatpush.msra.mxu0 %v826
    %1625 = vmatpush.msra.mxu0 %v818
    %1626 = vmatpush.msra.mxu0 %v810
    %1627 = vmatpush.msra.mxu0 %v802
    %1628 = vmatpush.msra.mxu0 %v794
    %1629 = vmatpush.msra.mxu0 %v786
    %1630 = vmatpush.msra.mxu0 %v778
    %1631 = vmatpush.msra.mxu0 %v770
    %1632 = vmatmul.f32.gmra.mxu0 %v762
    %v1633 = vpop.f32.mrf.mxu0
    %v1634 = vadd.f32 %v1284, %v1633
    %1635 = vdwg.mxu0
    %1636 = vmatpush.msra.mxu0 %v1018
    %1637 = vmatpush.msra.mxu0 %v1010
    %1638 = vmatpush.msra.mxu0 %v1002
    %1639 = vmatpush.msra.mxu0 %v994
    %1640 = vmatpush.msra.mxu0 %v986
    %1641 = vmatpush.msra.mxu0 %v978
    %1642 = vmatpush.msra.mxu0 %v970
    %1643 = vmatpush.msra.mxu0 %v962
    %1644 = vmatpush.msra.mxu0 %v954
    %1645 = vmatpush.msra.mxu0 %v946
    %1646 = vmatpush.msra.mxu0 %v938
    %1647 = vmatpush.msra.mxu0 %v930
    %1648 = vmatpush.msra.mxu0 %v922
    %1649 = vmatpush.msra.mxu0 %v914
    %1650 = vmatpush.msra.mxu0 %v906
    %1651 = vmatpush.msra.mxu0 %v898
    %1652 = vmatmul.f32.gmra.mxu0 %v763
    %v1653 = vpop.f32.mrf.mxu0
    %v1654 = vadd.f32 %v1634, %v1653
    %1655 = vdwg.mxu0
    %1656 = vmatpush.msra.mxu0 %v1146
    %1657 = vmatpush.msra.mxu0 %v1138
    %1658 = vmatpush.msra.mxu0 %v1130
    %1659 = vmatpush.msra.mxu0 %v1122
    %1660 = vmatpush.msra.mxu0 %v1114
    %1661 = vmatpush.msra.mxu0 %v1106
    %1662 = vmatpush.msra.mxu0 %v1098
    %1663 = vmatpush.msra.mxu0 %v1090
    %1664 = vmatpush.msra.mxu0 %v1082
    %1665 = vmatpush.msra.mxu0 %v1074
    %1666 = vmatpush.msra.mxu0 %v1066
    %1667 = vmatpush.msra.mxu0 %v1058
    %1668 = vmatpush.msra.mxu0 %v1050
    %1669 = vmatpush.msra.mxu0 %v1042
    %1670 = vmatpush.msra.mxu0 %v1034
    %1671 = vmatpush.msra.mxu0 %v1026
    %1672 = vmatmul.f32.gmra.mxu0 0.0
    %v1673 = vpop.f32.mrf.mxu0
    %v1674 = vadd.f32 %v1654, %v1673
    %1675 = vdwg.mxu0
    %1676 = vmatpush.msra.mxu0 %v1274
    %1677 = vmatpush.msra.mxu0 %v1266
    %1678 = vmatpush.msra.mxu0 %v1258
    %1679 = vmatpush.msra.mxu0 %v1250
    %1680 = vmatpush.msra.mxu0 %v1242
    %1681 = vmatpush.msra.mxu0 %v1234
    %1682 = vmatpush.msra.mxu0 %v1226
    %1683 = vmatpush.msra.mxu0 %v1218
    %1684 = vmatpush.msra.mxu0 %v1210
    %1685 = vmatpush.msra.mxu0 %v1202
    %1686 = vmatpush.msra.mxu0 %v1194
    %1687 = vmatpush.msra.mxu0 %v1186
    %1688 = vmatpush.msra.mxu0 %v1178
    %1689 = vmatpush.msra.mxu0 %v1170
    %1690 = vmatpush.msra.mxu0 %v1162
    %1691 = vmatpush.msra.mxu0 %v1154
    %1692 = vmatmul.f32.gmra.mxu0 0.0
    %v1693 = vpop.f32.mrf.mxu0
    %v1694 = vadd.f32 %v1674, %v1693
    %1695 = vdwg.mxu0
    %1696 = vmatpush.msra.mxu0 %v891
    %1697 = vmatpush.msra.mxu0 %v883
    %1698 = vmatpush.msra.mxu0 %v875
    %1699 = vmatpush.msra.mxu0 %v867
    %1700 = vmatpush.msra.mxu0 %v859
    %1701 = vmatpush.msra.mxu0 %v851
    %1702 = vmatpush.msra.mxu0 %v843
    %1703 = vmatpush.msra.mxu0 %v835
    %1704 = vmatpush.msra.mxu0 %v827
    %1705 = vmatpush.msra.mxu0 %v819
    %1706 = vmatpush.msra.mxu0 %v811
    %1707 = vmatpush.msra.mxu0 %v803
    %1708 = vmatpush.msra.mxu0 %v795
    %1709 = vmatpush.msra.mxu0 %v787
    %1710 = vmatpush.msra.mxu0 %v779
    %1711 = vmatpush.msra.mxu0 %v771
    %1712 = vmatmul.f32.gmra.mxu0 %v762
    %v1713 = vpop.f32.mrf.mxu0
    %v1714 = vadd.f32 %v1285, %v1713
    %1715 = vdwg.mxu0
    %1716 = vmatpush.msra.mxu0 %v1019
    %1717 = vmatpush.msra.mxu0 %v1011
    %1718 = vmatpush.msra.mxu0 %v1003
    %1719 = vmatpush.msra.mxu0 %v995
    %1720 = vmatpush.msra.mxu0 %v987
    %1721 = vmatpush.msra.mxu0 %v979
    %1722 = vmatpush.msra.mxu0 %v971
    %1723 = vmatpush.msra.mxu0 %v963
    %1724 = vmatpush.msra.mxu0 %v955
    %1725 = vmatpush.msra.mxu0 %v947
    %1726 = vmatpush.msra.mxu0 %v939
    %1727 = vmatpush.msra.mxu0 %v931
    %1728 = vmatpush.msra.mxu0 %v923
    %1729 = vmatpush.msra.mxu0 %v915
    %1730 = vmatpush.msra.mxu0 %v907
    %1731 = vmatpush.msra.mxu0 %v899
    %1732 = vmatmul.f32.gmra.mxu0 %v763
    %v1733 = vpop.f32.mrf.mxu0
    %v1734 = vadd.f32 %v1714, %v1733
    %1735 = vdwg.mxu0
    %1736 = vmatpush.msra.mxu0 %v1147
    %1737 = vmatpush.msra.mxu0 %v1139
    %1738 = vmatpush.msra.mxu0 %v1131
    %1739 = vmatpush.msra.mxu0 %v1123
    %1740 = vmatpush.msra.mxu0 %v1115
    %1741 = vmatpush.msra.mxu0 %v1107
    %1742 = vmatpush.msra.mxu0 %v1099
    %1743 = vmatpush.msra.mxu0 %v1091
    %1744 = vmatpush.msra.mxu0 %v1083
    %1745 = vmatpush.msra.mxu0 %v1075
    %1746 = vmatpush.msra.mxu0 %v1067
    %1747 = vmatpush.msra.mxu0 %v1059
    %1748 = vmatpush.msra.mxu0 %v1051
    %1749 = vmatpush.msra.mxu0 %v1043
    %1750 = vmatpush.msra.mxu0 %v1035
    %1751 = vmatpush.msra.mxu0 %v1027
    %1752 = vmatmul.f32.gmra.mxu0 0.0
    %v1753 = vpop.f32.mrf.mxu0
    %v1754 = vadd.f32 %v1734, %v1753
    %1755 = vdwg.mxu0
    %1756 = vmatpush.msra.mxu0 %v1275
    %1757 = vmatpush.msra.mxu0 %v1267
    %1758 = vmatpush.msra.mxu0 %v1259
    %1759 = vmatpush.msra.mxu0 %v1251
    %1760 = vmatpush.msra.mxu0 %v1243
    %1761 = vmatpush.msra.mxu0 %v1235
    %1762 = vmatpush.msra.mxu0 %v1227
    %1763 = vmatpush.msra.mxu0 %v1219
    %1764 = vmatpush.msra.mxu0 %v1211
    %1765 = vmatpush.msra.mxu0 %v1203
    %1766 = vmatpush.msra.mxu0 %v1195
    %1767 = vmatpush.msra.mxu0 %v1187
    %1768 = vmatpush.msra.mxu0 %v1179
    %1769 = vmatpush.msra.mxu0 %v1171
    %1770 = vmatpush.msra.mxu0 %v1163
    %1771 = vmatpush.msra.mxu0 %v1155
    %1772 = vmatmul.f32.gmra.mxu0 0.0
    %v1773 = vpop.f32.mrf.mxu0
    %v1774 = vadd.f32 %v1754, %v1773
    %1775 = vdwg.mxu0
    %1776 = vmatpush.msra.mxu0 %v892
    %1777 = vmatpush.msra.mxu0 %v884
    %1778 = vmatpush.msra.mxu0 %v876
    %1779 = vmatpush.msra.mxu0 %v868
    %1780 = vmatpush.msra.mxu0 %v860
    %1781 = vmatpush.msra.mxu0 %v852
    %1782 = vmatpush.msra.mxu0 %v844
    %1783 = vmatpush.msra.mxu0 %v836
    %1784 = vmatpush.msra.mxu0 %v828
    %1785 = vmatpush.msra.mxu0 %v820
    %1786 = vmatpush.msra.mxu0 %v812
    %1787 = vmatpush.msra.mxu0 %v804
    %1788 = vmatpush.msra.mxu0 %v796
    %1789 = vmatpush.msra.mxu0 %v788
    %1790 = vmatpush.msra.mxu0 %v780
    %1791 = vmatpush.msra.mxu0 %v772
    %1792 = vmatmul.f32.gmra.mxu0 %v762
    %v1793 = vpop.f32.mrf.mxu0
    %v1794 = vadd.f32 %v1286, %v1793
    %1795 = vdwg.mxu0
    %1796 = vmatpush.msra.mxu0 %v1020
    %1797 = vmatpush.msra.mxu0 %v1012
    %1798 = vmatpush.msra.mxu0 %v1004
    %1799 = vmatpush.msra.mxu0 %v996
    %1800 = vmatpush.msra.mxu0 %v988
    %1801 = vmatpush.msra.mxu0 %v980
    %1802 = vmatpush.msra.mxu0 %v972
    %1803 = vmatpush.msra.mxu0 %v964
    %1804 = vmatpush.msra.mxu0 %v956
    %1805 = vmatpush.msra.mxu0 %v948
    %1806 = vmatpush.msra.mxu0 %v940
    %1807 = vmatpush.msra.mxu0 %v932
    %1808 = vmatpush.msra.mxu0 %v924
    %1809 = vmatpush.msra.mxu0 %v916
    %1810 = vmatpush.msra.mxu0 %v908
    %1811 = vmatpush.msra.mxu0 %v900
    %1812 = vmatmul.f32.gmra.mxu0 %v763
    %v1813 = vpop.f32.mrf.mxu0
    %v1814 = vadd.f32 %v1794, %v1813
    %1815 = vdwg.mxu0
    %1816 = vmatpush.msra.mxu0 %v1148
    %1817 = vmatpush.msra.mxu0 %v1140
    %1818 = vmatpush.msra.mxu0 %v1132
    %1819 = vmatpush.msra.mxu0 %v1124
    %1820 = vmatpush.msra.mxu0 %v1116
    %1821 = vmatpush.msra.mxu0 %v1108
    %1822 = vmatpush.msra.mxu0 %v1100
    %1823 = vmatpush.msra.mxu0 %v1092
    %1824 = vmatpush.msra.mxu0 %v1084
    %1825 = vmatpush.msra.mxu0 %v1076
    %1826 = vmatpush.msra.mxu0 %v1068
    %1827 = vmatpush.msra.mxu0 %v1060
    %1828 = vmatpush.msra.mxu0 %v1052
    %1829 = vmatpush.msra.mxu0 %v1044
    %1830 = vmatpush.msra.mxu0 %v1036
    %1831 = vmatpush.msra.mxu0 %v1028
    %1832 = vmatmul.f32.gmra.mxu0 0.0
    %v1833 = vpop.f32.mrf.mxu0
    %v1834 = vadd.f32 %v1814, %v1833
    %1835 = vdwg.mxu0
    %1836 = vmatpush.msra.mxu0 %v1276
    %1837 = vmatpush.msra.mxu0 %v1268
    %1838 = vmatpush.msra.mxu0 %v1260
    %1839 = vmatpush.msra.mxu0 %v1252
    %1840 = vmatpush.msra.mxu0 %v1244
    %1841 = vmatpush.msra.mxu0 %v1236
    %1842 = vmatpush.msra.mxu0 %v1228
    %1843 = vmatpush.msra.mxu0 %v1220
    %1844 = vmatpush.msra.mxu0 %v1212
    %1845 = vmatpush.msra.mxu0 %v1204
    %1846 = vmatpush.msra.mxu0 %v1196
    %1847 = vmatpush.msra.mxu0 %v1188
    %1848 = vmatpush.msra.mxu0 %v1180
    %1849 = vmatpush.msra.mxu0 %v1172
    %1850 = vmatpush.msra.mxu0 %v1164
    %1851 = vmatpush.msra.mxu0 %v1156
    %1852 = vmatmul.f32.gmra.mxu0 0.0
    %v1853 = vpop.f32.mrf.mxu0
    %v1854 = vadd.f32 %v1834, %v1853
    %1855 = vdwg.mxu0
    %1856 = vmatpush.msra.mxu0 %v893
    %1857 = vmatpush.msra.mxu0 %v885
    %1858 = vmatpush.msra.mxu0 %v877
    %1859 = vmatpush.msra.mxu0 %v869
    %1860 = vmatpush.msra.mxu0 %v861
    %1861 = vmatpush.msra.mxu0 %v853
    %1862 = vmatpush.msra.mxu0 %v845
    %1863 = vmatpush.msra.mxu0 %v837
    %1864 = vmatpush.msra.mxu0 %v829
    %1865 = vmatpush.msra.mxu0 %v821
    %1866 = vmatpush.msra.mxu0 %v813
    %1867 = vmatpush.msra.mxu0 %v805
    %1868 = vmatpush.msra.mxu0 %v797
    %1869 = vmatpush.msra.mxu0 %v789
    %1870 = vmatpush.msra.mxu0 %v781
    %1871 = vmatpush.msra.mxu0 %v773
    %1872 = vmatmul.f32.gmra.mxu0 %v762
    %v1873 = vpop.f32.mrf.mxu0
    %v1874 = vadd.f32 %v1287, %v1873
    %1875 = vdwg.mxu0
    %1876 = vmatpush.msra.mxu0 %v1021
    %1877 = vmatpush.msra.mxu0 %v1013
    %1878 = vmatpush.msra.mxu0 %v1005
    %1879 = vmatpush.msra.mxu0 %v997
    %1880 = vmatpush.msra.mxu0 %v989
    %1881 = vmatpush.msra.mxu0 %v981
    %1882 = vmatpush.msra.mxu0 %v973
    %1883 = vmatpush.msra.mxu0 %v965
    %1884 = vmatpush.msra.mxu0 %v957
    %1885 = vmatpush.msra.mxu0 %v949
    %1886 = vmatpush.msra.mxu0 %v941
    %1887 = vmatpush.msra.mxu0 %v933
    %1888 = vmatpush.msra.mxu0 %v925
    %1889 = vmatpush.msra.mxu0 %v917
    %1890 = vmatpush.msra.mxu0 %v909
    %1891 = vmatpush.msra.mxu0 %v901
    %1892 = vmatmul.f32.gmra.mxu0 %v763
    %v1893 = vpop.f32.mrf.mxu0
    %v1894 = vadd.f32 %v1874, %v1893
    %1895 = vdwg.mxu0
    %1896 = vmatpush.msra.mxu0 %v1149
    %1897 = vmatpush.msra.mxu0 %v1141
    %1898 = vmatpush.msra.mxu0 %v1133
    %1899 = vmatpush.msra.mxu0 %v1125
    %1900 = vmatpush.msra.mxu0 %v1117
    %1901 = vmatpush.msra.mxu0 %v1109
    %1902 = vmatpush.msra.mxu0 %v1101
    %1903 = vmatpush.msra.mxu0 %v1093
    %1904 = vmatpush.msra.mxu0 %v1085
    %1905 = vmatpush.msra.mxu0 %v1077
    %1906 = vmatpush.msra.mxu0 %v1069
    %1907 = vmatpush.msra.mxu0 %v1061
    %1908 = vmatpush.msra.mxu0 %v1053
    %1909 = vmatpush.msra.mxu0 %v1045
    %1910 = vmatpush.msra.mxu0 %v1037
    %1911 = vmatpush.msra.mxu0 %v1029
    %1912 = vmatmul.f32.gmra.mxu0 0.0
    %v1913 = vpop.f32.mrf.mxu0
    %v1914 = vadd.f32 %v1894, %v1913
    %1915 = vdwg.mxu0
    %1916 = vmatpush.msra.mxu0 %v1277
    %1917 = vmatpush.msra.mxu0 %v1269
    %1918 = vmatpush.msra.mxu0 %v1261
    %1919 = vmatpush.msra.mxu0 %v1253
    %1920 = vmatpush.msra.mxu0 %v1245
    %1921 = vmatpush.msra.mxu0 %v1237
    %1922 = vmatpush.msra.mxu0 %v1229
    %1923 = vmatpush.msra.mxu0 %v1221
    %1924 = vmatpush.msra.mxu0 %v1213
    %1925 = vmatpush.msra.mxu0 %v1205
    %1926 = vmatpush.msra.mxu0 %v1197
    %1927 = vmatpush.msra.mxu0 %v1189
    %1928 = vmatpush.msra.mxu0 %v1181
    %1929 = vmatpush.msra.mxu0 %v1173
    %1930 = vmatpush.msra.mxu0 %v1165
    %1931 = vmatpush.msra.mxu0 %v1157
    %1932 = vmatmul.f32.gmra.mxu0 0.0
    %v1933 = vpop.f32.mrf.mxu0
    %v1934 = vadd.f32 %v1914, %v1933
    %1935 = vdwg.mxu0
    %v1936 = vxor.u32 %v1374, 2147483648
    %v1937 = vxor.u32 %v1454, 2147483648
    %v1938 = vmul.f32 %v1936, 1.442695
    %v1939 = vpow.pop %v1938
    %v1940 = vmul.f32 %v1937, 1.442695
    %v1941 = vpow.pop %v1940
    %v1942 = vadd.f32 %v1939, 1.0
    %v1943 = vadd.f32 %v1941, 1.0
    %v1944 = vrcp.pop %v1942
    %v1945 = vmul.f32 %v1942, %v1944
    %v1946 = vsub.f32 1.0, %v1945
    %v1947 = vmul.f32 %v1944, %v1946
    %v1948 = vadd.f32 %v1944, %v1947
    %vm1949 = vweird.f32 %v1942
    %vm1950 = vweird.f32 %v1944
    %vm1951 = vmor %vm1949, %vm1950
    %v1952 = vsel %vm1951, %v1944, %v1948
    %v1953 = vand.u32 2147483647, %v1942
    %vm1954 = vcmp.eq.f32.partialorder %v1953, 8.507059e+37
    %v1955 = vand.u32 %v1942, 2147483648
    %v1956 = vor.u32 1.1754944e-38, %v1955
    %v1957 = vsel %vm1954, %v1956, %v1952
    %v1958 = vmul.f32 1.0, %v1957
    %v1959 = vrcp.pop %v1943
    %v1960 = vmul.f32 %v1943, %v1959
    %v1961 = vsub.f32 1.0, %v1960
    %v1962 = vmul.f32 %v1959, %v1961
    %v1963 = vadd.f32 %v1959, %v1962
    %vm1964 = vweird.f32 %v1943
    %vm1965 = vweird.f32 %v1959
    %vm1966 = vmor %vm1964, %vm1965
    %v1967 = vsel %vm1966, %v1959, %v1963
    %v1968 = vand.u32 2147483647, %v1943
    %vm1969 = vcmp.eq.f32.partialorder %v1968, 8.507059e+37
    %v1970 = vand.u32 %v1943, 2147483648
    %v1971 = vor.u32 1.1754944e-38, %v1970
    %v1972 = vsel %vm1969, %v1971, %v1967
    %v1973 = vmul.f32 1.0, %v1972
    %v1974 = vxor.u32 %v1534, 2147483648
    %v1975 = vxor.u32 %v1614, 2147483648
    %v1976 = vmul.f32 %v1974, 1.442695
    %v1977 = vpow.pop %v1976
    %v1978 = vmul.f32 %v1975, 1.442695
    %v1979 = vpow.pop %v1978
    %v1980 = vadd.f32 %v1977, 1.0
    %v1981 = vadd.f32 %v1979, 1.0
    %v1982 = vrcp.pop %v1980
    %v1983 = vmul.f32 %v1980, %v1982
    %v1984 = vsub.f32 1.0, %v1983
    %v1985 = vmul.f32 %v1982, %v1984
    %v1986 = vadd.f32 %v1982, %v1985
    %vm1987 = vweird.f32 %v1980
    %vm1988 = vweird.f32 %v1982
    %vm1989 = vmor %vm1987, %vm1988
    %v1990 = vsel %vm1989, %v1982, %v1986
    %v1991 = vand.u32 2147483647, %v1980
    %vm1992 = vcmp.eq.f32.partialorder %v1991, 8.507059e+37
    %v1993 = vand.u32 %v1980, 2147483648
    %v1994 = vor.u32 1.1754944e-38, %v1993
    %v1995 = vsel %vm1992, %v1994, %v1990
    %v1996 = vmul.f32 1.0, %v1995
    %v1997 = vrcp.pop %v1981
    %v1998 = vmul.f32 %v1981, %v1997
    %v1999 = vsub.f32 1.0, %v1998
    %v2000 = vmul.f32 %v1997, %v1999
    %v2001 = vadd.f32 %v1997, %v2000
    %vm2002 = vweird.f32 %v1981
    %vm2003 = vweird.f32 %v1997
    %vm2004 = vmor %vm2002, %vm2003
    %v2005 = vsel %vm2004, %v1997, %v2001
    %v2006 = vand.u32 2147483647, %v1981
    %vm2007 = vcmp.eq.f32.partialorder %v2006, 8.507059e+37
    %v2008 = vand.u32 %v1981, 2147483648
    %v2009 = vor.u32 1.1754944e-38, %v2008
    %v2010 = vsel %vm2007, %v2009, %v2005
    %v2011 = vmul.f32 1.0, %v2010
    %v2012 = vtanh.pop %v1694
    %v2013 = vtanh.pop %v1774
    %v2014 = vxor.u32 %v1854, 2147483648
    %v2015 = vxor.u32 %v1934, 2147483648
    %v2016 = vmul.f32 %v2014, 1.442695
    %v2017 = vpow.pop %v2016
    %v2018 = vmul.f32 %v2015, 1.442695
    %v2019 = vpow.pop %v2018
    %v2020 = vadd.f32 %v2017, 1.0
    %v2021 = vadd.f32 %v2019, 1.0
    %v2022 = vrcp.pop %v2020
    %v2023 = vmul.f32 %v2020, %v2022
    %v2024 = vsub.f32 1.0, %v2023
    %v2025 = vmul.f32 %v2022, %v2024
    %v2026 = vadd.f32 %v2022, %v2025
    %vm2027 = vweird.f32 %v2020
    %vm2028 = vweird.f32 %v2022
    %vm2029 = vmor %vm2027, %vm2028
    %v2030 = vsel %vm2029, %v2022, %v2026
    %v2031 = vand.u32 2147483647, %v2020
    %vm2032 = vcmp.eq.f32.partialorder %v2031, 8.507059e+37
    %v2033 = vand.u32 %v2020, 2147483648
    %v2034 = vor.u32 1.1754944e-38, %v2033
    %v2035 = vsel %vm2032, %v2034, %v2030
    %v2036 = vmul.f32 1.0, %v2035
    %v2037 = vrcp.pop %v2021
    %v2038 = vmul.f32 %v2021, %v2037
    %v2039 = vsub.f32 1.0, %v2038
    %v2040 = vmul.f32 %v2037, %v2039
    %v2041 = vadd.f32 %v2037, %v2040
    %vm2042 = vweird.f32 %v2021
    %vm2043 = vweird.f32 %v2037
    %vm2044 = vmor %vm2042, %vm2043
    %v2045 = vsel %vm2044, %v2037, %v2041
    %v2046 = vand.u32 2147483647, %v2021
    %vm2047 = vcmp.eq.f32.partialorder %v2046, 8.507059e+37
    %v2048 = vand.u32 %v2021, 2147483648
    %v2049 = vor.u32 1.1754944e-38, %v2048
    %v2050 = vsel %vm2047, %v2049, %v2045
    %v2051 = vmul.f32 1.0, %v2050
    %v2052 = vmul.f32 %v1996, 0.0
    %v2053 = vmul.f32 %v2011, 0.0
    %v2054 = vmul.f32 %v1958, %v2012
    %v2055 = vmul.f32 %v1973, %v2013
    %v2056 = vadd.f32 %v2052, %v2054
    %v2057 = vadd.f32 %v2053, %v2055
    %v2058 = vtanh.pop %v2056
    %v2059 = vtanh.pop %v2057
    %v2060 = vmul.f32 %v2036, %v2058
    %v2061 = vmul.f32 %v2051, %v2059
    %s2062 = scalar_lea.vmem [#allocation3], 16
    %v2063 = vld [vmem:[%s2062] sm:$0xff]
    %v2064 = vld [vmem:[%s2062 + $0x8] sm:$0xff]
    %2065 = vst [vmem:[#allocation1] ss:$4 sm:$0xff] %v759
    %v2066 = vld.sshfl [vmem:[#allocation1] sm:$0xff pattern:$0x73625140]
    %v2067 = vld.sshfl [vmem:[#allocation1 + $0x8] sm:$0xff pattern:$0x73625140]
    %2070 = vmatpush.msra.mxu0 %v208
    %2071 = vmatpush.msra.mxu0 %v200
    %2072 = vmatpush.msra.mxu0 %v192
    %2073 = vmatpush.msra.mxu0 %v184
    %2074 = vmatpush.msra.mxu0 %v176
    %2075 = vmatpush.msra.mxu0 %v168
    %2076 = vmatpush.msra.mxu0 %v160
    %2077 = vmatpush.msra.mxu0 %v152
    %2078 = vmatpush.msra.mxu0 %v144
    %2079 = vmatpush.msra.mxu0 %v136
    %2080 = vmatpush.msra.mxu0 %v128
    %2081 = vmatpush.msra.mxu0 %v120
    %2082 = vmatpush.msra.mxu0 %v112
    %2083 = vmatpush.msra.mxu0 %v104
    %2084 = vmatpush.msra.mxu0 %v96
    %2085 = vmatpush.msra.mxu0 %v88
    %2086 = vmatmul.f32.gmra.mxu0 %v2066
    %v2087 = vpop.f32.mrf.mxu0
    %v2088 = vadd.f32 0.0, %v2087
    %2089 = vdwg.mxu0
    %2090 = vmatpush.msra.mxu0 %v336
    %2091 = vmatpush.msra.mxu0 %v328
    %2092 = vmatpush.msra.mxu0 %v320
    %2093 = vmatpush.msra.mxu0 %v312
    %2094 = vmatpush.msra.mxu0 %v304
    %2095 = vmatpush.msra.mxu0 %v296
    %2096 = vmatpush.msra.mxu0 %v288
    %2097 = vmatpush.msra.mxu0 %v280
    %2098 = vmatpush.msra.mxu0 %v272
    %2099 = vmatpush.msra.mxu0 %v264
    %2100 = vmatpush.msra.mxu0 %v256
    %2101 = vmatpush.msra.mxu0 %v248
    %2102 = vmatpush.msra.mxu0 %v240
    %2103 = vmatpush.msra.mxu0 %v232
    %2104 = vmatpush.msra.mxu0 %v224
    %2105 = vmatpush.msra.mxu0 %v216
    %2106 = vmatmul.f32.gmra.mxu0 %v2067
    %v2107 = vpop.f32.mrf.mxu0
    %v2108 = vadd.f32 %v2088, %v2107
    %2109 = vdwg.mxu0
    %2110 = vmatpush.msra.mxu0 %v209
    %2111 = vmatpush.msra.mxu0 %v201
    %2112 = vmatpush.msra.mxu0 %v193
    %2113 = vmatpush.msra.mxu0 %v185
    %2114 = vmatpush.msra.mxu0 %v177
    %2115 = vmatpush.msra.mxu0 %v169
    %2116 = vmatpush.msra.mxu0 %v161
    %2117 = vmatpush.msra.mxu0 %v153
    %2118 = vmatpush.msra.mxu0 %v145
    %2119 = vmatpush.msra.mxu0 %v137
    %2120 = vmatpush.msra.mxu0 %v129
    %2121 = vmatpush.msra.mxu0 %v121
    %2122 = vmatpush.msra.mxu0 %v113
    %2123 = vmatpush.msra.mxu0 %v105
    %2124 = vmatpush.msra.mxu0 %v97
    %2125 = vmatpush.msra.mxu0 %v89
    %2126 = vmatmul.f32.gmra.mxu0 %v2066
    %v2127 = vpop.f32.mrf.mxu0
    %v2128 = vadd.f32 0.0, %v2127
    %2129 = vdwg.mxu0
    %2130 = vmatpush.msra.mxu0 %v337
    %2131 = vmatpush.msra.mxu0 %v329
    %2132 = vmatpush.msra.mxu0 %v321
    %2133 = vmatpush.msra.mxu0 %v313
    %2134 = vmatpush.msra.mxu0 %v305
    %2135 = vmatpush.msra.mxu0 %v297
    %2136 = vmatpush.msra.mxu0 %v289
    %2137 = vmatpush.msra.mxu0 %v281
    %2138 = vmatpush.msra.mxu0 %v273
    %2139 = vmatpush.msra.mxu0 %v265
    %2140 = vmatpush.msra.mxu0 %v257
    %2141 = vmatpush.msra.mxu0 %v249
    %2142 = vmatpush.msra.mxu0 %v241
    %2143 = vmatpush.msra.mxu0 %v233
    %2144 = vmatpush.msra.mxu0 %v225
    %2145 = vmatpush.msra.mxu0 %v217
    %2146 = vmatmul.f32.gmra.mxu0 %v2067
    %v2147 = vpop.f32.mrf.mxu0
    %v2148 = vadd.f32 %v2128, %v2147
    %2149 = vdwg.mxu0
    %2150 = vmatpush.msra.mxu0 %v210
    %2151 = vmatpush.msra.mxu0 %v202
    %2152 = vmatpush.msra.mxu0 %v194
    %2153 = vmatpush.msra.mxu0 %v186
    %2154 = vmatpush.msra.mxu0 %v178
    %2155 = vmatpush.msra.mxu0 %v170
    %2156 = vmatpush.msra.mxu0 %v162
    %2157 = vmatpush.msra.mxu0 %v154
    %2158 = vmatpush.msra.mxu0 %v146
    %2159 = vmatpush.msra.mxu0 %v138
    %2160 = vmatpush.msra.mxu0 %v130
    %2161 = vmatpush.msra.mxu0 %v122
    %2162 = vmatpush.msra.mxu0 %v114
    %2163 = vmatpush.msra.mxu0 %v106
    %2164 = vmatpush.msra.mxu0 %v98
    %2165 = vmatpush.msra.mxu0 %v90
    %2166 = vmatmul.f32.gmra.mxu0 %v2066
    %v2167 = vpop.f32.mrf.mxu0
    %v2168 = vadd.f32 0.0, %v2167
    %2169 = vdwg.mxu0
    %2170 = vmatpush.msra.mxu0 %v338
    %2171 = vmatpush.msra.mxu0 %v330
    %2172 = vmatpush.msra.mxu0 %v322
    %2173 = vmatpush.msra.mxu0 %v314
    %2174 = vmatpush.msra.mxu0 %v306
    %2175 = vmatpush.msra.mxu0 %v298
    %2176 = vmatpush.msra.mxu0 %v290
    %2177 = vmatpush.msra.mxu0 %v282
    %2178 = vmatpush.msra.mxu0 %v274
    %2179 = vmatpush.msra.mxu0 %v266
    %2180 = vmatpush.msra.mxu0 %v258
    %2181 = vmatpush.msra.mxu0 %v250
    %2182 = vmatpush.msra.mxu0 %v242
    %2183 = vmatpush.msra.mxu0 %v234
    %2184 = vmatpush.msra.mxu0 %v226
    %2185 = vmatpush.msra.mxu0 %v218
    %2186 = vmatmul.f32.gmra.mxu0 %v2067
    %v2187 = vpop.f32.mrf.mxu0
    %v2188 = vadd.f32 %v2168, %v2187
    %2189 = vdwg.mxu0
    %2190 = vmatpush.msra.mxu0 %v211
    %2191 = vmatpush.msra.mxu0 %v203
    %2192 = vmatpush.msra.mxu0 %v195
    %2193 = vmatpush.msra.mxu0 %v187
    %2194 = vmatpush.msra.mxu0 %v179
    %2195 = vmatpush.msra.mxu0 %v171
    %2196 = vmatpush.msra.mxu0 %v163
    %2197 = vmatpush.msra.mxu0 %v155
    %2198 = vmatpush.msra.mxu0 %v147
    %2199 = vmatpush.msra.mxu0 %v139
    %2200 = vmatpush.msra.mxu0 %v131
    %2201 = vmatpush.msra.mxu0 %v123
    %2202 = vmatpush.msra.mxu0 %v115
    %2203 = vmatpush.msra.mxu0 %v107
    %2204 = vmatpush.msra.mxu0 %v99
    %2205 = vmatpush.msra.mxu0 %v91
    %2206 = vmatmul.f32.gmra.mxu0 %v2066
    %v2207 = vpop.f32.mrf.mxu0
    %v2208 = vadd.f32 0.0, %v2207
    %2209 = vdwg.mxu0
    %2210 = vmatpush.msra.mxu0 %v339
    %2211 = vmatpush.msra.mxu0 %v331
    %2212 = vmatpush.msra.mxu0 %v323
    %2213 = vmatpush.msra.mxu0 %v315
    %2214 = vmatpush.msra.mxu0 %v307
    %2215 = vmatpush.msra.mxu0 %v299
    %2216 = vmatpush.msra.mxu0 %v291
    %2217 = vmatpush.msra.mxu0 %v283
    %2218 = vmatpush.msra.mxu0 %v275
    %2219 = vmatpush.msra.mxu0 %v267
    %2220 = vmatpush.msra.mxu0 %v259
    %2221 = vmatpush.msra.mxu0 %v251
    %2222 = vmatpush.msra.mxu0 %v243
    %2223 = vmatpush.msra.mxu0 %v235
    %2224 = vmatpush.msra.mxu0 %v227
    %2225 = vmatpush.msra.mxu0 %v219
    %2226 = vmatmul.f32.gmra.mxu0 %v2067
    %v2227 = vpop.f32.mrf.mxu0
    %v2228 = vadd.f32 %v2208, %v2227
    %2229 = vdwg.mxu0
    %2230 = vmatpush.msra.mxu0 %v212
    %2231 = vmatpush.msra.mxu0 %v204
    %2232 = vmatpush.msra.mxu0 %v196
    %2233 = vmatpush.msra.mxu0 %v188
    %2234 = vmatpush.msra.mxu0 %v180
    %2235 = vmatpush.msra.mxu0 %v172
    %2236 = vmatpush.msra.mxu0 %v164
    %2237 = vmatpush.msra.mxu0 %v156
    %2238 = vmatpush.msra.mxu0 %v148
    %2239 = vmatpush.msra.mxu0 %v140
    %2240 = vmatpush.msra.mxu0 %v132
    %2241 = vmatpush.msra.mxu0 %v124
    %2242 = vmatpush.msra.mxu0 %v116
    %2243 = vmatpush.msra.mxu0 %v108
    %2244 = vmatpush.msra.mxu0 %v100
    %2245 = vmatpush.msra.mxu0 %v92
    %2246 = vmatmul.f32.gmra.mxu0 %v2066
    %v2247 = vpop.f32.mrf.mxu0
    %v2248 = vadd.f32 0.0, %v2247
    %2249 = vdwg.mxu0
    %2250 = vmatpush.msra.mxu0 %v340
    %2251 = vmatpush.msra.mxu0 %v332
    %2252 = vmatpush.msra.mxu0 %v324
    %2253 = vmatpush.msra.mxu0 %v316
    %2254 = vmatpush.msra.mxu0 %v308
    %2255 = vmatpush.msra.mxu0 %v300
    %2256 = vmatpush.msra.mxu0 %v292
    %2257 = vmatpush.msra.mxu0 %v284
    %2258 = vmatpush.msra.mxu0 %v276
    %2259 = vmatpush.msra.mxu0 %v268
    %2260 = vmatpush.msra.mxu0 %v260
    %2261 = vmatpush.msra.mxu0 %v252
    %2262 = vmatpush.msra.mxu0 %v244
    %2263 = vmatpush.msra.mxu0 %v236
    %2264 = vmatpush.msra.mxu0 %v228
    %2265 = vmatpush.msra.mxu0 %v220
    %2266 = vmatmul.f32.gmra.mxu0 %v2067
    %v2267 = vpop.f32.mrf.mxu0
    %v2268 = vadd.f32 %v2248, %v2267
    %2269 = vdwg.mxu0
    %2270 = vmatpush.msra.mxu0 %v213
    %2271 = vmatpush.msra.mxu0 %v205
    %2272 = vmatpush.msra.mxu0 %v197
    %2273 = vmatpush.msra.mxu0 %v189
    %2274 = vmatpush.msra.mxu0 %v181
    %2275 = vmatpush.msra.mxu0 %v173
    %2276 = vmatpush.msra.mxu0 %v165
    %2277 = vmatpush.msra.mxu0 %v157
    %2278 = vmatpush.msra.mxu0 %v149
    %2279 = vmatpush.msra.mxu0 %v141
    %2280 = vmatpush.msra.mxu0 %v133
    %2281 = vmatpush.msra.mxu0 %v125
    %2282 = vmatpush.msra.mxu0 %v117
    %2283 = vmatpush.msra.mxu0 %v109
    %2284 = vmatpush.msra.mxu0 %v101
    %2285 = vmatpush.msra.mxu0 %v93
    %2286 = vmatmul.f32.gmra.mxu0 %v2066
    %v2287 = vpop.f32.mrf.mxu0
    %v2288 = vadd.f32 0.0, %v2287
    %2289 = vdwg.mxu0
    %2290 = vmatpush.msra.mxu0 %v341
    %2291 = vmatpush.msra.mxu0 %v333
    %2292 = vmatpush.msra.mxu0 %v325
    %2293 = vmatpush.msra.mxu0 %v317
    %2294 = vmatpush.msra.mxu0 %v309
    %2295 = vmatpush.msra.mxu0 %v301
    %2296 = vmatpush.msra.mxu0 %v293
    %2297 = vmatpush.msra.mxu0 %v285
    %2298 = vmatpush.msra.mxu0 %v277
    %2299 = vmatpush.msra.mxu0 %v269
    %2300 = vmatpush.msra.mxu0 %v261
    %2301 = vmatpush.msra.mxu0 %v253
    %2302 = vmatpush.msra.mxu0 %v245
    %2303 = vmatpush.msra.mxu0 %v237
    %2304 = vmatpush.msra.mxu0 %v229
    %2305 = vmatpush.msra.mxu0 %v221
    %2306 = vmatmul.f32.gmra.mxu0 %v2067
    %v2307 = vpop.f32.mrf.mxu0
    %v2308 = vadd.f32 %v2288, %v2307
    %2309 = vdwg.mxu0
    %2310 = vmatpush.msra.mxu0 %v214
    %2311 = vmatpush.msra.mxu0 %v206
    %2312 = vmatpush.msra.mxu0 %v198
    %2313 = vmatpush.msra.mxu0 %v190
    %2314 = vmatpush.msra.mxu0 %v182
    %2315 = vmatpush.msra.mxu0 %v174
    %2316 = vmatpush.msra.mxu0 %v166
    %2317 = vmatpush.msra.mxu0 %v158
    %2318 = vmatpush.msra.mxu0 %v150
    %2319 = vmatpush.msra.mxu0 %v142
    %2320 = vmatpush.msra.mxu0 %v134
    %2321 = vmatpush.msra.mxu0 %v126
    %2322 = vmatpush.msra.mxu0 %v118
    %2323 = vmatpush.msra.mxu0 %v110
    %2324 = vmatpush.msra.mxu0 %v102
    %2325 = vmatpush.msra.mxu0 %v94
    %2326 = vmatmul.f32.gmra.mxu0 %v2066
    %v2327 = vpop.f32.mrf.mxu0
    %v2328 = vadd.f32 0.0, %v2327
    %2329 = vdwg.mxu0
    %2330 = vmatpush.msra.mxu0 %v342
    %2331 = vmatpush.msra.mxu0 %v334
    %2332 = vmatpush.msra.mxu0 %v326
    %2333 = vmatpush.msra.mxu0 %v318
    %2334 = vmatpush.msra.mxu0 %v310
    %2335 = vmatpush.msra.mxu0 %v302
    %2336 = vmatpush.msra.mxu0 %v294
    %2337 = vmatpush.msra.mxu0 %v286
    %2338 = vmatpush.msra.mxu0 %v278
    %2339 = vmatpush.msra.mxu0 %v270
    %2340 = vmatpush.msra.mxu0 %v262
    %2341 = vmatpush.msra.mxu0 %v254
    %2342 = vmatpush.msra.mxu0 %v246
    %2343 = vmatpush.msra.mxu0 %v238
    %2344 = vmatpush.msra.mxu0 %v230
    %2345 = vmatpush.msra.mxu0 %v222
    %2346 = vmatmul.f32.gmra.mxu0 %v2067
    %v2347 = vpop.f32.mrf.mxu0
    %v2348 = vadd.f32 %v2328, %v2347
    %2349 = vdwg.mxu0
    %2350 = vmatpush.msra.mxu0 %v215
    %2351 = vmatpush.msra.mxu0 %v207
    %2352 = vmatpush.msra.mxu0 %v199
    %2353 = vmatpush.msra.mxu0 %v191
    %2354 = vmatpush.msra.mxu0 %v183
    %2355 = vmatpush.msra.mxu0 %v175
    %2356 = vmatpush.msra.mxu0 %v167
    %2357 = vmatpush.msra.mxu0 %v159
    %2358 = vmatpush.msra.mxu0 %v151
    %2359 = vmatpush.msra.mxu0 %v143
    %2360 = vmatpush.msra.mxu0 %v135
    %2361 = vmatpush.msra.mxu0 %v127
    %2362 = vmatpush.msra.mxu0 %v119
    %2363 = vmatpush.msra.mxu0 %v111
    %2364 = vmatpush.msra.mxu0 %v103
    %2365 = vmatpush.msra.mxu0 %v95
    %2366 = vmatmul.f32.gmra.mxu0 %v2066
    %v2367 = vpop.f32.mrf.mxu0
    %v2368 = vadd.f32 0.0, %v2367
    %2369 = vdwg.mxu0
    %2370 = vmatpush.msra.mxu0 %v343
    %2371 = vmatpush.msra.mxu0 %v335
    %2372 = vmatpush.msra.mxu0 %v327
    %2373 = vmatpush.msra.mxu0 %v319
    %2374 = vmatpush.msra.mxu0 %v311
    %2375 = vmatpush.msra.mxu0 %v303
    %2376 = vmatpush.msra.mxu0 %v295
    %2377 = vmatpush.msra.mxu0 %v287
    %2378 = vmatpush.msra.mxu0 %v279
    %2379 = vmatpush.msra.mxu0 %v271
    %2380 = vmatpush.msra.mxu0 %v263
    %2381 = vmatpush.msra.mxu0 %v255
    %2382 = vmatpush.msra.mxu0 %v247
    %2383 = vmatpush.msra.mxu0 %v239
    %2384 = vmatpush.msra.mxu0 %v231
    %2385 = vmatpush.msra.mxu0 %v223
    %2386 = vmatmul.f32.gmra.mxu0 %v2067
    %v2387 = vpop.f32.mrf.mxu0
    %v2388 = vadd.f32 %v2368, %v2387
    %2389 = vdwg.mxu0
    %v2398 = vrot.slane %v2148, 6
    %v2399 = vrot.slane %v2188, 4
    %v2400 = vrot.slane %v2228, 2
    %v2401 = vrot.slane %v2308, 6
    %v2402 = vrot.slane %v2348, 4
    %v2403 = vrot.slane %v2388, 2
    %v2404 = vsel %vm678, %v2108, %v2398
    %v2405 = vsel %vm680, %v2399, %v2400
    %v2406 = vsel %vm682, %v2404, %v2405
    %v2407 = vsel %vm678, %v2268, %v2401
    %v2408 = vsel %vm680, %v2402, %v2403
    %v2409 = vsel %vm682, %v2407, %v2408
    %v2412 = vadd.f32 %v2063, %v2406
    %v2413 = vadd.f32 %v2064, %v2409
    %v2414 = vxor.u32 %v2412, 2147483648
    %v2415 = vmul.f32 %v2414, 1.442695
    %v2416 = vpow.pop %v2415
    %v2417 = vadd.f32 %v2416, 1.0
    %v2418 = vrcp.pop %v2417
    %v2419 = vmul.f32 %v2417, %v2418
    %v2420 = vsub.f32 1.0, %v2419
    %v2421 = vmul.f32 %v2418, %v2420
    %v2422 = vadd.f32 %v2418, %v2421
    %vm2423 = vweird.f32 %v2417
    %vm2424 = vweird.f32 %v2418
    %vm2425 = vmor %vm2423, %vm2424
    %v2426 = vsel %vm2425, %v2418, %v2422
    %v2427 = vand.u32 2147483647, %v2417
    %vm2428 = vcmp.eq.f32.partialorder %v2427, 8.507059e+37
    %v2429 = vand.u32 %v2417, 2147483648
    %v2430 = vor.u32 1.1754944e-38, %v2429
    %v2431 = vsel %vm2428, %v2430, %v2426
    %v2432 = vmul.f32 1.0, %v2431
    %v2434 = vrot.slane %v2412, 4
    %v2436 = vxor.u32 %v2434, 2147483648
    %v2437 = vmul.f32 %v2436, 1.442695
    %v2438 = vpow.pop %v2437
    %v2439 = vadd.f32 %v2438, 1.0
    %v2440 = vrcp.pop %v2439
    %v2441 = vmul.f32 %v2439, %v2440
    %v2442 = vsub.f32 1.0, %v2441
    %v2443 = vmul.f32 %v2440, %v2442
    %v2444 = vadd.f32 %v2440, %v2443
    %vm2445 = vweird.f32 %v2439
    %vm2446 = vweird.f32 %v2440
    %vm2447 = vmor %vm2445, %vm2446
    %v2448 = vsel %vm2447, %v2440, %v2444
    %v2449 = vand.u32 2147483647, %v2439
    %vm2450 = vcmp.eq.f32.partialorder %v2449, 8.507059e+37
    %v2451 = vand.u32 %v2439, 2147483648
    %v2452 = vor.u32 1.1754944e-38, %v2451
    %v2453 = vsel %vm2450, %v2452, %v2448
    %v2454 = vmul.f32 1.0, %v2453
    %v2455 = vtanh.pop %v2413
    %v2457 = vrot.slane %v2413, 4
    %v2459 = vxor.u32 %v2457, 2147483648
    %v2460 = vmul.f32 %v2459, 1.442695
    %v2461 = vpow.pop %v2460
    %v2462 = vadd.f32 %v2461, 1.0
    %v2463 = vrcp.pop %v2462
    %v2464 = vmul.f32 %v2462, %v2463
    %v2465 = vsub.f32 1.0, %v2464
    %v2466 = vmul.f32 %v2463, %v2465
    %v2467 = vadd.f32 %v2463, %v2466
    %vm2468 = vweird.f32 %v2462
    %vm2469 = vweird.f32 %v2463
    %vm2470 = vmor %vm2468, %vm2469
    %v2471 = vsel %vm2470, %v2463, %v2467
    %v2472 = vand.u32 2147483647, %v2462
    %vm2473 = vcmp.eq.f32.partialorder %v2472, 8.507059e+37
    %v2474 = vand.u32 %v2462, 2147483648
    %v2475 = vor.u32 1.1754944e-38, %v2474
    %v2476 = vsel %vm2473, %v2475, %v2471
    %v2477 = vmul.f32 1.0, %v2476
    %v2478 = vmul.f32 %v2454, %v757
    %v2479 = vmul.f32 %v2432, %v2455
    %v2480 = vadd.f32 %v2478, %v2479
    %v2481 = vtanh.pop %v2480
    %v2482 = vmul.f32 %v2477, %v2481
    %2484 = vst [vmem:[#allocation1] ss:$4 sm:$0xff] %v2482
    %v2485 = vld.sshfl [vmem:[#allocation1] sm:$0xff pattern:$0x73625140]
    %v2486 = vld.sshfl [vmem:[#allocation1 + $0x8] sm:$0xff pattern:$0x73625140]
    %2489 = vmatpush.msra.mxu0 %v886
    %2490 = vmatpush.msra.mxu0 %v878
    %2491 = vmatpush.msra.mxu0 %v870
    %2492 = vmatpush.msra.mxu0 %v862
    %2493 = vmatpush.msra.mxu0 %v854
    %2494 = vmatpush.msra.mxu0 %v846
    %2495 = vmatpush.msra.mxu0 %v838
    %2496 = vmatpush.msra.mxu0 %v830
    %2497 = vmatpush.msra.mxu0 %v822
    %2498 = vmatpush.msra.mxu0 %v814
    %2499 = vmatpush.msra.mxu0 %v806
    %2500 = vmatpush.msra.mxu0 %v798
    %2501 = vmatpush.msra.mxu0 %v790
    %2502 = vmatpush.msra.mxu0 %v782
    %2503 = vmatpush.msra.mxu0 %v774
    %2504 = vmatpush.msra.mxu0 %v766
    %2505 = vmatmul.f32.gmra.mxu0 %v2485
    %v2506 = vpop.f32.mrf.mxu0
    %v2507 = vadd.f32 %v1280, %v2506
    %2508 = vdwg.mxu0
    %2509 = vmatpush.msra.mxu0 %v1014
    %2510 = vmatpush.msra.mxu0 %v1006
    %2511 = vmatpush.msra.mxu0 %v998
    %2512 = vmatpush.msra.mxu0 %v990
    %2513 = vmatpush.msra.mxu0 %v982
    %2514 = vmatpush.msra.mxu0 %v974
    %2515 = vmatpush.msra.mxu0 %v966
    %2516 = vmatpush.msra.mxu0 %v958
    %2517 = vmatpush.msra.mxu0 %v950
    %2518 = vmatpush.msra.mxu0 %v942
    %2519 = vmatpush.msra.mxu0 %v934
    %2520 = vmatpush.msra.mxu0 %v926
    %2521 = vmatpush.msra.mxu0 %v918
    %2522 = vmatpush.msra.mxu0 %v910
    %2523 = vmatpush.msra.mxu0 %v902
    %2524 = vmatpush.msra.mxu0 %v894
    %2525 = vmatmul.f32.gmra.mxu0 %v2486
    %v2526 = vpop.f32.mrf.mxu0
    %v2527 = vadd.f32 %v2507, %v2526
    %2528 = vdwg.mxu0
    %2529 = vmatpush.msra.mxu0 %v1142
    %2530 = vmatpush.msra.mxu0 %v1134
    %2531 = vmatpush.msra.mxu0 %v1126
    %2532 = vmatpush.msra.mxu0 %v1118
    %2533 = vmatpush.msra.mxu0 %v1110
    %2534 = vmatpush.msra.mxu0 %v1102
    %2535 = vmatpush.msra.mxu0 %v1094
    %2536 = vmatpush.msra.mxu0 %v1086
    %2537 = vmatpush.msra.mxu0 %v1078
    %2538 = vmatpush.msra.mxu0 %v1070
    %2539 = vmatpush.msra.mxu0 %v1062
    %2540 = vmatpush.msra.mxu0 %v1054
    %2541 = vmatpush.msra.mxu0 %v1046
    %2542 = vmatpush.msra.mxu0 %v1038
    %2543 = vmatpush.msra.mxu0 %v1030
    %2544 = vmatpush.msra.mxu0 %v1022
    %2545 = vmatmul.f32.gmra.mxu0 %v2060
    %v2546 = vpop.f32.mrf.mxu0
    %v2547 = vadd.f32 %v2527, %v2546
    %2548 = vdwg.mxu0
    %2549 = vmatpush.msra.mxu0 %v1270
    %2550 = vmatpush.msra.mxu0 %v1262
    %2551 = vmatpush.msra.mxu0 %v1254
    %2552 = vmatpush.msra.mxu0 %v1246
    %2553 = vmatpush.msra.mxu0 %v1238
    %2554 = vmatpush.msra.mxu0 %v1230
    %2555 = vmatpush.msra.mxu0 %v1222
    %2556 = vmatpush.msra.mxu0 %v1214
    %2557 = vmatpush.msra.mxu0 %v1206
    %2558 = vmatpush.msra.mxu0 %v1198
    %2559 = vmatpush.msra.mxu0 %v1190
    %2560 = vmatpush.msra.mxu0 %v1182
    %2561 = vmatpush.msra.mxu0 %v1174
    %2562 = vmatpush.msra.mxu0 %v1166
    %2563 = vmatpush.msra.mxu0 %v1158
    %2564 = vmatpush.msra.mxu0 %v1150
    %2565 = vmatmul.f32.gmra.mxu0 %v2061
    %v2566 = vpop.f32.mrf.mxu0
    %v2567 = vadd.f32 %v2547, %v2566
    %2568 = vdwg.mxu0
    %2569 = vmatpush.msra.mxu0 %v887
    %2570 = vmatpush.msra.mxu0 %v879
    %2571 = vmatpush.msra.mxu0 %v871
    %2572 = vmatpush.msra.mxu0 %v863
    %2573 = vmatpush.msra.mxu0 %v855
    %2574 = vmatpush.msra.mxu0 %v847
    %2575 = vmatpush.msra.mxu0 %v839
    %2576 = vmatpush.msra.mxu0 %v831
    %2577 = vmatpush.msra.mxu0 %v823
    %2578 = vmatpush.msra.mxu0 %v815
    %2579 = vmatpush.msra.mxu0 %v807
    %2580 = vmatpush.msra.mxu0 %v799
    %2581 = vmatpush.msra.mxu0 %v791
    %2582 = vmatpush.msra.mxu0 %v783
    %2583 = vmatpush.msra.mxu0 %v775
    %2584 = vmatpush.msra.mxu0 %v767
    %2585 = vmatmul.f32.gmra.mxu0 %v2485
    %v2586 = vpop.f32.mrf.mxu0
    %v2587 = vadd.f32 %v1281, %v2586
    %2588 = vdwg.mxu0
    %2589 = vmatpush.msra.mxu0 %v1015
    %2590 = vmatpush.msra.mxu0 %v1007
    %2591 = vmatpush.msra.mxu0 %v999
    %2592 = vmatpush.msra.mxu0 %v991
    %2593 = vmatpush.msra.mxu0 %v983
    %2594 = vmatpush.msra.mxu0 %v975
    %2595 = vmatpush.msra.mxu0 %v967
    %2596 = vmatpush.msra.mxu0 %v959
    %2597 = vmatpush.msra.mxu0 %v951
    %2598 = vmatpush.msra.mxu0 %v943
    %2599 = vmatpush.msra.mxu0 %v935
    %2600 = vmatpush.msra.mxu0 %v927
    %2601 = vmatpush.msra.mxu0 %v919
    %2602 = vmatpush.msra.mxu0 %v911
    %2603 = vmatpush.msra.mxu0 %v903
    %2604 = vmatpush.msra.mxu0 %v895
    %2605 = vmatmul.f32.gmra.mxu0 %v2486
    %v2606 = vpop.f32.mrf.mxu0
    %v2607 = vadd.f32 %v2587, %v2606
    %2608 = vdwg.mxu0
    %2609 = vmatpush.msra.mxu0 %v1143
    %2610 = vmatpush.msra.mxu0 %v1135
    %2611 = vmatpush.msra.mxu0 %v1127
    %2612 = vmatpush.msra.mxu0 %v1119
    %2613 = vmatpush.msra.mxu0 %v1111
    %2614 = vmatpush.msra.mxu0 %v1103
    %2615 = vmatpush.msra.mxu0 %v1095
    %2616 = vmatpush.msra.mxu0 %v1087
    %2617 = vmatpush.msra.mxu0 %v1079
    %2618 = vmatpush.msra.mxu0 %v1071
    %2619 = vmatpush.msra.mxu0 %v1063
    %2620 = vmatpush.msra.mxu0 %v1055
    %2621 = vmatpush.msra.mxu0 %v1047
    %2622 = vmatpush.msra.mxu0 %v1039
    %2623 = vmatpush.msra.mxu0 %v1031
    %2624 = vmatpush.msra.mxu0 %v1023
    %2625 = vmatmul.f32.gmra.mxu0 %v2060
    %v2626 = vpop.f32.mrf.mxu0
    %v2627 = vadd.f32 %v2607, %v2626
    %2628 = vdwg.mxu0
    %2629 = vmatpush.msra.mxu0 %v1271
    %2630 = vmatpush.msra.mxu0 %v1263
    %2631 = vmatpush.msra.mxu0 %v1255
    %2632 = vmatpush.msra.mxu0 %v1247
    %2633 = vmatpush.msra.mxu0 %v1239
    %2634 = vmatpush.msra.mxu0 %v1231
    %2635 = vmatpush.msra.mxu0 %v1223
    %2636 = vmatpush.msra.mxu0 %v1215
    %2637 = vmatpush.msra.mxu0 %v1207
    %2638 = vmatpush.msra.mxu0 %v1199
    %2639 = vmatpush.msra.mxu0 %v1191
    %2640 = vmatpush.msra.mxu0 %v1183
    %2641 = vmatpush.msra.mxu0 %v1175
    %2642 = vmatpush.msra.mxu0 %v1167
    %2643 = vmatpush.msra.mxu0 %v1159
    %2644 = vmatpush.msra.mxu0 %v1151
    %2645 = vmatmul.f32.gmra.mxu0 %v2061
    %v2646 = vpop.f32.mrf.mxu0
    %v2647 = vadd.f32 %v2627, %v2646
    %2648 = vdwg.mxu0
    %2649 = vmatpush.msra.mxu0 %v888
    %2650 = vmatpush.msra.mxu0 %v880
    %2651 = vmatpush.msra.mxu0 %v872
    %2652 = vmatpush.msra.mxu0 %v864
    %2653 = vmatpush.msra.mxu0 %v856
    %2654 = vmatpush.msra.mxu0 %v848
    %2655 = vmatpush.msra.mxu0 %v840
    %2656 = vmatpush.msra.mxu0 %v832
    %2657 = vmatpush.msra.mxu0 %v824
    %2658 = vmatpush.msra.mxu0 %v816
    %2659 = vmatpush.msra.mxu0 %v808
    %2660 = vmatpush.msra.mxu0 %v800
    %2661 = vmatpush.msra.mxu0 %v792
    %2662 = vmatpush.msra.mxu0 %v784
    %2663 = vmatpush.msra.mxu0 %v776
    %2664 = vmatpush.msra.mxu0 %v768
    %2665 = vmatmul.f32.gmra.mxu0 %v2485
    %v2666 = vpop.f32.mrf.mxu0
    %v2667 = vadd.f32 %v1282, %v2666
    %2668 = vdwg.mxu0
    %2669 = vmatpush.msra.mxu0 %v1016
    %2670 = vmatpush.msra.mxu0 %v1008
    %2671 = vmatpush.msra.mxu0 %v1000
    %2672 = vmatpush.msra.mxu0 %v992
    %2673 = vmatpush.msra.mxu0 %v984
    %2674 = vmatpush.msra.mxu0 %v976
    %2675 = vmatpush.msra.mxu0 %v968
    %2676 = vmatpush.msra.mxu0 %v960
    %2677 = vmatpush.msra.mxu0 %v952
    %2678 = vmatpush.msra.mxu0 %v944
    %2679 = vmatpush.msra.mxu0 %v936
    %2680 = vmatpush.msra.mxu0 %v928
    %2681 = vmatpush.msra.mxu0 %v920
    %2682 = vmatpush.msra.mxu0 %v912
    %2683 = vmatpush.msra.mxu0 %v904
    %2684 = vmatpush.msra.mxu0 %v896
    %2685 = vmatmul.f32.gmra.mxu0 %v2486
    %v2686 = vpop.f32.mrf.mxu0
    %v2687 = vadd.f32 %v2667, %v2686
    %2688 = vdwg.mxu0
    %2689 = vmatpush.msra.mxu0 %v1144
    %2690 = vmatpush.msra.mxu0 %v1136
    %2691 = vmatpush.msra.mxu0 %v1128
    %2692 = vmatpush.msra.mxu0 %v1120
    %2693 = vmatpush.msra.mxu0 %v1112
    %2694 = vmatpush.msra.mxu0 %v1104
    %2695 = vmatpush.msra.mxu0 %v1096
    %2696 = vmatpush.msra.mxu0 %v1088
    %2697 = vmatpush.msra.mxu0 %v1080
    %2698 = vmatpush.msra.mxu0 %v1072
    %2699 = vmatpush.msra.mxu0 %v1064
    %2700 = vmatpush.msra.mxu0 %v1056
    %2701 = vmatpush.msra.mxu0 %v1048
    %2702 = vmatpush.msra.mxu0 %v1040
    %2703 = vmatpush.msra.mxu0 %v1032
    %2704 = vmatpush.msra.mxu0 %v1024
    %2705 = vmatmul.f32.gmra.mxu0 %v2060
    %v2706 = vpop.f32.mrf.mxu0
    %v2707 = vadd.f32 %v2687, %v2706
    %2708 = vdwg.mxu0
    %2709 = vmatpush.msra.mxu0 %v1272
    %2710 = vmatpush.msra.mxu0 %v1264
    %2711 = vmatpush.msra.mxu0 %v1256
    %2712 = vmatpush.msra.mxu0 %v1248
    %2713 = vmatpush.msra.mxu0 %v1240
    %2714 = vmatpush.msra.mxu0 %v1232
    %2715 = vmatpush.msra.mxu0 %v1224
    %2716 = vmatpush.msra.mxu0 %v1216
    %2717 = vmatpush.msra.mxu0 %v1208
    %2718 = vmatpush.msra.mxu0 %v1200
    %2719 = vmatpush.msra.mxu0 %v1192
    %2720 = vmatpush.msra.mxu0 %v1184
    %2721 = vmatpush.msra.mxu0 %v1176
    %2722 = vmatpush.msra.mxu0 %v1168
    %2723 = vmatpush.msra.mxu0 %v1160
    %2724 = vmatpush.msra.mxu0 %v1152
    %2725 = vmatmul.f32.gmra.mxu0 %v2061
    %v2726 = vpop.f32.mrf.mxu0
    %v2727 = vadd.f32 %v2707, %v2726
    %2728 = vdwg.mxu0
    %2729 = vmatpush.msra.mxu0 %v889
    %2730 = vmatpush.msra.mxu0 %v881
    %2731 = vmatpush.msra.mxu0 %v873
    %2732 = vmatpush.msra.mxu0 %v865
    %2733 = vmatpush.msra.mxu0 %v857
    %2734 = vmatpush.msra.mxu0 %v849
    %2735 = vmatpush.msra.mxu0 %v841
    %2736 = vmatpush.msra.mxu0 %v833
    %2737 = vmatpush.msra.mxu0 %v825
    %2738 = vmatpush.msra.mxu0 %v817
    %2739 = vmatpush.msra.mxu0 %v809
    %2740 = vmatpush.msra.mxu0 %v801
    %2741 = vmatpush.msra.mxu0 %v793
    %2742 = vmatpush.msra.mxu0 %v785
    %2743 = vmatpush.msra.mxu0 %v777
    %2744 = vmatpush.msra.mxu0 %v769
    %2745 = vmatmul.f32.gmra.mxu0 %v2485
    %v2746 = vpop.f32.mrf.mxu0
    %v2747 = vadd.f32 %v1283, %v2746
    %2748 = vdwg.mxu0
    %2749 = vmatpush.msra.mxu0 %v1017
    %2750 = vmatpush.msra.mxu0 %v1009
    %2751 = vmatpush.msra.mxu0 %v1001
    %2752 = vmatpush.msra.mxu0 %v993
    %2753 = vmatpush.msra.mxu0 %v985
    %2754 = vmatpush.msra.mxu0 %v977
    %2755 = vmatpush.msra.mxu0 %v969
    %2756 = vmatpush.msra.mxu0 %v961
    %2757 = vmatpush.msra.mxu0 %v953
    %2758 = vmatpush.msra.mxu0 %v945
    %2759 = vmatpush.msra.mxu0 %v937
    %2760 = vmatpush.msra.mxu0 %v929
    %2761 = vmatpush.msra.mxu0 %v921
    %2762 = vmatpush.msra.mxu0 %v913
    %2763 = vmatpush.msra.mxu0 %v905
    %2764 = vmatpush.msra.mxu0 %v897
    %2765 = vmatmul.f32.gmra.mxu0 %v2486
    %v2766 = vpop.f32.mrf.mxu0
    %v2767 = vadd.f32 %v2747, %v2766
    %2768 = vdwg.mxu0
    %2769 = vmatpush.msra.mxu0 %v1145
    %2770 = vmatpush.msra.mxu0 %v1137
    %2771 = vmatpush.msra.mxu0 %v1129
    %2772 = vmatpush.msra.mxu0 %v1121
    %2773 = vmatpush.msra.mxu0 %v1113
    %2774 = vmatpush.msra.mxu0 %v1105
    %2775 = vmatpush.msra.mxu0 %v1097
    %2776 = vmatpush.msra.mxu0 %v1089
    %2777 = vmatpush.msra.mxu0 %v1081
    %2778 = vmatpush.msra.mxu0 %v1073
    %2779 = vmatpush.msra.mxu0 %v1065
    %2780 = vmatpush.msra.mxu0 %v1057
    %2781 = vmatpush.msra.mxu0 %v1049
    %2782 = vmatpush.msra.mxu0 %v1041
    %2783 = vmatpush.msra.mxu0 %v1033
    %2784 = vmatpush.msra.mxu0 %v1025
    %2785 = vmatmul.f32.gmra.mxu0 %v2060
    %v2786 = vpop.f32.mrf.mxu0
    %v2787 = vadd.f32 %v2767, %v2786
    %2788 = vdwg.mxu0
    %2789 = vmatpush.msra.mxu0 %v1273
    %2790 = vmatpush.msra.mxu0 %v1265
    %2791 = vmatpush.msra.mxu0 %v1257
    %2792 = vmatpush.msra.mxu0 %v1249
    %2793 = vmatpush.msra.mxu0 %v1241
    %2794 = vmatpush.msra.mxu0 %v1233
    %2795 = vmatpush.msra.mxu0 %v1225
    %2796 = vmatpush.msra.mxu0 %v1217
    %2797 = vmatpush.msra.mxu0 %v1209
    %2798 = vmatpush.msra.mxu0 %v1201
    %2799 = vmatpush.msra.mxu0 %v1193
    %2800 = vmatpush.msra.mxu0 %v1185
    %2801 = vmatpush.msra.mxu0 %v1177
    %2802 = vmatpush.msra.mxu0 %v1169
    %2803 = vmatpush.msra.mxu0 %v1161
    %2804 = vmatpush.msra.mxu0 %v1153
    %2805 = vmatmul.f32.gmra.mxu0 %v2061
    %v2806 = vpop.f32.mrf.mxu0
    %v2807 = vadd.f32 %v2787, %v2806
    %2808 = vdwg.mxu0
    %2809 = vmatpush.msra.mxu0 %v890
    %2810 = vmatpush.msra.mxu0 %v882
    %2811 = vmatpush.msra.mxu0 %v874
    %2812 = vmatpush.msra.mxu0 %v866
    %2813 = vmatpush.msra.mxu0 %v858
    %2814 = vmatpush.msra.mxu0 %v850
    %2815 = vmatpush.msra.mxu0 %v842
    %2816 = vmatpush.msra.mxu0 %v834
    %2817 = vmatpush.msra.mxu0 %v826
    %2818 = vmatpush.msra.mxu0 %v818
    %2819 = vmatpush.msra.mxu0 %v810
    %2820 = vmatpush.msra.mxu0 %v802
    %2821 = vmatpush.msra.mxu0 %v794
    %2822 = vmatpush.msra.mxu0 %v786
    %2823 = vmatpush.msra.mxu0 %v778
    %2824 = vmatpush.msra.mxu0 %v770
    %2825 = vmatmul.f32.gmra.mxu0 %v2485
    %v2826 = vpop.f32.mrf.mxu0
    %v2827 = vadd.f32 %v1284, %v2826
    %2828 = vdwg.mxu0
    %2829 = vmatpush.msra.mxu0 %v1018
    %2830 = vmatpush.msra.mxu0 %v1010
    %2831 = vmatpush.msra.mxu0 %v1002
    %2832 = vmatpush.msra.mxu0 %v994
    %2833 = vmatpush.msra.mxu0 %v986
    %2834 = vmatpush.msra.mxu0 %v978
    %2835 = vmatpush.msra.mxu0 %v970
    %2836 = vmatpush.msra.mxu0 %v962
    %2837 = vmatpush.msra.mxu0 %v954
    %2838 = vmatpush.msra.mxu0 %v946
    %2839 = vmatpush.msra.mxu0 %v938
    %2840 = vmatpush.msra.mxu0 %v930
    %2841 = vmatpush.msra.mxu0 %v922
    %2842 = vmatpush.msra.mxu0 %v914
    %2843 = vmatpush.msra.mxu0 %v906
    %2844 = vmatpush.msra.mxu0 %v898
    %2845 = vmatmul.f32.gmra.mxu0 %v2486
    %v2846 = vpop.f32.mrf.mxu0
    %v2847 = vadd.f32 %v2827, %v2846
    %2848 = vdwg.mxu0
    %2849 = vmatpush.msra.mxu0 %v1146
    %2850 = vmatpush.msra.mxu0 %v1138
    %2851 = vmatpush.msra.mxu0 %v1130
    %2852 = vmatpush.msra.mxu0 %v1122
    %2853 = vmatpush.msra.mxu0 %v1114
    %2854 = vmatpush.msra.mxu0 %v1106
    %2855 = vmatpush.msra.mxu0 %v1098
    %2856 = vmatpush.msra.mxu0 %v1090
    %2857 = vmatpush.msra.mxu0 %v1082
    %2858 = vmatpush.msra.mxu0 %v1074
    %2859 = vmatpush.msra.mxu0 %v1066
    %2860 = vmatpush.msra.mxu0 %v1058
    %2861 = vmatpush.msra.mxu0 %v1050
    %2862 = vmatpush.msra.mxu0 %v1042
    %2863 = vmatpush.msra.mxu0 %v1034
    %2864 = vmatpush.msra.mxu0 %v1026
    %2865 = vmatmul.f32.gmra.mxu0 %v2060
    %v2866 = vpop.f32.mrf.mxu0
    %v2867 = vadd.f32 %v2847, %v2866
    %2868 = vdwg.mxu0
    %2869 = vmatpush.msra.mxu0 %v1274
    %2870 = vmatpush.msra.mxu0 %v1266
    %2871 = vmatpush.msra.mxu0 %v1258
    %2872 = vmatpush.msra.mxu0 %v1250
    %2873 = vmatpush.msra.mxu0 %v1242
    %2874 = vmatpush.msra.mxu0 %v1234
    %2875 = vmatpush.msra.mxu0 %v1226
    %2876 = vmatpush.msra.mxu0 %v1218
    %2877 = vmatpush.msra.mxu0 %v1210
    %2878 = vmatpush.msra.mxu0 %v1202
    %2879 = vmatpush.msra.mxu0 %v1194
    %2880 = vmatpush.msra.mxu0 %v1186
    %2881 = vmatpush.msra.mxu0 %v1178
    %2882 = vmatpush.msra.mxu0 %v1170
    %2883 = vmatpush.msra.mxu0 %v1162
    %2884 = vmatpush.msra.mxu0 %v1154
    %2885 = vmatmul.f32.gmra.mxu0 %v2061
    %v2886 = vpop.f32.mrf.mxu0
    %v2887 = vadd.f32 %v2867, %v2886
    %2888 = vdwg.mxu0
    %2889 = vmatpush.msra.mxu0 %v891
    %2890 = vmatpush.msra.mxu0 %v883
    %2891 = vmatpush.msra.mxu0 %v875
    %2892 = vmatpush.msra.mxu0 %v867
    %2893 = vmatpush.msra.mxu0 %v859
    %2894 = vmatpush.msra.mxu0 %v851
    %2895 = vmatpush.msra.mxu0 %v843
    %2896 = vmatpush.msra.mxu0 %v835
    %2897 = vmatpush.msra.mxu0 %v827
    %2898 = vmatpush.msra.mxu0 %v819
    %2899 = vmatpush.msra.mxu0 %v811
    %2900 = vmatpush.msra.mxu0 %v803
    %2901 = vmatpush.msra.mxu0 %v795
    %2902 = vmatpush.msra.mxu0 %v787
    %2903 = vmatpush.msra.mxu0 %v779
    %2904 = vmatpush.msra.mxu0 %v771
    %2905 = vmatmul.f32.gmra.mxu0 %v2485
    %v2906 = vpop.f32.mrf.mxu0
    %v2907 = vadd.f32 %v1285, %v2906
    %2908 = vdwg.mxu0
    %2909 = vmatpush.msra.mxu0 %v1019
    %2910 = vmatpush.msra.mxu0 %v1011
    %2911 = vmatpush.msra.mxu0 %v1003
    %2912 = vmatpush.msra.mxu0 %v995
    %2913 = vmatpush.msra.mxu0 %v987
    %2914 = vmatpush.msra.mxu0 %v979
    %2915 = vmatpush.msra.mxu0 %v971
    %2916 = vmatpush.msra.mxu0 %v963
    %2917 = vmatpush.msra.mxu0 %v955
    %2918 = vmatpush.msra.mxu0 %v947
    %2919 = vmatpush.msra.mxu0 %v939
    %2920 = vmatpush.msra.mxu0 %v931
    %2921 = vmatpush.msra.mxu0 %v923
    %2922 = vmatpush.msra.mxu0 %v915
    %2923 = vmatpush.msra.mxu0 %v907
    %2924 = vmatpush.msra.mxu0 %v899
    %2925 = vmatmul.f32.gmra.mxu0 %v2486
    %v2926 = vpop.f32.mrf.mxu0
    %v2927 = vadd.f32 %v2907, %v2926
    %2928 = vdwg.mxu0
    %2929 = vmatpush.msra.mxu0 %v1147
    %2930 = vmatpush.msra.mxu0 %v1139
    %2931 = vmatpush.msra.mxu0 %v1131
    %2932 = vmatpush.msra.mxu0 %v1123
    %2933 = vmatpush.msra.mxu0 %v1115
    %2934 = vmatpush.msra.mxu0 %v1107
    %2935 = vmatpush.msra.mxu0 %v1099
    %2936 = vmatpush.msra.mxu0 %v1091
    %2937 = vmatpush.msra.mxu0 %v1083
    %2938 = vmatpush.msra.mxu0 %v1075
    %2939 = vmatpush.msra.mxu0 %v1067
    %2940 = vmatpush.msra.mxu0 %v1059
    %2941 = vmatpush.msra.mxu0 %v1051
    %2942 = vmatpush.msra.mxu0 %v1043
    %2943 = vmatpush.msra.mxu0 %v1035
    %2944 = vmatpush.msra.mxu0 %v1027
    %2945 = vmatmul.f32.gmra.mxu0 %v2060
    %v2946 = vpop.f32.mrf.mxu0
    %v2947 = vadd.f32 %v2927, %v2946
    %2948 = vdwg.mxu0
    %2949 = vmatpush.msra.mxu0 %v1275
    %2950 = vmatpush.msra.mxu0 %v1267
    %2951 = vmatpush.msra.mxu0 %v1259
    %2952 = vmatpush.msra.mxu0 %v1251
    %2953 = vmatpush.msra.mxu0 %v1243
    %2954 = vmatpush.msra.mxu0 %v1235
    %2955 = vmatpush.msra.mxu0 %v1227
    %2956 = vmatpush.msra.mxu0 %v1219
    %2957 = vmatpush.msra.mxu0 %v1211
    %2958 = vmatpush.msra.mxu0 %v1203
    %2959 = vmatpush.msra.mxu0 %v1195
    %2960 = vmatpush.msra.mxu0 %v1187
    %2961 = vmatpush.msra.mxu0 %v1179
    %2962 = vmatpush.msra.mxu0 %v1171
    %2963 = vmatpush.msra.mxu0 %v1163
    %2964 = vmatpush.msra.mxu0 %v1155
    %2965 = vmatmul.f32.gmra.mxu0 %v2061
    %v2966 = vpop.f32.mrf.mxu0
    %v2967 = vadd.f32 %v2947, %v2966
    %2968 = vdwg.mxu0
    %2969 = vmatpush.msra.mxu0 %v892
    %2970 = vmatpush.msra.mxu0 %v884
    %2971 = vmatpush.msra.mxu0 %v876
    %2972 = vmatpush.msra.mxu0 %v868
    %2973 = vmatpush.msra.mxu0 %v860
    %2974 = vmatpush.msra.mxu0 %v852
    %2975 = vmatpush.msra.mxu0 %v844
    %2976 = vmatpush.msra.mxu0 %v836
    %2977 = vmatpush.msra.mxu0 %v828
    %2978 = vmatpush.msra.mxu0 %v820
    %2979 = vmatpush.msra.mxu0 %v812
    %2980 = vmatpush.msra.mxu0 %v804
    %2981 = vmatpush.msra.mxu0 %v796
    %2982 = vmatpush.msra.mxu0 %v788
    %2983 = vmatpush.msra.mxu0 %v780
    %2984 = vmatpush.msra.mxu0 %v772
    %2985 = vmatmul.f32.gmra.mxu0 %v2485
    %v2986 = vpop.f32.mrf.mxu0
    %v2987 = vadd.f32 %v1286, %v2986
    %2988 = vdwg.mxu0
    %2989 = vmatpush.msra.mxu0 %v1020
    %2990 = vmatpush.msra.mxu0 %v1012
    %2991 = vmatpush.msra.mxu0 %v1004
    %2992 = vmatpush.msra.mxu0 %v996
    %2993 = vmatpush.msra.mxu0 %v988
    %2994 = vmatpush.msra.mxu0 %v980
    %2995 = vmatpush.msra.mxu0 %v972
    %2996 = vmatpush.msra.mxu0 %v964
    %2997 = vmatpush.msra.mxu0 %v956
    %2998 = vmatpush.msra.mxu0 %v948
    %2999 = vmatpush.msra.mxu0 %v940
    %3000 = vmatpush.msra.mxu0 %v932
    %3001 = vmatpush.msra.mxu0 %v924
    %3002 = vmatpush.msra.mxu0 %v916
    %3003 = vmatpush.msra.mxu0 %v908
    %3004 = vmatpush.msra.mxu0 %v900
    %3005 = vmatmul.f32.gmra.mxu0 %v2486
    %v3006 = vpop.f32.mrf.mxu0
    %v3007 = vadd.f32 %v2987, %v3006
    %3008 = vdwg.mxu0
    %3009 = vmatpush.msra.mxu0 %v1148
    %3010 = vmatpush.msra.mxu0 %v1140
    %3011 = vmatpush.msra.mxu0 %v1132
    %3012 = vmatpush.msra.mxu0 %v1124
    %3013 = vmatpush.msra.mxu0 %v1116
    %3014 = vmatpush.msra.mxu0 %v1108
    %3015 = vmatpush.msra.mxu0 %v1100
    %3016 = vmatpush.msra.mxu0 %v1092
    %3017 = vmatpush.msra.mxu0 %v1084
    %3018 = vmatpush.msra.mxu0 %v1076
    %3019 = vmatpush.msra.mxu0 %v1068
    %3020 = vmatpush.msra.mxu0 %v1060
    %3021 = vmatpush.msra.mxu0 %v1052
    %3022 = vmatpush.msra.mxu0 %v1044
    %3023 = vmatpush.msra.mxu0 %v1036
    %3024 = vmatpush.msra.mxu0 %v1028
    %3025 = vmatmul.f32.gmra.mxu0 %v2060
    %v3026 = vpop.f32.mrf.mxu0
    %v3027 = vadd.f32 %v3007, %v3026
    %3028 = vdwg.mxu0
    %3029 = vmatpush.msra.mxu0 %v1276
    %3030 = vmatpush.msra.mxu0 %v1268
    %3031 = vmatpush.msra.mxu0 %v1260
    %3032 = vmatpush.msra.mxu0 %v1252
    %3033 = vmatpush.msra.mxu0 %v1244
    %3034 = vmatpush.msra.mxu0 %v1236
    %3035 = vmatpush.msra.mxu0 %v1228
    %3036 = vmatpush.msra.mxu0 %v1220
    %3037 = vmatpush.msra.mxu0 %v1212
    %3038 = vmatpush.msra.mxu0 %v1204
    %3039 = vmatpush.msra.mxu0 %v1196
    %3040 = vmatpush.msra.mxu0 %v1188
    %3041 = vmatpush.msra.mxu0 %v1180
    %3042 = vmatpush.msra.mxu0 %v1172
    %3043 = vmatpush.msra.mxu0 %v1164
    %3044 = vmatpush.msra.mxu0 %v1156
    %3045 = vmatmul.f32.gmra.mxu0 %v2061
    %v3046 = vpop.f32.mrf.mxu0
    %v3047 = vadd.f32 %v3027, %v3046
    %3048 = vdwg.mxu0
    %3049 = vmatpush.msra.mxu0 %v893
    %3050 = vmatpush.msra.mxu0 %v885
    %3051 = vmatpush.msra.mxu0 %v877
    %3052 = vmatpush.msra.mxu0 %v869
    %3053 = vmatpush.msra.mxu0 %v861
    %3054 = vmatpush.msra.mxu0 %v853
    %3055 = vmatpush.msra.mxu0 %v845
    %3056 = vmatpush.msra.mxu0 %v837
    %3057 = vmatpush.msra.mxu0 %v829
    %3058 = vmatpush.msra.mxu0 %v821
    %3059 = vmatpush.msra.mxu0 %v813
    %3060 = vmatpush.msra.mxu0 %v805
    %3061 = vmatpush.msra.mxu0 %v797
    %3062 = vmatpush.msra.mxu0 %v789
    %3063 = vmatpush.msra.mxu0 %v781
    %3064 = vmatpush.msra.mxu0 %v773
    %3065 = vmatmul.f32.gmra.mxu0 %v2485
    %v3066 = vpop.f32.mrf.mxu0
    %v3067 = vadd.f32 %v1287, %v3066
    %3068 = vdwg.mxu0
    %3069 = vmatpush.msra.mxu0 %v1021
    %3070 = vmatpush.msra.mxu0 %v1013
    %3071 = vmatpush.msra.mxu0 %v1005
    %3072 = vmatpush.msra.mxu0 %v997
    %3073 = vmatpush.msra.mxu0 %v989
    %3074 = vmatpush.msra.mxu0 %v981
    %3075 = vmatpush.msra.mxu0 %v973
    %3076 = vmatpush.msra.mxu0 %v965
    %3077 = vmatpush.msra.mxu0 %v957
    %3078 = vmatpush.msra.mxu0 %v949
    %3079 = vmatpush.msra.mxu0 %v941
    %3080 = vmatpush.msra.mxu0 %v933
    %3081 = vmatpush.msra.mxu0 %v925
    %3082 = vmatpush.msra.mxu0 %v917
    %3083 = vmatpush.msra.mxu0 %v909
    %3084 = vmatpush.msra.mxu0 %v901
    %3085 = vmatmul.f32.gmra.mxu0 %v2486
    %v3086 = vpop.f32.mrf.mxu0
    %v3087 = vadd.f32 %v3067, %v3086
    %3088 = vdwg.mxu0
    %3089 = vmatpush.msra.mxu0 %v1149
    %3090 = vmatpush.msra.mxu0 %v1141
    %3091 = vmatpush.msra.mxu0 %v1133
    %3092 = vmatpush.msra.mxu0 %v1125
    %3093 = vmatpush.msra.mxu0 %v1117
    %3094 = vmatpush.msra.mxu0 %v1109
    %3095 = vmatpush.msra.mxu0 %v1101
    %3096 = vmatpush.msra.mxu0 %v1093
    %3097 = vmatpush.msra.mxu0 %v1085
    %3098 = vmatpush.msra.mxu0 %v1077
    %3099 = vmatpush.msra.mxu0 %v1069
    %3100 = vmatpush.msra.mxu0 %v1061
    %3101 = vmatpush.msra.mxu0 %v1053
    %3102 = vmatpush.msra.mxu0 %v1045
    %3103 = vmatpush.msra.mxu0 %v1037
    %3104 = vmatpush.msra.mxu0 %v1029
    %3105 = vmatmul.f32.gmra.mxu0 %v2060
    %v3106 = vpop.f32.mrf.mxu0
    %v3107 = vadd.f32 %v3087, %v3106
    %3108 = vdwg.mxu0
    %3109 = vmatpush.msra.mxu0 %v1277
    %3110 = vmatpush.msra.mxu0 %v1269
    %3111 = vmatpush.msra.mxu0 %v1261
    %3112 = vmatpush.msra.mxu0 %v1253
    %3113 = vmatpush.msra.mxu0 %v1245
    %3114 = vmatpush.msra.mxu0 %v1237
    %3115 = vmatpush.msra.mxu0 %v1229
    %3116 = vmatpush.msra.mxu0 %v1221
    %3117 = vmatpush.msra.mxu0 %v1213
    %3118 = vmatpush.msra.mxu0 %v1205
    %3119 = vmatpush.msra.mxu0 %v1197
    %3120 = vmatpush.msra.mxu0 %v1189
    %3121 = vmatpush.msra.mxu0 %v1181
    %3122 = vmatpush.msra.mxu0 %v1173
    %3123 = vmatpush.msra.mxu0 %v1165
    %3124 = vmatpush.msra.mxu0 %v1157
    %3125 = vmatmul.f32.gmra.mxu0 %v2061
    %v3126 = vpop.f32.mrf.mxu0
    %v3127 = vadd.f32 %v3107, %v3126
    %3128 = vdwg.mxu0
    %v3129 = vxor.u32 %v2567, 2147483648
    %v3130 = vxor.u32 %v2647, 2147483648
    %v3131 = vmul.f32 %v3129, 1.442695
    %v3132 = vpow.pop %v3131
    %v3133 = vmul.f32 %v3130, 1.442695
    %v3134 = vpow.pop %v3133
    %v3135 = vadd.f32 %v3132, 1.0
    %v3136 = vadd.f32 %v3134, 1.0
    %v3137 = vrcp.pop %v3135
    %v3138 = vmul.f32 %v3135, %v3137
    %v3139 = vsub.f32 1.0, %v3138
    %v3140 = vmul.f32 %v3137, %v3139
    %v3141 = vadd.f32 %v3137, %v3140
    %vm3142 = vweird.f32 %v3135
    %vm3143 = vweird.f32 %v3137
    %vm3144 = vmor %vm3142, %vm3143
    %v3145 = vsel %vm3144, %v3137, %v3141
    %v3146 = vand.u32 2147483647, %v3135
    %vm3147 = vcmp.eq.f32.partialorder %v3146, 8.507059e+37
    %v3148 = vand.u32 %v3135, 2147483648
    %v3149 = vor.u32 1.1754944e-38, %v3148
    %v3150 = vsel %vm3147, %v3149, %v3145
    %v3151 = vmul.f32 1.0, %v3150
    %v3152 = vrcp.pop %v3136
    %v3153 = vmul.f32 %v3136, %v3152
    %v3154 = vsub.f32 1.0, %v3153
    %v3155 = vmul.f32 %v3152, %v3154
    %v3156 = vadd.f32 %v3152, %v3155
    %vm3157 = vweird.f32 %v3136
    %vm3158 = vweird.f32 %v3152
    %vm3159 = vmor %vm3157, %vm3158
    %v3160 = vsel %vm3159, %v3152, %v3156
    %v3161 = vand.u32 2147483647, %v3136
    %vm3162 = vcmp.eq.f32.partialorder %v3161, 8.507059e+37
    %v3163 = vand.u32 %v3136, 2147483648
    %v3164 = vor.u32 1.1754944e-38, %v3163
    %v3165 = vsel %vm3162, %v3164, %v3160
    %v3166 = vmul.f32 1.0, %v3165
    %v3167 = vxor.u32 %v2727, 2147483648
    %v3168 = vxor.u32 %v2807, 2147483648
    %v3169 = vmul.f32 %v3167, 1.442695
    %v3170 = vpow.pop %v3169
    %v3171 = vmul.f32 %v3168, 1.442695
    %v3172 = vpow.pop %v3171
    %v3173 = vadd.f32 %v3170, 1.0
    %v3174 = vadd.f32 %v3172, 1.0
    %v3175 = vrcp.pop %v3173
    %v3176 = vmul.f32 %v3173, %v3175
    %v3177 = vsub.f32 1.0, %v3176
    %v3178 = vmul.f32 %v3175, %v3177
    %v3179 = vadd.f32 %v3175, %v3178
    %vm3180 = vweird.f32 %v3173
    %vm3181 = vweird.f32 %v3175
    %vm3182 = vmor %vm3180, %vm3181
    %v3183 = vsel %vm3182, %v3175, %v3179
    %v3184 = vand.u32 2147483647, %v3173
    %vm3185 = vcmp.eq.f32.partialorder %v3184, 8.507059e+37
    %v3186 = vand.u32 %v3173, 2147483648
    %v3187 = vor.u32 1.1754944e-38, %v3186
    %v3188 = vsel %vm3185, %v3187, %v3183
    %v3189 = vmul.f32 1.0, %v3188
    %v3190 = vrcp.pop %v3174
    %v3191 = vmul.f32 %v3174, %v3190
    %v3192 = vsub.f32 1.0, %v3191
    %v3193 = vmul.f32 %v3190, %v3192
    %v3194 = vadd.f32 %v3190, %v3193
    %vm3195 = vweird.f32 %v3174
    %vm3196 = vweird.f32 %v3190
    %vm3197 = vmor %vm3195, %vm3196
    %v3198 = vsel %vm3197, %v3190, %v3194
    %v3199 = vand.u32 2147483647, %v3174
    %vm3200 = vcmp.eq.f32.partialorder %v3199, 8.507059e+37
    %v3201 = vand.u32 %v3174, 2147483648
    %v3202 = vor.u32 1.1754944e-38, %v3201
    %v3203 = vsel %vm3200, %v3202, %v3198
    %v3204 = vmul.f32 1.0, %v3203
    %v3205 = vtanh.pop %v2887
    %v3206 = vtanh.pop %v2967
    %v3207 = vxor.u32 %v3047, 2147483648
    %v3208 = vxor.u32 %v3127, 2147483648
    %v3209 = vmul.f32 %v3207, 1.442695
    %v3210 = vpow.pop %v3209
    %v3211 = vmul.f32 %v3208, 1.442695
    %v3212 = vpow.pop %v3211
    %v3213 = vadd.f32 %v3210, 1.0
    %v3214 = vadd.f32 %v3212, 1.0
    %v3215 = vrcp.pop %v3213
    %v3216 = vmul.f32 %v3213, %v3215
    %v3217 = vsub.f32 1.0, %v3216
    %v3218 = vmul.f32 %v3215, %v3217
    %v3219 = vadd.f32 %v3215, %v3218
    %vm3220 = vweird.f32 %v3213
    %vm3221 = vweird.f32 %v3215
    %vm3222 = vmor %vm3220, %vm3221
    %v3223 = vsel %vm3222, %v3215, %v3219
    %v3224 = vand.u32 2147483647, %v3213
    %vm3225 = vcmp.eq.f32.partialorder %v3224, 8.507059e+37
    %v3226 = vand.u32 %v3213, 2147483648
    %v3227 = vor.u32 1.1754944e-38, %v3226
    %v3228 = vsel %vm3225, %v3227, %v3223
    %v3229 = vmul.f32 1.0, %v3228
    %v3230 = vrcp.pop %v3214
    %v3231 = vmul.f32 %v3214, %v3230
    %v3232 = vsub.f32 1.0, %v3231
    %v3233 = vmul.f32 %v3230, %v3232
    %v3234 = vadd.f32 %v3230, %v3233
    %vm3235 = vweird.f32 %v3214
    %vm3236 = vweird.f32 %v3230
    %vm3237 = vmor %vm3235, %vm3236
    %v3238 = vsel %vm3237, %v3230, %v3234
    %v3239 = vand.u32 2147483647, %v3214
    %vm3240 = vcmp.eq.f32.partialorder %v3239, 8.507059e+37
    %v3241 = vand.u32 %v3214, 2147483648
    %v3242 = vor.u32 1.1754944e-38, %v3241
    %v3243 = vsel %vm3240, %v3242, %v3238
    %v3244 = vmul.f32 1.0, %v3243
    %v3245 = vmul.f32 %v3189, %v2056
    %v3246 = vmul.f32 %v3204, %v2057
    %v3247 = vmul.f32 %v3151, %v3205
    %v3248 = vmul.f32 %v3166, %v3206
    %v3249 = vadd.f32 %v3245, %v3247
    %v3250 = vadd.f32 %v3246, %v3248
    %v3251 = vtanh.pop %v3249
    %v3252 = vtanh.pop %v3250
    %v3253 = vmul.f32 %v3229, %v3251
    %v3254 = vmul.f32 %v3244, %v3252
    %s3255 = scalar_lea.vmem [#allocation3], 32
    %v3256 = vld [vmem:[%s3255] sm:$0xff]
    %v3257 = vld [vmem:[%s3255 + $0x8] sm:$0xff]
    %3258 = vst [vmem:[#allocation1] ss:$4 sm:$0xff] %v2482
    %v3259 = vld.sshfl [vmem:[#allocation1] sm:$0xff pattern:$0x73625140]
    %v3260 = vld.sshfl [vmem:[#allocation1 + $0x8] sm:$0xff pattern:$0x73625140]
    %3263 = vmatpush.msra.mxu0 %v208
    %3264 = vmatpush.msra.mxu0 %v200
    %3265 = vmatpush.msra.mxu0 %v192
    %3266 = vmatpush.msra.mxu0 %v184
    %3267 = vmatpush.msra.mxu0 %v176
    %3268 = vmatpush.msra.mxu0 %v168
    %3269 = vmatpush.msra.mxu0 %v160
    %3270 = vmatpush.msra.mxu0 %v152
    %3271 = vmatpush.msra.mxu0 %v144
    %3272 = vmatpush.msra.mxu0 %v136
    %3273 = vmatpush.msra.mxu0 %v128
    %3274 = vmatpush.msra.mxu0 %v120
    %3275 = vmatpush.msra.mxu0 %v112
    %3276 = vmatpush.msra.mxu0 %v104
    %3277 = vmatpush.msra.mxu0 %v96
    %3278 = vmatpush.msra.mxu0 %v88
    %3279 = vmatmul.f32.gmra.mxu0 %v3259
    %v3280 = vpop.f32.mrf.mxu0
    %v3281 = vadd.f32 0.0, %v3280
    %3282 = vdwg.mxu0
    %3283 = vmatpush.msra.mxu0 %v336
    %3284 = vmatpush.msra.mxu0 %v328
    %3285 = vmatpush.msra.mxu0 %v320
    %3286 = vmatpush.msra.mxu0 %v312
    %3287 = vmatpush.msra.mxu0 %v304
    %3288 = vmatpush.msra.mxu0 %v296
    %3289 = vmatpush.msra.mxu0 %v288
    %3290 = vmatpush.msra.mxu0 %v280
    %3291 = vmatpush.msra.mxu0 %v272
    %3292 = vmatpush.msra.mxu0 %v264
    %3293 = vmatpush.msra.mxu0 %v256
    %3294 = vmatpush.msra.mxu0 %v248
    %3295 = vmatpush.msra.mxu0 %v240
    %3296 = vmatpush.msra.mxu0 %v232
    %3297 = vmatpush.msra.mxu0 %v224
    %3298 = vmatpush.msra.mxu0 %v216
    %3299 = vmatmul.f32.gmra.mxu0 %v3260
    %v3300 = vpop.f32.mrf.mxu0
    %v3301 = vadd.f32 %v3281, %v3300
    %3302 = vdwg.mxu0
    %3303 = vmatpush.msra.mxu0 %v209
    %3304 = vmatpush.msra.mxu0 %v201
    %3305 = vmatpush.msra.mxu0 %v193
    %3306 = vmatpush.msra.mxu0 %v185
    %3307 = vmatpush.msra.mxu0 %v177
    %3308 = vmatpush.msra.mxu0 %v169
    %3309 = vmatpush.msra.mxu0 %v161
    %3310 = vmatpush.msra.mxu0 %v153
    %3311 = vmatpush.msra.mxu0 %v145
    %3312 = vmatpush.msra.mxu0 %v137
    %3313 = vmatpush.msra.mxu0 %v129
    %3314 = vmatpush.msra.mxu0 %v121
    %3315 = vmatpush.msra.mxu0 %v113
    %3316 = vmatpush.msra.mxu0 %v105
    %3317 = vmatpush.msra.mxu0 %v97
    %3318 = vmatpush.msra.mxu0 %v89
    %3319 = vmatmul.f32.gmra.mxu0 %v3259
    %v3320 = vpop.f32.mrf.mxu0
    %v3321 = vadd.f32 0.0, %v3320
    %3322 = vdwg.mxu0
    %3323 = vmatpush.msra.mxu0 %v337
    %3324 = vmatpush.msra.mxu0 %v329
    %3325 = vmatpush.msra.mxu0 %v321
    %3326 = vmatpush.msra.mxu0 %v313
    %3327 = vmatpush.msra.mxu0 %v305
    %3328 = vmatpush.msra.mxu0 %v297
    %3329 = vmatpush.msra.mxu0 %v289
    %3330 = vmatpush.msra.mxu0 %v281
    %3331 = vmatpush.msra.mxu0 %v273
    %3332 = vmatpush.msra.mxu0 %v265
    %3333 = vmatpush.msra.mxu0 %v257
    %3334 = vmatpush.msra.mxu0 %v249
    %3335 = vmatpush.msra.mxu0 %v241
    %3336 = vmatpush.msra.mxu0 %v233
    %3337 = vmatpush.msra.mxu0 %v225
    %3338 = vmatpush.msra.mxu0 %v217
    %3339 = vmatmul.f32.gmra.mxu0 %v3260
    %v3340 = vpop.f32.mrf.mxu0
    %v3341 = vadd.f32 %v3321, %v3340
    %3342 = vdwg.mxu0
    %3343 = vmatpush.msra.mxu0 %v210
    %3344 = vmatpush.msra.mxu0 %v202
    %3345 = vmatpush.msra.mxu0 %v194
    %3346 = vmatpush.msra.mxu0 %v186
    %3347 = vmatpush.msra.mxu0 %v178
    %3348 = vmatpush.msra.mxu0 %v170
    %3349 = vmatpush.msra.mxu0 %v162
    %3350 = vmatpush.msra.mxu0 %v154
    %3351 = vmatpush.msra.mxu0 %v146
    %3352 = vmatpush.msra.mxu0 %v138
    %3353 = vmatpush.msra.mxu0 %v130
    %3354 = vmatpush.msra.mxu0 %v122
    %3355 = vmatpush.msra.mxu0 %v114
    %3356 = vmatpush.msra.mxu0 %v106
    %3357 = vmatpush.msra.mxu0 %v98
    %3358 = vmatpush.msra.mxu0 %v90
    %3359 = vmatmul.f32.gmra.mxu0 %v3259
    %v3360 = vpop.f32.mrf.mxu0
    %v3361 = vadd.f32 0.0, %v3360
    %3362 = vdwg.mxu0
    %3363 = vmatpush.msra.mxu0 %v338
    %3364 = vmatpush.msra.mxu0 %v330
    %3365 = vmatpush.msra.mxu0 %v322
    %3366 = vmatpush.msra.mxu0 %v314
    %3367 = vmatpush.msra.mxu0 %v306
    %3368 = vmatpush.msra.mxu0 %v298
    %3369 = vmatpush.msra.mxu0 %v290
    %3370 = vmatpush.msra.mxu0 %v282
    %3371 = vmatpush.msra.mxu0 %v274
    %3372 = vmatpush.msra.mxu0 %v266
    %3373 = vmatpush.msra.mxu0 %v258
    %3374 = vmatpush.msra.mxu0 %v250
    %3375 = vmatpush.msra.mxu0 %v242
    %3376 = vmatpush.msra.mxu0 %v234
    %3377 = vmatpush.msra.mxu0 %v226
    %3378 = vmatpush.msra.mxu0 %v218
    %3379 = vmatmul.f32.gmra.mxu0 %v3260
    %v3380 = vpop.f32.mrf.mxu0
    %v3381 = vadd.f32 %v3361, %v3380
    %3382 = vdwg.mxu0
    %3383 = vmatpush.msra.mxu0 %v211
    %3384 = vmatpush.msra.mxu0 %v203
    %3385 = vmatpush.msra.mxu0 %v195
    %3386 = vmatpush.msra.mxu0 %v187
    %3387 = vmatpush.msra.mxu0 %v179
    %3388 = vmatpush.msra.mxu0 %v171
    %3389 = vmatpush.msra.mxu0 %v163
    %3390 = vmatpush.msra.mxu0 %v155
    %3391 = vmatpush.msra.mxu0 %v147
    %3392 = vmatpush.msra.mxu0 %v139
    %3393 = vmatpush.msra.mxu0 %v131
    %3394 = vmatpush.msra.mxu0 %v123
    %3395 = vmatpush.msra.mxu0 %v115
    %3396 = vmatpush.msra.mxu0 %v107
    %3397 = vmatpush.msra.mxu0 %v99
    %3398 = vmatpush.msra.mxu0 %v91
    %3399 = vmatmul.f32.gmra.mxu0 %v3259
    %v3400 = vpop.f32.mrf.mxu0
    %v3401 = vadd.f32 0.0, %v3400
    %3402 = vdwg.mxu0
    %3403 = vmatpush.msra.mxu0 %v339
    %3404 = vmatpush.msra.mxu0 %v331
    %3405 = vmatpush.msra.mxu0 %v323
    %3406 = vmatpush.msra.mxu0 %v315
    %3407 = vmatpush.msra.mxu0 %v307
    %3408 = vmatpush.msra.mxu0 %v299
    %3409 = vmatpush.msra.mxu0 %v291
    %3410 = vmatpush.msra.mxu0 %v283
    %3411 = vmatpush.msra.mxu0 %v275
    %3412 = vmatpush.msra.mxu0 %v267
    %3413 = vmatpush.msra.mxu0 %v259
    %3414 = vmatpush.msra.mxu0 %v251
    %3415 = vmatpush.msra.mxu0 %v243
    %3416 = vmatpush.msra.mxu0 %v235
    %3417 = vmatpush.msra.mxu0 %v227
    %3418 = vmatpush.msra.mxu0 %v219
    %3419 = vmatmul.f32.gmra.mxu0 %v3260
    %v3420 = vpop.f32.mrf.mxu0
    %v3421 = vadd.f32 %v3401, %v3420
    %3422 = vdwg.mxu0
    %3423 = vmatpush.msra.mxu0 %v212
    %3424 = vmatpush.msra.mxu0 %v204
    %3425 = vmatpush.msra.mxu0 %v196
    %3426 = vmatpush.msra.mxu0 %v188
    %3427 = vmatpush.msra.mxu0 %v180
    %3428 = vmatpush.msra.mxu0 %v172
    %3429 = vmatpush.msra.mxu0 %v164
    %3430 = vmatpush.msra.mxu0 %v156
    %3431 = vmatpush.msra.mxu0 %v148
    %3432 = vmatpush.msra.mxu0 %v140
    %3433 = vmatpush.msra.mxu0 %v132
    %3434 = vmatpush.msra.mxu0 %v124
    %3435 = vmatpush.msra.mxu0 %v116
    %3436 = vmatpush.msra.mxu0 %v108
    %3437 = vmatpush.msra.mxu0 %v100
    %3438 = vmatpush.msra.mxu0 %v92
    %3439 = vmatmul.f32.gmra.mxu0 %v3259
    %v3440 = vpop.f32.mrf.mxu0
    %v3441 = vadd.f32 0.0, %v3440
    %3442 = vdwg.mxu0
    %3443 = vmatpush.msra.mxu0 %v340
    %3444 = vmatpush.msra.mxu0 %v332
    %3445 = vmatpush.msra.mxu0 %v324
    %3446 = vmatpush.msra.mxu0 %v316
    %3447 = vmatpush.msra.mxu0 %v308
    %3448 = vmatpush.msra.mxu0 %v300
    %3449 = vmatpush.msra.mxu0 %v292
    %3450 = vmatpush.msra.mxu0 %v284
    %3451 = vmatpush.msra.mxu0 %v276
    %3452 = vmatpush.msra.mxu0 %v268
    %3453 = vmatpush.msra.mxu0 %v260
    %3454 = vmatpush.msra.mxu0 %v252
    %3455 = vmatpush.msra.mxu0 %v244
    %3456 = vmatpush.msra.mxu0 %v236
    %3457 = vmatpush.msra.mxu0 %v228
    %3458 = vmatpush.msra.mxu0 %v220
    %3459 = vmatmul.f32.gmra.mxu0 %v3260
    %v3460 = vpop.f32.mrf.mxu0
    %v3461 = vadd.f32 %v3441, %v3460
    %3462 = vdwg.mxu0
    %3463 = vmatpush.msra.mxu0 %v213
    %3464 = vmatpush.msra.mxu0 %v205
    %3465 = vmatpush.msra.mxu0 %v197
    %3466 = vmatpush.msra.mxu0 %v189
    %3467 = vmatpush.msra.mxu0 %v181
    %3468 = vmatpush.msra.mxu0 %v173
    %3469 = vmatpush.msra.mxu0 %v165
    %3470 = vmatpush.msra.mxu0 %v157
    %3471 = vmatpush.msra.mxu0 %v149
    %3472 = vmatpush.msra.mxu0 %v141
    %3473 = vmatpush.msra.mxu0 %v133
    %3474 = vmatpush.msra.mxu0 %v125
    %3475 = vmatpush.msra.mxu0 %v117
    %3476 = vmatpush.msra.mxu0 %v109
    %3477 = vmatpush.msra.mxu0 %v101
    %3478 = vmatpush.msra.mxu0 %v93
    %3479 = vmatmul.f32.gmra.mxu0 %v3259
    %v3480 = vpop.f32.mrf.mxu0
    %v3481 = vadd.f32 0.0, %v3480
    %3482 = vdwg.mxu0
    %3483 = vmatpush.msra.mxu0 %v341
    %3484 = vmatpush.msra.mxu0 %v333
    %3485 = vmatpush.msra.mxu0 %v325
    %3486 = vmatpush.msra.mxu0 %v317
    %3487 = vmatpush.msra.mxu0 %v309
    %3488 = vmatpush.msra.mxu0 %v301
    %3489 = vmatpush.msra.mxu0 %v293
    %3490 = vmatpush.msra.mxu0 %v285
    %3491 = vmatpush.msra.mxu0 %v277
    %3492 = vmatpush.msra.mxu0 %v269
    %3493 = vmatpush.msra.mxu0 %v261
    %3494 = vmatpush.msra.mxu0 %v253
    %3495 = vmatpush.msra.mxu0 %v245
    %3496 = vmatpush.msra.mxu0 %v237
    %3497 = vmatpush.msra.mxu0 %v229
    %3498 = vmatpush.msra.mxu0 %v221
    %3499 = vmatmul.f32.gmra.mxu0 %v3260
    %v3500 = vpop.f32.mrf.mxu0
    %v3501 = vadd.f32 %v3481, %v3500
    %3502 = vdwg.mxu0
    %3503 = vmatpush.msra.mxu0 %v214
    %3504 = vmatpush.msra.mxu0 %v206
    %3505 = vmatpush.msra.mxu0 %v198
    %3506 = vmatpush.msra.mxu0 %v190
    %3507 = vmatpush.msra.mxu0 %v182
    %3508 = vmatpush.msra.mxu0 %v174
    %3509 = vmatpush.msra.mxu0 %v166
    %3510 = vmatpush.msra.mxu0 %v158
    %3511 = vmatpush.msra.mxu0 %v150
    %3512 = vmatpush.msra.mxu0 %v142
    %3513 = vmatpush.msra.mxu0 %v134
    %3514 = vmatpush.msra.mxu0 %v126
    %3515 = vmatpush.msra.mxu0 %v118
    %3516 = vmatpush.msra.mxu0 %v110
    %3517 = vmatpush.msra.mxu0 %v102
    %3518 = vmatpush.msra.mxu0 %v94
    %3519 = vmatmul.f32.gmra.mxu0 %v3259
    %v3520 = vpop.f32.mrf.mxu0
    %v3521 = vadd.f32 0.0, %v3520
    %3522 = vdwg.mxu0
    %3523 = vmatpush.msra.mxu0 %v342
    %3524 = vmatpush.msra.mxu0 %v334
    %3525 = vmatpush.msra.mxu0 %v326
    %3526 = vmatpush.msra.mxu0 %v318
    %3527 = vmatpush.msra.mxu0 %v310
    %3528 = vmatpush.msra.mxu0 %v302
    %3529 = vmatpush.msra.mxu0 %v294
    %3530 = vmatpush.msra.mxu0 %v286
    %3531 = vmatpush.msra.mxu0 %v278
    %3532 = vmatpush.msra.mxu0 %v270
    %3533 = vmatpush.msra.mxu0 %v262
    %3534 = vmatpush.msra.mxu0 %v254
    %3535 = vmatpush.msra.mxu0 %v246
    %3536 = vmatpush.msra.mxu0 %v238
    %3537 = vmatpush.msra.mxu0 %v230
    %3538 = vmatpush.msra.mxu0 %v222
    %3539 = vmatmul.f32.gmra.mxu0 %v3260
    %v3540 = vpop.f32.mrf.mxu0
    %v3541 = vadd.f32 %v3521, %v3540
    %3542 = vdwg.mxu0
    %3543 = vmatpush.msra.mxu0 %v215
    %3544 = vmatpush.msra.mxu0 %v207
    %3545 = vmatpush.msra.mxu0 %v199
    %3546 = vmatpush.msra.mxu0 %v191
    %3547 = vmatpush.msra.mxu0 %v183
    %3548 = vmatpush.msra.mxu0 %v175
    %3549 = vmatpush.msra.mxu0 %v167
    %3550 = vmatpush.msra.mxu0 %v159
    %3551 = vmatpush.msra.mxu0 %v151
    %3552 = vmatpush.msra.mxu0 %v143
    %3553 = vmatpush.msra.mxu0 %v135
    %3554 = vmatpush.msra.mxu0 %v127
    %3555 = vmatpush.msra.mxu0 %v119
    %3556 = vmatpush.msra.mxu0 %v111
    %3557 = vmatpush.msra.mxu0 %v103
    %3558 = vmatpush.msra.mxu0 %v95
    %3559 = vmatmul.f32.gmra.mxu0 %v3259
    %v3560 = vpop.f32.mrf.mxu0
    %v3561 = vadd.f32 0.0, %v3560
    %3562 = vdwg.mxu0
    %3563 = vmatpush.msra.mxu0 %v343
    %3564 = vmatpush.msra.mxu0 %v335
    %3565 = vmatpush.msra.mxu0 %v327
    %3566 = vmatpush.msra.mxu0 %v319
    %3567 = vmatpush.msra.mxu0 %v311
    %3568 = vmatpush.msra.mxu0 %v303
    %3569 = vmatpush.msra.mxu0 %v295
    %3570 = vmatpush.msra.mxu0 %v287
    %3571 = vmatpush.msra.mxu0 %v279
    %3572 = vmatpush.msra.mxu0 %v271
    %3573 = vmatpush.msra.mxu0 %v263
    %3574 = vmatpush.msra.mxu0 %v255
    %3575 = vmatpush.msra.mxu0 %v247
    %3576 = vmatpush.msra.mxu0 %v239
    %3577 = vmatpush.msra.mxu0 %v231
    %3578 = vmatpush.msra.mxu0 %v223
    %3579 = vmatmul.f32.gmra.mxu0 %v3260
    %v3580 = vpop.f32.mrf.mxu0
    %v3581 = vadd.f32 %v3561, %v3580
    %3582 = vdwg.mxu0
    %v3591 = vrot.slane %v3341, 6
    %v3592 = vrot.slane %v3381, 4
    %v3593 = vrot.slane %v3421, 2
    %v3594 = vrot.slane %v3501, 6
    %v3595 = vrot.slane %v3541, 4
    %v3596 = vrot.slane %v3581, 2
    %v3597 = vsel %vm678, %v3301, %v3591
    %v3598 = vsel %vm680, %v3592, %v3593
    %v3599 = vsel %vm682, %v3597, %v3598
    %v3600 = vsel %vm678, %v3461, %v3594
    %v3601 = vsel %vm680, %v3595, %v3596
    %v3602 = vsel %vm682, %v3600, %v3601
    %v3605 = vadd.f32 %v3256, %v3599
    %v3606 = vadd.f32 %v3257, %v3602
    %v3607 = vxor.u32 %v3605, 2147483648
    %v3608 = vmul.f32 %v3607, 1.442695
    %v3609 = vpow.pop %v3608
    %v3610 = vadd.f32 %v3609, 1.0
    %v3611 = vrcp.pop %v3610
    %v3612 = vmul.f32 %v3610, %v3611
    %v3613 = vsub.f32 1.0, %v3612
    %v3614 = vmul.f32 %v3611, %v3613
    %v3615 = vadd.f32 %v3611, %v3614
    %vm3616 = vweird.f32 %v3610
    %vm3617 = vweird.f32 %v3611
    %vm3618 = vmor %vm3616, %vm3617
    %v3619 = vsel %vm3618, %v3611, %v3615
    %v3620 = vand.u32 2147483647, %v3610
    %vm3621 = vcmp.eq.f32.partialorder %v3620, 8.507059e+37
    %v3622 = vand.u32 %v3610, 2147483648
    %v3623 = vor.u32 1.1754944e-38, %v3622
    %v3624 = vsel %vm3621, %v3623, %v3619
    %v3625 = vmul.f32 1.0, %v3624
    %v3627 = vrot.slane %v3605, 4
    %v3629 = vxor.u32 %v3627, 2147483648
    %v3630 = vmul.f32 %v3629, 1.442695
    %v3631 = vpow.pop %v3630
    %v3632 = vadd.f32 %v3631, 1.0
    %v3633 = vrcp.pop %v3632
    %v3634 = vmul.f32 %v3632, %v3633
    %v3635 = vsub.f32 1.0, %v3634
    %v3636 = vmul.f32 %v3633, %v3635
    %v3637 = vadd.f32 %v3633, %v3636
    %vm3638 = vweird.f32 %v3632
    %vm3639 = vweird.f32 %v3633
    %vm3640 = vmor %vm3638, %vm3639
    %v3641 = vsel %vm3640, %v3633, %v3637
    %v3642 = vand.u32 2147483647, %v3632
    %vm3643 = vcmp.eq.f32.partialorder %v3642, 8.507059e+37
    %v3644 = vand.u32 %v3632, 2147483648
    %v3645 = vor.u32 1.1754944e-38, %v3644
    %v3646 = vsel %vm3643, %v3645, %v3641
    %v3647 = vmul.f32 1.0, %v3646
    %v3648 = vtanh.pop %v3606
    %v3650 = vrot.slane %v3606, 4
    %v3652 = vxor.u32 %v3650, 2147483648
    %v3653 = vmul.f32 %v3652, 1.442695
    %v3654 = vpow.pop %v3653
    %v3655 = vadd.f32 %v3654, 1.0
    %v3656 = vrcp.pop %v3655
    %v3657 = vmul.f32 %v3655, %v3656
    %v3658 = vsub.f32 1.0, %v3657
    %v3659 = vmul.f32 %v3656, %v3658
    %v3660 = vadd.f32 %v3656, %v3659
    %vm3661 = vweird.f32 %v3655
    %vm3662 = vweird.f32 %v3656
    %vm3663 = vmor %vm3661, %vm3662
    %v3664 = vsel %vm3663, %v3656, %v3660
    %v3665 = vand.u32 2147483647, %v3655
    %vm3666 = vcmp.eq.f32.partialorder %v3665, 8.507059e+37
    %v3667 = vand.u32 %v3655, 2147483648
    %v3668 = vor.u32 1.1754944e-38, %v3667
    %v3669 = vsel %vm3666, %v3668, %v3664
    %v3670 = vmul.f32 1.0, %v3669
    %v3671 = vmul.f32 %v3647, %v2480
    %v3672 = vmul.f32 %v3625, %v3648
    %v3673 = vadd.f32 %v3671, %v3672
    %v3674 = vtanh.pop %v3673
    %v3675 = vmul.f32 %v3670, %v3674
    %3677 = vst [vmem:[#allocation1] ss:$4 sm:$0xff] %v3675
    %v3678 = vld.sshfl [vmem:[#allocation1] sm:$0xff pattern:$0x73625140]
    %v3679 = vld.sshfl [vmem:[#allocation1 + $0x8] sm:$0xff pattern:$0x73625140]
    %3682 = vmatpush.msra.mxu0 %v886
    %3683 = vmatpush.msra.mxu0 %v878
    %3684 = vmatpush.msra.mxu0 %v870
    %3685 = vmatpush.msra.mxu0 %v862
    %3686 = vmatpush.msra.mxu0 %v854
    %3687 = vmatpush.msra.mxu0 %v846
    %3688 = vmatpush.msra.mxu0 %v838
    %3689 = vmatpush.msra.mxu0 %v830
    %3690 = vmatpush.msra.mxu0 %v822
    %3691 = vmatpush.msra.mxu0 %v814
    %3692 = vmatpush.msra.mxu0 %v806
    %3693 = vmatpush.msra.mxu0 %v798
    %3694 = vmatpush.msra.mxu0 %v790
    %3695 = vmatpush.msra.mxu0 %v782
    %3696 = vmatpush.msra.mxu0 %v774
    %3697 = vmatpush.msra.mxu0 %v766
    %3698 = vmatmul.f32.gmra.mxu0 %v3678
    %v3699 = vpop.f32.mrf.mxu0
    %v3700 = vadd.f32 %v1280, %v3699
    %3701 = vdwg.mxu0
    %3702 = vmatpush.msra.mxu0 %v1014
    %3703 = vmatpush.msra.mxu0 %v1006
    %3704 = vmatpush.msra.mxu0 %v998
    %3705 = vmatpush.msra.mxu0 %v990
    %3706 = vmatpush.msra.mxu0 %v982
    %3707 = vmatpush.msra.mxu0 %v974
    %3708 = vmatpush.msra.mxu0 %v966
    %3709 = vmatpush.msra.mxu0 %v958
    %3710 = vmatpush.msra.mxu0 %v950
    %3711 = vmatpush.msra.mxu0 %v942
    %3712 = vmatpush.msra.mxu0 %v934
    %3713 = vmatpush.msra.mxu0 %v926
    %3714 = vmatpush.msra.mxu0 %v918
    %3715 = vmatpush.msra.mxu0 %v910
    %3716 = vmatpush.msra.mxu0 %v902
    %3717 = vmatpush.msra.mxu0 %v894
    %3718 = vmatmul.f32.gmra.mxu0 %v3679
    %v3719 = vpop.f32.mrf.mxu0
    %v3720 = vadd.f32 %v3700, %v3719
    %3721 = vdwg.mxu0
    %3722 = vmatpush.msra.mxu0 %v1142
    %3723 = vmatpush.msra.mxu0 %v1134
    %3724 = vmatpush.msra.mxu0 %v1126
    %3725 = vmatpush.msra.mxu0 %v1118
    %3726 = vmatpush.msra.mxu0 %v1110
    %3727 = vmatpush.msra.mxu0 %v1102
    %3728 = vmatpush.msra.mxu0 %v1094
    %3729 = vmatpush.msra.mxu0 %v1086
    %3730 = vmatpush.msra.mxu0 %v1078
    %3731 = vmatpush.msra.mxu0 %v1070
    %3732 = vmatpush.msra.mxu0 %v1062
    %3733 = vmatpush.msra.mxu0 %v1054
    %3734 = vmatpush.msra.mxu0 %v1046
    %3735 = vmatpush.msra.mxu0 %v1038
    %3736 = vmatpush.msra.mxu0 %v1030
    %3737 = vmatpush.msra.mxu0 %v1022
    %3738 = vmatmul.f32.gmra.mxu0 %v3253
    %v3739 = vpop.f32.mrf.mxu0
    %v3740 = vadd.f32 %v3720, %v3739
    %3741 = vdwg.mxu0
    %3742 = vmatpush.msra.mxu0 %v1270
    %3743 = vmatpush.msra.mxu0 %v1262
    %3744 = vmatpush.msra.mxu0 %v1254
    %3745 = vmatpush.msra.mxu0 %v1246
    %3746 = vmatpush.msra.mxu0 %v1238
    %3747 = vmatpush.msra.mxu0 %v1230
    %3748 = vmatpush.msra.mxu0 %v1222
    %3749 = vmatpush.msra.mxu0 %v1214
    %3750 = vmatpush.msra.mxu0 %v1206
    %3751 = vmatpush.msra.mxu0 %v1198
    %3752 = vmatpush.msra.mxu0 %v1190
    %3753 = vmatpush.msra.mxu0 %v1182
    %3754 = vmatpush.msra.mxu0 %v1174
    %3755 = vmatpush.msra.mxu0 %v1166
    %3756 = vmatpush.msra.mxu0 %v1158
    %3757 = vmatpush.msra.mxu0 %v1150
    %3758 = vmatmul.f32.gmra.mxu0 %v3254
    %v3759 = vpop.f32.mrf.mxu0
    %v3760 = vadd.f32 %v3740, %v3759
    %3761 = vdwg.mxu0
    %3762 = vmatpush.msra.mxu0 %v887
    %3763 = vmatpush.msra.mxu0 %v879
    %3764 = vmatpush.msra.mxu0 %v871
    %3765 = vmatpush.msra.mxu0 %v863
    %3766 = vmatpush.msra.mxu0 %v855
    %3767 = vmatpush.msra.mxu0 %v847
    %3768 = vmatpush.msra.mxu0 %v839
    %3769 = vmatpush.msra.mxu0 %v831
    %3770 = vmatpush.msra.mxu0 %v823
    %3771 = vmatpush.msra.mxu0 %v815
    %3772 = vmatpush.msra.mxu0 %v807
    %3773 = vmatpush.msra.mxu0 %v799
    %3774 = vmatpush.msra.mxu0 %v791
    %3775 = vmatpush.msra.mxu0 %v783
    %3776 = vmatpush.msra.mxu0 %v775
    %3777 = vmatpush.msra.mxu0 %v767
    %3778 = vmatmul.f32.gmra.mxu0 %v3678
    %v3779 = vpop.f32.mrf.mxu0
    %v3780 = vadd.f32 %v1281, %v3779
    %3781 = vdwg.mxu0
    %3782 = vmatpush.msra.mxu0 %v1015
    %3783 = vmatpush.msra.mxu0 %v1007
    %3784 = vmatpush.msra.mxu0 %v999
    %3785 = vmatpush.msra.mxu0 %v991
    %3786 = vmatpush.msra.mxu0 %v983
    %3787 = vmatpush.msra.mxu0 %v975
    %3788 = vmatpush.msra.mxu0 %v967
    %3789 = vmatpush.msra.mxu0 %v959
    %3790 = vmatpush.msra.mxu0 %v951
    %3791 = vmatpush.msra.mxu0 %v943
    %3792 = vmatpush.msra.mxu0 %v935
    %3793 = vmatpush.msra.mxu0 %v927
    %3794 = vmatpush.msra.mxu0 %v919
    %3795 = vmatpush.msra.mxu0 %v911
    %3796 = vmatpush.msra.mxu0 %v903
    %3797 = vmatpush.msra.mxu0 %v895
    %3798 = vmatmul.f32.gmra.mxu0 %v3679
    %v3799 = vpop.f32.mrf.mxu0
    %v3800 = vadd.f32 %v3780, %v3799
    %3801 = vdwg.mxu0
    %3802 = vmatpush.msra.mxu0 %v1143
    %3803 = vmatpush.msra.mxu0 %v1135
    %3804 = vmatpush.msra.mxu0 %v1127
    %3805 = vmatpush.msra.mxu0 %v1119
    %3806 = vmatpush.msra.mxu0 %v1111
    %3807 = vmatpush.msra.mxu0 %v1103
    %3808 = vmatpush.msra.mxu0 %v1095
    %3809 = vmatpush.msra.mxu0 %v1087
    %3810 = vmatpush.msra.mxu0 %v1079
    %3811 = vmatpush.msra.mxu0 %v1071
    %3812 = vmatpush.msra.mxu0 %v1063
    %3813 = vmatpush.msra.mxu0 %v1055
    %3814 = vmatpush.msra.mxu0 %v1047
    %3815 = vmatpush.msra.mxu0 %v1039
    %3816 = vmatpush.msra.mxu0 %v1031
    %3817 = vmatpush.msra.mxu0 %v1023
    %3818 = vmatmul.f32.gmra.mxu0 %v3253
    %v3819 = vpop.f32.mrf.mxu0
    %v3820 = vadd.f32 %v3800, %v3819
    %3821 = vdwg.mxu0
    %3822 = vmatpush.msra.mxu0 %v1271
    %3823 = vmatpush.msra.mxu0 %v1263
    %3824 = vmatpush.msra.mxu0 %v1255
    %3825 = vmatpush.msra.mxu0 %v1247
    %3826 = vmatpush.msra.mxu0 %v1239
    %3827 = vmatpush.msra.mxu0 %v1231
    %3828 = vmatpush.msra.mxu0 %v1223
    %3829 = vmatpush.msra.mxu0 %v1215
    %3830 = vmatpush.msra.mxu0 %v1207
    %3831 = vmatpush.msra.mxu0 %v1199
    %3832 = vmatpush.msra.mxu0 %v1191
    %3833 = vmatpush.msra.mxu0 %v1183
    %3834 = vmatpush.msra.mxu0 %v1175
    %3835 = vmatpush.msra.mxu0 %v1167
    %3836 = vmatpush.msra.mxu0 %v1159
    %3837 = vmatpush.msra.mxu0 %v1151
    %3838 = vmatmul.f32.gmra.mxu0 %v3254
    %v3839 = vpop.f32.mrf.mxu0
    %v3840 = vadd.f32 %v3820, %v3839
    %3841 = vdwg.mxu0
    %3842 = vmatpush.msra.mxu0 %v888
    %3843 = vmatpush.msra.mxu0 %v880
    %3844 = vmatpush.msra.mxu0 %v872
    %3845 = vmatpush.msra.mxu0 %v864
    %3846 = vmatpush.msra.mxu0 %v856
    %3847 = vmatpush.msra.mxu0 %v848
    %3848 = vmatpush.msra.mxu0 %v840
    %3849 = vmatpush.msra.mxu0 %v832
    %3850 = vmatpush.msra.mxu0 %v824
    %3851 = vmatpush.msra.mxu0 %v816
    %3852 = vmatpush.msra.mxu0 %v808
    %3853 = vmatpush.msra.mxu0 %v800
    %3854 = vmatpush.msra.mxu0 %v792
    %3855 = vmatpush.msra.mxu0 %v784
    %3856 = vmatpush.msra.mxu0 %v776
    %3857 = vmatpush.msra.mxu0 %v768
    %3858 = vmatmul.f32.gmra.mxu0 %v3678
    %v3859 = vpop.f32.mrf.mxu0
    %v3860 = vadd.f32 %v1282, %v3859
    %3861 = vdwg.mxu0
    %3862 = vmatpush.msra.mxu0 %v1016
    %3863 = vmatpush.msra.mxu0 %v1008
    %3864 = vmatpush.msra.mxu0 %v1000
    %3865 = vmatpush.msra.mxu0 %v992
    %3866 = vmatpush.msra.mxu0 %v984
    %3867 = vmatpush.msra.mxu0 %v976
    %3868 = vmatpush.msra.mxu0 %v968
    %3869 = vmatpush.msra.mxu0 %v960
    %3870 = vmatpush.msra.mxu0 %v952
    %3871 = vmatpush.msra.mxu0 %v944
    %3872 = vmatpush.msra.mxu0 %v936
    %3873 = vmatpush.msra.mxu0 %v928
    %3874 = vmatpush.msra.mxu0 %v920
    %3875 = vmatpush.msra.mxu0 %v912
    %3876 = vmatpush.msra.mxu0 %v904
    %3877 = vmatpush.msra.mxu0 %v896
    %3878 = vmatmul.f32.gmra.mxu0 %v3679
    %v3879 = vpop.f32.mrf.mxu0
    %v3880 = vadd.f32 %v3860, %v3879
    %3881 = vdwg.mxu0
    %3882 = vmatpush.msra.mxu0 %v1144
    %3883 = vmatpush.msra.mxu0 %v1136
    %3884 = vmatpush.msra.mxu0 %v1128
    %3885 = vmatpush.msra.mxu0 %v1120
    %3886 = vmatpush.msra.mxu0 %v1112
    %3887 = vmatpush.msra.mxu0 %v1104
    %3888 = vmatpush.msra.mxu0 %v1096
    %3889 = vmatpush.msra.mxu0 %v1088
    %3890 = vmatpush.msra.mxu0 %v1080
    %3891 = vmatpush.msra.mxu0 %v1072
    %3892 = vmatpush.msra.mxu0 %v1064
    %3893 = vmatpush.msra.mxu0 %v1056
    %3894 = vmatpush.msra.mxu0 %v1048
    %3895 = vmatpush.msra.mxu0 %v1040
    %3896 = vmatpush.msra.mxu0 %v1032
    %3897 = vmatpush.msra.mxu0 %v1024
    %3898 = vmatmul.f32.gmra.mxu0 %v3253
    %v3899 = vpop.f32.mrf.mxu0
    %v3900 = vadd.f32 %v3880, %v3899
    %3901 = vdwg.mxu0
    %3902 = vmatpush.msra.mxu0 %v1272
    %3903 = vmatpush.msra.mxu0 %v1264
    %3904 = vmatpush.msra.mxu0 %v1256
    %3905 = vmatpush.msra.mxu0 %v1248
    %3906 = vmatpush.msra.mxu0 %v1240
    %3907 = vmatpush.msra.mxu0 %v1232
    %3908 = vmatpush.msra.mxu0 %v1224
    %3909 = vmatpush.msra.mxu0 %v1216
    %3910 = vmatpush.msra.mxu0 %v1208
    %3911 = vmatpush.msra.mxu0 %v1200
    %3912 = vmatpush.msra.mxu0 %v1192
    %3913 = vmatpush.msra.mxu0 %v1184
    %3914 = vmatpush.msra.mxu0 %v1176
    %3915 = vmatpush.msra.mxu0 %v1168
    %3916 = vmatpush.msra.mxu0 %v1160
    %3917 = vmatpush.msra.mxu0 %v1152
    %3918 = vmatmul.f32.gmra.mxu0 %v3254
    %v3919 = vpop.f32.mrf.mxu0
    %v3920 = vadd.f32 %v3900, %v3919
    %3921 = vdwg.mxu0
    %3922 = vmatpush.msra.mxu0 %v889
    %3923 = vmatpush.msra.mxu0 %v881
    %3924 = vmatpush.msra.mxu0 %v873
    %3925 = vmatpush.msra.mxu0 %v865
    %3926 = vmatpush.msra.mxu0 %v857
    %3927 = vmatpush.msra.mxu0 %v849
    %3928 = vmatpush.msra.mxu0 %v841
    %3929 = vmatpush.msra.mxu0 %v833
    %3930 = vmatpush.msra.mxu0 %v825
    %3931 = vmatpush.msra.mxu0 %v817
    %3932 = vmatpush.msra.mxu0 %v809
    %3933 = vmatpush.msra.mxu0 %v801
    %3934 = vmatpush.msra.mxu0 %v793
    %3935 = vmatpush.msra.mxu0 %v785
    %3936 = vmatpush.msra.mxu0 %v777
    %3937 = vmatpush.msra.mxu0 %v769
    %3938 = vmatmul.f32.gmra.mxu0 %v3678
    %v3939 = vpop.f32.mrf.mxu0
    %v3940 = vadd.f32 %v1283, %v3939
    %3941 = vdwg.mxu0
    %3942 = vmatpush.msra.mxu0 %v1017
    %3943 = vmatpush.msra.mxu0 %v1009
    %3944 = vmatpush.msra.mxu0 %v1001
    %3945 = vmatpush.msra.mxu0 %v993
    %3946 = vmatpush.msra.mxu0 %v985
    %3947 = vmatpush.msra.mxu0 %v977
    %3948 = vmatpush.msra.mxu0 %v969
    %3949 = vmatpush.msra.mxu0 %v961
    %3950 = vmatpush.msra.mxu0 %v953
    %3951 = vmatpush.msra.mxu0 %v945
    %3952 = vmatpush.msra.mxu0 %v937
    %3953 = vmatpush.msra.mxu0 %v929
    %3954 = vmatpush.msra.mxu0 %v921
    %3955 = vmatpush.msra.mxu0 %v913
    %3956 = vmatpush.msra.mxu0 %v905
    %3957 = vmatpush.msra.mxu0 %v897
    %3958 = vmatmul.f32.gmra.mxu0 %v3679
    %v3959 = vpop.f32.mrf.mxu0
    %v3960 = vadd.f32 %v3940, %v3959
    %3961 = vdwg.mxu0
    %3962 = vmatpush.msra.mxu0 %v1145
    %3963 = vmatpush.msra.mxu0 %v1137
    %3964 = vmatpush.msra.mxu0 %v1129
    %3965 = vmatpush.msra.mxu0 %v1121
    %3966 = vmatpush.msra.mxu0 %v1113
    %3967 = vmatpush.msra.mxu0 %v1105
    %3968 = vmatpush.msra.mxu0 %v1097
    %3969 = vmatpush.msra.mxu0 %v1089
    %3970 = vmatpush.msra.mxu0 %v1081
    %3971 = vmatpush.msra.mxu0 %v1073
    %3972 = vmatpush.msra.mxu0 %v1065
    %3973 = vmatpush.msra.mxu0 %v1057
    %3974 = vmatpush.msra.mxu0 %v1049
    %3975 = vmatpush.msra.mxu0 %v1041
    %3976 = vmatpush.msra.mxu0 %v1033
    %3977 = vmatpush.msra.mxu0 %v1025
    %3978 = vmatmul.f32.gmra.mxu0 %v3253
    %v3979 = vpop.f32.mrf.mxu0
    %v3980 = vadd.f32 %v3960, %v3979
    %3981 = vdwg.mxu0
    %3982 = vmatpush.msra.mxu0 %v1273
    %3983 = vmatpush.msra.mxu0 %v1265
    %3984 = vmatpush.msra.mxu0 %v1257
    %3985 = vmatpush.msra.mxu0 %v1249
    %3986 = vmatpush.msra.mxu0 %v1241
    %3987 = vmatpush.msra.mxu0 %v1233
    %3988 = vmatpush.msra.mxu0 %v1225
    %3989 = vmatpush.msra.mxu0 %v1217
    %3990 = vmatpush.msra.mxu0 %v1209
    %3991 = vmatpush.msra.mxu0 %v1201
    %3992 = vmatpush.msra.mxu0 %v1193
    %3993 = vmatpush.msra.mxu0 %v1185
    %3994 = vmatpush.msra.mxu0 %v1177
    %3995 = vmatpush.msra.mxu0 %v1169
    %3996 = vmatpush.msra.mxu0 %v1161
    %3997 = vmatpush.msra.mxu0 %v1153
    %3998 = vmatmul.f32.gmra.mxu0 %v3254
    %v3999 = vpop.f32.mrf.mxu0
    %v4000 = vadd.f32 %v3980, %v3999
    %4001 = vdwg.mxu0
    %4002 = vmatpush.msra.mxu0 %v890
    %4003 = vmatpush.msra.mxu0 %v882
    %4004 = vmatpush.msra.mxu0 %v874
    %4005 = vmatpush.msra.mxu0 %v866
    %4006 = vmatpush.msra.mxu0 %v858
    %4007 = vmatpush.msra.mxu0 %v850
    %4008 = vmatpush.msra.mxu0 %v842
    %4009 = vmatpush.msra.mxu0 %v834
    %4010 = vmatpush.msra.mxu0 %v826
    %4011 = vmatpush.msra.mxu0 %v818
    %4012 = vmatpush.msra.mxu0 %v810
    %4013 = vmatpush.msra.mxu0 %v802
    %4014 = vmatpush.msra.mxu0 %v794
    %4015 = vmatpush.msra.mxu0 %v786
    %4016 = vmatpush.msra.mxu0 %v778
    %4017 = vmatpush.msra.mxu0 %v770
    %4018 = vmatmul.f32.gmra.mxu0 %v3678
    %v4019 = vpop.f32.mrf.mxu0
    %v4020 = vadd.f32 %v1284, %v4019
    %4021 = vdwg.mxu0
    %4022 = vmatpush.msra.mxu0 %v1018
    %4023 = vmatpush.msra.mxu0 %v1010
    %4024 = vmatpush.msra.mxu0 %v1002
    %4025 = vmatpush.msra.mxu0 %v994
    %4026 = vmatpush.msra.mxu0 %v986
    %4027 = vmatpush.msra.mxu0 %v978
    %4028 = vmatpush.msra.mxu0 %v970
    %4029 = vmatpush.msra.mxu0 %v962
    %4030 = vmatpush.msra.mxu0 %v954
    %4031 = vmatpush.msra.mxu0 %v946
    %4032 = vmatpush.msra.mxu0 %v938
    %4033 = vmatpush.msra.mxu0 %v930
    %4034 = vmatpush.msra.mxu0 %v922
    %4035 = vmatpush.msra.mxu0 %v914
    %4036 = vmatpush.msra.mxu0 %v906
    %4037 = vmatpush.msra.mxu0 %v898
    %4038 = vmatmul.f32.gmra.mxu0 %v3679
    %v4039 = vpop.f32.mrf.mxu0
    %v4040 = vadd.f32 %v4020, %v4039
    %4041 = vdwg.mxu0
    %4042 = vmatpush.msra.mxu0 %v1146
    %4043 = vmatpush.msra.mxu0 %v1138
    %4044 = vmatpush.msra.mxu0 %v1130
    %4045 = vmatpush.msra.mxu0 %v1122
    %4046 = vmatpush.msra.mxu0 %v1114
    %4047 = vmatpush.msra.mxu0 %v1106
    %4048 = vmatpush.msra.mxu0 %v1098
    %4049 = vmatpush.msra.mxu0 %v1090
    %4050 = vmatpush.msra.mxu0 %v1082
    %4051 = vmatpush.msra.mxu0 %v1074
    %4052 = vmatpush.msra.mxu0 %v1066
    %4053 = vmatpush.msra.mxu0 %v1058
    %4054 = vmatpush.msra.mxu0 %v1050
    %4055 = vmatpush.msra.mxu0 %v1042
    %4056 = vmatpush.msra.mxu0 %v1034
    %4057 = vmatpush.msra.mxu0 %v1026
    %4058 = vmatmul.f32.gmra.mxu0 %v3253
    %v4059 = vpop.f32.mrf.mxu0
    %v4060 = vadd.f32 %v4040, %v4059
    %4061 = vdwg.mxu0
    %4062 = vmatpush.msra.mxu0 %v1274
    %4063 = vmatpush.msra.mxu0 %v1266
    %4064 = vmatpush.msra.mxu0 %v1258
    %4065 = vmatpush.msra.mxu0 %v1250
    %4066 = vmatpush.msra.mxu0 %v1242
    %4067 = vmatpush.msra.mxu0 %v1234
    %4068 = vmatpush.msra.mxu0 %v1226
    %4069 = vmatpush.msra.mxu0 %v1218
    %4070 = vmatpush.msra.mxu0 %v1210
    %4071 = vmatpush.msra.mxu0 %v1202
    %4072 = vmatpush.msra.mxu0 %v1194
    %4073 = vmatpush.msra.mxu0 %v1186
    %4074 = vmatpush.msra.mxu0 %v1178
    %4075 = vmatpush.msra.mxu0 %v1170
    %4076 = vmatpush.msra.mxu0 %v1162
    %4077 = vmatpush.msra.mxu0 %v1154
    %4078 = vmatmul.f32.gmra.mxu0 %v3254
    %v4079 = vpop.f32.mrf.mxu0
    %v4080 = vadd.f32 %v4060, %v4079
    %4081 = vdwg.mxu0
    %4082 = vmatpush.msra.mxu0 %v891
    %4083 = vmatpush.msra.mxu0 %v883
    %4084 = vmatpush.msra.mxu0 %v875
    %4085 = vmatpush.msra.mxu0 %v867
    %4086 = vmatpush.msra.mxu0 %v859
    %4087 = vmatpush.msra.mxu0 %v851
    %4088 = vmatpush.msra.mxu0 %v843
    %4089 = vmatpush.msra.mxu0 %v835
    %4090 = vmatpush.msra.mxu0 %v827
    %4091 = vmatpush.msra.mxu0 %v819
    %4092 = vmatpush.msra.mxu0 %v811
    %4093 = vmatpush.msra.mxu0 %v803
    %4094 = vmatpush.msra.mxu0 %v795
    %4095 = vmatpush.msra.mxu0 %v787
    %4096 = vmatpush.msra.mxu0 %v779
    %4097 = vmatpush.msra.mxu0 %v771
    %4098 = vmatmul.f32.gmra.mxu0 %v3678
    %v4099 = vpop.f32.mrf.mxu0
    %v4100 = vadd.f32 %v1285, %v4099
    %4101 = vdwg.mxu0
    %4102 = vmatpush.msra.mxu0 %v1019
    %4103 = vmatpush.msra.mxu0 %v1011
    %4104 = vmatpush.msra.mxu0 %v1003
    %4105 = vmatpush.msra.mxu0 %v995
    %4106 = vmatpush.msra.mxu0 %v987
    %4107 = vmatpush.msra.mxu0 %v979
    %4108 = vmatpush.msra.mxu0 %v971
    %4109 = vmatpush.msra.mxu0 %v963
    %4110 = vmatpush.msra.mxu0 %v955
    %4111 = vmatpush.msra.mxu0 %v947
    %4112 = vmatpush.msra.mxu0 %v939
    %4113 = vmatpush.msra.mxu0 %v931
    %4114 = vmatpush.msra.mxu0 %v923
    %4115 = vmatpush.msra.mxu0 %v915
    %4116 = vmatpush.msra.mxu0 %v907
    %4117 = vmatpush.msra.mxu0 %v899
    %4118 = vmatmul.f32.gmra.mxu0 %v3679
    %v4119 = vpop.f32.mrf.mxu0
    %v4120 = vadd.f32 %v4100, %v4119
    %4121 = vdwg.mxu0
    %4122 = vmatpush.msra.mxu0 %v1147
    %4123 = vmatpush.msra.mxu0 %v1139
    %4124 = vmatpush.msra.mxu0 %v1131
    %4125 = vmatpush.msra.mxu0 %v1123
    %4126 = vmatpush.msra.mxu0 %v1115
    %4127 = vmatpush.msra.mxu0 %v1107
    %4128 = vmatpush.msra.mxu0 %v1099
    %4129 = vmatpush.msra.mxu0 %v1091
    %4130 = vmatpush.msra.mxu0 %v1083
    %4131 = vmatpush.msra.mxu0 %v1075
    %4132 = vmatpush.msra.mxu0 %v1067
    %4133 = vmatpush.msra.mxu0 %v1059
    %4134 = vmatpush.msra.mxu0 %v1051
    %4135 = vmatpush.msra.mxu0 %v1043
    %4136 = vmatpush.msra.mxu0 %v1035
    %4137 = vmatpush.msra.mxu0 %v1027
    %4138 = vmatmul.f32.gmra.mxu0 %v3253
    %v4139 = vpop.f32.mrf.mxu0
    %v4140 = vadd.f32 %v4120, %v4139
    %4141 = vdwg.mxu0
    %4142 = vmatpush.msra.mxu0 %v1275
    %4143 = vmatpush.msra.mxu0 %v1267
    %4144 = vmatpush.msra.mxu0 %v1259
    %4145 = vmatpush.msra.mxu0 %v1251
    %4146 = vmatpush.msra.mxu0 %v1243
    %4147 = vmatpush.msra.mxu0 %v1235
    %4148 = vmatpush.msra.mxu0 %v1227
    %4149 = vmatpush.msra.mxu0 %v1219
    %4150 = vmatpush.msra.mxu0 %v1211
    %4151 = vmatpush.msra.mxu0 %v1203
    %4152 = vmatpush.msra.mxu0 %v1195
    %4153 = vmatpush.msra.mxu0 %v1187
    %4154 = vmatpush.msra.mxu0 %v1179
    %4155 = vmatpush.msra.mxu0 %v1171
    %4156 = vmatpush.msra.mxu0 %v1163
    %4157 = vmatpush.msra.mxu0 %v1155
    %4158 = vmatmul.f32.gmra.mxu0 %v3254
    %v4159 = vpop.f32.mrf.mxu0
    %v4160 = vadd.f32 %v4140, %v4159
    %4161 = vdwg.mxu0
    %4162 = vmatpush.msra.mxu0 %v892
    %4163 = vmatpush.msra.mxu0 %v884
    %4164 = vmatpush.msra.mxu0 %v876
    %4165 = vmatpush.msra.mxu0 %v868
    %4166 = vmatpush.msra.mxu0 %v860
    %4167 = vmatpush.msra.mxu0 %v852
    %4168 = vmatpush.msra.mxu0 %v844
    %4169 = vmatpush.msra.mxu0 %v836
    %4170 = vmatpush.msra.mxu0 %v828
    %4171 = vmatpush.msra.mxu0 %v820
    %4172 = vmatpush.msra.mxu0 %v812
    %4173 = vmatpush.msra.mxu0 %v804
    %4174 = vmatpush.msra.mxu0 %v796
    %4175 = vmatpush.msra.mxu0 %v788
    %4176 = vmatpush.msra.mxu0 %v780
    %4177 = vmatpush.msra.mxu0 %v772
    %4178 = vmatmul.f32.gmra.mxu0 %v3678
    %v4179 = vpop.f32.mrf.mxu0
    %v4180 = vadd.f32 %v1286, %v4179
    %4181 = vdwg.mxu0
    %4182 = vmatpush.msra.mxu0 %v1020
    %4183 = vmatpush.msra.mxu0 %v1012
    %4184 = vmatpush.msra.mxu0 %v1004
    %4185 = vmatpush.msra.mxu0 %v996
    %4186 = vmatpush.msra.mxu0 %v988
    %4187 = vmatpush.msra.mxu0 %v980
    %4188 = vmatpush.msra.mxu0 %v972
    %4189 = vmatpush.msra.mxu0 %v964
    %4190 = vmatpush.msra.mxu0 %v956
    %4191 = vmatpush.msra.mxu0 %v948
    %4192 = vmatpush.msra.mxu0 %v940
    %4193 = vmatpush.msra.mxu0 %v932
    %4194 = vmatpush.msra.mxu0 %v924
    %4195 = vmatpush.msra.mxu0 %v916
    %4196 = vmatpush.msra.mxu0 %v908
    %4197 = vmatpush.msra.mxu0 %v900
    %4198 = vmatmul.f32.gmra.mxu0 %v3679
    %v4199 = vpop.f32.mrf.mxu0
    %v4200 = vadd.f32 %v4180, %v4199
    %4201 = vdwg.mxu0
    %4202 = vmatpush.msra.mxu0 %v1148
    %4203 = vmatpush.msra.mxu0 %v1140
    %4204 = vmatpush.msra.mxu0 %v1132
    %4205 = vmatpush.msra.mxu0 %v1124
    %4206 = vmatpush.msra.mxu0 %v1116
    %4207 = vmatpush.msra.mxu0 %v1108
    %4208 = vmatpush.msra.mxu0 %v1100
    %4209 = vmatpush.msra.mxu0 %v1092
    %4210 = vmatpush.msra.mxu0 %v1084
    %4211 = vmatpush.msra.mxu0 %v1076
    %4212 = vmatpush.msra.mxu0 %v1068
    %4213 = vmatpush.msra.mxu0 %v1060
    %4214 = vmatpush.msra.mxu0 %v1052
    %4215 = vmatpush.msra.mxu0 %v1044
    %4216 = vmatpush.msra.mxu0 %v1036
    %4217 = vmatpush.msra.mxu0 %v1028
    %4218 = vmatmul.f32.gmra.mxu0 %v3253
    %v4219 = vpop.f32.mrf.mxu0
    %v4220 = vadd.f32 %v4200, %v4219
    %4221 = vdwg.mxu0
    %4222 = vmatpush.msra.mxu0 %v1276
    %4223 = vmatpush.msra.mxu0 %v1268
    %4224 = vmatpush.msra.mxu0 %v1260
    %4225 = vmatpush.msra.mxu0 %v1252
    %4226 = vmatpush.msra.mxu0 %v1244
    %4227 = vmatpush.msra.mxu0 %v1236
    %4228 = vmatpush.msra.mxu0 %v1228
    %4229 = vmatpush.msra.mxu0 %v1220
    %4230 = vmatpush.msra.mxu0 %v1212
    %4231 = vmatpush.msra.mxu0 %v1204
    %4232 = vmatpush.msra.mxu0 %v1196
    %4233 = vmatpush.msra.mxu0 %v1188
    %4234 = vmatpush.msra.mxu0 %v1180
    %4235 = vmatpush.msra.mxu0 %v1172
    %4236 = vmatpush.msra.mxu0 %v1164
    %4237 = vmatpush.msra.mxu0 %v1156
    %4238 = vmatmul.f32.gmra.mxu0 %v3254
    %v4239 = vpop.f32.mrf.mxu0
    %v4240 = vadd.f32 %v4220, %v4239
    %4241 = vdwg.mxu0
    %4242 = vmatpush.msra.mxu0 %v893
    %4243 = vmatpush.msra.mxu0 %v885
    %4244 = vmatpush.msra.mxu0 %v877
    %4245 = vmatpush.msra.mxu0 %v869
    %4246 = vmatpush.msra.mxu0 %v861
    %4247 = vmatpush.msra.mxu0 %v853
    %4248 = vmatpush.msra.mxu0 %v845
    %4249 = vmatpush.msra.mxu0 %v837
    %4250 = vmatpush.msra.mxu0 %v829
    %4251 = vmatpush.msra.mxu0 %v821
    %4252 = vmatpush.msra.mxu0 %v813
    %4253 = vmatpush.msra.mxu0 %v805
    %4254 = vmatpush.msra.mxu0 %v797
    %4255 = vmatpush.msra.mxu0 %v789
    %4256 = vmatpush.msra.mxu0 %v781
    %4257 = vmatpush.msra.mxu0 %v773
    %4258 = vmatmul.f32.gmra.mxu0 %v3678
    %v4259 = vpop.f32.mrf.mxu0
    %v4260 = vadd.f32 %v1287, %v4259
    %4261 = vdwg.mxu0
    %4262 = vmatpush.msra.mxu0 %v1021
    %4263 = vmatpush.msra.mxu0 %v1013
    %4264 = vmatpush.msra.mxu0 %v1005
    %4265 = vmatpush.msra.mxu0 %v997
    %4266 = vmatpush.msra.mxu0 %v989
    %4267 = vmatpush.msra.mxu0 %v981
    %4268 = vmatpush.msra.mxu0 %v973
    %4269 = vmatpush.msra.mxu0 %v965
    %4270 = vmatpush.msra.mxu0 %v957
    %4271 = vmatpush.msra.mxu0 %v949
    %4272 = vmatpush.msra.mxu0 %v941
    %4273 = vmatpush.msra.mxu0 %v933
    %4274 = vmatpush.msra.mxu0 %v925
    %4275 = vmatpush.msra.mxu0 %v917
    %4276 = vmatpush.msra.mxu0 %v909
    %4277 = vmatpush.msra.mxu0 %v901
    %4278 = vmatmul.f32.gmra.mxu0 %v3679
    %v4279 = vpop.f32.mrf.mxu0
    %v4280 = vadd.f32 %v4260, %v4279
    %4281 = vdwg.mxu0
    %4282 = vmatpush.msra.mxu0 %v1149
    %4283 = vmatpush.msra.mxu0 %v1141
    %4284 = vmatpush.msra.mxu0 %v1133
    %4285 = vmatpush.msra.mxu0 %v1125
    %4286 = vmatpush.msra.mxu0 %v1117
    %4287 = vmatpush.msra.mxu0 %v1109
    %4288 = vmatpush.msra.mxu0 %v1101
    %4289 = vmatpush.msra.mxu0 %v1093
    %4290 = vmatpush.msra.mxu0 %v1085
    %4291 = vmatpush.msra.mxu0 %v1077
    %4292 = vmatpush.msra.mxu0 %v1069
    %4293 = vmatpush.msra.mxu0 %v1061
    %4294 = vmatpush.msra.mxu0 %v1053
    %4295 = vmatpush.msra.mxu0 %v1045
    %4296 = vmatpush.msra.mxu0 %v1037
    %4297 = vmatpush.msra.mxu0 %v1029
    %4298 = vmatmul.f32.gmra.mxu0 %v3253
    %v4299 = vpop.f32.mrf.mxu0
    %v4300 = vadd.f32 %v4280, %v4299
    %4301 = vdwg.mxu0
    %4302 = vmatpush.msra.mxu0 %v1277
    %4303 = vmatpush.msra.mxu0 %v1269
    %4304 = vmatpush.msra.mxu0 %v1261
    %4305 = vmatpush.msra.mxu0 %v1253
    %4306 = vmatpush.msra.mxu0 %v1245
    %4307 = vmatpush.msra.mxu0 %v1237
    %4308 = vmatpush.msra.mxu0 %v1229
    %4309 = vmatpush.msra.mxu0 %v1221
    %4310 = vmatpush.msra.mxu0 %v1213
    %4311 = vmatpush.msra.mxu0 %v1205
    %4312 = vmatpush.msra.mxu0 %v1197
    %4313 = vmatpush.msra.mxu0 %v1189
    %4314 = vmatpush.msra.mxu0 %v1181
    %4315 = vmatpush.msra.mxu0 %v1173
    %4316 = vmatpush.msra.mxu0 %v1165
    %4317 = vmatpush.msra.mxu0 %v1157
    %4318 = vmatmul.f32.gmra.mxu0 %v3254
    %v4319 = vpop.f32.mrf.mxu0
    %v4320 = vadd.f32 %v4300, %v4319
    %4321 = vdwg.mxu0
    %v4322 = vxor.u32 %v3760, 2147483648
    %v4323 = vxor.u32 %v3840, 2147483648
    %v4324 = vmul.f32 %v4322, 1.442695
    %v4325 = vpow.pop %v4324
    %v4326 = vmul.f32 %v4323, 1.442695
    %v4327 = vpow.pop %v4326
    %v4328 = vadd.f32 %v4325, 1.0
    %v4329 = vadd.f32 %v4327, 1.0
    %v4330 = vrcp.pop %v4328
    %v4331 = vmul.f32 %v4328, %v4330
    %v4332 = vsub.f32 1.0, %v4331
    %v4333 = vmul.f32 %v4330, %v4332
    %v4334 = vadd.f32 %v4330, %v4333
    %vm4335 = vweird.f32 %v4328
    %vm4336 = vweird.f32 %v4330
    %vm4337 = vmor %vm4335, %vm4336
    %v4338 = vsel %vm4337, %v4330, %v4334
    %v4339 = vand.u32 2147483647, %v4328
    %vm4340 = vcmp.eq.f32.partialorder %v4339, 8.507059e+37
    %v4341 = vand.u32 %v4328, 2147483648
    %v4342 = vor.u32 1.1754944e-38, %v4341
    %v4343 = vsel %vm4340, %v4342, %v4338
    %v4344 = vmul.f32 1.0, %v4343
    %v4345 = vrcp.pop %v4329
    %v4346 = vmul.f32 %v4329, %v4345
    %v4347 = vsub.f32 1.0, %v4346
    %v4348 = vmul.f32 %v4345, %v4347
    %v4349 = vadd.f32 %v4345, %v4348
    %vm4350 = vweird.f32 %v4329
    %vm4351 = vweird.f32 %v4345
    %vm4352 = vmor %vm4350, %vm4351
    %v4353 = vsel %vm4352, %v4345, %v4349
    %v4354 = vand.u32 2147483647, %v4329
    %vm4355 = vcmp.eq.f32.partialorder %v4354, 8.507059e+37
    %v4356 = vand.u32 %v4329, 2147483648
    %v4357 = vor.u32 1.1754944e-38, %v4356
    %v4358 = vsel %vm4355, %v4357, %v4353
    %v4359 = vmul.f32 1.0, %v4358
    %v4360 = vxor.u32 %v3920, 2147483648
    %v4361 = vxor.u32 %v4000, 2147483648
    %v4362 = vmul.f32 %v4360, 1.442695
    %v4363 = vpow.pop %v4362
    %v4364 = vmul.f32 %v4361, 1.442695
    %v4365 = vpow.pop %v4364
    %v4366 = vadd.f32 %v4363, 1.0
    %v4367 = vadd.f32 %v4365, 1.0
    %v4368 = vrcp.pop %v4366
    %v4369 = vmul.f32 %v4366, %v4368
    %v4370 = vsub.f32 1.0, %v4369
    %v4371 = vmul.f32 %v4368, %v4370
    %v4372 = vadd.f32 %v4368, %v4371
    %vm4373 = vweird.f32 %v4366
    %vm4374 = vweird.f32 %v4368
    %vm4375 = vmor %vm4373, %vm4374
    %v4376 = vsel %vm4375, %v4368, %v4372
    %v4377 = vand.u32 2147483647, %v4366
    %vm4378 = vcmp.eq.f32.partialorder %v4377, 8.507059e+37
    %v4379 = vand.u32 %v4366, 2147483648
    %v4380 = vor.u32 1.1754944e-38, %v4379
    %v4381 = vsel %vm4378, %v4380, %v4376
    %v4382 = vmul.f32 1.0, %v4381
    %v4383 = vrcp.pop %v4367
    %v4384 = vmul.f32 %v4367, %v4383
    %v4385 = vsub.f32 1.0, %v4384
    %v4386 = vmul.f32 %v4383, %v4385
    %v4387 = vadd.f32 %v4383, %v4386
    %vm4388 = vweird.f32 %v4367
    %vm4389 = vweird.f32 %v4383
    %vm4390 = vmor %vm4388, %vm4389
    %v4391 = vsel %vm4390, %v4383, %v4387
    %v4392 = vand.u32 2147483647, %v4367
    %vm4393 = vcmp.eq.f32.partialorder %v4392, 8.507059e+37
    %v4394 = vand.u32 %v4367, 2147483648
    %v4395 = vor.u32 1.1754944e-38, %v4394
    %v4396 = vsel %vm4393, %v4395, %v4391
    %v4397 = vmul.f32 1.0, %v4396
    %v4398 = vtanh.pop %v4080
    %v4399 = vtanh.pop %v4160
    %v4400 = vxor.u32 %v4240, 2147483648
    %v4401 = vxor.u32 %v4320, 2147483648
    %v4402 = vmul.f32 %v4400, 1.442695
    %v4403 = vpow.pop %v4402
    %v4404 = vmul.f32 %v4401, 1.442695
    %v4405 = vpow.pop %v4404
    %v4406 = vadd.f32 %v4403, 1.0
    %v4407 = vadd.f32 %v4405, 1.0
    %v4408 = vrcp.pop %v4406
    %v4409 = vmul.f32 %v4406, %v4408
    %v4410 = vsub.f32 1.0, %v4409
    %v4411 = vmul.f32 %v4408, %v4410
    %v4412 = vadd.f32 %v4408, %v4411
    %vm4413 = vweird.f32 %v4406
    %vm4414 = vweird.f32 %v4408
    %vm4415 = vmor %vm4413, %vm4414
    %v4416 = vsel %vm4415, %v4408, %v4412
    %v4417 = vand.u32 2147483647, %v4406
    %vm4418 = vcmp.eq.f32.partialorder %v4417, 8.507059e+37
    %v4419 = vand.u32 %v4406, 2147483648
    %v4420 = vor.u32 1.1754944e-38, %v4419
    %v4421 = vsel %vm4418, %v4420, %v4416
    %v4422 = vmul.f32 1.0, %v4421
    %v4423 = vrcp.pop %v4407
    %v4424 = vmul.f32 %v4407, %v4423
    %v4425 = vsub.f32 1.0, %v4424
    %v4426 = vmul.f32 %v4423, %v4425
    %v4427 = vadd.f32 %v4423, %v4426
    %vm4428 = vweird.f32 %v4407
    %vm4429 = vweird.f32 %v4423
    %vm4430 = vmor %vm4428, %vm4429
    %v4431 = vsel %vm4430, %v4423, %v4427
    %v4432 = vand.u32 2147483647, %v4407
    %vm4433 = vcmp.eq.f32.partialorder %v4432, 8.507059e+37
    %v4434 = vand.u32 %v4407, 2147483648
    %v4435 = vor.u32 1.1754944e-38, %v4434
    %v4436 = vsel %vm4433, %v4435, %v4431
    %v4437 = vmul.f32 1.0, %v4436
    %v4438 = vmul.f32 %v4382, %v3249
    %v4439 = vmul.f32 %v4397, %v3250
    %v4440 = vmul.f32 %v4344, %v4398
    %v4441 = vmul.f32 %v4359, %v4399
    %v4442 = vadd.f32 %v4438, %v4440
    %v4443 = vadd.f32 %v4439, %v4441
    %v4444 = vtanh.pop %v4442
    %v4445 = vtanh.pop %v4443
    %v4446 = vmul.f32 %v4422, %v4444
    %v4447 = vmul.f32 %v4437, %v4445
    %s4448 = scalar_lea.vmem [#allocation3], 48
    %v4449 = vld [vmem:[%s4448] sm:$0xff]
    %v4450 = vld [vmem:[%s4448 + $0x8] sm:$0xff]
    %4451 = vst [vmem:[#allocation1] ss:$4 sm:$0xff] %v3675
    %v4452 = vld.sshfl [vmem:[#allocation1] sm:$0xff pattern:$0x73625140]
    %v4453 = vld.sshfl [vmem:[#allocation1 + $0x8] sm:$0xff pattern:$0x73625140]
    %4456 = vmatpush.msra.mxu0 %v208
    %4457 = vmatpush.msra.mxu0 %v200
    %4458 = vmatpush.msra.mxu0 %v192
    %4459 = vmatpush.msra.mxu0 %v184
    %4460 = vmatpush.msra.mxu0 %v176
    %4461 = vmatpush.msra.mxu0 %v168
    %4462 = vmatpush.msra.mxu0 %v160
    %4463 = vmatpush.msra.mxu0 %v152
    %4464 = vmatpush.msra.mxu0 %v144
    %4465 = vmatpush.msra.mxu0 %v136
    %4466 = vmatpush.msra.mxu0 %v128
    %4467 = vmatpush.msra.mxu0 %v120
    %4468 = vmatpush.msra.mxu0 %v112
    %4469 = vmatpush.msra.mxu0 %v104
    %4470 = vmatpush.msra.mxu0 %v96
    %4471 = vmatpush.msra.mxu0 %v88
    %4472 = vmatmul.f32.gmra.mxu0 %v4452
    %v4473 = vpop.f32.mrf.mxu0
    %v4474 = vadd.f32 0.0, %v4473
    %4475 = vdwg.mxu0
    %4476 = vmatpush.msra.mxu0 %v336
    %4477 = vmatpush.msra.mxu0 %v328
    %4478 = vmatpush.msra.mxu0 %v320
    %4479 = vmatpush.msra.mxu0 %v312
    %4480 = vmatpush.msra.mxu0 %v304
    %4481 = vmatpush.msra.mxu0 %v296
    %4482 = vmatpush.msra.mxu0 %v288
    %4483 = vmatpush.msra.mxu0 %v280
    %4484 = vmatpush.msra.mxu0 %v272
    %4485 = vmatpush.msra.mxu0 %v264
    %4486 = vmatpush.msra.mxu0 %v256
    %4487 = vmatpush.msra.mxu0 %v248
    %4488 = vmatpush.msra.mxu0 %v240
    %4489 = vmatpush.msra.mxu0 %v232
    %4490 = vmatpush.msra.mxu0 %v224
    %4491 = vmatpush.msra.mxu0 %v216
    %4492 = vmatmul.f32.gmra.mxu0 %v4453
    %v4493 = vpop.f32.mrf.mxu0
    %v4494 = vadd.f32 %v4474, %v4493
    %4495 = vdwg.mxu0
    %4496 = vmatpush.msra.mxu0 %v209
    %4497 = vmatpush.msra.mxu0 %v201
    %4498 = vmatpush.msra.mxu0 %v193
    %4499 = vmatpush.msra.mxu0 %v185
    %4500 = vmatpush.msra.mxu0 %v177
    %4501 = vmatpush.msra.mxu0 %v169
    %4502 = vmatpush.msra.mxu0 %v161
    %4503 = vmatpush.msra.mxu0 %v153
    %4504 = vmatpush.msra.mxu0 %v145
    %4505 = vmatpush.msra.mxu0 %v137
    %4506 = vmatpush.msra.mxu0 %v129
    %4507 = vmatpush.msra.mxu0 %v121
    %4508 = vmatpush.msra.mxu0 %v113
    %4509 = vmatpush.msra.mxu0 %v105
    %4510 = vmatpush.msra.mxu0 %v97
    %4511 = vmatpush.msra.mxu0 %v89
    %4512 = vmatmul.f32.gmra.mxu0 %v4452
    %v4513 = vpop.f32.mrf.mxu0
    %v4514 = vadd.f32 0.0, %v4513
    %4515 = vdwg.mxu0
    %4516 = vmatpush.msra.mxu0 %v337
    %4517 = vmatpush.msra.mxu0 %v329
    %4518 = vmatpush.msra.mxu0 %v321
    %4519 = vmatpush.msra.mxu0 %v313
    %4520 = vmatpush.msra.mxu0 %v305
    %4521 = vmatpush.msra.mxu0 %v297
    %4522 = vmatpush.msra.mxu0 %v289
    %4523 = vmatpush.msra.mxu0 %v281
    %4524 = vmatpush.msra.mxu0 %v273
    %4525 = vmatpush.msra.mxu0 %v265
    %4526 = vmatpush.msra.mxu0 %v257
    %4527 = vmatpush.msra.mxu0 %v249
    %4528 = vmatpush.msra.mxu0 %v241
    %4529 = vmatpush.msra.mxu0 %v233
    %4530 = vmatpush.msra.mxu0 %v225
    %4531 = vmatpush.msra.mxu0 %v217
    %4532 = vmatmul.f32.gmra.mxu0 %v4453
    %v4533 = vpop.f32.mrf.mxu0
    %v4534 = vadd.f32 %v4514, %v4533
    %4535 = vdwg.mxu0
    %4536 = vmatpush.msra.mxu0 %v210
    %4537 = vmatpush.msra.mxu0 %v202
    %4538 = vmatpush.msra.mxu0 %v194
    %4539 = vmatpush.msra.mxu0 %v186
    %4540 = vmatpush.msra.mxu0 %v178
    %4541 = vmatpush.msra.mxu0 %v170
    %4542 = vmatpush.msra.mxu0 %v162
    %4543 = vmatpush.msra.mxu0 %v154
    %4544 = vmatpush.msra.mxu0 %v146
    %4545 = vmatpush.msra.mxu0 %v138
    %4546 = vmatpush.msra.mxu0 %v130
    %4547 = vmatpush.msra.mxu0 %v122
    %4548 = vmatpush.msra.mxu0 %v114
    %4549 = vmatpush.msra.mxu0 %v106
    %4550 = vmatpush.msra.mxu0 %v98
    %4551 = vmatpush.msra.mxu0 %v90
    %4552 = vmatmul.f32.gmra.mxu0 %v4452
    %v4553 = vpop.f32.mrf.mxu0
    %v4554 = vadd.f32 0.0, %v4553
    %4555 = vdwg.mxu0
    %4556 = vmatpush.msra.mxu0 %v338
    %4557 = vmatpush.msra.mxu0 %v330
    %4558 = vmatpush.msra.mxu0 %v322
    %4559 = vmatpush.msra.mxu0 %v314
    %4560 = vmatpush.msra.mxu0 %v306
    %4561 = vmatpush.msra.mxu0 %v298
    %4562 = vmatpush.msra.mxu0 %v290
    %4563 = vmatpush.msra.mxu0 %v282
    %4564 = vmatpush.msra.mxu0 %v274
    %4565 = vmatpush.msra.mxu0 %v266
    %4566 = vmatpush.msra.mxu0 %v258
    %4567 = vmatpush.msra.mxu0 %v250
    %4568 = vmatpush.msra.mxu0 %v242
    %4569 = vmatpush.msra.mxu0 %v234
    %4570 = vmatpush.msra.mxu0 %v226
    %4571 = vmatpush.msra.mxu0 %v218
    %4572 = vmatmul.f32.gmra.mxu0 %v4453
    %v4573 = vpop.f32.mrf.mxu0
    %v4574 = vadd.f32 %v4554, %v4573
    %4575 = vdwg.mxu0
    %4576 = vmatpush.msra.mxu0 %v211
    %4577 = vmatpush.msra.mxu0 %v203
    %4578 = vmatpush.msra.mxu0 %v195
    %4579 = vmatpush.msra.mxu0 %v187
    %4580 = vmatpush.msra.mxu0 %v179
    %4581 = vmatpush.msra.mxu0 %v171
    %4582 = vmatpush.msra.mxu0 %v163
    %4583 = vmatpush.msra.mxu0 %v155
    %4584 = vmatpush.msra.mxu0 %v147
    %4585 = vmatpush.msra.mxu0 %v139
    %4586 = vmatpush.msra.mxu0 %v131
    %4587 = vmatpush.msra.mxu0 %v123
    %4588 = vmatpush.msra.mxu0 %v115
    %4589 = vmatpush.msra.mxu0 %v107
    %4590 = vmatpush.msra.mxu0 %v99
    %4591 = vmatpush.msra.mxu0 %v91
    %4592 = vmatmul.f32.gmra.mxu0 %v4452
    %v4593 = vpop.f32.mrf.mxu0
    %v4594 = vadd.f32 0.0, %v4593
    %4595 = vdwg.mxu0
    %4596 = vmatpush.msra.mxu0 %v339
    %4597 = vmatpush.msra.mxu0 %v331
    %4598 = vmatpush.msra.mxu0 %v323
    %4599 = vmatpush.msra.mxu0 %v315
    %4600 = vmatpush.msra.mxu0 %v307
    %4601 = vmatpush.msra.mxu0 %v299
    %4602 = vmatpush.msra.mxu0 %v291
    %4603 = vmatpush.msra.mxu0 %v283
    %4604 = vmatpush.msra.mxu0 %v275
    %4605 = vmatpush.msra.mxu0 %v267
    %4606 = vmatpush.msra.mxu0 %v259
    %4607 = vmatpush.msra.mxu0 %v251
    %4608 = vmatpush.msra.mxu0 %v243
    %4609 = vmatpush.msra.mxu0 %v235
    %4610 = vmatpush.msra.mxu0 %v227
    %4611 = vmatpush.msra.mxu0 %v219
    %4612 = vmatmul.f32.gmra.mxu0 %v4453
    %v4613 = vpop.f32.mrf.mxu0
    %v4614 = vadd.f32 %v4594, %v4613
    %4615 = vdwg.mxu0
    %4616 = vmatpush.msra.mxu0 %v212
    %4617 = vmatpush.msra.mxu0 %v204
    %4618 = vmatpush.msra.mxu0 %v196
    %4619 = vmatpush.msra.mxu0 %v188
    %4620 = vmatpush.msra.mxu0 %v180
    %4621 = vmatpush.msra.mxu0 %v172
    %4622 = vmatpush.msra.mxu0 %v164
    %4623 = vmatpush.msra.mxu0 %v156
    %4624 = vmatpush.msra.mxu0 %v148
    %4625 = vmatpush.msra.mxu0 %v140
    %4626 = vmatpush.msra.mxu0 %v132
    %4627 = vmatpush.msra.mxu0 %v124
    %4628 = vmatpush.msra.mxu0 %v116
    %4629 = vmatpush.msra.mxu0 %v108
    %4630 = vmatpush.msra.mxu0 %v100
    %4631 = vmatpush.msra.mxu0 %v92
    %4632 = vmatmul.f32.gmra.mxu0 %v4452
    %v4633 = vpop.f32.mrf.mxu0
    %v4634 = vadd.f32 0.0, %v4633
    %4635 = vdwg.mxu0
    %4636 = vmatpush.msra.mxu0 %v340
    %4637 = vmatpush.msra.mxu0 %v332
    %4638 = vmatpush.msra.mxu0 %v324
    %4639 = vmatpush.msra.mxu0 %v316
    %4640 = vmatpush.msra.mxu0 %v308
    %4641 = vmatpush.msra.mxu0 %v300
    %4642 = vmatpush.msra.mxu0 %v292
    %4643 = vmatpush.msra.mxu0 %v284
    %4644 = vmatpush.msra.mxu0 %v276
    %4645 = vmatpush.msra.mxu0 %v268
    %4646 = vmatpush.msra.mxu0 %v260
    %4647 = vmatpush.msra.mxu0 %v252
    %4648 = vmatpush.msra.mxu0 %v244
    %4649 = vmatpush.msra.mxu0 %v236
    %4650 = vmatpush.msra.mxu0 %v228
    %4651 = vmatpush.msra.mxu0 %v220
    %4652 = vmatmul.f32.gmra.mxu0 %v4453
    %v4653 = vpop.f32.mrf.mxu0
    %v4654 = vadd.f32 %v4634, %v4653
    %4655 = vdwg.mxu0
    %4656 = vmatpush.msra.mxu0 %v213
    %4657 = vmatpush.msra.mxu0 %v205
    %4658 = vmatpush.msra.mxu0 %v197
    %4659 = vmatpush.msra.mxu0 %v189
    %4660 = vmatpush.msra.mxu0 %v181
    %4661 = vmatpush.msra.mxu0 %v173
    %4662 = vmatpush.msra.mxu0 %v165
    %4663 = vmatpush.msra.mxu0 %v157
    %4664 = vmatpush.msra.mxu0 %v149
    %4665 = vmatpush.msra.mxu0 %v141
    %4666 = vmatpush.msra.mxu0 %v133
    %4667 = vmatpush.msra.mxu0 %v125
    %4668 = vmatpush.msra.mxu0 %v117
    %4669 = vmatpush.msra.mxu0 %v109
    %4670 = vmatpush.msra.mxu0 %v101
    %4671 = vmatpush.msra.mxu0 %v93
    %4672 = vmatmul.f32.gmra.mxu0 %v4452
    %v4673 = vpop.f32.mrf.mxu0
    %v4674 = vadd.f32 0.0, %v4673
    %4675 = vdwg.mxu0
    %4676 = vmatpush.msra.mxu0 %v341
    %4677 = vmatpush.msra.mxu0 %v333
    %4678 = vmatpush.msra.mxu0 %v325
    %4679 = vmatpush.msra.mxu0 %v317
    %4680 = vmatpush.msra.mxu0 %v309
    %4681 = vmatpush.msra.mxu0 %v301
    %4682 = vmatpush.msra.mxu0 %v293
    %4683 = vmatpush.msra.mxu0 %v285
    %4684 = vmatpush.msra.mxu0 %v277
    %4685 = vmatpush.msra.mxu0 %v269
    %4686 = vmatpush.msra.mxu0 %v261
    %4687 = vmatpush.msra.mxu0 %v253
    %4688 = vmatpush.msra.mxu0 %v245
    %4689 = vmatpush.msra.mxu0 %v237
    %4690 = vmatpush.msra.mxu0 %v229
    %4691 = vmatpush.msra.mxu0 %v221
    %4692 = vmatmul.f32.gmra.mxu0 %v4453
    %v4693 = vpop.f32.mrf.mxu0
    %v4694 = vadd.f32 %v4674, %v4693
    %4695 = vdwg.mxu0
    %4696 = vmatpush.msra.mxu0 %v214
    %4697 = vmatpush.msra.mxu0 %v206
    %4698 = vmatpush.msra.mxu0 %v198
    %4699 = vmatpush.msra.mxu0 %v190
    %4700 = vmatpush.msra.mxu0 %v182
    %4701 = vmatpush.msra.mxu0 %v174
    %4702 = vmatpush.msra.mxu0 %v166
    %4703 = vmatpush.msra.mxu0 %v158
    %4704 = vmatpush.msra.mxu0 %v150
    %4705 = vmatpush.msra.mxu0 %v142
    %4706 = vmatpush.msra.mxu0 %v134
    %4707 = vmatpush.msra.mxu0 %v126
    %4708 = vmatpush.msra.mxu0 %v118
    %4709 = vmatpush.msra.mxu0 %v110
    %4710 = vmatpush.msra.mxu0 %v102
    %4711 = vmatpush.msra.mxu0 %v94
    %4712 = vmatmul.f32.gmra.mxu0 %v4452
    %v4713 = vpop.f32.mrf.mxu0
    %v4714 = vadd.f32 0.0, %v4713
    %4715 = vdwg.mxu0
    %4716 = vmatpush.msra.mxu0 %v342
    %4717 = vmatpush.msra.mxu0 %v334
    %4718 = vmatpush.msra.mxu0 %v326
    %4719 = vmatpush.msra.mxu0 %v318
    %4720 = vmatpush.msra.mxu0 %v310
    %4721 = vmatpush.msra.mxu0 %v302
    %4722 = vmatpush.msra.mxu0 %v294
    %4723 = vmatpush.msra.mxu0 %v286
    %4724 = vmatpush.msra.mxu0 %v278
    %4725 = vmatpush.msra.mxu0 %v270
    %4726 = vmatpush.msra.mxu0 %v262
    %4727 = vmatpush.msra.mxu0 %v254
    %4728 = vmatpush.msra.mxu0 %v246
    %4729 = vmatpush.msra.mxu0 %v238
    %4730 = vmatpush.msra.mxu0 %v230
    %4731 = vmatpush.msra.mxu0 %v222
    %4732 = vmatmul.f32.gmra.mxu0 %v4453
    %v4733 = vpop.f32.mrf.mxu0
    %v4734 = vadd.f32 %v4714, %v4733
    %4735 = vdwg.mxu0
    %4736 = vmatpush.msra.mxu0 %v215
    %4737 = vmatpush.msra.mxu0 %v207
    %4738 = vmatpush.msra.mxu0 %v199
    %4739 = vmatpush.msra.mxu0 %v191
    %4740 = vmatpush.msra.mxu0 %v183
    %4741 = vmatpush.msra.mxu0 %v175
    %4742 = vmatpush.msra.mxu0 %v167
    %4743 = vmatpush.msra.mxu0 %v159
    %4744 = vmatpush.msra.mxu0 %v151
    %4745 = vmatpush.msra.mxu0 %v143
    %4746 = vmatpush.msra.mxu0 %v135
    %4747 = vmatpush.msra.mxu0 %v127
    %4748 = vmatpush.msra.mxu0 %v119
    %4749 = vmatpush.msra.mxu0 %v111
    %4750 = vmatpush.msra.mxu0 %v103
    %4751 = vmatpush.msra.mxu0 %v95
    %4752 = vmatmul.f32.gmra.mxu0 %v4452
    %v4753 = vpop.f32.mrf.mxu0
    %v4754 = vadd.f32 0.0, %v4753
    %4755 = vdwg.mxu0
    %4756 = vmatpush.msra.mxu0 %v343
    %4757 = vmatpush.msra.mxu0 %v335
    %4758 = vmatpush.msra.mxu0 %v327
    %4759 = vmatpush.msra.mxu0 %v319
    %4760 = vmatpush.msra.mxu0 %v311
    %4761 = vmatpush.msra.mxu0 %v303
    %4762 = vmatpush.msra.mxu0 %v295
    %4763 = vmatpush.msra.mxu0 %v287
    %4764 = vmatpush.msra.mxu0 %v279
    %4765 = vmatpush.msra.mxu0 %v271
    %4766 = vmatpush.msra.mxu0 %v263
    %4767 = vmatpush.msra.mxu0 %v255
    %4768 = vmatpush.msra.mxu0 %v247
    %4769 = vmatpush.msra.mxu0 %v239
    %4770 = vmatpush.msra.mxu0 %v231
    %4771 = vmatpush.msra.mxu0 %v223
    %4772 = vmatmul.f32.gmra.mxu0 %v4453
    %v4773 = vpop.f32.mrf.mxu0
    %v4774 = vadd.f32 %v4754, %v4773
    %4775 = vdwg.mxu0
    %v4784 = vrot.slane %v4534, 6
    %v4785 = vrot.slane %v4574, 4
    %v4786 = vrot.slane %v4614, 2
    %v4787 = vrot.slane %v4694, 6
    %v4788 = vrot.slane %v4734, 4
    %v4789 = vrot.slane %v4774, 2
    %v4790 = vsel %vm678, %v4494, %v4784
    %v4791 = vsel %vm680, %v4785, %v4786
    %v4792 = vsel %vm682, %v4790, %v4791
    %v4793 = vsel %vm678, %v4654, %v4787
    %v4794 = vsel %vm680, %v4788, %v4789
    %v4795 = vsel %vm682, %v4793, %v4794
    %v4798 = vadd.f32 %v4449, %v4792
    %v4799 = vadd.f32 %v4450, %v4795
    %v4800 = vxor.u32 %v4798, 2147483648
    %v4801 = vmul.f32 %v4800, 1.442695
    %v4802 = vpow.pop %v4801
    %v4803 = vadd.f32 %v4802, 1.0
    %v4804 = vrcp.pop %v4803
    %v4805 = vmul.f32 %v4803, %v4804
    %v4806 = vsub.f32 1.0, %v4805
    %v4807 = vmul.f32 %v4804, %v4806
    %v4808 = vadd.f32 %v4804, %v4807
    %vm4809 = vweird.f32 %v4803
    %vm4810 = vweird.f32 %v4804
    %vm4811 = vmor %vm4809, %vm4810
    %v4812 = vsel %vm4811, %v4804, %v4808
    %v4813 = vand.u32 2147483647, %v4803
    %vm4814 = vcmp.eq.f32.partialorder %v4813, 8.507059e+37
    %v4815 = vand.u32 %v4803, 2147483648
    %v4816 = vor.u32 1.1754944e-38, %v4815
    %v4817 = vsel %vm4814, %v4816, %v4812
    %v4818 = vmul.f32 1.0, %v4817
    %v4820 = vrot.slane %v4798, 4
    %v4822 = vxor.u32 %v4820, 2147483648
    %v4823 = vmul.f32 %v4822, 1.442695
    %v4824 = vpow.pop %v4823
    %v4825 = vadd.f32 %v4824, 1.0
    %v4826 = vrcp.pop %v4825
    %v4827 = vmul.f32 %v4825, %v4826
    %v4828 = vsub.f32 1.0, %v4827
    %v4829 = vmul.f32 %v4826, %v4828
    %v4830 = vadd.f32 %v4826, %v4829
    %vm4831 = vweird.f32 %v4825
    %vm4832 = vweird.f32 %v4826
    %vm4833 = vmor %vm4831, %vm4832
    %v4834 = vsel %vm4833, %v4826, %v4830
    %v4835 = vand.u32 2147483647, %v4825
    %vm4836 = vcmp.eq.f32.partialorder %v4835, 8.507059e+37
    %v4837 = vand.u32 %v4825, 2147483648
    %v4838 = vor.u32 1.1754944e-38, %v4837
    %v4839 = vsel %vm4836, %v4838, %v4834
    %v4840 = vmul.f32 1.0, %v4839
    %v4841 = vtanh.pop %v4799
    %v4843 = vrot.slane %v4799, 4
    %v4845 = vxor.u32 %v4843, 2147483648
    %v4846 = vmul.f32 %v4845, 1.442695
    %v4847 = vpow.pop %v4846
    %v4848 = vadd.f32 %v4847, 1.0
    %v4849 = vrcp.pop %v4848
    %v4850 = vmul.f32 %v4848, %v4849
    %v4851 = vsub.f32 1.0, %v4850
    %v4852 = vmul.f32 %v4849, %v4851
    %v4853 = vadd.f32 %v4849, %v4852
    %vm4854 = vweird.f32 %v4848
    %vm4855 = vweird.f32 %v4849
    %vm4856 = vmor %vm4854, %vm4855
    %v4857 = vsel %vm4856, %v4849, %v4853
    %v4858 = vand.u32 2147483647, %v4848
    %vm4859 = vcmp.eq.f32.partialorder %v4858, 8.507059e+37
    %v4860 = vand.u32 %v4848, 2147483648
    %v4861 = vor.u32 1.1754944e-38, %v4860
    %v4862 = vsel %vm4859, %v4861, %v4857
    %v4863 = vmul.f32 1.0, %v4862
    %v4864 = vmul.f32 %v4840, %v3673
    %v4865 = vmul.f32 %v4818, %v4841
    %v4866 = vadd.f32 %v4864, %v4865
    %v4867 = vtanh.pop %v4866
    %v4868 = vmul.f32 %v4863, %v4867
    %4870 = vst [vmem:[#allocation1] ss:$4 sm:$0xff] %v4868
    %v4871 = vld.sshfl [vmem:[#allocation1] sm:$0xff pattern:$0x73625140]
    %v4872 = vld.sshfl [vmem:[#allocation1 + $0x8] sm:$0xff pattern:$0x73625140]
    %4875 = vmatpush.msra.mxu0 %v886
    %4876 = vmatpush.msra.mxu0 %v878
    %4877 = vmatpush.msra.mxu0 %v870
    %4878 = vmatpush.msra.mxu0 %v862
    %4879 = vmatpush.msra.mxu0 %v854
    %4880 = vmatpush.msra.mxu0 %v846
    %4881 = vmatpush.msra.mxu0 %v838
    %4882 = vmatpush.msra.mxu0 %v830
    %4883 = vmatpush.msra.mxu0 %v822
    %4884 = vmatpush.msra.mxu0 %v814
    %4885 = vmatpush.msra.mxu0 %v806
    %4886 = vmatpush.msra.mxu0 %v798
    %4887 = vmatpush.msra.mxu0 %v790
    %4888 = vmatpush.msra.mxu0 %v782
    %4889 = vmatpush.msra.mxu0 %v774
    %4890 = vmatpush.msra.mxu0 %v766
    %4891 = vmatmul.f32.gmra.mxu0 %v4871
    %v4892 = vpop.f32.mrf.mxu0
    %v4893 = vadd.f32 %v1280, %v4892
    %4894 = vdwg.mxu0
    %4895 = vmatpush.msra.mxu0 %v1014
    %4896 = vmatpush.msra.mxu0 %v1006
    %4897 = vmatpush.msra.mxu0 %v998
    %4898 = vmatpush.msra.mxu0 %v990
    %4899 = vmatpush.msra.mxu0 %v982
    %4900 = vmatpush.msra.mxu0 %v974
    %4901 = vmatpush.msra.mxu0 %v966
    %4902 = vmatpush.msra.mxu0 %v958
    %4903 = vmatpush.msra.mxu0 %v950
    %4904 = vmatpush.msra.mxu0 %v942
    %4905 = vmatpush.msra.mxu0 %v934
    %4906 = vmatpush.msra.mxu0 %v926
    %4907 = vmatpush.msra.mxu0 %v918
    %4908 = vmatpush.msra.mxu0 %v910
    %4909 = vmatpush.msra.mxu0 %v902
    %4910 = vmatpush.msra.mxu0 %v894
    %4911 = vmatmul.f32.gmra.mxu0 %v4872
    %v4912 = vpop.f32.mrf.mxu0
    %v4913 = vadd.f32 %v4893, %v4912
    %4914 = vdwg.mxu0
    %4915 = vmatpush.msra.mxu0 %v1142
    %4916 = vmatpush.msra.mxu0 %v1134
    %4917 = vmatpush.msra.mxu0 %v1126
    %4918 = vmatpush.msra.mxu0 %v1118
    %4919 = vmatpush.msra.mxu0 %v1110
    %4920 = vmatpush.msra.mxu0 %v1102
    %4921 = vmatpush.msra.mxu0 %v1094
    %4922 = vmatpush.msra.mxu0 %v1086
    %4923 = vmatpush.msra.mxu0 %v1078
    %4924 = vmatpush.msra.mxu0 %v1070
    %4925 = vmatpush.msra.mxu0 %v1062
    %4926 = vmatpush.msra.mxu0 %v1054
    %4927 = vmatpush.msra.mxu0 %v1046
    %4928 = vmatpush.msra.mxu0 %v1038
    %4929 = vmatpush.msra.mxu0 %v1030
    %4930 = vmatpush.msra.mxu0 %v1022
    %4931 = vmatmul.f32.gmra.mxu0 %v4446
    %v4932 = vpop.f32.mrf.mxu0
    %v4933 = vadd.f32 %v4913, %v4932
    %4934 = vdwg.mxu0
    %4935 = vmatpush.msra.mxu0 %v1270
    %4936 = vmatpush.msra.mxu0 %v1262
    %4937 = vmatpush.msra.mxu0 %v1254
    %4938 = vmatpush.msra.mxu0 %v1246
    %4939 = vmatpush.msra.mxu0 %v1238
    %4940 = vmatpush.msra.mxu0 %v1230
    %4941 = vmatpush.msra.mxu0 %v1222
    %4942 = vmatpush.msra.mxu0 %v1214
    %4943 = vmatpush.msra.mxu0 %v1206
    %4944 = vmatpush.msra.mxu0 %v1198
    %4945 = vmatpush.msra.mxu0 %v1190
    %4946 = vmatpush.msra.mxu0 %v1182
    %4947 = vmatpush.msra.mxu0 %v1174
    %4948 = vmatpush.msra.mxu0 %v1166
    %4949 = vmatpush.msra.mxu0 %v1158
    %4950 = vmatpush.msra.mxu0 %v1150
    %4951 = vmatmul.f32.gmra.mxu0 %v4447
    %v4952 = vpop.f32.mrf.mxu0
    %v4953 = vadd.f32 %v4933, %v4952
    %4954 = vdwg.mxu0
    %4955 = vmatpush.msra.mxu0 %v887
    %4956 = vmatpush.msra.mxu0 %v879
    %4957 = vmatpush.msra.mxu0 %v871
    %4958 = vmatpush.msra.mxu0 %v863
    %4959 = vmatpush.msra.mxu0 %v855
    %4960 = vmatpush.msra.mxu0 %v847
    %4961 = vmatpush.msra.mxu0 %v839
    %4962 = vmatpush.msra.mxu0 %v831
    %4963 = vmatpush.msra.mxu0 %v823
    %4964 = vmatpush.msra.mxu0 %v815
    %4965 = vmatpush.msra.mxu0 %v807
    %4966 = vmatpush.msra.mxu0 %v799
    %4967 = vmatpush.msra.mxu0 %v791
    %4968 = vmatpush.msra.mxu0 %v783
    %4969 = vmatpush.msra.mxu0 %v775
    %4970 = vmatpush.msra.mxu0 %v767
    %4971 = vmatmul.f32.gmra.mxu0 %v4871
    %v4972 = vpop.f32.mrf.mxu0
    %v4973 = vadd.f32 %v1281, %v4972
    %4974 = vdwg.mxu0
    %4975 = vmatpush.msra.mxu0 %v1015
    %4976 = vmatpush.msra.mxu0 %v1007
    %4977 = vmatpush.msra.mxu0 %v999
    %4978 = vmatpush.msra.mxu0 %v991
    %4979 = vmatpush.msra.mxu0 %v983
    %4980 = vmatpush.msra.mxu0 %v975
    %4981 = vmatpush.msra.mxu0 %v967
    %4982 = vmatpush.msra.mxu0 %v959
    %4983 = vmatpush.msra.mxu0 %v951
    %4984 = vmatpush.msra.mxu0 %v943
    %4985 = vmatpush.msra.mxu0 %v935
    %4986 = vmatpush.msra.mxu0 %v927
    %4987 = vmatpush.msra.mxu0 %v919
    %4988 = vmatpush.msra.mxu0 %v911
    %4989 = vmatpush.msra.mxu0 %v903
    %4990 = vmatpush.msra.mxu0 %v895
    %4991 = vmatmul.f32.gmra.mxu0 %v4872
    %v4992 = vpop.f32.mrf.mxu0
    %v4993 = vadd.f32 %v4973, %v4992
    %4994 = vdwg.mxu0
    %4995 = vmatpush.msra.mxu0 %v1143
    %4996 = vmatpush.msra.mxu0 %v1135
    %4997 = vmatpush.msra.mxu0 %v1127
    %4998 = vmatpush.msra.mxu0 %v1119
    %4999 = vmatpush.msra.mxu0 %v1111
    %5000 = vmatpush.msra.mxu0 %v1103
    %5001 = vmatpush.msra.mxu0 %v1095
    %5002 = vmatpush.msra.mxu0 %v1087
    %5003 = vmatpush.msra.mxu0 %v1079
    %5004 = vmatpush.msra.mxu0 %v1071
    %5005 = vmatpush.msra.mxu0 %v1063
    %5006 = vmatpush.msra.mxu0 %v1055
    %5007 = vmatpush.msra.mxu0 %v1047
    %5008 = vmatpush.msra.mxu0 %v1039
    %5009 = vmatpush.msra.mxu0 %v1031
    %5010 = vmatpush.msra.mxu0 %v1023
    %5011 = vmatmul.f32.gmra.mxu0 %v4446
    %v5012 = vpop.f32.mrf.mxu0
    %v5013 = vadd.f32 %v4993, %v5012
    %5014 = vdwg.mxu0
    %5015 = vmatpush.msra.mxu0 %v1271
    %5016 = vmatpush.msra.mxu0 %v1263
    %5017 = vmatpush.msra.mxu0 %v1255
    %5018 = vmatpush.msra.mxu0 %v1247
    %5019 = vmatpush.msra.mxu0 %v1239
    %5020 = vmatpush.msra.mxu0 %v1231
    %5021 = vmatpush.msra.mxu0 %v1223
    %5022 = vmatpush.msra.mxu0 %v1215
    %5023 = vmatpush.msra.mxu0 %v1207
    %5024 = vmatpush.msra.mxu0 %v1199
    %5025 = vmatpush.msra.mxu0 %v1191
    %5026 = vmatpush.msra.mxu0 %v1183
    %5027 = vmatpush.msra.mxu0 %v1175
    %5028 = vmatpush.msra.mxu0 %v1167
    %5029 = vmatpush.msra.mxu0 %v1159
    %5030 = vmatpush.msra.mxu0 %v1151
    %5031 = vmatmul.f32.gmra.mxu0 %v4447
    %v5032 = vpop.f32.mrf.mxu0
    %v5033 = vadd.f32 %v5013, %v5032
    %5034 = vdwg.mxu0
    %5035 = vmatpush.msra.mxu0 %v888
    %5036 = vmatpush.msra.mxu0 %v880
    %5037 = vmatpush.msra.mxu0 %v872
    %5038 = vmatpush.msra.mxu0 %v864
    %5039 = vmatpush.msra.mxu0 %v856
    %5040 = vmatpush.msra.mxu0 %v848
    %5041 = vmatpush.msra.mxu0 %v840
    %5042 = vmatpush.msra.mxu0 %v832
    %5043 = vmatpush.msra.mxu0 %v824
    %5044 = vmatpush.msra.mxu0 %v816
    %5045 = vmatpush.msra.mxu0 %v808
    %5046 = vmatpush.msra.mxu0 %v800
    %5047 = vmatpush.msra.mxu0 %v792
    %5048 = vmatpush.msra.mxu0 %v784
    %5049 = vmatpush.msra.mxu0 %v776
    %5050 = vmatpush.msra.mxu0 %v768
    %5051 = vmatmul.f32.gmra.mxu0 %v4871
    %v5052 = vpop.f32.mrf.mxu0
    %v5053 = vadd.f32 %v1282, %v5052
    %5054 = vdwg.mxu0
    %5055 = vmatpush.msra.mxu0 %v1016
    %5056 = vmatpush.msra.mxu0 %v1008
    %5057 = vmatpush.msra.mxu0 %v1000
    %5058 = vmatpush.msra.mxu0 %v992
    %5059 = vmatpush.msra.mxu0 %v984
    %5060 = vmatpush.msra.mxu0 %v976
    %5061 = vmatpush.msra.mxu0 %v968
    %5062 = vmatpush.msra.mxu0 %v960
    %5063 = vmatpush.msra.mxu0 %v952
    %5064 = vmatpush.msra.mxu0 %v944
    %5065 = vmatpush.msra.mxu0 %v936
    %5066 = vmatpush.msra.mxu0 %v928
    %5067 = vmatpush.msra.mxu0 %v920
    %5068 = vmatpush.msra.mxu0 %v912
    %5069 = vmatpush.msra.mxu0 %v904
    %5070 = vmatpush.msra.mxu0 %v896
    %5071 = vmatmul.f32.gmra.mxu0 %v4872
    %v5072 = vpop.f32.mrf.mxu0
    %v5073 = vadd.f32 %v5053, %v5072
    %5074 = vdwg.mxu0
    %5075 = vmatpush.msra.mxu0 %v1144
    %5076 = vmatpush.msra.mxu0 %v1136
    %5077 = vmatpush.msra.mxu0 %v1128
    %5078 = vmatpush.msra.mxu0 %v1120
    %5079 = vmatpush.msra.mxu0 %v1112
    %5080 = vmatpush.msra.mxu0 %v1104
    %5081 = vmatpush.msra.mxu0 %v1096
    %5082 = vmatpush.msra.mxu0 %v1088
    %5083 = vmatpush.msra.mxu0 %v1080
    %5084 = vmatpush.msra.mxu0 %v1072
    %5085 = vmatpush.msra.mxu0 %v1064
    %5086 = vmatpush.msra.mxu0 %v1056
    %5087 = vmatpush.msra.mxu0 %v1048
    %5088 = vmatpush.msra.mxu0 %v1040
    %5089 = vmatpush.msra.mxu0 %v1032
    %5090 = vmatpush.msra.mxu0 %v1024
    %5091 = vmatmul.f32.gmra.mxu0 %v4446
    %v5092 = vpop.f32.mrf.mxu0
    %v5093 = vadd.f32 %v5073, %v5092
    %5094 = vdwg.mxu0
    %5095 = vmatpush.msra.mxu0 %v1272
    %5096 = vmatpush.msra.mxu0 %v1264
    %5097 = vmatpush.msra.mxu0 %v1256
    %5098 = vmatpush.msra.mxu0 %v1248
    %5099 = vmatpush.msra.mxu0 %v1240
    %5100 = vmatpush.msra.mxu0 %v1232
    %5101 = vmatpush.msra.mxu0 %v1224
    %5102 = vmatpush.msra.mxu0 %v1216
    %5103 = vmatpush.msra.mxu0 %v1208
    %5104 = vmatpush.msra.mxu0 %v1200
    %5105 = vmatpush.msra.mxu0 %v1192
    %5106 = vmatpush.msra.mxu0 %v1184
    %5107 = vmatpush.msra.mxu0 %v1176
    %5108 = vmatpush.msra.mxu0 %v1168
    %5109 = vmatpush.msra.mxu0 %v1160
    %5110 = vmatpush.msra.mxu0 %v1152
    %5111 = vmatmul.f32.gmra.mxu0 %v4447
    %v5112 = vpop.f32.mrf.mxu0
    %v5113 = vadd.f32 %v5093, %v5112
    %5114 = vdwg.mxu0
    %5115 = vmatpush.msra.mxu0 %v889
    %5116 = vmatpush.msra.mxu0 %v881
    %5117 = vmatpush.msra.mxu0 %v873
    %5118 = vmatpush.msra.mxu0 %v865
    %5119 = vmatpush.msra.mxu0 %v857
    %5120 = vmatpush.msra.mxu0 %v849
    %5121 = vmatpush.msra.mxu0 %v841
    %5122 = vmatpush.msra.mxu0 %v833
    %5123 = vmatpush.msra.mxu0 %v825
    %5124 = vmatpush.msra.mxu0 %v817
    %5125 = vmatpush.msra.mxu0 %v809
    %5126 = vmatpush.msra.mxu0 %v801
    %5127 = vmatpush.msra.mxu0 %v793
    %5128 = vmatpush.msra.mxu0 %v785
    %5129 = vmatpush.msra.mxu0 %v777
    %5130 = vmatpush.msra.mxu0 %v769
    %5131 = vmatmul.f32.gmra.mxu0 %v4871
    %v5132 = vpop.f32.mrf.mxu0
    %v5133 = vadd.f32 %v1283, %v5132
    %5134 = vdwg.mxu0
    %5135 = vmatpush.msra.mxu0 %v1017
    %5136 = vmatpush.msra.mxu0 %v1009
    %5137 = vmatpush.msra.mxu0 %v1001
    %5138 = vmatpush.msra.mxu0 %v993
    %5139 = vmatpush.msra.mxu0 %v985
    %5140 = vmatpush.msra.mxu0 %v977
    %5141 = vmatpush.msra.mxu0 %v969
    %5142 = vmatpush.msra.mxu0 %v961
    %5143 = vmatpush.msra.mxu0 %v953
    %5144 = vmatpush.msra.mxu0 %v945
    %5145 = vmatpush.msra.mxu0 %v937
    %5146 = vmatpush.msra.mxu0 %v929
    %5147 = vmatpush.msra.mxu0 %v921
    %5148 = vmatpush.msra.mxu0 %v913
    %5149 = vmatpush.msra.mxu0 %v905
    %5150 = vmatpush.msra.mxu0 %v897
    %5151 = vmatmul.f32.gmra.mxu0 %v4872
    %v5152 = vpop.f32.mrf.mxu0
    %v5153 = vadd.f32 %v5133, %v5152
    %5154 = vdwg.mxu0
    %5155 = vmatpush.msra.mxu0 %v1145
    %5156 = vmatpush.msra.mxu0 %v1137
    %5157 = vmatpush.msra.mxu0 %v1129
    %5158 = vmatpush.msra.mxu0 %v1121
    %5159 = vmatpush.msra.mxu0 %v1113
    %5160 = vmatpush.msra.mxu0 %v1105
    %5161 = vmatpush.msra.mxu0 %v1097
    %5162 = vmatpush.msra.mxu0 %v1089
    %5163 = vmatpush.msra.mxu0 %v1081
    %5164 = vmatpush.msra.mxu0 %v1073
    %5165 = vmatpush.msra.mxu0 %v1065
    %5166 = vmatpush.msra.mxu0 %v1057
    %5167 = vmatpush.msra.mxu0 %v1049
    %5168 = vmatpush.msra.mxu0 %v1041
    %5169 = vmatpush.msra.mxu0 %v1033
    %5170 = vmatpush.msra.mxu0 %v1025
    %5171 = vmatmul.f32.gmra.mxu0 %v4446
    %v5172 = vpop.f32.mrf.mxu0
    %v5173 = vadd.f32 %v5153, %v5172
    %5174 = vdwg.mxu0
    %5175 = vmatpush.msra.mxu0 %v1273
    %5176 = vmatpush.msra.mxu0 %v1265
    %5177 = vmatpush.msra.mxu0 %v1257
    %5178 = vmatpush.msra.mxu0 %v1249
    %5179 = vmatpush.msra.mxu0 %v1241
    %5180 = vmatpush.msra.mxu0 %v1233
    %5181 = vmatpush.msra.mxu0 %v1225
    %5182 = vmatpush.msra.mxu0 %v1217
    %5183 = vmatpush.msra.mxu0 %v1209
    %5184 = vmatpush.msra.mxu0 %v1201
    %5185 = vmatpush.msra.mxu0 %v1193
    %5186 = vmatpush.msra.mxu0 %v1185
    %5187 = vmatpush.msra.mxu0 %v1177
    %5188 = vmatpush.msra.mxu0 %v1169
    %5189 = vmatpush.msra.mxu0 %v1161
    %5190 = vmatpush.msra.mxu0 %v1153
    %5191 = vmatmul.f32.gmra.mxu0 %v4447
    %v5192 = vpop.f32.mrf.mxu0
    %v5193 = vadd.f32 %v5173, %v5192
    %5194 = vdwg.mxu0
    %5195 = vmatpush.msra.mxu0 %v890
    %5196 = vmatpush.msra.mxu0 %v882
    %5197 = vmatpush.msra.mxu0 %v874
    %5198 = vmatpush.msra.mxu0 %v866
    %5199 = vmatpush.msra.mxu0 %v858
    %5200 = vmatpush.msra.mxu0 %v850
    %5201 = vmatpush.msra.mxu0 %v842
    %5202 = vmatpush.msra.mxu0 %v834
    %5203 = vmatpush.msra.mxu0 %v826
    %5204 = vmatpush.msra.mxu0 %v818
    %5205 = vmatpush.msra.mxu0 %v810
    %5206 = vmatpush.msra.mxu0 %v802
    %5207 = vmatpush.msra.mxu0 %v794
    %5208 = vmatpush.msra.mxu0 %v786
    %5209 = vmatpush.msra.mxu0 %v778
    %5210 = vmatpush.msra.mxu0 %v770
    %5211 = vmatmul.f32.gmra.mxu0 %v4871
    %v5212 = vpop.f32.mrf.mxu0
    %v5213 = vadd.f32 %v1284, %v5212
    %5214 = vdwg.mxu0
    %5215 = vmatpush.msra.mxu0 %v1018
    %5216 = vmatpush.msra.mxu0 %v1010
    %5217 = vmatpush.msra.mxu0 %v1002
    %5218 = vmatpush.msra.mxu0 %v994
    %5219 = vmatpush.msra.mxu0 %v986
    %5220 = vmatpush.msra.mxu0 %v978
    %5221 = vmatpush.msra.mxu0 %v970
    %5222 = vmatpush.msra.mxu0 %v962
    %5223 = vmatpush.msra.mxu0 %v954
    %5224 = vmatpush.msra.mxu0 %v946
    %5225 = vmatpush.msra.mxu0 %v938
    %5226 = vmatpush.msra.mxu0 %v930
    %5227 = vmatpush.msra.mxu0 %v922
    %5228 = vmatpush.msra.mxu0 %v914
    %5229 = vmatpush.msra.mxu0 %v906
    %5230 = vmatpush.msra.mxu0 %v898
    %5231 = vmatmul.f32.gmra.mxu0 %v4872
    %v5232 = vpop.f32.mrf.mxu0
    %v5233 = vadd.f32 %v5213, %v5232
    %5234 = vdwg.mxu0
    %5235 = vmatpush.msra.mxu0 %v1146
    %5236 = vmatpush.msra.mxu0 %v1138
    %5237 = vmatpush.msra.mxu0 %v1130
    %5238 = vmatpush.msra.mxu0 %v1122
    %5239 = vmatpush.msra.mxu0 %v1114
    %5240 = vmatpush.msra.mxu0 %v1106
    %5241 = vmatpush.msra.mxu0 %v1098
    %5242 = vmatpush.msra.mxu0 %v1090
    %5243 = vmatpush.msra.mxu0 %v1082
    %5244 = vmatpush.msra.mxu0 %v1074
    %5245 = vmatpush.msra.mxu0 %v1066
    %5246 = vmatpush.msra.mxu0 %v1058
    %5247 = vmatpush.msra.mxu0 %v1050
    %5248 = vmatpush.msra.mxu0 %v1042
    %5249 = vmatpush.msra.mxu0 %v1034
    %5250 = vmatpush.msra.mxu0 %v1026
    %5251 = vmatmul.f32.gmra.mxu0 %v4446
    %v5252 = vpop.f32.mrf.mxu0
    %v5253 = vadd.f32 %v5233, %v5252
    %5254 = vdwg.mxu0
    %5255 = vmatpush.msra.mxu0 %v1274
    %5256 = vmatpush.msra.mxu0 %v1266
    %5257 = vmatpush.msra.mxu0 %v1258
    %5258 = vmatpush.msra.mxu0 %v1250
    %5259 = vmatpush.msra.mxu0 %v1242
    %5260 = vmatpush.msra.mxu0 %v1234
    %5261 = vmatpush.msra.mxu0 %v1226
    %5262 = vmatpush.msra.mxu0 %v1218
    %5263 = vmatpush.msra.mxu0 %v1210
    %5264 = vmatpush.msra.mxu0 %v1202
    %5265 = vmatpush.msra.mxu0 %v1194
    %5266 = vmatpush.msra.mxu0 %v1186
    %5267 = vmatpush.msra.mxu0 %v1178
    %5268 = vmatpush.msra.mxu0 %v1170
    %5269 = vmatpush.msra.mxu0 %v1162
    %5270 = vmatpush.msra.mxu0 %v1154
    %5271 = vmatmul.f32.gmra.mxu0 %v4447
    %v5272 = vpop.f32.mrf.mxu0
    %v5273 = vadd.f32 %v5253, %v5272
    %5274 = vdwg.mxu0
    %5275 = vmatpush.msra.mxu0 %v891
    %5276 = vmatpush.msra.mxu0 %v883
    %5277 = vmatpush.msra.mxu0 %v875
    %5278 = vmatpush.msra.mxu0 %v867
    %5279 = vmatpush.msra.mxu0 %v859
    %5280 = vmatpush.msra.mxu0 %v851
    %5281 = vmatpush.msra.mxu0 %v843
    %5282 = vmatpush.msra.mxu0 %v835
    %5283 = vmatpush.msra.mxu0 %v827
    %5284 = vmatpush.msra.mxu0 %v819
    %5285 = vmatpush.msra.mxu0 %v811
    %5286 = vmatpush.msra.mxu0 %v803
    %5287 = vmatpush.msra.mxu0 %v795
    %5288 = vmatpush.msra.mxu0 %v787
    %5289 = vmatpush.msra.mxu0 %v779
    %5290 = vmatpush.msra.mxu0 %v771
    %5291 = vmatmul.f32.gmra.mxu0 %v4871
    %v5292 = vpop.f32.mrf.mxu0
    %v5293 = vadd.f32 %v1285, %v5292
    %5294 = vdwg.mxu0
    %5295 = vmatpush.msra.mxu0 %v1019
    %5296 = vmatpush.msra.mxu0 %v1011
    %5297 = vmatpush.msra.mxu0 %v1003
    %5298 = vmatpush.msra.mxu0 %v995
    %5299 = vmatpush.msra.mxu0 %v987
    %5300 = vmatpush.msra.mxu0 %v979
    %5301 = vmatpush.msra.mxu0 %v971
    %5302 = vmatpush.msra.mxu0 %v963
    %5303 = vmatpush.msra.mxu0 %v955
    %5304 = vmatpush.msra.mxu0 %v947
    %5305 = vmatpush.msra.mxu0 %v939
    %5306 = vmatpush.msra.mxu0 %v931
    %5307 = vmatpush.msra.mxu0 %v923
    %5308 = vmatpush.msra.mxu0 %v915
    %5309 = vmatpush.msra.mxu0 %v907
    %5310 = vmatpush.msra.mxu0 %v899
    %5311 = vmatmul.f32.gmra.mxu0 %v4872
    %v5312 = vpop.f32.mrf.mxu0
    %v5313 = vadd.f32 %v5293, %v5312
    %5314 = vdwg.mxu0
    %5315 = vmatpush.msra.mxu0 %v1147
    %5316 = vmatpush.msra.mxu0 %v1139
    %5317 = vmatpush.msra.mxu0 %v1131
    %5318 = vmatpush.msra.mxu0 %v1123
    %5319 = vmatpush.msra.mxu0 %v1115
    %5320 = vmatpush.msra.mxu0 %v1107
    %5321 = vmatpush.msra.mxu0 %v1099
    %5322 = vmatpush.msra.mxu0 %v1091
    %5323 = vmatpush.msra.mxu0 %v1083
    %5324 = vmatpush.msra.mxu0 %v1075
    %5325 = vmatpush.msra.mxu0 %v1067
    %5326 = vmatpush.msra.mxu0 %v1059
    %5327 = vmatpush.msra.mxu0 %v1051
    %5328 = vmatpush.msra.mxu0 %v1043
    %5329 = vmatpush.msra.mxu0 %v1035
    %5330 = vmatpush.msra.mxu0 %v1027
    %5331 = vmatmul.f32.gmra.mxu0 %v4446
    %v5332 = vpop.f32.mrf.mxu0
    %v5333 = vadd.f32 %v5313, %v5332
    %5334 = vdwg.mxu0
    %5335 = vmatpush.msra.mxu0 %v1275
    %5336 = vmatpush.msra.mxu0 %v1267
    %5337 = vmatpush.msra.mxu0 %v1259
    %5338 = vmatpush.msra.mxu0 %v1251
    %5339 = vmatpush.msra.mxu0 %v1243
    %5340 = vmatpush.msra.mxu0 %v1235
    %5341 = vmatpush.msra.mxu0 %v1227
    %5342 = vmatpush.msra.mxu0 %v1219
    %5343 = vmatpush.msra.mxu0 %v1211
    %5344 = vmatpush.msra.mxu0 %v1203
    %5345 = vmatpush.msra.mxu0 %v1195
    %5346 = vmatpush.msra.mxu0 %v1187
    %5347 = vmatpush.msra.mxu0 %v1179
    %5348 = vmatpush.msra.mxu0 %v1171
    %5349 = vmatpush.msra.mxu0 %v1163
    %5350 = vmatpush.msra.mxu0 %v1155
    %5351 = vmatmul.f32.gmra.mxu0 %v4447
    %v5352 = vpop.f32.mrf.mxu0
    %v5353 = vadd.f32 %v5333, %v5352
    %5354 = vdwg.mxu0
    %5355 = vmatpush.msra.mxu0 %v892
    %5356 = vmatpush.msra.mxu0 %v884
    %5357 = vmatpush.msra.mxu0 %v876
    %5358 = vmatpush.msra.mxu0 %v868
    %5359 = vmatpush.msra.mxu0 %v860
    %5360 = vmatpush.msra.mxu0 %v852
    %5361 = vmatpush.msra.mxu0 %v844
    %5362 = vmatpush.msra.mxu0 %v836
    %5363 = vmatpush.msra.mxu0 %v828
    %5364 = vmatpush.msra.mxu0 %v820
    %5365 = vmatpush.msra.mxu0 %v812
    %5366 = vmatpush.msra.mxu0 %v804
    %5367 = vmatpush.msra.mxu0 %v796
    %5368 = vmatpush.msra.mxu0 %v788
    %5369 = vmatpush.msra.mxu0 %v780
    %5370 = vmatpush.msra.mxu0 %v772
    %5371 = vmatmul.f32.gmra.mxu0 %v4871
    %v5372 = vpop.f32.mrf.mxu0
    %v5373 = vadd.f32 %v1286, %v5372
    %5374 = vdwg.mxu0
    %5375 = vmatpush.msra.mxu0 %v1020
    %5376 = vmatpush.msra.mxu0 %v1012
    %5377 = vmatpush.msra.mxu0 %v1004
    %5378 = vmatpush.msra.mxu0 %v996
    %5379 = vmatpush.msra.mxu0 %v988
    %5380 = vmatpush.msra.mxu0 %v980
    %5381 = vmatpush.msra.mxu0 %v972
    %5382 = vmatpush.msra.mxu0 %v964
    %5383 = vmatpush.msra.mxu0 %v956
    %5384 = vmatpush.msra.mxu0 %v948
    %5385 = vmatpush.msra.mxu0 %v940
    %5386 = vmatpush.msra.mxu0 %v932
    %5387 = vmatpush.msra.mxu0 %v924
    %5388 = vmatpush.msra.mxu0 %v916
    %5389 = vmatpush.msra.mxu0 %v908
    %5390 = vmatpush.msra.mxu0 %v900
    %5391 = vmatmul.f32.gmra.mxu0 %v4872
    %v5392 = vpop.f32.mrf.mxu0
    %v5393 = vadd.f32 %v5373, %v5392
    %5394 = vdwg.mxu0
    %5395 = vmatpush.msra.mxu0 %v1148
    %5396 = vmatpush.msra.mxu0 %v1140
    %5397 = vmatpush.msra.mxu0 %v1132
    %5398 = vmatpush.msra.mxu0 %v1124
    %5399 = vmatpush.msra.mxu0 %v1116
    %5400 = vmatpush.msra.mxu0 %v1108
    %5401 = vmatpush.msra.mxu0 %v1100
    %5402 = vmatpush.msra.mxu0 %v1092
    %5403 = vmatpush.msra.mxu0 %v1084
    %5404 = vmatpush.msra.mxu0 %v1076
    %5405 = vmatpush.msra.mxu0 %v1068
    %5406 = vmatpush.msra.mxu0 %v1060
    %5407 = vmatpush.msra.mxu0 %v1052
    %5408 = vmatpush.msra.mxu0 %v1044
    %5409 = vmatpush.msra.mxu0 %v1036
    %5410 = vmatpush.msra.mxu0 %v1028
    %5411 = vmatmul.f32.gmra.mxu0 %v4446
    %v5412 = vpop.f32.mrf.mxu0
    %v5413 = vadd.f32 %v5393, %v5412
    %5414 = vdwg.mxu0
    %5415 = vmatpush.msra.mxu0 %v1276
    %5416 = vmatpush.msra.mxu0 %v1268
    %5417 = vmatpush.msra.mxu0 %v1260
    %5418 = vmatpush.msra.mxu0 %v1252
    %5419 = vmatpush.msra.mxu0 %v1244
    %5420 = vmatpush.msra.mxu0 %v1236
    %5421 = vmatpush.msra.mxu0 %v1228
    %5422 = vmatpush.msra.mxu0 %v1220
    %5423 = vmatpush.msra.mxu0 %v1212
    %5424 = vmatpush.msra.mxu0 %v1204
    %5425 = vmatpush.msra.mxu0 %v1196
    %5426 = vmatpush.msra.mxu0 %v1188
    %5427 = vmatpush.msra.mxu0 %v1180
    %5428 = vmatpush.msra.mxu0 %v1172
    %5429 = vmatpush.msra.mxu0 %v1164
    %5430 = vmatpush.msra.mxu0 %v1156
    %5431 = vmatmul.f32.gmra.mxu0 %v4447
    %v5432 = vpop.f32.mrf.mxu0
    %v5433 = vadd.f32 %v5413, %v5432
    %5434 = vdwg.mxu0
    %5435 = vmatpush.msra.mxu0 %v893
    %5436 = vmatpush.msra.mxu0 %v885
    %5437 = vmatpush.msra.mxu0 %v877
    %5438 = vmatpush.msra.mxu0 %v869
    %5439 = vmatpush.msra.mxu0 %v861
    %5440 = vmatpush.msra.mxu0 %v853
    %5441 = vmatpush.msra.mxu0 %v845
    %5442 = vmatpush.msra.mxu0 %v837
    %5443 = vmatpush.msra.mxu0 %v829
    %5444 = vmatpush.msra.mxu0 %v821
    %5445 = vmatpush.msra.mxu0 %v813
    %5446 = vmatpush.msra.mxu0 %v805
    %5447 = vmatpush.msra.mxu0 %v797
    %5448 = vmatpush.msra.mxu0 %v789
    %5449 = vmatpush.msra.mxu0 %v781
    %5450 = vmatpush.msra.mxu0 %v773
    %5451 = vmatmul.f32.gmra.mxu0 %v4871
    %v5452 = vpop.f32.mrf.mxu0
    %v5453 = vadd.f32 %v1287, %v5452
    %5454 = vdwg.mxu0
    %5455 = vmatpush.msra.mxu0 %v1021
    %5456 = vmatpush.msra.mxu0 %v1013
    %5457 = vmatpush.msra.mxu0 %v1005
    %5458 = vmatpush.msra.mxu0 %v997
    %5459 = vmatpush.msra.mxu0 %v989
    %5460 = vmatpush.msra.mxu0 %v981
    %5461 = vmatpush.msra.mxu0 %v973
    %5462 = vmatpush.msra.mxu0 %v965
    %5463 = vmatpush.msra.mxu0 %v957
    %5464 = vmatpush.msra.mxu0 %v949
    %5465 = vmatpush.msra.mxu0 %v941
    %5466 = vmatpush.msra.mxu0 %v933
    %5467 = vmatpush.msra.mxu0 %v925
    %5468 = vmatpush.msra.mxu0 %v917
    %5469 = vmatpush.msra.mxu0 %v909
    %5470 = vmatpush.msra.mxu0 %v901
    %5471 = vmatmul.f32.gmra.mxu0 %v4872
    %v5472 = vpop.f32.mrf.mxu0
    %v5473 = vadd.f32 %v5453, %v5472
    %5474 = vdwg.mxu0
    %5475 = vmatpush.msra.mxu0 %v1149
    %5476 = vmatpush.msra.mxu0 %v1141
    %5477 = vmatpush.msra.mxu0 %v1133
    %5478 = vmatpush.msra.mxu0 %v1125
    %5479 = vmatpush.msra.mxu0 %v1117
    %5480 = vmatpush.msra.mxu0 %v1109
    %5481 = vmatpush.msra.mxu0 %v1101
    %5482 = vmatpush.msra.mxu0 %v1093
    %5483 = vmatpush.msra.mxu0 %v1085
    %5484 = vmatpush.msra.mxu0 %v1077
    %5485 = vmatpush.msra.mxu0 %v1069
    %5486 = vmatpush.msra.mxu0 %v1061
    %5487 = vmatpush.msra.mxu0 %v1053
    %5488 = vmatpush.msra.mxu0 %v1045
    %5489 = vmatpush.msra.mxu0 %v1037
    %5490 = vmatpush.msra.mxu0 %v1029
    %5491 = vmatmul.f32.gmra.mxu0 %v4446
    %v5492 = vpop.f32.mrf.mxu0
    %v5493 = vadd.f32 %v5473, %v5492
    %5494 = vdwg.mxu0
    %5495 = vmatpush.msra.mxu0 %v1277
    %5496 = vmatpush.msra.mxu0 %v1269
    %5497 = vmatpush.msra.mxu0 %v1261
    %5498 = vmatpush.msra.mxu0 %v1253
    %5499 = vmatpush.msra.mxu0 %v1245
    %5500 = vmatpush.msra.mxu0 %v1237
    %5501 = vmatpush.msra.mxu0 %v1229
    %5502 = vmatpush.msra.mxu0 %v1221
    %5503 = vmatpush.msra.mxu0 %v1213
    %5504 = vmatpush.msra.mxu0 %v1205
    %5505 = vmatpush.msra.mxu0 %v1197
    %5506 = vmatpush.msra.mxu0 %v1189
    %5507 = vmatpush.msra.mxu0 %v1181
    %5508 = vmatpush.msra.mxu0 %v1173
    %5509 = vmatpush.msra.mxu0 %v1165
    %5510 = vmatpush.msra.mxu0 %v1157
    %5511 = vmatmul.f32.gmra.mxu0 %v4447
    %v5512 = vpop.f32.mrf.mxu0
    %v5513 = vadd.f32 %v5493, %v5512
    %5514 = vdwg.mxu0
    %v5515 = vxor.u32 %v4953, 2147483648
    %v5516 = vxor.u32 %v5033, 2147483648
    %v5517 = vmul.f32 %v5515, 1.442695
    %v5518 = vpow.pop %v5517
    %v5519 = vmul.f32 %v5516, 1.442695
    %v5520 = vpow.pop %v5519
    %v5521 = vadd.f32 %v5518, 1.0
    %v5522 = vadd.f32 %v5520, 1.0
    %v5523 = vrcp.pop %v5521
    %v5524 = vmul.f32 %v5521, %v5523
    %v5525 = vsub.f32 1.0, %v5524
    %v5526 = vmul.f32 %v5523, %v5525
    %v5527 = vadd.f32 %v5523, %v5526
    %vm5528 = vweird.f32 %v5521
    %vm5529 = vweird.f32 %v5523
    %vm5530 = vmor %vm5528, %vm5529
    %v5531 = vsel %vm5530, %v5523, %v5527
    %v5532 = vand.u32 2147483647, %v5521
    %vm5533 = vcmp.eq.f32.partialorder %v5532, 8.507059e+37
    %v5534 = vand.u32 %v5521, 2147483648
    %v5535 = vor.u32 1.1754944e-38, %v5534
    %v5536 = vsel %vm5533, %v5535, %v5531
    %v5537 = vmul.f32 1.0, %v5536
    %v5538 = vrcp.pop %v5522
    %v5539 = vmul.f32 %v5522, %v5538
    %v5540 = vsub.f32 1.0, %v5539
    %v5541 = vmul.f32 %v5538, %v5540
    %v5542 = vadd.f32 %v5538, %v5541
    %vm5543 = vweird.f32 %v5522
    %vm5544 = vweird.f32 %v5538
    %vm5545 = vmor %vm5543, %vm5544
    %v5546 = vsel %vm5545, %v5538, %v5542
    %v5547 = vand.u32 2147483647, %v5522
    %vm5548 = vcmp.eq.f32.partialorder %v5547, 8.507059e+37
    %v5549 = vand.u32 %v5522, 2147483648
    %v5550 = vor.u32 1.1754944e-38, %v5549
    %v5551 = vsel %vm5548, %v5550, %v5546
    %v5552 = vmul.f32 1.0, %v5551
    %v5553 = vxor.u32 %v5113, 2147483648
    %v5554 = vxor.u32 %v5193, 2147483648
    %v5555 = vmul.f32 %v5553, 1.442695
    %v5556 = vpow.pop %v5555
    %v5557 = vmul.f32 %v5554, 1.442695
    %v5558 = vpow.pop %v5557
    %v5559 = vadd.f32 %v5556, 1.0
    %v5560 = vadd.f32 %v5558, 1.0
    %v5561 = vrcp.pop %v5559
    %v5562 = vmul.f32 %v5559, %v5561
    %v5563 = vsub.f32 1.0, %v5562
    %v5564 = vmul.f32 %v5561, %v5563
    %v5565 = vadd.f32 %v5561, %v5564
    %vm5566 = vweird.f32 %v5559
    %vm5567 = vweird.f32 %v5561
    %vm5568 = vmor %vm5566, %vm5567
    %v5569 = vsel %vm5568, %v5561, %v5565
    %v5570 = vand.u32 2147483647, %v5559
    %vm5571 = vcmp.eq.f32.partialorder %v5570, 8.507059e+37
    %v5572 = vand.u32 %v5559, 2147483648
    %v5573 = vor.u32 1.1754944e-38, %v5572
    %v5574 = vsel %vm5571, %v5573, %v5569
    %v5575 = vmul.f32 1.0, %v5574
    %v5576 = vrcp.pop %v5560
    %v5577 = vmul.f32 %v5560, %v5576
    %v5578 = vsub.f32 1.0, %v5577
    %v5579 = vmul.f32 %v5576, %v5578
    %v5580 = vadd.f32 %v5576, %v5579
    %vm5581 = vweird.f32 %v5560
    %vm5582 = vweird.f32 %v5576
    %vm5583 = vmor %vm5581, %vm5582
    %v5584 = vsel %vm5583, %v5576, %v5580
    %v5585 = vand.u32 2147483647, %v5560
    %vm5586 = vcmp.eq.f32.partialorder %v5585, 8.507059e+37
    %v5587 = vand.u32 %v5560, 2147483648
    %v5588 = vor.u32 1.1754944e-38, %v5587
    %v5589 = vsel %vm5586, %v5588, %v5584
    %v5590 = vmul.f32 1.0, %v5589
    %v5591 = vtanh.pop %v5273
    %v5592 = vtanh.pop %v5353
    %v5593 = vxor.u32 %v5433, 2147483648
    %v5594 = vxor.u32 %v5513, 2147483648
    %v5595 = vmul.f32 %v5593, 1.442695
    %v5596 = vpow.pop %v5595
    %v5597 = vmul.f32 %v5594, 1.442695
    %v5598 = vpow.pop %v5597
    %v5599 = vadd.f32 %v5596, 1.0
    %v5600 = vadd.f32 %v5598, 1.0
    %v5601 = vrcp.pop %v5599
    %v5602 = vmul.f32 %v5599, %v5601
    %v5603 = vsub.f32 1.0, %v5602
    %v5604 = vmul.f32 %v5601, %v5603
    %v5605 = vadd.f32 %v5601, %v5604
    %vm5606 = vweird.f32 %v5599
    %vm5607 = vweird.f32 %v5601
    %vm5608 = vmor %vm5606, %vm5607
    %v5609 = vsel %vm5608, %v5601, %v5605
    %v5610 = vand.u32 2147483647, %v5599
    %vm5611 = vcmp.eq.f32.partialorder %v5610, 8.507059e+37
    %v5612 = vand.u32 %v5599, 2147483648
    %v5613 = vor.u32 1.1754944e-38, %v5612
    %v5614 = vsel %vm5611, %v5613, %v5609
    %v5615 = vmul.f32 1.0, %v5614
    %v5616 = vrcp.pop %v5600
    %v5617 = vmul.f32 %v5600, %v5616
    %v5618 = vsub.f32 1.0, %v5617
    %v5619 = vmul.f32 %v5616, %v5618
    %v5620 = vadd.f32 %v5616, %v5619
    %vm5621 = vweird.f32 %v5600
    %vm5622 = vweird.f32 %v5616
    %vm5623 = vmor %vm5621, %vm5622
    %v5624 = vsel %vm5623, %v5616, %v5620
    %v5625 = vand.u32 2147483647, %v5600
    %vm5626 = vcmp.eq.f32.partialorder %v5625, 8.507059e+37
    %v5627 = vand.u32 %v5600, 2147483648
    %v5628 = vor.u32 1.1754944e-38, %v5627
    %v5629 = vsel %vm5626, %v5628, %v5624
    %v5630 = vmul.f32 1.0, %v5629
    %v5631 = vmul.f32 %v5575, %v4442
    %v5632 = vmul.f32 %v5590, %v4443
    %v5633 = vmul.f32 %v5537, %v5591
    %v5634 = vmul.f32 %v5552, %v5592
    %v5635 = vadd.f32 %v5631, %v5633
    %v5636 = vadd.f32 %v5632, %v5634
    %v5637 = vtanh.pop %v5635
    %v5638 = vtanh.pop %v5636
    %v5639 = vmul.f32 %v5615, %v5637
    %v5640 = vmul.f32 %v5630, %v5638
    %s5641 = scalar_lea.vmem [#allocation3], 64
    %v5642 = vld [vmem:[%s5641] sm:$0xff]
    %v5643 = vld [vmem:[%s5641 + $0x8] sm:$0xff]
    %5644 = vst [vmem:[#allocation1] ss:$4 sm:$0xff] %v4868
    %v5645 = vld.sshfl [vmem:[#allocation1] sm:$0xff pattern:$0x73625140]
    %v5646 = vld.sshfl [vmem:[#allocation1 + $0x8] sm:$0xff pattern:$0x73625140]
    %5649 = vmatpush.msra.mxu0 %v208
    %5650 = vmatpush.msra.mxu0 %v200
    %5651 = vmatpush.msra.mxu0 %v192
    %5652 = vmatpush.msra.mxu0 %v184
    %5653 = vmatpush.msra.mxu0 %v176
    %5654 = vmatpush.msra.mxu0 %v168
    %5655 = vmatpush.msra.mxu0 %v160
    %5656 = vmatpush.msra.mxu0 %v152
    %5657 = vmatpush.msra.mxu0 %v144
    %5658 = vmatpush.msra.mxu0 %v136
    %5659 = vmatpush.msra.mxu0 %v128
    %5660 = vmatpush.msra.mxu0 %v120
    %5661 = vmatpush.msra.mxu0 %v112
    %5662 = vmatpush.msra.mxu0 %v104
    %5663 = vmatpush.msra.mxu0 %v96
    %5664 = vmatpush.msra.mxu0 %v88
    %5665 = vmatmul.f32.gmra.mxu0 %v5645
    %v5666 = vpop.f32.mrf.mxu0
    %v5667 = vadd.f32 0.0, %v5666
    %5668 = vdwg.mxu0
    %5669 = vmatpush.msra.mxu0 %v336
    %5670 = vmatpush.msra.mxu0 %v328
    %5671 = vmatpush.msra.mxu0 %v320
    %5672 = vmatpush.msra.mxu0 %v312
    %5673 = vmatpush.msra.mxu0 %v304
    %5674 = vmatpush.msra.mxu0 %v296
    %5675 = vmatpush.msra.mxu0 %v288
    %5676 = vmatpush.msra.mxu0 %v280
    %5677 = vmatpush.msra.mxu0 %v272
    %5678 = vmatpush.msra.mxu0 %v264
    %5679 = vmatpush.msra.mxu0 %v256
    %5680 = vmatpush.msra.mxu0 %v248
    %5681 = vmatpush.msra.mxu0 %v240
    %5682 = vmatpush.msra.mxu0 %v232
    %5683 = vmatpush.msra.mxu0 %v224
    %5684 = vmatpush.msra.mxu0 %v216
    %5685 = vmatmul.f32.gmra.mxu0 %v5646
    %v5686 = vpop.f32.mrf.mxu0
    %v5687 = vadd.f32 %v5667, %v5686
    %5688 = vdwg.mxu0
    %5689 = vmatpush.msra.mxu0 %v209
    %5690 = vmatpush.msra.mxu0 %v201
    %5691 = vmatpush.msra.mxu0 %v193
    %5692 = vmatpush.msra.mxu0 %v185
    %5693 = vmatpush.msra.mxu0 %v177
    %5694 = vmatpush.msra.mxu0 %v169
    %5695 = vmatpush.msra.mxu0 %v161
    %5696 = vmatpush.msra.mxu0 %v153
    %5697 = vmatpush.msra.mxu0 %v145
    %5698 = vmatpush.msra.mxu0 %v137
    %5699 = vmatpush.msra.mxu0 %v129
    %5700 = vmatpush.msra.mxu0 %v121
    %5701 = vmatpush.msra.mxu0 %v113
    %5702 = vmatpush.msra.mxu0 %v105
    %5703 = vmatpush.msra.mxu0 %v97
    %5704 = vmatpush.msra.mxu0 %v89
    %5705 = vmatmul.f32.gmra.mxu0 %v5645
    %v5706 = vpop.f32.mrf.mxu0
    %v5707 = vadd.f32 0.0, %v5706
    %5708 = vdwg.mxu0
    %5709 = vmatpush.msra.mxu0 %v337
    %5710 = vmatpush.msra.mxu0 %v329
    %5711 = vmatpush.msra.mxu0 %v321
    %5712 = vmatpush.msra.mxu0 %v313
    %5713 = vmatpush.msra.mxu0 %v305
    %5714 = vmatpush.msra.mxu0 %v297
    %5715 = vmatpush.msra.mxu0 %v289
    %5716 = vmatpush.msra.mxu0 %v281
    %5717 = vmatpush.msra.mxu0 %v273
    %5718 = vmatpush.msra.mxu0 %v265
    %5719 = vmatpush.msra.mxu0 %v257
    %5720 = vmatpush.msra.mxu0 %v249
    %5721 = vmatpush.msra.mxu0 %v241
    %5722 = vmatpush.msra.mxu0 %v233
    %5723 = vmatpush.msra.mxu0 %v225
    %5724 = vmatpush.msra.mxu0 %v217
    %5725 = vmatmul.f32.gmra.mxu0 %v5646
    %v5726 = vpop.f32.mrf.mxu0
    %v5727 = vadd.f32 %v5707, %v5726
    %5728 = vdwg.mxu0
    %5729 = vmatpush.msra.mxu0 %v210
    %5730 = vmatpush.msra.mxu0 %v202
    %5731 = vmatpush.msra.mxu0 %v194
    %5732 = vmatpush.msra.mxu0 %v186
    %5733 = vmatpush.msra.mxu0 %v178
    %5734 = vmatpush.msra.mxu0 %v170
    %5735 = vmatpush.msra.mxu0 %v162
    %5736 = vmatpush.msra.mxu0 %v154
    %5737 = vmatpush.msra.mxu0 %v146
    %5738 = vmatpush.msra.mxu0 %v138
    %5739 = vmatpush.msra.mxu0 %v130
    %5740 = vmatpush.msra.mxu0 %v122
    %5741 = vmatpush.msra.mxu0 %v114
    %5742 = vmatpush.msra.mxu0 %v106
    %5743 = vmatpush.msra.mxu0 %v98
    %5744 = vmatpush.msra.mxu0 %v90
    %5745 = vmatmul.f32.gmra.mxu0 %v5645
    %v5746 = vpop.f32.mrf.mxu0
    %v5747 = vadd.f32 0.0, %v5746
    %5748 = vdwg.mxu0
    %5749 = vmatpush.msra.mxu0 %v338
    %5750 = vmatpush.msra.mxu0 %v330
    %5751 = vmatpush.msra.mxu0 %v322
    %5752 = vmatpush.msra.mxu0 %v314
    %5753 = vmatpush.msra.mxu0 %v306
    %5754 = vmatpush.msra.mxu0 %v298
    %5755 = vmatpush.msra.mxu0 %v290
    %5756 = vmatpush.msra.mxu0 %v282
    %5757 = vmatpush.msra.mxu0 %v274
    %5758 = vmatpush.msra.mxu0 %v266
    %5759 = vmatpush.msra.mxu0 %v258
    %5760 = vmatpush.msra.mxu0 %v250
    %5761 = vmatpush.msra.mxu0 %v242
    %5762 = vmatpush.msra.mxu0 %v234
    %5763 = vmatpush.msra.mxu0 %v226
    %5764 = vmatpush.msra.mxu0 %v218
    %5765 = vmatmul.f32.gmra.mxu0 %v5646
    %v5766 = vpop.f32.mrf.mxu0
    %v5767 = vadd.f32 %v5747, %v5766
    %5768 = vdwg.mxu0
    %5769 = vmatpush.msra.mxu0 %v211
    %5770 = vmatpush.msra.mxu0 %v203
    %5771 = vmatpush.msra.mxu0 %v195
    %5772 = vmatpush.msra.mxu0 %v187
    %5773 = vmatpush.msra.mxu0 %v179
    %5774 = vmatpush.msra.mxu0 %v171
    %5775 = vmatpush.msra.mxu0 %v163
    %5776 = vmatpush.msra.mxu0 %v155
    %5777 = vmatpush.msra.mxu0 %v147
    %5778 = vmatpush.msra.mxu0 %v139
    %5779 = vmatpush.msra.mxu0 %v131
    %5780 = vmatpush.msra.mxu0 %v123
    %5781 = vmatpush.msra.mxu0 %v115
    %5782 = vmatpush.msra.mxu0 %v107
    %5783 = vmatpush.msra.mxu0 %v99
    %5784 = vmatpush.msra.mxu0 %v91
    %5785 = vmatmul.f32.gmra.mxu0 %v5645
    %v5786 = vpop.f32.mrf.mxu0
    %v5787 = vadd.f32 0.0, %v5786
    %5788 = vdwg.mxu0
    %5789 = vmatpush.msra.mxu0 %v339
    %5790 = vmatpush.msra.mxu0 %v331
    %5791 = vmatpush.msra.mxu0 %v323
    %5792 = vmatpush.msra.mxu0 %v315
    %5793 = vmatpush.msra.mxu0 %v307
    %5794 = vmatpush.msra.mxu0 %v299
    %5795 = vmatpush.msra.mxu0 %v291
    %5796 = vmatpush.msra.mxu0 %v283
    %5797 = vmatpush.msra.mxu0 %v275
    %5798 = vmatpush.msra.mxu0 %v267
    %5799 = vmatpush.msra.mxu0 %v259
    %5800 = vmatpush.msra.mxu0 %v251
    %5801 = vmatpush.msra.mxu0 %v243
    %5802 = vmatpush.msra.mxu0 %v235
    %5803 = vmatpush.msra.mxu0 %v227
    %5804 = vmatpush.msra.mxu0 %v219
    %5805 = vmatmul.f32.gmra.mxu0 %v5646
    %v5806 = vpop.f32.mrf.mxu0
    %v5807 = vadd.f32 %v5787, %v5806
    %5808 = vdwg.mxu0
    %5809 = vmatpush.msra.mxu0 %v212
    %5810 = vmatpush.msra.mxu0 %v204
    %5811 = vmatpush.msra.mxu0 %v196
    %5812 = vmatpush.msra.mxu0 %v188
    %5813 = vmatpush.msra.mxu0 %v180
    %5814 = vmatpush.msra.mxu0 %v172
    %5815 = vmatpush.msra.mxu0 %v164
    %5816 = vmatpush.msra.mxu0 %v156
    %5817 = vmatpush.msra.mxu0 %v148
    %5818 = vmatpush.msra.mxu0 %v140
    %5819 = vmatpush.msra.mxu0 %v132
    %5820 = vmatpush.msra.mxu0 %v124
    %5821 = vmatpush.msra.mxu0 %v116
    %5822 = vmatpush.msra.mxu0 %v108
    %5823 = vmatpush.msra.mxu0 %v100
    %5824 = vmatpush.msra.mxu0 %v92
    %5825 = vmatmul.f32.gmra.mxu0 %v5645
    %v5826 = vpop.f32.mrf.mxu0
    %v5827 = vadd.f32 0.0, %v5826
    %5828 = vdwg.mxu0
    %5829 = vmatpush.msra.mxu0 %v340
    %5830 = vmatpush.msra.mxu0 %v332
    %5831 = vmatpush.msra.mxu0 %v324
    %5832 = vmatpush.msra.mxu0 %v316
    %5833 = vmatpush.msra.mxu0 %v308
    %5834 = vmatpush.msra.mxu0 %v300
    %5835 = vmatpush.msra.mxu0 %v292
    %5836 = vmatpush.msra.mxu0 %v284
    %5837 = vmatpush.msra.mxu0 %v276
    %5838 = vmatpush.msra.mxu0 %v268
    %5839 = vmatpush.msra.mxu0 %v260
    %5840 = vmatpush.msra.mxu0 %v252
    %5841 = vmatpush.msra.mxu0 %v244
    %5842 = vmatpush.msra.mxu0 %v236
    %5843 = vmatpush.msra.mxu0 %v228
    %5844 = vmatpush.msra.mxu0 %v220
    %5845 = vmatmul.f32.gmra.mxu0 %v5646
    %v5846 = vpop.f32.mrf.mxu0
    %v5847 = vadd.f32 %v5827, %v5846
    %5848 = vdwg.mxu0
    %5849 = vmatpush.msra.mxu0 %v213
    %5850 = vmatpush.msra.mxu0 %v205
    %5851 = vmatpush.msra.mxu0 %v197
    %5852 = vmatpush.msra.mxu0 %v189
    %5853 = vmatpush.msra.mxu0 %v181
    %5854 = vmatpush.msra.mxu0 %v173
    %5855 = vmatpush.msra.mxu0 %v165
    %5856 = vmatpush.msra.mxu0 %v157
    %5857 = vmatpush.msra.mxu0 %v149
    %5858 = vmatpush.msra.mxu0 %v141
    %5859 = vmatpush.msra.mxu0 %v133
    %5860 = vmatpush.msra.mxu0 %v125
    %5861 = vmatpush.msra.mxu0 %v117
    %5862 = vmatpush.msra.mxu0 %v109
    %5863 = vmatpush.msra.mxu0 %v101
    %5864 = vmatpush.msra.mxu0 %v93
    %5865 = vmatmul.f32.gmra.mxu0 %v5645
    %v5866 = vpop.f32.mrf.mxu0
    %v5867 = vadd.f32 0.0, %v5866
    %5868 = vdwg.mxu0
    %5869 = vmatpush.msra.mxu0 %v341
    %5870 = vmatpush.msra.mxu0 %v333
    %5871 = vmatpush.msra.mxu0 %v325
    %5872 = vmatpush.msra.mxu0 %v317
    %5873 = vmatpush.msra.mxu0 %v309
    %5874 = vmatpush.msra.mxu0 %v301
    %5875 = vmatpush.msra.mxu0 %v293
    %5876 = vmatpush.msra.mxu0 %v285
    %5877 = vmatpush.msra.mxu0 %v277
    %5878 = vmatpush.msra.mxu0 %v269
    %5879 = vmatpush.msra.mxu0 %v261
    %5880 = vmatpush.msra.mxu0 %v253
    %5881 = vmatpush.msra.mxu0 %v245
    %5882 = vmatpush.msra.mxu0 %v237
    %5883 = vmatpush.msra.mxu0 %v229
    %5884 = vmatpush.msra.mxu0 %v221
    %5885 = vmatmul.f32.gmra.mxu0 %v5646
    %v5886 = vpop.f32.mrf.mxu0
    %v5887 = vadd.f32 %v5867, %v5886
    %5888 = vdwg.mxu0
    %5889 = vmatpush.msra.mxu0 %v214
    %5890 = vmatpush.msra.mxu0 %v206
    %5891 = vmatpush.msra.mxu0 %v198
    %5892 = vmatpush.msra.mxu0 %v190
    %5893 = vmatpush.msra.mxu0 %v182
    %5894 = vmatpush.msra.mxu0 %v174
    %5895 = vmatpush.msra.mxu0 %v166
    %5896 = vmatpush.msra.mxu0 %v158
    %5897 = vmatpush.msra.mxu0 %v150
    %5898 = vmatpush.msra.mxu0 %v142
    %5899 = vmatpush.msra.mxu0 %v134
    %5900 = vmatpush.msra.mxu0 %v126
    %5901 = vmatpush.msra.mxu0 %v118
    %5902 = vmatpush.msra.mxu0 %v110
    %5903 = vmatpush.msra.mxu0 %v102
    %5904 = vmatpush.msra.mxu0 %v94
    %5905 = vmatmul.f32.gmra.mxu0 %v5645
    %v5906 = vpop.f32.mrf.mxu0
    %v5907 = vadd.f32 0.0, %v5906
    %5908 = vdwg.mxu0
    %5909 = vmatpush.msra.mxu0 %v342
    %5910 = vmatpush.msra.mxu0 %v334
    %5911 = vmatpush.msra.mxu0 %v326
    %5912 = vmatpush.msra.mxu0 %v318
    %5913 = vmatpush.msra.mxu0 %v310
    %5914 = vmatpush.msra.mxu0 %v302
    %5915 = vmatpush.msra.mxu0 %v294
    %5916 = vmatpush.msra.mxu0 %v286
    %5917 = vmatpush.msra.mxu0 %v278
    %5918 = vmatpush.msra.mxu0 %v270
    %5919 = vmatpush.msra.mxu0 %v262
    %5920 = vmatpush.msra.mxu0 %v254
    %5921 = vmatpush.msra.mxu0 %v246
    %5922 = vmatpush.msra.mxu0 %v238
    %5923 = vmatpush.msra.mxu0 %v230
    %5924 = vmatpush.msra.mxu0 %v222
    %5925 = vmatmul.f32.gmra.mxu0 %v5646
    %v5926 = vpop.f32.mrf.mxu0
    %v5927 = vadd.f32 %v5907, %v5926
    %5928 = vdwg.mxu0
    %5929 = vmatpush.msra.mxu0 %v215
    %5930 = vmatpush.msra.mxu0 %v207
    %5931 = vmatpush.msra.mxu0 %v199
    %5932 = vmatpush.msra.mxu0 %v191
    %5933 = vmatpush.msra.mxu0 %v183
    %5934 = vmatpush.msra.mxu0 %v175
    %5935 = vmatpush.msra.mxu0 %v167
    %5936 = vmatpush.msra.mxu0 %v159
    %5937 = vmatpush.msra.mxu0 %v151
    %5938 = vmatpush.msra.mxu0 %v143
    %5939 = vmatpush.msra.mxu0 %v135
    %5940 = vmatpush.msra.mxu0 %v127
    %5941 = vmatpush.msra.mxu0 %v119
    %5942 = vmatpush.msra.mxu0 %v111
    %5943 = vmatpush.msra.mxu0 %v103
    %5944 = vmatpush.msra.mxu0 %v95
    %5945 = vmatmul.f32.gmra.mxu0 %v5645
    %v5946 = vpop.f32.mrf.mxu0
    %v5947 = vadd.f32 0.0, %v5946
    %5948 = vdwg.mxu0
    %5949 = vmatpush.msra.mxu0 %v343
    %5950 = vmatpush.msra.mxu0 %v335
    %5951 = vmatpush.msra.mxu0 %v327
    %5952 = vmatpush.msra.mxu0 %v319
    %5953 = vmatpush.msra.mxu0 %v311
    %5954 = vmatpush.msra.mxu0 %v303
    %5955 = vmatpush.msra.mxu0 %v295
    %5956 = vmatpush.msra.mxu0 %v287
    %5957 = vmatpush.msra.mxu0 %v279
    %5958 = vmatpush.msra.mxu0 %v271
    %5959 = vmatpush.msra.mxu0 %v263
    %5960 = vmatpush.msra.mxu0 %v255
    %5961 = vmatpush.msra.mxu0 %v247
    %5962 = vmatpush.msra.mxu0 %v239
    %5963 = vmatpush.msra.mxu0 %v231
    %5964 = vmatpush.msra.mxu0 %v223
    %5965 = vmatmul.f32.gmra.mxu0 %v5646
    %v5966 = vpop.f32.mrf.mxu0
    %v5967 = vadd.f32 %v5947, %v5966
    %5968 = vdwg.mxu0
    %v5977 = vrot.slane %v5727, 6
    %v5978 = vrot.slane %v5767, 4
    %v5979 = vrot.slane %v5807, 2
    %v5980 = vrot.slane %v5887, 6
    %v5981 = vrot.slane %v5927, 4
    %v5982 = vrot.slane %v5967, 2
    %v5983 = vsel %vm678, %v5687, %v5977
    %v5984 = vsel %vm680, %v5978, %v5979
    %v5985 = vsel %vm682, %v5983, %v5984
    %v5986 = vsel %vm678, %v5847, %v5980
    %v5987 = vsel %vm680, %v5981, %v5982
    %v5988 = vsel %vm682, %v5986, %v5987
    %v5991 = vadd.f32 %v5642, %v5985
    %v5992 = vadd.f32 %v5643, %v5988
    %v5993 = vxor.u32 %v5991, 2147483648
    %v5994 = vmul.f32 %v5993, 1.442695
    %v5995 = vpow.pop %v5994
    %v5996 = vadd.f32 %v5995, 1.0
    %v5997 = vrcp.pop %v5996
    %v5998 = vmul.f32 %v5996, %v5997
    %v5999 = vsub.f32 1.0, %v5998
    %v6000 = vmul.f32 %v5997, %v5999
    %v6001 = vadd.f32 %v5997, %v6000
    %vm6002 = vweird.f32 %v5996
    %vm6003 = vweird.f32 %v5997
    %vm6004 = vmor %vm6002, %vm6003
    %v6005 = vsel %vm6004, %v5997, %v6001
    %v6006 = vand.u32 2147483647, %v5996
    %vm6007 = vcmp.eq.f32.partialorder %v6006, 8.507059e+37
    %v6008 = vand.u32 %v5996, 2147483648
    %v6009 = vor.u32 1.1754944e-38, %v6008
    %v6010 = vsel %vm6007, %v6009, %v6005
    %v6011 = vmul.f32 1.0, %v6010
    %v6013 = vrot.slane %v5991, 4
    %v6015 = vxor.u32 %v6013, 2147483648
    %v6016 = vmul.f32 %v6015, 1.442695
    %v6017 = vpow.pop %v6016
    %v6018 = vadd.f32 %v6017, 1.0
    %v6019 = vrcp.pop %v6018
    %v6020 = vmul.f32 %v6018, %v6019
    %v6021 = vsub.f32 1.0, %v6020
    %v6022 = vmul.f32 %v6019, %v6021
    %v6023 = vadd.f32 %v6019, %v6022
    %vm6024 = vweird.f32 %v6018
    %vm6025 = vweird.f32 %v6019
    %vm6026 = vmor %vm6024, %vm6025
    %v6027 = vsel %vm6026, %v6019, %v6023
    %v6028 = vand.u32 2147483647, %v6018
    %vm6029 = vcmp.eq.f32.partialorder %v6028, 8.507059e+37
    %v6030 = vand.u32 %v6018, 2147483648
    %v6031 = vor.u32 1.1754944e-38, %v6030
    %v6032 = vsel %vm6029, %v6031, %v6027
    %v6033 = vmul.f32 1.0, %v6032
    %v6034 = vtanh.pop %v5992
    %v6036 = vrot.slane %v5992, 4
    %v6038 = vxor.u32 %v6036, 2147483648
    %v6039 = vmul.f32 %v6038, 1.442695
    %v6040 = vpow.pop %v6039
    %v6041 = vadd.f32 %v6040, 1.0
    %v6042 = vrcp.pop %v6041
    %v6043 = vmul.f32 %v6041, %v6042
    %v6044 = vsub.f32 1.0, %v6043
    %v6045 = vmul.f32 %v6042, %v6044
    %v6046 = vadd.f32 %v6042, %v6045
    %vm6047 = vweird.f32 %v6041
    %vm6048 = vweird.f32 %v6042
    %vm6049 = vmor %vm6047, %vm6048
    %v6050 = vsel %vm6049, %v6042, %v6046
    %v6051 = vand.u32 2147483647, %v6041
    %vm6052 = vcmp.eq.f32.partialorder %v6051, 8.507059e+37
    %v6053 = vand.u32 %v6041, 2147483648
    %v6054 = vor.u32 1.1754944e-38, %v6053
    %v6055 = vsel %vm6052, %v6054, %v6050
    %v6056 = vmul.f32 1.0, %v6055
    %v6057 = vmul.f32 %v6033, %v4866
    %v6058 = vmul.f32 %v6011, %v6034
    %v6059 = vadd.f32 %v6057, %v6058
    %v6060 = vtanh.pop %v6059
    %v6061 = vmul.f32 %v6056, %v6060
    %6063 = vst [vmem:[#allocation1] ss:$4 sm:$0xff] %v6061
    %v6064 = vld.sshfl [vmem:[#allocation1] sm:$0xff pattern:$0x73625140]
    %v6065 = vld.sshfl [vmem:[#allocation1 + $0x8] sm:$0xff pattern:$0x73625140]
    %6068 = vmatpush.msra.mxu0 %v886
    %6069 = vmatpush.msra.mxu0 %v878
    %6070 = vmatpush.msra.mxu0 %v870
    %6071 = vmatpush.msra.mxu0 %v862
    %6072 = vmatpush.msra.mxu0 %v854
    %6073 = vmatpush.msra.mxu0 %v846
    %6074 = vmatpush.msra.mxu0 %v838
    %6075 = vmatpush.msra.mxu0 %v830
    %6076 = vmatpush.msra.mxu0 %v822
    %6077 = vmatpush.msra.mxu0 %v814
    %6078 = vmatpush.msra.mxu0 %v806
    %6079 = vmatpush.msra.mxu0 %v798
    %6080 = vmatpush.msra.mxu0 %v790
    %6081 = vmatpush.msra.mxu0 %v782
    %6082 = vmatpush.msra.mxu0 %v774
    %6083 = vmatpush.msra.mxu0 %v766
    %6084 = vmatmul.f32.gmra.mxu0 %v6064
    %v6085 = vpop.f32.mrf.mxu0
    %v6086 = vadd.f32 %v1280, %v6085
    %6087 = vdwg.mxu0
    %6088 = vmatpush.msra.mxu0 %v1014
    %6089 = vmatpush.msra.mxu0 %v1006
    %6090 = vmatpush.msra.mxu0 %v998
    %6091 = vmatpush.msra.mxu0 %v990
    %6092 = vmatpush.msra.mxu0 %v982
    %6093 = vmatpush.msra.mxu0 %v974
    %6094 = vmatpush.msra.mxu0 %v966
    %6095 = vmatpush.msra.mxu0 %v958
    %6096 = vmatpush.msra.mxu0 %v950
    %6097 = vmatpush.msra.mxu0 %v942
    %6098 = vmatpush.msra.mxu0 %v934
    %6099 = vmatpush.msra.mxu0 %v926
    %6100 = vmatpush.msra.mxu0 %v918
    %6101 = vmatpush.msra.mxu0 %v910
    %6102 = vmatpush.msra.mxu0 %v902
    %6103 = vmatpush.msra.mxu0 %v894
    %6104 = vmatmul.f32.gmra.mxu0 %v6065
    %v6105 = vpop.f32.mrf.mxu0
    %v6106 = vadd.f32 %v6086, %v6105
    %6107 = vdwg.mxu0
    %6108 = vmatpush.msra.mxu0 %v1142
    %6109 = vmatpush.msra.mxu0 %v1134
    %6110 = vmatpush.msra.mxu0 %v1126
    %6111 = vmatpush.msra.mxu0 %v1118
    %6112 = vmatpush.msra.mxu0 %v1110
    %6113 = vmatpush.msra.mxu0 %v1102
    %6114 = vmatpush.msra.mxu0 %v1094
    %6115 = vmatpush.msra.mxu0 %v1086
    %6116 = vmatpush.msra.mxu0 %v1078
    %6117 = vmatpush.msra.mxu0 %v1070
    %6118 = vmatpush.msra.mxu0 %v1062
    %6119 = vmatpush.msra.mxu0 %v1054
    %6120 = vmatpush.msra.mxu0 %v1046
    %6121 = vmatpush.msra.mxu0 %v1038
    %6122 = vmatpush.msra.mxu0 %v1030
    %6123 = vmatpush.msra.mxu0 %v1022
    %6124 = vmatmul.f32.gmra.mxu0 %v5639
    %v6125 = vpop.f32.mrf.mxu0
    %v6126 = vadd.f32 %v6106, %v6125
    %6127 = vdwg.mxu0
    %6128 = vmatpush.msra.mxu0 %v1270
    %6129 = vmatpush.msra.mxu0 %v1262
    %6130 = vmatpush.msra.mxu0 %v1254
    %6131 = vmatpush.msra.mxu0 %v1246
    %6132 = vmatpush.msra.mxu0 %v1238
    %6133 = vmatpush.msra.mxu0 %v1230
    %6134 = vmatpush.msra.mxu0 %v1222
    %6135 = vmatpush.msra.mxu0 %v1214
    %6136 = vmatpush.msra.mxu0 %v1206
    %6137 = vmatpush.msra.mxu0 %v1198
    %6138 = vmatpush.msra.mxu0 %v1190
    %6139 = vmatpush.msra.mxu0 %v1182
    %6140 = vmatpush.msra.mxu0 %v1174
    %6141 = vmatpush.msra.mxu0 %v1166
    %6142 = vmatpush.msra.mxu0 %v1158
    %6143 = vmatpush.msra.mxu0 %v1150
    %6144 = vmatmul.f32.gmra.mxu0 %v5640
    %v6145 = vpop.f32.mrf.mxu0
    %v6146 = vadd.f32 %v6126, %v6145
    %6147 = vdwg.mxu0
    %6148 = vmatpush.msra.mxu0 %v887
    %6149 = vmatpush.msra.mxu0 %v879
    %6150 = vmatpush.msra.mxu0 %v871
    %6151 = vmatpush.msra.mxu0 %v863
    %6152 = vmatpush.msra.mxu0 %v855
    %6153 = vmatpush.msra.mxu0 %v847
    %6154 = vmatpush.msra.mxu0 %v839
    %6155 = vmatpush.msra.mxu0 %v831
    %6156 = vmatpush.msra.mxu0 %v823
    %6157 = vmatpush.msra.mxu0 %v815
    %6158 = vmatpush.msra.mxu0 %v807
    %6159 = vmatpush.msra.mxu0 %v799
    %6160 = vmatpush.msra.mxu0 %v791
    %6161 = vmatpush.msra.mxu0 %v783
    %6162 = vmatpush.msra.mxu0 %v775
    %6163 = vmatpush.msra.mxu0 %v767
    %6164 = vmatmul.f32.gmra.mxu0 %v6064
    %v6165 = vpop.f32.mrf.mxu0
    %v6166 = vadd.f32 %v1281, %v6165
    %6167 = vdwg.mxu0
    %6168 = vmatpush.msra.mxu0 %v1015
    %6169 = vmatpush.msra.mxu0 %v1007
    %6170 = vmatpush.msra.mxu0 %v999
    %6171 = vmatpush.msra.mxu0 %v991
    %6172 = vmatpush.msra.mxu0 %v983
    %6173 = vmatpush.msra.mxu0 %v975
    %6174 = vmatpush.msra.mxu0 %v967
    %6175 = vmatpush.msra.mxu0 %v959
    %6176 = vmatpush.msra.mxu0 %v951
    %6177 = vmatpush.msra.mxu0 %v943
    %6178 = vmatpush.msra.mxu0 %v935
    %6179 = vmatpush.msra.mxu0 %v927
    %6180 = vmatpush.msra.mxu0 %v919
    %6181 = vmatpush.msra.mxu0 %v911
    %6182 = vmatpush.msra.mxu0 %v903
    %6183 = vmatpush.msra.mxu0 %v895
    %6184 = vmatmul.f32.gmra.mxu0 %v6065
    %v6185 = vpop.f32.mrf.mxu0
    %v6186 = vadd.f32 %v6166, %v6185
    %6187 = vdwg.mxu0
    %6188 = vmatpush.msra.mxu0 %v1143
    %6189 = vmatpush.msra.mxu0 %v1135
    %6190 = vmatpush.msra.mxu0 %v1127
    %6191 = vmatpush.msra.mxu0 %v1119
    %6192 = vmatpush.msra.mxu0 %v1111
    %6193 = vmatpush.msra.mxu0 %v1103
    %6194 = vmatpush.msra.mxu0 %v1095
    %6195 = vmatpush.msra.mxu0 %v1087
    %6196 = vmatpush.msra.mxu0 %v1079
    %6197 = vmatpush.msra.mxu0 %v1071
    %6198 = vmatpush.msra.mxu0 %v1063
    %6199 = vmatpush.msra.mxu0 %v1055
    %6200 = vmatpush.msra.mxu0 %v1047
    %6201 = vmatpush.msra.mxu0 %v1039
    %6202 = vmatpush.msra.mxu0 %v1031
    %6203 = vmatpush.msra.mxu0 %v1023
    %6204 = vmatmul.f32.gmra.mxu0 %v5639
    %v6205 = vpop.f32.mrf.mxu0
    %v6206 = vadd.f32 %v6186, %v6205
    %6207 = vdwg.mxu0
    %6208 = vmatpush.msra.mxu0 %v1271
    %6209 = vmatpush.msra.mxu0 %v1263
    %6210 = vmatpush.msra.mxu0 %v1255
    %6211 = vmatpush.msra.mxu0 %v1247
    %6212 = vmatpush.msra.mxu0 %v1239
    %6213 = vmatpush.msra.mxu0 %v1231
    %6214 = vmatpush.msra.mxu0 %v1223
    %6215 = vmatpush.msra.mxu0 %v1215
    %6216 = vmatpush.msra.mxu0 %v1207
    %6217 = vmatpush.msra.mxu0 %v1199
    %6218 = vmatpush.msra.mxu0 %v1191
    %6219 = vmatpush.msra.mxu0 %v1183
    %6220 = vmatpush.msra.mxu0 %v1175
    %6221 = vmatpush.msra.mxu0 %v1167
    %6222 = vmatpush.msra.mxu0 %v1159
    %6223 = vmatpush.msra.mxu0 %v1151
    %6224 = vmatmul.f32.gmra.mxu0 %v5640
    %v6225 = vpop.f32.mrf.mxu0
    %v6226 = vadd.f32 %v6206, %v6225
    %6227 = vdwg.mxu0
    %6228 = vmatpush.msra.mxu0 %v888
    %6229 = vmatpush.msra.mxu0 %v880
    %6230 = vmatpush.msra.mxu0 %v872
    %6231 = vmatpush.msra.mxu0 %v864
    %6232 = vmatpush.msra.mxu0 %v856
    %6233 = vmatpush.msra.mxu0 %v848
    %6234 = vmatpush.msra.mxu0 %v840
    %6235 = vmatpush.msra.mxu0 %v832
    %6236 = vmatpush.msra.mxu0 %v824
    %6237 = vmatpush.msra.mxu0 %v816
    %6238 = vmatpush.msra.mxu0 %v808
    %6239 = vmatpush.msra.mxu0 %v800
    %6240 = vmatpush.msra.mxu0 %v792
    %6241 = vmatpush.msra.mxu0 %v784
    %6242 = vmatpush.msra.mxu0 %v776
    %6243 = vmatpush.msra.mxu0 %v768
    %6244 = vmatmul.f32.gmra.mxu0 %v6064
    %v6245 = vpop.f32.mrf.mxu0
    %v6246 = vadd.f32 %v1282, %v6245
    %6247 = vdwg.mxu0
    %6248 = vmatpush.msra.mxu0 %v1016
    %6249 = vmatpush.msra.mxu0 %v1008
    %6250 = vmatpush.msra.mxu0 %v1000
    %6251 = vmatpush.msra.mxu0 %v992
    %6252 = vmatpush.msra.mxu0 %v984
    %6253 = vmatpush.msra.mxu0 %v976
    %6254 = vmatpush.msra.mxu0 %v968
    %6255 = vmatpush.msra.mxu0 %v960
    %6256 = vmatpush.msra.mxu0 %v952
    %6257 = vmatpush.msra.mxu0 %v944
    %6258 = vmatpush.msra.mxu0 %v936
    %6259 = vmatpush.msra.mxu0 %v928
    %6260 = vmatpush.msra.mxu0 %v920
    %6261 = vmatpush.msra.mxu0 %v912
    %6262 = vmatpush.msra.mxu0 %v904
    %6263 = vmatpush.msra.mxu0 %v896
    %6264 = vmatmul.f32.gmra.mxu0 %v6065
    %v6265 = vpop.f32.mrf.mxu0
    %v6266 = vadd.f32 %v6246, %v6265
    %6267 = vdwg.mxu0
    %6268 = vmatpush.msra.mxu0 %v1144
    %6269 = vmatpush.msra.mxu0 %v1136
    %6270 = vmatpush.msra.mxu0 %v1128
    %6271 = vmatpush.msra.mxu0 %v1120
    %6272 = vmatpush.msra.mxu0 %v1112
    %6273 = vmatpush.msra.mxu0 %v1104
    %6274 = vmatpush.msra.mxu0 %v1096
    %6275 = vmatpush.msra.mxu0 %v1088
    %6276 = vmatpush.msra.mxu0 %v1080
    %6277 = vmatpush.msra.mxu0 %v1072
    %6278 = vmatpush.msra.mxu0 %v1064
    %6279 = vmatpush.msra.mxu0 %v1056
    %6280 = vmatpush.msra.mxu0 %v1048
    %6281 = vmatpush.msra.mxu0 %v1040
    %6282 = vmatpush.msra.mxu0 %v1032
    %6283 = vmatpush.msra.mxu0 %v1024
    %6284 = vmatmul.f32.gmra.mxu0 %v5639
    %v6285 = vpop.f32.mrf.mxu0
    %v6286 = vadd.f32 %v6266, %v6285
    %6287 = vdwg.mxu0
    %6288 = vmatpush.msra.mxu0 %v1272
    %6289 = vmatpush.msra.mxu0 %v1264
    %6290 = vmatpush.msra.mxu0 %v1256
    %6291 = vmatpush.msra.mxu0 %v1248
    %6292 = vmatpush.msra.mxu0 %v1240
    %6293 = vmatpush.msra.mxu0 %v1232
    %6294 = vmatpush.msra.mxu0 %v1224
    %6295 = vmatpush.msra.mxu0 %v1216
    %6296 = vmatpush.msra.mxu0 %v1208
    %6297 = vmatpush.msra.mxu0 %v1200
    %6298 = vmatpush.msra.mxu0 %v1192
    %6299 = vmatpush.msra.mxu0 %v1184
    %6300 = vmatpush.msra.mxu0 %v1176
    %6301 = vmatpush.msra.mxu0 %v1168
    %6302 = vmatpush.msra.mxu0 %v1160
    %6303 = vmatpush.msra.mxu0 %v1152
    %6304 = vmatmul.f32.gmra.mxu0 %v5640
    %v6305 = vpop.f32.mrf.mxu0
    %v6306 = vadd.f32 %v6286, %v6305
    %6307 = vdwg.mxu0
    %6308 = vmatpush.msra.mxu0 %v889
    %6309 = vmatpush.msra.mxu0 %v881
    %6310 = vmatpush.msra.mxu0 %v873
    %6311 = vmatpush.msra.mxu0 %v865
    %6312 = vmatpush.msra.mxu0 %v857
    %6313 = vmatpush.msra.mxu0 %v849
    %6314 = vmatpush.msra.mxu0 %v841
    %6315 = vmatpush.msra.mxu0 %v833
    %6316 = vmatpush.msra.mxu0 %v825
    %6317 = vmatpush.msra.mxu0 %v817
    %6318 = vmatpush.msra.mxu0 %v809
    %6319 = vmatpush.msra.mxu0 %v801
    %6320 = vmatpush.msra.mxu0 %v793
    %6321 = vmatpush.msra.mxu0 %v785
    %6322 = vmatpush.msra.mxu0 %v777
    %6323 = vmatpush.msra.mxu0 %v769
    %6324 = vmatmul.f32.gmra.mxu0 %v6064
    %v6325 = vpop.f32.mrf.mxu0
    %v6326 = vadd.f32 %v1283, %v6325
    %6327 = vdwg.mxu0
    %6328 = vmatpush.msra.mxu0 %v1017
    %6329 = vmatpush.msra.mxu0 %v1009
    %6330 = vmatpush.msra.mxu0 %v1001
    %6331 = vmatpush.msra.mxu0 %v993
    %6332 = vmatpush.msra.mxu0 %v985
    %6333 = vmatpush.msra.mxu0 %v977
    %6334 = vmatpush.msra.mxu0 %v969
    %6335 = vmatpush.msra.mxu0 %v961
    %6336 = vmatpush.msra.mxu0 %v953
    %6337 = vmatpush.msra.mxu0 %v945
    %6338 = vmatpush.msra.mxu0 %v937
    %6339 = vmatpush.msra.mxu0 %v929
    %6340 = vmatpush.msra.mxu0 %v921
    %6341 = vmatpush.msra.mxu0 %v913
    %6342 = vmatpush.msra.mxu0 %v905
    %6343 = vmatpush.msra.mxu0 %v897
    %6344 = vmatmul.f32.gmra.mxu0 %v6065
    %v6345 = vpop.f32.mrf.mxu0
    %v6346 = vadd.f32 %v6326, %v6345
    %6347 = vdwg.mxu0
    %6348 = vmatpush.msra.mxu0 %v1145
    %6349 = vmatpush.msra.mxu0 %v1137
    %6350 = vmatpush.msra.mxu0 %v1129
    %6351 = vmatpush.msra.mxu0 %v1121
    %6352 = vmatpush.msra.mxu0 %v1113
    %6353 = vmatpush.msra.mxu0 %v1105
    %6354 = vmatpush.msra.mxu0 %v1097
    %6355 = vmatpush.msra.mxu0 %v1089
    %6356 = vmatpush.msra.mxu0 %v1081
    %6357 = vmatpush.msra.mxu0 %v1073
    %6358 = vmatpush.msra.mxu0 %v1065
    %6359 = vmatpush.msra.mxu0 %v1057
    %6360 = vmatpush.msra.mxu0 %v1049
    %6361 = vmatpush.msra.mxu0 %v1041
    %6362 = vmatpush.msra.mxu0 %v1033
    %6363 = vmatpush.msra.mxu0 %v1025
    %6364 = vmatmul.f32.gmra.mxu0 %v5639
    %v6365 = vpop.f32.mrf.mxu0
    %v6366 = vadd.f32 %v6346, %v6365
    %6367 = vdwg.mxu0
    %6368 = vmatpush.msra.mxu0 %v1273
    %6369 = vmatpush.msra.mxu0 %v1265
    %6370 = vmatpush.msra.mxu0 %v1257
    %6371 = vmatpush.msra.mxu0 %v1249
    %6372 = vmatpush.msra.mxu0 %v1241
    %6373 = vmatpush.msra.mxu0 %v1233
    %6374 = vmatpush.msra.mxu0 %v1225
    %6375 = vmatpush.msra.mxu0 %v1217
    %6376 = vmatpush.msra.mxu0 %v1209
    %6377 = vmatpush.msra.mxu0 %v1201
    %6378 = vmatpush.msra.mxu0 %v1193
    %6379 = vmatpush.msra.mxu0 %v1185
    %6380 = vmatpush.msra.mxu0 %v1177
    %6381 = vmatpush.msra.mxu0 %v1169
    %6382 = vmatpush.msra.mxu0 %v1161
    %6383 = vmatpush.msra.mxu0 %v1153
    %6384 = vmatmul.f32.gmra.mxu0 %v5640
    %v6385 = vpop.f32.mrf.mxu0
    %v6386 = vadd.f32 %v6366, %v6385
    %6387 = vdwg.mxu0
    %6388 = vmatpush.msra.mxu0 %v890
    %6389 = vmatpush.msra.mxu0 %v882
    %6390 = vmatpush.msra.mxu0 %v874
    %6391 = vmatpush.msra.mxu0 %v866
    %6392 = vmatpush.msra.mxu0 %v858
    %6393 = vmatpush.msra.mxu0 %v850
    %6394 = vmatpush.msra.mxu0 %v842
    %6395 = vmatpush.msra.mxu0 %v834
    %6396 = vmatpush.msra.mxu0 %v826
    %6397 = vmatpush.msra.mxu0 %v818
    %6398 = vmatpush.msra.mxu0 %v810
    %6399 = vmatpush.msra.mxu0 %v802
    %6400 = vmatpush.msra.mxu0 %v794
    %6401 = vmatpush.msra.mxu0 %v786
    %6402 = vmatpush.msra.mxu0 %v778
    %6403 = vmatpush.msra.mxu0 %v770
    %6404 = vmatmul.f32.gmra.mxu0 %v6064
    %v6405 = vpop.f32.mrf.mxu0
    %v6406 = vadd.f32 %v1284, %v6405
    %6407 = vdwg.mxu0
    %6408 = vmatpush.msra.mxu0 %v1018
    %6409 = vmatpush.msra.mxu0 %v1010
    %6410 = vmatpush.msra.mxu0 %v1002
    %6411 = vmatpush.msra.mxu0 %v994
    %6412 = vmatpush.msra.mxu0 %v986
    %6413 = vmatpush.msra.mxu0 %v978
    %6414 = vmatpush.msra.mxu0 %v970
    %6415 = vmatpush.msra.mxu0 %v962
    %6416 = vmatpush.msra.mxu0 %v954
    %6417 = vmatpush.msra.mxu0 %v946
    %6418 = vmatpush.msra.mxu0 %v938
    %6419 = vmatpush.msra.mxu0 %v930
    %6420 = vmatpush.msra.mxu0 %v922
    %6421 = vmatpush.msra.mxu0 %v914
    %6422 = vmatpush.msra.mxu0 %v906
    %6423 = vmatpush.msra.mxu0 %v898
    %6424 = vmatmul.f32.gmra.mxu0 %v6065
    %v6425 = vpop.f32.mrf.mxu0
    %v6426 = vadd.f32 %v6406, %v6425
    %6427 = vdwg.mxu0
    %6428 = vmatpush.msra.mxu0 %v1146
    %6429 = vmatpush.msra.mxu0 %v1138
    %6430 = vmatpush.msra.mxu0 %v1130
    %6431 = vmatpush.msra.mxu0 %v1122
    %6432 = vmatpush.msra.mxu0 %v1114
    %6433 = vmatpush.msra.mxu0 %v1106
    %6434 = vmatpush.msra.mxu0 %v1098
    %6435 = vmatpush.msra.mxu0 %v1090
    %6436 = vmatpush.msra.mxu0 %v1082
    %6437 = vmatpush.msra.mxu0 %v1074
    %6438 = vmatpush.msra.mxu0 %v1066
    %6439 = vmatpush.msra.mxu0 %v1058
    %6440 = vmatpush.msra.mxu0 %v1050
    %6441 = vmatpush.msra.mxu0 %v1042
    %6442 = vmatpush.msra.mxu0 %v1034
    %6443 = vmatpush.msra.mxu0 %v1026
    %6444 = vmatmul.f32.gmra.mxu0 %v5639
    %v6445 = vpop.f32.mrf.mxu0
    %v6446 = vadd.f32 %v6426, %v6445
    %6447 = vdwg.mxu0
    %6448 = vmatpush.msra.mxu0 %v1274
    %6449 = vmatpush.msra.mxu0 %v1266
    %6450 = vmatpush.msra.mxu0 %v1258
    %6451 = vmatpush.msra.mxu0 %v1250
    %6452 = vmatpush.msra.mxu0 %v1242
    %6453 = vmatpush.msra.mxu0 %v1234
    %6454 = vmatpush.msra.mxu0 %v1226
    %6455 = vmatpush.msra.mxu0 %v1218
    %6456 = vmatpush.msra.mxu0 %v1210
    %6457 = vmatpush.msra.mxu0 %v1202
    %6458 = vmatpush.msra.mxu0 %v1194
    %6459 = vmatpush.msra.mxu0 %v1186
    %6460 = vmatpush.msra.mxu0 %v1178
    %6461 = vmatpush.msra.mxu0 %v1170
    %6462 = vmatpush.msra.mxu0 %v1162
    %6463 = vmatpush.msra.mxu0 %v1154
    %6464 = vmatmul.f32.gmra.mxu0 %v5640
    %v6465 = vpop.f32.mrf.mxu0
    %v6466 = vadd.f32 %v6446, %v6465
    %6467 = vdwg.mxu0
    %6468 = vmatpush.msra.mxu0 %v891
    %6469 = vmatpush.msra.mxu0 %v883
    %6470 = vmatpush.msra.mxu0 %v875
    %6471 = vmatpush.msra.mxu0 %v867
    %6472 = vmatpush.msra.mxu0 %v859
    %6473 = vmatpush.msra.mxu0 %v851
    %6474 = vmatpush.msra.mxu0 %v843
    %6475 = vmatpush.msra.mxu0 %v835
    %6476 = vmatpush.msra.mxu0 %v827
    %6477 = vmatpush.msra.mxu0 %v819
    %6478 = vmatpush.msra.mxu0 %v811
    %6479 = vmatpush.msra.mxu0 %v803
    %6480 = vmatpush.msra.mxu0 %v795
    %6481 = vmatpush.msra.mxu0 %v787
    %6482 = vmatpush.msra.mxu0 %v779
    %6483 = vmatpush.msra.mxu0 %v771
    %6484 = vmatmul.f32.gmra.mxu0 %v6064
    %v6485 = vpop.f32.mrf.mxu0
    %v6486 = vadd.f32 %v1285, %v6485
    %6487 = vdwg.mxu0
    %6488 = vmatpush.msra.mxu0 %v1019
    %6489 = vmatpush.msra.mxu0 %v1011
    %6490 = vmatpush.msra.mxu0 %v1003
    %6491 = vmatpush.msra.mxu0 %v995
    %6492 = vmatpush.msra.mxu0 %v987
    %6493 = vmatpush.msra.mxu0 %v979
    %6494 = vmatpush.msra.mxu0 %v971
    %6495 = vmatpush.msra.mxu0 %v963
    %6496 = vmatpush.msra.mxu0 %v955
    %6497 = vmatpush.msra.mxu0 %v947
    %6498 = vmatpush.msra.mxu0 %v939
    %6499 = vmatpush.msra.mxu0 %v931
    %6500 = vmatpush.msra.mxu0 %v923
    %6501 = vmatpush.msra.mxu0 %v915
    %6502 = vmatpush.msra.mxu0 %v907
    %6503 = vmatpush.msra.mxu0 %v899
    %6504 = vmatmul.f32.gmra.mxu0 %v6065
    %v6505 = vpop.f32.mrf.mxu0
    %v6506 = vadd.f32 %v6486, %v6505
    %6507 = vdwg.mxu0
    %6508 = vmatpush.msra.mxu0 %v1147
    %6509 = vmatpush.msra.mxu0 %v1139
    %6510 = vmatpush.msra.mxu0 %v1131
    %6511 = vmatpush.msra.mxu0 %v1123
    %6512 = vmatpush.msra.mxu0 %v1115
    %6513 = vmatpush.msra.mxu0 %v1107
    %6514 = vmatpush.msra.mxu0 %v1099
    %6515 = vmatpush.msra.mxu0 %v1091
    %6516 = vmatpush.msra.mxu0 %v1083
    %6517 = vmatpush.msra.mxu0 %v1075
    %6518 = vmatpush.msra.mxu0 %v1067
    %6519 = vmatpush.msra.mxu0 %v1059
    %6520 = vmatpush.msra.mxu0 %v1051
    %6521 = vmatpush.msra.mxu0 %v1043
    %6522 = vmatpush.msra.mxu0 %v1035
    %6523 = vmatpush.msra.mxu0 %v1027
    %6524 = vmatmul.f32.gmra.mxu0 %v5639
    %v6525 = vpop.f32.mrf.mxu0
    %v6526 = vadd.f32 %v6506, %v6525
    %6527 = vdwg.mxu0
    %6528 = vmatpush.msra.mxu0 %v1275
    %6529 = vmatpush.msra.mxu0 %v1267
    %6530 = vmatpush.msra.mxu0 %v1259
    %6531 = vmatpush.msra.mxu0 %v1251
    %6532 = vmatpush.msra.mxu0 %v1243
    %6533 = vmatpush.msra.mxu0 %v1235
    %6534 = vmatpush.msra.mxu0 %v1227
    %6535 = vmatpush.msra.mxu0 %v1219
    %6536 = vmatpush.msra.mxu0 %v1211
    %6537 = vmatpush.msra.mxu0 %v1203
    %6538 = vmatpush.msra.mxu0 %v1195
    %6539 = vmatpush.msra.mxu0 %v1187
    %6540 = vmatpush.msra.mxu0 %v1179
    %6541 = vmatpush.msra.mxu0 %v1171
    %6542 = vmatpush.msra.mxu0 %v1163
    %6543 = vmatpush.msra.mxu0 %v1155
    %6544 = vmatmul.f32.gmra.mxu0 %v5640
    %v6545 = vpop.f32.mrf.mxu0
    %v6546 = vadd.f32 %v6526, %v6545
    %6547 = vdwg.mxu0
    %6548 = vmatpush.msra.mxu0 %v892
    %6549 = vmatpush.msra.mxu0 %v884
    %6550 = vmatpush.msra.mxu0 %v876
    %6551 = vmatpush.msra.mxu0 %v868
    %6552 = vmatpush.msra.mxu0 %v860
    %6553 = vmatpush.msra.mxu0 %v852
    %6554 = vmatpush.msra.mxu0 %v844
    %6555 = vmatpush.msra.mxu0 %v836
    %6556 = vmatpush.msra.mxu0 %v828
    %6557 = vmatpush.msra.mxu0 %v820
    %6558 = vmatpush.msra.mxu0 %v812
    %6559 = vmatpush.msra.mxu0 %v804
    %6560 = vmatpush.msra.mxu0 %v796
    %6561 = vmatpush.msra.mxu0 %v788
    %6562 = vmatpush.msra.mxu0 %v780
    %6563 = vmatpush.msra.mxu0 %v772
    %6564 = vmatmul.f32.gmra.mxu0 %v6064
    %v6565 = vpop.f32.mrf.mxu0
    %v6566 = vadd.f32 %v1286, %v6565
    %6567 = vdwg.mxu0
    %6568 = vmatpush.msra.mxu0 %v1020
    %6569 = vmatpush.msra.mxu0 %v1012
    %6570 = vmatpush.msra.mxu0 %v1004
    %6571 = vmatpush.msra.mxu0 %v996
    %6572 = vmatpush.msra.mxu0 %v988
    %6573 = vmatpush.msra.mxu0 %v980
    %6574 = vmatpush.msra.mxu0 %v972
    %6575 = vmatpush.msra.mxu0 %v964
    %6576 = vmatpush.msra.mxu0 %v956
    %6577 = vmatpush.msra.mxu0 %v948
    %6578 = vmatpush.msra.mxu0 %v940
    %6579 = vmatpush.msra.mxu0 %v932
    %6580 = vmatpush.msra.mxu0 %v924
    %6581 = vmatpush.msra.mxu0 %v916
    %6582 = vmatpush.msra.mxu0 %v908
    %6583 = vmatpush.msra.mxu0 %v900
    %6584 = vmatmul.f32.gmra.mxu0 %v6065
    %v6585 = vpop.f32.mrf.mxu0
    %v6586 = vadd.f32 %v6566, %v6585
    %6587 = vdwg.mxu0
    %6588 = vmatpush.msra.mxu0 %v1148
    %6589 = vmatpush.msra.mxu0 %v1140
    %6590 = vmatpush.msra.mxu0 %v1132
    %6591 = vmatpush.msra.mxu0 %v1124
    %6592 = vmatpush.msra.mxu0 %v1116
    %6593 = vmatpush.msra.mxu0 %v1108
    %6594 = vmatpush.msra.mxu0 %v1100
    %6595 = vmatpush.msra.mxu0 %v1092
    %6596 = vmatpush.msra.mxu0 %v1084
    %6597 = vmatpush.msra.mxu0 %v1076
    %6598 = vmatpush.msra.mxu0 %v1068
    %6599 = vmatpush.msra.mxu0 %v1060
    %6600 = vmatpush.msra.mxu0 %v1052
    %6601 = vmatpush.msra.mxu0 %v1044
    %6602 = vmatpush.msra.mxu0 %v1036
    %6603 = vmatpush.msra.mxu0 %v1028
    %6604 = vmatmul.f32.gmra.mxu0 %v5639
    %v6605 = vpop.f32.mrf.mxu0
    %v6606 = vadd.f32 %v6586, %v6605
    %6607 = vdwg.mxu0
    %6608 = vmatpush.msra.mxu0 %v1276
    %6609 = vmatpush.msra.mxu0 %v1268
    %6610 = vmatpush.msra.mxu0 %v1260
    %6611 = vmatpush.msra.mxu0 %v1252
    %6612 = vmatpush.msra.mxu0 %v1244
    %6613 = vmatpush.msra.mxu0 %v1236
    %6614 = vmatpush.msra.mxu0 %v1228
    %6615 = vmatpush.msra.mxu0 %v1220
    %6616 = vmatpush.msra.mxu0 %v1212
    %6617 = vmatpush.msra.mxu0 %v1204
    %6618 = vmatpush.msra.mxu0 %v1196
    %6619 = vmatpush.msra.mxu0 %v1188
    %6620 = vmatpush.msra.mxu0 %v1180
    %6621 = vmatpush.msra.mxu0 %v1172
    %6622 = vmatpush.msra.mxu0 %v1164
    %6623 = vmatpush.msra.mxu0 %v1156
    %6624 = vmatmul.f32.gmra.mxu0 %v5640
    %v6625 = vpop.f32.mrf.mxu0
    %v6626 = vadd.f32 %v6606, %v6625
    %6627 = vdwg.mxu0
    %6628 = vmatpush.msra.mxu0 %v893
    %6629 = vmatpush.msra.mxu0 %v885
    %6630 = vmatpush.msra.mxu0 %v877
    %6631 = vmatpush.msra.mxu0 %v869
    %6632 = vmatpush.msra.mxu0 %v861
    %6633 = vmatpush.msra.mxu0 %v853
    %6634 = vmatpush.msra.mxu0 %v845
    %6635 = vmatpush.msra.mxu0 %v837
    %6636 = vmatpush.msra.mxu0 %v829
    %6637 = vmatpush.msra.mxu0 %v821
    %6638 = vmatpush.msra.mxu0 %v813
    %6639 = vmatpush.msra.mxu0 %v805
    %6640 = vmatpush.msra.mxu0 %v797
    %6641 = vmatpush.msra.mxu0 %v789
    %6642 = vmatpush.msra.mxu0 %v781
    %6643 = vmatpush.msra.mxu0 %v773
    %6644 = vmatmul.f32.gmra.mxu0 %v6064
    %v6645 = vpop.f32.mrf.mxu0
    %v6646 = vadd.f32 %v1287, %v6645
    %6647 = vdwg.mxu0
    %6648 = vmatpush.msra.mxu0 %v1021
    %6649 = vmatpush.msra.mxu0 %v1013
    %6650 = vmatpush.msra.mxu0 %v1005
    %6651 = vmatpush.msra.mxu0 %v997
    %6652 = vmatpush.msra.mxu0 %v989
    %6653 = vmatpush.msra.mxu0 %v981
    %6654 = vmatpush.msra.mxu0 %v973
    %6655 = vmatpush.msra.mxu0 %v965
    %6656 = vmatpush.msra.mxu0 %v957
    %6657 = vmatpush.msra.mxu0 %v949
    %6658 = vmatpush.msra.mxu0 %v941
    %6659 = vmatpush.msra.mxu0 %v933
    %6660 = vmatpush.msra.mxu0 %v925
    %6661 = vmatpush.msra.mxu0 %v917
    %6662 = vmatpush.msra.mxu0 %v909
    %6663 = vmatpush.msra.mxu0 %v901
    %6664 = vmatmul.f32.gmra.mxu0 %v6065
    %v6665 = vpop.f32.mrf.mxu0
    %v6666 = vadd.f32 %v6646, %v6665
    %6667 = vdwg.mxu0
    %6668 = vmatpush.msra.mxu0 %v1149
    %6669 = vmatpush.msra.mxu0 %v1141
    %6670 = vmatpush.msra.mxu0 %v1133
    %6671 = vmatpush.msra.mxu0 %v1125
    %6672 = vmatpush.msra.mxu0 %v1117
    %6673 = vmatpush.msra.mxu0 %v1109
    %6674 = vmatpush.msra.mxu0 %v1101
    %6675 = vmatpush.msra.mxu0 %v1093
    %6676 = vmatpush.msra.mxu0 %v1085
    %6677 = vmatpush.msra.mxu0 %v1077
    %6678 = vmatpush.msra.mxu0 %v1069
    %6679 = vmatpush.msra.mxu0 %v1061
    %6680 = vmatpush.msra.mxu0 %v1053
    %6681 = vmatpush.msra.mxu0 %v1045
    %6682 = vmatpush.msra.mxu0 %v1037
    %6683 = vmatpush.msra.mxu0 %v1029
    %6684 = vmatmul.f32.gmra.mxu0 %v5639
    %v6685 = vpop.f32.mrf.mxu0
    %v6686 = vadd.f32 %v6666, %v6685
    %6687 = vdwg.mxu0
    %6688 = vmatpush.msra.mxu0 %v1277
    %6689 = vmatpush.msra.mxu0 %v1269
    %6690 = vmatpush.msra.mxu0 %v1261
    %6691 = vmatpush.msra.mxu0 %v1253
    %6692 = vmatpush.msra.mxu0 %v1245
    %6693 = vmatpush.msra.mxu0 %v1237
    %6694 = vmatpush.msra.mxu0 %v1229
    %6695 = vmatpush.msra.mxu0 %v1221
    %6696 = vmatpush.msra.mxu0 %v1213
    %6697 = vmatpush.msra.mxu0 %v1205
    %6698 = vmatpush.msra.mxu0 %v1197
    %6699 = vmatpush.msra.mxu0 %v1189
    %6700 = vmatpush.msra.mxu0 %v1181
    %6701 = vmatpush.msra.mxu0 %v1173
    %6702 = vmatpush.msra.mxu0 %v1165
    %6703 = vmatpush.msra.mxu0 %v1157
    %6704 = vmatmul.f32.gmra.mxu0 %v5640
    %v6705 = vpop.f32.mrf.mxu0
    %v6706 = vadd.f32 %v6686, %v6705
    %6707 = vdwg.mxu0
    %v6708 = vxor.u32 %v6146, 2147483648
    %v6709 = vxor.u32 %v6226, 2147483648
    %v6710 = vmul.f32 %v6708, 1.442695
    %v6711 = vpow.pop %v6710
    %v6712 = vmul.f32 %v6709, 1.442695
    %v6713 = vpow.pop %v6712
    %v6714 = vadd.f32 %v6711, 1.0
    %v6715 = vadd.f32 %v6713, 1.0
    %v6716 = vrcp.pop %v6714
    %v6717 = vmul.f32 %v6714, %v6716
    %v6718 = vsub.f32 1.0, %v6717
    %v6719 = vmul.f32 %v6716, %v6718
    %v6720 = vadd.f32 %v6716, %v6719
    %vm6721 = vweird.f32 %v6714
    %vm6722 = vweird.f32 %v6716
    %vm6723 = vmor %vm6721, %vm6722
    %v6724 = vsel %vm6723, %v6716, %v6720
    %v6725 = vand.u32 2147483647, %v6714
    %vm6726 = vcmp.eq.f32.partialorder %v6725, 8.507059e+37
    %v6727 = vand.u32 %v6714, 2147483648
    %v6728 = vor.u32 1.1754944e-38, %v6727
    %v6729 = vsel %vm6726, %v6728, %v6724
    %v6730 = vmul.f32 1.0, %v6729
    %v6731 = vrcp.pop %v6715
    %v6732 = vmul.f32 %v6715, %v6731
    %v6733 = vsub.f32 1.0, %v6732
    %v6734 = vmul.f32 %v6731, %v6733
    %v6735 = vadd.f32 %v6731, %v6734
    %vm6736 = vweird.f32 %v6715
    %vm6737 = vweird.f32 %v6731
    %vm6738 = vmor %vm6736, %vm6737
    %v6739 = vsel %vm6738, %v6731, %v6735
    %v6740 = vand.u32 2147483647, %v6715
    %vm6741 = vcmp.eq.f32.partialorder %v6740, 8.507059e+37
    %v6742 = vand.u32 %v6715, 2147483648
    %v6743 = vor.u32 1.1754944e-38, %v6742
    %v6744 = vsel %vm6741, %v6743, %v6739
    %v6745 = vmul.f32 1.0, %v6744
    %v6746 = vxor.u32 %v6306, 2147483648
    %v6747 = vxor.u32 %v6386, 2147483648
    %v6748 = vmul.f32 %v6746, 1.442695
    %v6749 = vpow.pop %v6748
    %v6750 = vmul.f32 %v6747, 1.442695
    %v6751 = vpow.pop %v6750
    %v6752 = vadd.f32 %v6749, 1.0
    %v6753 = vadd.f32 %v6751, 1.0
    %v6754 = vrcp.pop %v6752
    %v6755 = vmul.f32 %v6752, %v6754
    %v6756 = vsub.f32 1.0, %v6755
    %v6757 = vmul.f32 %v6754, %v6756
    %v6758 = vadd.f32 %v6754, %v6757
    %vm6759 = vweird.f32 %v6752
    %vm6760 = vweird.f32 %v6754
    %vm6761 = vmor %vm6759, %vm6760
    %v6762 = vsel %vm6761, %v6754, %v6758
    %v6763 = vand.u32 2147483647, %v6752
    %vm6764 = vcmp.eq.f32.partialorder %v6763, 8.507059e+37
    %v6765 = vand.u32 %v6752, 2147483648
    %v6766 = vor.u32 1.1754944e-38, %v6765
    %v6767 = vsel %vm6764, %v6766, %v6762
    %v6768 = vmul.f32 1.0, %v6767
    %v6769 = vrcp.pop %v6753
    %v6770 = vmul.f32 %v6753, %v6769
    %v6771 = vsub.f32 1.0, %v6770
    %v6772 = vmul.f32 %v6769, %v6771
    %v6773 = vadd.f32 %v6769, %v6772
    %vm6774 = vweird.f32 %v6753
    %vm6775 = vweird.f32 %v6769
    %vm6776 = vmor %vm6774, %vm6775
    %v6777 = vsel %vm6776, %v6769, %v6773
    %v6778 = vand.u32 2147483647, %v6753
    %vm6779 = vcmp.eq.f32.partialorder %v6778, 8.507059e+37
    %v6780 = vand.u32 %v6753, 2147483648
    %v6781 = vor.u32 1.1754944e-38, %v6780
    %v6782 = vsel %vm6779, %v6781, %v6777
    %v6783 = vmul.f32 1.0, %v6782
    %v6784 = vtanh.pop %v6466
    %v6785 = vtanh.pop %v6546
    %v6786 = vxor.u32 %v6626, 2147483648
    %v6787 = vxor.u32 %v6706, 2147483648
    %v6788 = vmul.f32 %v6786, 1.442695
    %v6789 = vpow.pop %v6788
    %v6790 = vmul.f32 %v6787, 1.442695
    %v6791 = vpow.pop %v6790
    %v6792 = vadd.f32 %v6789, 1.0
    %v6793 = vadd.f32 %v6791, 1.0
    %v6794 = vrcp.pop %v6792
    %v6795 = vmul.f32 %v6792, %v6794
    %v6796 = vsub.f32 1.0, %v6795
    %v6797 = vmul.f32 %v6794, %v6796
    %v6798 = vadd.f32 %v6794, %v6797
    %vm6799 = vweird.f32 %v6792
    %vm6800 = vweird.f32 %v6794
    %vm6801 = vmor %vm6799, %vm6800
    %v6802 = vsel %vm6801, %v6794, %v6798
    %v6803 = vand.u32 2147483647, %v6792
    %vm6804 = vcmp.eq.f32.partialorder %v6803, 8.507059e+37
    %v6805 = vand.u32 %v6792, 2147483648
    %v6806 = vor.u32 1.1754944e-38, %v6805
    %v6807 = vsel %vm6804, %v6806, %v6802
    %v6808 = vmul.f32 1.0, %v6807
    %v6809 = vrcp.pop %v6793
    %v6810 = vmul.f32 %v6793, %v6809
    %v6811 = vsub.f32 1.0, %v6810
    %v6812 = vmul.f32 %v6809, %v6811
    %v6813 = vadd.f32 %v6809, %v6812
    %vm6814 = vweird.f32 %v6793
    %vm6815 = vweird.f32 %v6809
    %vm6816 = vmor %vm6814, %vm6815
    %v6817 = vsel %vm6816, %v6809, %v6813
    %v6818 = vand.u32 2147483647, %v6793
    %vm6819 = vcmp.eq.f32.partialorder %v6818, 8.507059e+37
    %v6820 = vand.u32 %v6793, 2147483648
    %v6821 = vor.u32 1.1754944e-38, %v6820
    %v6822 = vsel %vm6819, %v6821, %v6817
    %v6823 = vmul.f32 1.0, %v6822
    %v6824 = vmul.f32 %v6768, %v5635
    %v6825 = vmul.f32 %v6783, %v5636
    %v6826 = vmul.f32 %v6730, %v6784
    %v6827 = vmul.f32 %v6745, %v6785
    %v6828 = vadd.f32 %v6824, %v6826
    %v6829 = vadd.f32 %v6825, %v6827
    %v6830 = vtanh.pop %v6828
    %v6831 = vtanh.pop %v6829
    %v6832 = vmul.f32 %v6808, %v6830
    %v6833 = vmul.f32 %v6823, %v6831
    %s6834 = scalar_lea.vmem [#allocation3], 80
    %v6835 = vld [vmem:[%s6834] sm:$0xff]
    %v6836 = vld [vmem:[%s6834 + $0x8] sm:$0xff]
    %6837 = vst [vmem:[#allocation1] ss:$4 sm:$0xff] %v6061
    %v6838 = vld.sshfl [vmem:[#allocation1] sm:$0xff pattern:$0x73625140]
    %v6839 = vld.sshfl [vmem:[#allocation1 + $0x8] sm:$0xff pattern:$0x73625140]
    %6842 = vmatpush.msra.mxu0 %v208
    %6843 = vmatpush.msra.mxu0 %v200
    %6844 = vmatpush.msra.mxu0 %v192
    %6845 = vmatpush.msra.mxu0 %v184
    %6846 = vmatpush.msra.mxu0 %v176
    %6847 = vmatpush.msra.mxu0 %v168
    %6848 = vmatpush.msra.mxu0 %v160
    %6849 = vmatpush.msra.mxu0 %v152
    %6850 = vmatpush.msra.mxu0 %v144
    %6851 = vmatpush.msra.mxu0 %v136
    %6852 = vmatpush.msra.mxu0 %v128
    %6853 = vmatpush.msra.mxu0 %v120
    %6854 = vmatpush.msra.mxu0 %v112
    %6855 = vmatpush.msra.mxu0 %v104
    %6856 = vmatpush.msra.mxu0 %v96
    %6857 = vmatpush.msra.mxu0 %v88
    %6858 = vmatmul.f32.gmra.mxu0 %v6838
    %v6859 = vpop.f32.mrf.mxu0
    %v6860 = vadd.f32 0.0, %v6859
    %6861 = vdwg.mxu0
    %6862 = vmatpush.msra.mxu0 %v336
    %6863 = vmatpush.msra.mxu0 %v328
    %6864 = vmatpush.msra.mxu0 %v320
    %6865 = vmatpush.msra.mxu0 %v312
    %6866 = vmatpush.msra.mxu0 %v304
    %6867 = vmatpush.msra.mxu0 %v296
    %6868 = vmatpush.msra.mxu0 %v288
    %6869 = vmatpush.msra.mxu0 %v280
    %6870 = vmatpush.msra.mxu0 %v272
    %6871 = vmatpush.msra.mxu0 %v264
    %6872 = vmatpush.msra.mxu0 %v256
    %6873 = vmatpush.msra.mxu0 %v248
    %6874 = vmatpush.msra.mxu0 %v240
    %6875 = vmatpush.msra.mxu0 %v232
    %6876 = vmatpush.msra.mxu0 %v224
    %6877 = vmatpush.msra.mxu0 %v216
    %6878 = vmatmul.f32.gmra.mxu0 %v6839
    %v6879 = vpop.f32.mrf.mxu0
    %v6880 = vadd.f32 %v6860, %v6879
    %6881 = vdwg.mxu0
    %6882 = vmatpush.msra.mxu0 %v209
    %6883 = vmatpush.msra.mxu0 %v201
    %6884 = vmatpush.msra.mxu0 %v193
    %6885 = vmatpush.msra.mxu0 %v185
    %6886 = vmatpush.msra.mxu0 %v177
    %6887 = vmatpush.msra.mxu0 %v169
    %6888 = vmatpush.msra.mxu0 %v161
    %6889 = vmatpush.msra.mxu0 %v153
    %6890 = vmatpush.msra.mxu0 %v145
    %6891 = vmatpush.msra.mxu0 %v137
    %6892 = vmatpush.msra.mxu0 %v129
    %6893 = vmatpush.msra.mxu0 %v121
    %6894 = vmatpush.msra.mxu0 %v113
    %6895 = vmatpush.msra.mxu0 %v105
    %6896 = vmatpush.msra.mxu0 %v97
    %6897 = vmatpush.msra.mxu0 %v89
    %6898 = vmatmul.f32.gmra.mxu0 %v6838
    %v6899 = vpop.f32.mrf.mxu0
    %v6900 = vadd.f32 0.0, %v6899
    %6901 = vdwg.mxu0
    %6902 = vmatpush.msra.mxu0 %v337
    %6903 = vmatpush.msra.mxu0 %v329
    %6904 = vmatpush.msra.mxu0 %v321
    %6905 = vmatpush.msra.mxu0 %v313
    %6906 = vmatpush.msra.mxu0 %v305
    %6907 = vmatpush.msra.mxu0 %v297
    %6908 = vmatpush.msra.mxu0 %v289
    %6909 = vmatpush.msra.mxu0 %v281
    %6910 = vmatpush.msra.mxu0 %v273
    %6911 = vmatpush.msra.mxu0 %v265
    %6912 = vmatpush.msra.mxu0 %v257
    %6913 = vmatpush.msra.mxu0 %v249
    %6914 = vmatpush.msra.mxu0 %v241
    %6915 = vmatpush.msra.mxu0 %v233
    %6916 = vmatpush.msra.mxu0 %v225
    %6917 = vmatpush.msra.mxu0 %v217
    %6918 = vmatmul.f32.gmra.mxu0 %v6839
    %v6919 = vpop.f32.mrf.mxu0
    %v6920 = vadd.f32 %v6900, %v6919
    %6921 = vdwg.mxu0
    %6922 = vmatpush.msra.mxu0 %v210
    %6923 = vmatpush.msra.mxu0 %v202
    %6924 = vmatpush.msra.mxu0 %v194
    %6925 = vmatpush.msra.mxu0 %v186
    %6926 = vmatpush.msra.mxu0 %v178
    %6927 = vmatpush.msra.mxu0 %v170
    %6928 = vmatpush.msra.mxu0 %v162
    %6929 = vmatpush.msra.mxu0 %v154
    %6930 = vmatpush.msra.mxu0 %v146
    %6931 = vmatpush.msra.mxu0 %v138
    %6932 = vmatpush.msra.mxu0 %v130
    %6933 = vmatpush.msra.mxu0 %v122
    %6934 = vmatpush.msra.mxu0 %v114
    %6935 = vmatpush.msra.mxu0 %v106
    %6936 = vmatpush.msra.mxu0 %v98
    %6937 = vmatpush.msra.mxu0 %v90
    %6938 = vmatmul.f32.gmra.mxu0 %v6838
    %v6939 = vpop.f32.mrf.mxu0
    %v6940 = vadd.f32 0.0, %v6939
    %6941 = vdwg.mxu0
    %6942 = vmatpush.msra.mxu0 %v338
    %6943 = vmatpush.msra.mxu0 %v330
    %6944 = vmatpush.msra.mxu0 %v322
    %6945 = vmatpush.msra.mxu0 %v314
    %6946 = vmatpush.msra.mxu0 %v306
    %6947 = vmatpush.msra.mxu0 %v298
    %6948 = vmatpush.msra.mxu0 %v290
    %6949 = vmatpush.msra.mxu0 %v282
    %6950 = vmatpush.msra.mxu0 %v274
    %6951 = vmatpush.msra.mxu0 %v266
    %6952 = vmatpush.msra.mxu0 %v258
    %6953 = vmatpush.msra.mxu0 %v250
    %6954 = vmatpush.msra.mxu0 %v242
    %6955 = vmatpush.msra.mxu0 %v234
    %6956 = vmatpush.msra.mxu0 %v226
    %6957 = vmatpush.msra.mxu0 %v218
    %6958 = vmatmul.f32.gmra.mxu0 %v6839
    %v6959 = vpop.f32.mrf.mxu0
    %v6960 = vadd.f32 %v6940, %v6959
    %6961 = vdwg.mxu0
    %6962 = vmatpush.msra.mxu0 %v211
    %6963 = vmatpush.msra.mxu0 %v203
    %6964 = vmatpush.msra.mxu0 %v195
    %6965 = vmatpush.msra.mxu0 %v187
    %6966 = vmatpush.msra.mxu0 %v179
    %6967 = vmatpush.msra.mxu0 %v171
    %6968 = vmatpush.msra.mxu0 %v163
    %6969 = vmatpush.msra.mxu0 %v155
    %6970 = vmatpush.msra.mxu0 %v147
    %6971 = vmatpush.msra.mxu0 %v139
    %6972 = vmatpush.msra.mxu0 %v131
    %6973 = vmatpush.msra.mxu0 %v123
    %6974 = vmatpush.msra.mxu0 %v115
    %6975 = vmatpush.msra.mxu0 %v107
    %6976 = vmatpush.msra.mxu0 %v99
    %6977 = vmatpush.msra.mxu0 %v91
    %6978 = vmatmul.f32.gmra.mxu0 %v6838
    %v6979 = vpop.f32.mrf.mxu0
    %v6980 = vadd.f32 0.0, %v6979
    %6981 = vdwg.mxu0
    %6982 = vmatpush.msra.mxu0 %v339
    %6983 = vmatpush.msra.mxu0 %v331
    %6984 = vmatpush.msra.mxu0 %v323
    %6985 = vmatpush.msra.mxu0 %v315
    %6986 = vmatpush.msra.mxu0 %v307
    %6987 = vmatpush.msra.mxu0 %v299
    %6988 = vmatpush.msra.mxu0 %v291
    %6989 = vmatpush.msra.mxu0 %v283
    %6990 = vmatpush.msra.mxu0 %v275
    %6991 = vmatpush.msra.mxu0 %v267
    %6992 = vmatpush.msra.mxu0 %v259
    %6993 = vmatpush.msra.mxu0 %v251
    %6994 = vmatpush.msra.mxu0 %v243
    %6995 = vmatpush.msra.mxu0 %v235
    %6996 = vmatpush.msra.mxu0 %v227
    %6997 = vmatpush.msra.mxu0 %v219
    %6998 = vmatmul.f32.gmra.mxu0 %v6839
    %v6999 = vpop.f32.mrf.mxu0
    %v7000 = vadd.f32 %v6980, %v6999
    %7001 = vdwg.mxu0
    %7002 = vmatpush.msra.mxu0 %v212
    %7003 = vmatpush.msra.mxu0 %v204
    %7004 = vmatpush.msra.mxu0 %v196
    %7005 = vmatpush.msra.mxu0 %v188
    %7006 = vmatpush.msra.mxu0 %v180
    %7007 = vmatpush.msra.mxu0 %v172
    %7008 = vmatpush.msra.mxu0 %v164
    %7009 = vmatpush.msra.mxu0 %v156
    %7010 = vmatpush.msra.mxu0 %v148
    %7011 = vmatpush.msra.mxu0 %v140
    %7012 = vmatpush.msra.mxu0 %v132
    %7013 = vmatpush.msra.mxu0 %v124
    %7014 = vmatpush.msra.mxu0 %v116
    %7015 = vmatpush.msra.mxu0 %v108
    %7016 = vmatpush.msra.mxu0 %v100
    %7017 = vmatpush.msra.mxu0 %v92
    %7018 = vmatmul.f32.gmra.mxu0 %v6838
    %v7019 = vpop.f32.mrf.mxu0
    %v7020 = vadd.f32 0.0, %v7019
    %7021 = vdwg.mxu0
    %7022 = vmatpush.msra.mxu0 %v340
    %7023 = vmatpush.msra.mxu0 %v332
    %7024 = vmatpush.msra.mxu0 %v324
    %7025 = vmatpush.msra.mxu0 %v316
    %7026 = vmatpush.msra.mxu0 %v308
    %7027 = vmatpush.msra.mxu0 %v300
    %7028 = vmatpush.msra.mxu0 %v292
    %7029 = vmatpush.msra.mxu0 %v284
    %7030 = vmatpush.msra.mxu0 %v276
    %7031 = vmatpush.msra.mxu0 %v268
    %7032 = vmatpush.msra.mxu0 %v260
    %7033 = vmatpush.msra.mxu0 %v252
    %7034 = vmatpush.msra.mxu0 %v244
    %7035 = vmatpush.msra.mxu0 %v236
    %7036 = vmatpush.msra.mxu0 %v228
    %7037 = vmatpush.msra.mxu0 %v220
    %7038 = vmatmul.f32.gmra.mxu0 %v6839
    %v7039 = vpop.f32.mrf.mxu0
    %v7040 = vadd.f32 %v7020, %v7039
    %7041 = vdwg.mxu0
    %7042 = vmatpush.msra.mxu0 %v213
    %7043 = vmatpush.msra.mxu0 %v205
    %7044 = vmatpush.msra.mxu0 %v197
    %7045 = vmatpush.msra.mxu0 %v189
    %7046 = vmatpush.msra.mxu0 %v181
    %7047 = vmatpush.msra.mxu0 %v173
    %7048 = vmatpush.msra.mxu0 %v165
    %7049 = vmatpush.msra.mxu0 %v157
    %7050 = vmatpush.msra.mxu0 %v149
    %7051 = vmatpush.msra.mxu0 %v141
    %7052 = vmatpush.msra.mxu0 %v133
    %7053 = vmatpush.msra.mxu0 %v125
    %7054 = vmatpush.msra.mxu0 %v117
    %7055 = vmatpush.msra.mxu0 %v109
    %7056 = vmatpush.msra.mxu0 %v101
    %7057 = vmatpush.msra.mxu0 %v93
    %7058 = vmatmul.f32.gmra.mxu0 %v6838
    %v7059 = vpop.f32.mrf.mxu0
    %v7060 = vadd.f32 0.0, %v7059
    %7061 = vdwg.mxu0
    %7062 = vmatpush.msra.mxu0 %v341
    %7063 = vmatpush.msra.mxu0 %v333
    %7064 = vmatpush.msra.mxu0 %v325
    %7065 = vmatpush.msra.mxu0 %v317
    %7066 = vmatpush.msra.mxu0 %v309
    %7067 = vmatpush.msra.mxu0 %v301
    %7068 = vmatpush.msra.mxu0 %v293
    %7069 = vmatpush.msra.mxu0 %v285
    %7070 = vmatpush.msra.mxu0 %v277
    %7071 = vmatpush.msra.mxu0 %v269
    %7072 = vmatpush.msra.mxu0 %v261
    %7073 = vmatpush.msra.mxu0 %v253
    %7074 = vmatpush.msra.mxu0 %v245
    %7075 = vmatpush.msra.mxu0 %v237
    %7076 = vmatpush.msra.mxu0 %v229
    %7077 = vmatpush.msra.mxu0 %v221
    %7078 = vmatmul.f32.gmra.mxu0 %v6839
    %v7079 = vpop.f32.mrf.mxu0
    %v7080 = vadd.f32 %v7060, %v7079
    %7081 = vdwg.mxu0
    %7082 = vmatpush.msra.mxu0 %v214
    %7083 = vmatpush.msra.mxu0 %v206
    %7084 = vmatpush.msra.mxu0 %v198
    %7085 = vmatpush.msra.mxu0 %v190
    %7086 = vmatpush.msra.mxu0 %v182
    %7087 = vmatpush.msra.mxu0 %v174
    %7088 = vmatpush.msra.mxu0 %v166
    %7089 = vmatpush.msra.mxu0 %v158
    %7090 = vmatpush.msra.mxu0 %v150
    %7091 = vmatpush.msra.mxu0 %v142
    %7092 = vmatpush.msra.mxu0 %v134
    %7093 = vmatpush.msra.mxu0 %v126
    %7094 = vmatpush.msra.mxu0 %v118
    %7095 = vmatpush.msra.mxu0 %v110
    %7096 = vmatpush.msra.mxu0 %v102
    %7097 = vmatpush.msra.mxu0 %v94
    %7098 = vmatmul.f32.gmra.mxu0 %v6838
    %v7099 = vpop.f32.mrf.mxu0
    %v7100 = vadd.f32 0.0, %v7099
    %7101 = vdwg.mxu0
    %7102 = vmatpush.msra.mxu0 %v342
    %7103 = vmatpush.msra.mxu0 %v334
    %7104 = vmatpush.msra.mxu0 %v326
    %7105 = vmatpush.msra.mxu0 %v318
    %7106 = vmatpush.msra.mxu0 %v310
    %7107 = vmatpush.msra.mxu0 %v302
    %7108 = vmatpush.msra.mxu0 %v294
    %7109 = vmatpush.msra.mxu0 %v286
    %7110 = vmatpush.msra.mxu0 %v278
    %7111 = vmatpush.msra.mxu0 %v270
    %7112 = vmatpush.msra.mxu0 %v262
    %7113 = vmatpush.msra.mxu0 %v254
    %7114 = vmatpush.msra.mxu0 %v246
    %7115 = vmatpush.msra.mxu0 %v238
    %7116 = vmatpush.msra.mxu0 %v230
    %7117 = vmatpush.msra.mxu0 %v222
    %7118 = vmatmul.f32.gmra.mxu0 %v6839
    %v7119 = vpop.f32.mrf.mxu0
    %v7120 = vadd.f32 %v7100, %v7119
    %7121 = vdwg.mxu0
    %7122 = vmatpush.msra.mxu0 %v215
    %7123 = vmatpush.msra.mxu0 %v207
    %7124 = vmatpush.msra.mxu0 %v199
    %7125 = vmatpush.msra.mxu0 %v191
    %7126 = vmatpush.msra.mxu0 %v183
    %7127 = vmatpush.msra.mxu0 %v175
    %7128 = vmatpush.msra.mxu0 %v167
    %7129 = vmatpush.msra.mxu0 %v159
    %7130 = vmatpush.msra.mxu0 %v151
    %7131 = vmatpush.msra.mxu0 %v143
    %7132 = vmatpush.msra.mxu0 %v135
    %7133 = vmatpush.msra.mxu0 %v127
    %7134 = vmatpush.msra.mxu0 %v119
    %7135 = vmatpush.msra.mxu0 %v111
    %7136 = vmatpush.msra.mxu0 %v103
    %7137 = vmatpush.msra.mxu0 %v95
    %7138 = vmatmul.f32.gmra.mxu0 %v6838
    %v7139 = vpop.f32.mrf.mxu0
    %v7140 = vadd.f32 0.0, %v7139
    %7141 = vdwg.mxu0
    %7142 = vmatpush.msra.mxu0 %v343
    %7143 = vmatpush.msra.mxu0 %v335
    %7144 = vmatpush.msra.mxu0 %v327
    %7145 = vmatpush.msra.mxu0 %v319
    %7146 = vmatpush.msra.mxu0 %v311
    %7147 = vmatpush.msra.mxu0 %v303
    %7148 = vmatpush.msra.mxu0 %v295
    %7149 = vmatpush.msra.mxu0 %v287
    %7150 = vmatpush.msra.mxu0 %v279
    %7151 = vmatpush.msra.mxu0 %v271
    %7152 = vmatpush.msra.mxu0 %v263
    %7153 = vmatpush.msra.mxu0 %v255
    %7154 = vmatpush.msra.mxu0 %v247
    %7155 = vmatpush.msra.mxu0 %v239
    %7156 = vmatpush.msra.mxu0 %v231
    %7157 = vmatpush.msra.mxu0 %v223
    %7158 = vmatmul.f32.gmra.mxu0 %v6839
    %v7159 = vpop.f32.mrf.mxu0
    %v7160 = vadd.f32 %v7140, %v7159
    %7161 = vdwg.mxu0
    %v7170 = vrot.slane %v6920, 6
    %v7171 = vrot.slane %v6960, 4
    %v7172 = vrot.slane %v7000, 2
    %v7173 = vrot.slane %v7080, 6
    %v7174 = vrot.slane %v7120, 4
    %v7175 = vrot.slane %v7160, 2
    %v7176 = vsel %vm678, %v6880, %v7170
    %v7177 = vsel %vm680, %v7171, %v7172
    %v7178 = vsel %vm682, %v7176, %v7177
    %v7179 = vsel %vm678, %v7040, %v7173
    %v7180 = vsel %vm680, %v7174, %v7175
    %v7181 = vsel %vm682, %v7179, %v7180
    %v7184 = vadd.f32 %v6835, %v7178
    %v7185 = vadd.f32 %v6836, %v7181
    %v7186 = vxor.u32 %v7184, 2147483648
    %v7187 = vmul.f32 %v7186, 1.442695
    %v7188 = vpow.pop %v7187
    %v7189 = vadd.f32 %v7188, 1.0
    %v7190 = vrcp.pop %v7189
    %v7191 = vmul.f32 %v7189, %v7190
    %v7192 = vsub.f32 1.0, %v7191
    %v7193 = vmul.f32 %v7190, %v7192
    %v7194 = vadd.f32 %v7190, %v7193
    %vm7195 = vweird.f32 %v7189
    %vm7196 = vweird.f32 %v7190
    %vm7197 = vmor %vm7195, %vm7196
    %v7198 = vsel %vm7197, %v7190, %v7194
    %v7199 = vand.u32 2147483647, %v7189
    %vm7200 = vcmp.eq.f32.partialorder %v7199, 8.507059e+37
    %v7201 = vand.u32 %v7189, 2147483648
    %v7202 = vor.u32 1.1754944e-38, %v7201
    %v7203 = vsel %vm7200, %v7202, %v7198
    %v7204 = vmul.f32 1.0, %v7203
    %v7206 = vrot.slane %v7184, 4
    %v7208 = vxor.u32 %v7206, 2147483648
    %v7209 = vmul.f32 %v7208, 1.442695
    %v7210 = vpow.pop %v7209
    %v7211 = vadd.f32 %v7210, 1.0
    %v7212 = vrcp.pop %v7211
    %v7213 = vmul.f32 %v7211, %v7212
    %v7214 = vsub.f32 1.0, %v7213
    %v7215 = vmul.f32 %v7212, %v7214
    %v7216 = vadd.f32 %v7212, %v7215
    %vm7217 = vweird.f32 %v7211
    %vm7218 = vweird.f32 %v7212
    %vm7219 = vmor %vm7217, %vm7218
    %v7220 = vsel %vm7219, %v7212, %v7216
    %v7221 = vand.u32 2147483647, %v7211
    %vm7222 = vcmp.eq.f32.partialorder %v7221, 8.507059e+37
    %v7223 = vand.u32 %v7211, 2147483648
    %v7224 = vor.u32 1.1754944e-38, %v7223
    %v7225 = vsel %vm7222, %v7224, %v7220
    %v7226 = vmul.f32 1.0, %v7225
    %v7227 = vtanh.pop %v7185
    %v7229 = vrot.slane %v7185, 4
    %v7231 = vxor.u32 %v7229, 2147483648
    %v7232 = vmul.f32 %v7231, 1.442695
    %v7233 = vpow.pop %v7232
    %v7234 = vadd.f32 %v7233, 1.0
    %v7235 = vrcp.pop %v7234
    %v7236 = vmul.f32 %v7234, %v7235
    %v7237 = vsub.f32 1.0, %v7236
    %v7238 = vmul.f32 %v7235, %v7237
    %v7239 = vadd.f32 %v7235, %v7238
    %vm7240 = vweird.f32 %v7234
    %vm7241 = vweird.f32 %v7235
    %vm7242 = vmor %vm7240, %vm7241
    %v7243 = vsel %vm7242, %v7235, %v7239
    %v7244 = vand.u32 2147483647, %v7234
    %vm7245 = vcmp.eq.f32.partialorder %v7244, 8.507059e+37
    %v7246 = vand.u32 %v7234, 2147483648
    %v7247 = vor.u32 1.1754944e-38, %v7246
    %v7248 = vsel %vm7245, %v7247, %v7243
    %v7249 = vmul.f32 1.0, %v7248
    %v7250 = vmul.f32 %v7226, %v6059
    %v7251 = vmul.f32 %v7204, %v7227
    %v7252 = vadd.f32 %v7250, %v7251
    %v7253 = vtanh.pop %v7252
    %v7254 = vmul.f32 %v7249, %v7253
    %7256 = vst [vmem:[#allocation1] ss:$4 sm:$0xff] %v7254
    %v7257 = vld.sshfl [vmem:[#allocation1] sm:$0xff pattern:$0x73625140]
    %v7258 = vld.sshfl [vmem:[#allocation1 + $0x8] sm:$0xff pattern:$0x73625140]
    %7261 = vmatpush.msra.mxu0 %v886
    %7262 = vmatpush.msra.mxu0 %v878
    %7263 = vmatpush.msra.mxu0 %v870
    %7264 = vmatpush.msra.mxu0 %v862
    %7265 = vmatpush.msra.mxu0 %v854
    %7266 = vmatpush.msra.mxu0 %v846
    %7267 = vmatpush.msra.mxu0 %v838
    %7268 = vmatpush.msra.mxu0 %v830
    %7269 = vmatpush.msra.mxu0 %v822
    %7270 = vmatpush.msra.mxu0 %v814
    %7271 = vmatpush.msra.mxu0 %v806
    %7272 = vmatpush.msra.mxu0 %v798
    %7273 = vmatpush.msra.mxu0 %v790
    %7274 = vmatpush.msra.mxu0 %v782
    %7275 = vmatpush.msra.mxu0 %v774
    %7276 = vmatpush.msra.mxu0 %v766
    %7277 = vmatmul.f32.gmra.mxu0 %v7257
    %v7278 = vpop.f32.mrf.mxu0
    %v7279 = vadd.f32 %v1280, %v7278
    %7280 = vdwg.mxu0
    %7281 = vmatpush.msra.mxu0 %v1014
    %7282 = vmatpush.msra.mxu0 %v1006
    %7283 = vmatpush.msra.mxu0 %v998
    %7284 = vmatpush.msra.mxu0 %v990
    %7285 = vmatpush.msra.mxu0 %v982
    %7286 = vmatpush.msra.mxu0 %v974
    %7287 = vmatpush.msra.mxu0 %v966
    %7288 = vmatpush.msra.mxu0 %v958
    %7289 = vmatpush.msra.mxu0 %v950
    %7290 = vmatpush.msra.mxu0 %v942
    %7291 = vmatpush.msra.mxu0 %v934
    %7292 = vmatpush.msra.mxu0 %v926
    %7293 = vmatpush.msra.mxu0 %v918
    %7294 = vmatpush.msra.mxu0 %v910
    %7295 = vmatpush.msra.mxu0 %v902
    %7296 = vmatpush.msra.mxu0 %v894
    %7297 = vmatmul.f32.gmra.mxu0 %v7258
    %v7298 = vpop.f32.mrf.mxu0
    %v7299 = vadd.f32 %v7279, %v7298
    %7300 = vdwg.mxu0
    %7301 = vmatpush.msra.mxu0 %v1142
    %7302 = vmatpush.msra.mxu0 %v1134
    %7303 = vmatpush.msra.mxu0 %v1126
    %7304 = vmatpush.msra.mxu0 %v1118
    %7305 = vmatpush.msra.mxu0 %v1110
    %7306 = vmatpush.msra.mxu0 %v1102
    %7307 = vmatpush.msra.mxu0 %v1094
    %7308 = vmatpush.msra.mxu0 %v1086
    %7309 = vmatpush.msra.mxu0 %v1078
    %7310 = vmatpush.msra.mxu0 %v1070
    %7311 = vmatpush.msra.mxu0 %v1062
    %7312 = vmatpush.msra.mxu0 %v1054
    %7313 = vmatpush.msra.mxu0 %v1046
    %7314 = vmatpush.msra.mxu0 %v1038
    %7315 = vmatpush.msra.mxu0 %v1030
    %7316 = vmatpush.msra.mxu0 %v1022
    %7317 = vmatmul.f32.gmra.mxu0 %v6832
    %v7318 = vpop.f32.mrf.mxu0
    %v7319 = vadd.f32 %v7299, %v7318
    %7320 = vdwg.mxu0
    %7321 = vmatpush.msra.mxu0 %v1270
    %7322 = vmatpush.msra.mxu0 %v1262
    %7323 = vmatpush.msra.mxu0 %v1254
    %7324 = vmatpush.msra.mxu0 %v1246
    %7325 = vmatpush.msra.mxu0 %v1238
    %7326 = vmatpush.msra.mxu0 %v1230
    %7327 = vmatpush.msra.mxu0 %v1222
    %7328 = vmatpush.msra.mxu0 %v1214
    %7329 = vmatpush.msra.mxu0 %v1206
    %7330 = vmatpush.msra.mxu0 %v1198
    %7331 = vmatpush.msra.mxu0 %v1190
    %7332 = vmatpush.msra.mxu0 %v1182
    %7333 = vmatpush.msra.mxu0 %v1174
    %7334 = vmatpush.msra.mxu0 %v1166
    %7335 = vmatpush.msra.mxu0 %v1158
    %7336 = vmatpush.msra.mxu0 %v1150
    %7337 = vmatmul.f32.gmra.mxu0 %v6833
    %v7338 = vpop.f32.mrf.mxu0
    %v7339 = vadd.f32 %v7319, %v7338
    %7340 = vdwg.mxu0
    %7341 = vmatpush.msra.mxu0 %v887
    %7342 = vmatpush.msra.mxu0 %v879
    %7343 = vmatpush.msra.mxu0 %v871
    %7344 = vmatpush.msra.mxu0 %v863
    %7345 = vmatpush.msra.mxu0 %v855
    %7346 = vmatpush.msra.mxu0 %v847
    %7347 = vmatpush.msra.mxu0 %v839
    %7348 = vmatpush.msra.mxu0 %v831
    %7349 = vmatpush.msra.mxu0 %v823
    %7350 = vmatpush.msra.mxu0 %v815
    %7351 = vmatpush.msra.mxu0 %v807
    %7352 = vmatpush.msra.mxu0 %v799
    %7353 = vmatpush.msra.mxu0 %v791
    %7354 = vmatpush.msra.mxu0 %v783
    %7355 = vmatpush.msra.mxu0 %v775
    %7356 = vmatpush.msra.mxu0 %v767
    %7357 = vmatmul.f32.gmra.mxu0 %v7257
    %v7358 = vpop.f32.mrf.mxu0
    %v7359 = vadd.f32 %v1281, %v7358
    %7360 = vdwg.mxu0
    %7361 = vmatpush.msra.mxu0 %v1015
    %7362 = vmatpush.msra.mxu0 %v1007
    %7363 = vmatpush.msra.mxu0 %v999
    %7364 = vmatpush.msra.mxu0 %v991
    %7365 = vmatpush.msra.mxu0 %v983
    %7366 = vmatpush.msra.mxu0 %v975
    %7367 = vmatpush.msra.mxu0 %v967
    %7368 = vmatpush.msra.mxu0 %v959
    %7369 = vmatpush.msra.mxu0 %v951
    %7370 = vmatpush.msra.mxu0 %v943
    %7371 = vmatpush.msra.mxu0 %v935
    %7372 = vmatpush.msra.mxu0 %v927
    %7373 = vmatpush.msra.mxu0 %v919
    %7374 = vmatpush.msra.mxu0 %v911
    %7375 = vmatpush.msra.mxu0 %v903
    %7376 = vmatpush.msra.mxu0 %v895
    %7377 = vmatmul.f32.gmra.mxu0 %v7258
    %v7378 = vpop.f32.mrf.mxu0
    %v7379 = vadd.f32 %v7359, %v7378
    %7380 = vdwg.mxu0
    %7381 = vmatpush.msra.mxu0 %v1143
    %7382 = vmatpush.msra.mxu0 %v1135
    %7383 = vmatpush.msra.mxu0 %v1127
    %7384 = vmatpush.msra.mxu0 %v1119
    %7385 = vmatpush.msra.mxu0 %v1111
    %7386 = vmatpush.msra.mxu0 %v1103
    %7387 = vmatpush.msra.mxu0 %v1095
    %7388 = vmatpush.msra.mxu0 %v1087
    %7389 = vmatpush.msra.mxu0 %v1079
    %7390 = vmatpush.msra.mxu0 %v1071
    %7391 = vmatpush.msra.mxu0 %v1063
    %7392 = vmatpush.msra.mxu0 %v1055
    %7393 = vmatpush.msra.mxu0 %v1047
    %7394 = vmatpush.msra.mxu0 %v1039
    %7395 = vmatpush.msra.mxu0 %v1031
    %7396 = vmatpush.msra.mxu0 %v1023
    %7397 = vmatmul.f32.gmra.mxu0 %v6832
    %v7398 = vpop.f32.mrf.mxu0
    %v7399 = vadd.f32 %v7379, %v7398
    %7400 = vdwg.mxu0
    %7401 = vmatpush.msra.mxu0 %v1271
    %7402 = vmatpush.msra.mxu0 %v1263
    %7403 = vmatpush.msra.mxu0 %v1255
    %7404 = vmatpush.msra.mxu0 %v1247
    %7405 = vmatpush.msra.mxu0 %v1239
    %7406 = vmatpush.msra.mxu0 %v1231
    %7407 = vmatpush.msra.mxu0 %v1223
    %7408 = vmatpush.msra.mxu0 %v1215
    %7409 = vmatpush.msra.mxu0 %v1207
    %7410 = vmatpush.msra.mxu0 %v1199
    %7411 = vmatpush.msra.mxu0 %v1191
    %7412 = vmatpush.msra.mxu0 %v1183
    %7413 = vmatpush.msra.mxu0 %v1175
    %7414 = vmatpush.msra.mxu0 %v1167
    %7415 = vmatpush.msra.mxu0 %v1159
    %7416 = vmatpush.msra.mxu0 %v1151
    %7417 = vmatmul.f32.gmra.mxu0 %v6833
    %v7418 = vpop.f32.mrf.mxu0
    %v7419 = vadd.f32 %v7399, %v7418
    %7420 = vdwg.mxu0
    %7421 = vmatpush.msra.mxu0 %v888
    %7422 = vmatpush.msra.mxu0 %v880
    %7423 = vmatpush.msra.mxu0 %v872
    %7424 = vmatpush.msra.mxu0 %v864
    %7425 = vmatpush.msra.mxu0 %v856
    %7426 = vmatpush.msra.mxu0 %v848
    %7427 = vmatpush.msra.mxu0 %v840
    %7428 = vmatpush.msra.mxu0 %v832
    %7429 = vmatpush.msra.mxu0 %v824
    %7430 = vmatpush.msra.mxu0 %v816
    %7431 = vmatpush.msra.mxu0 %v808
    %7432 = vmatpush.msra.mxu0 %v800
    %7433 = vmatpush.msra.mxu0 %v792
    %7434 = vmatpush.msra.mxu0 %v784
    %7435 = vmatpush.msra.mxu0 %v776
    %7436 = vmatpush.msra.mxu0 %v768
    %7437 = vmatmul.f32.gmra.mxu0 %v7257
    %v7438 = vpop.f32.mrf.mxu0
    %v7439 = vadd.f32 %v1282, %v7438
    %7440 = vdwg.mxu0
    %7441 = vmatpush.msra.mxu0 %v1016
    %7442 = vmatpush.msra.mxu0 %v1008
    %7443 = vmatpush.msra.mxu0 %v1000
    %7444 = vmatpush.msra.mxu0 %v992
    %7445 = vmatpush.msra.mxu0 %v984
    %7446 = vmatpush.msra.mxu0 %v976
    %7447 = vmatpush.msra.mxu0 %v968
    %7448 = vmatpush.msra.mxu0 %v960
    %7449 = vmatpush.msra.mxu0 %v952
    %7450 = vmatpush.msra.mxu0 %v944
    %7451 = vmatpush.msra.mxu0 %v936
    %7452 = vmatpush.msra.mxu0 %v928
    %7453 = vmatpush.msra.mxu0 %v920
    %7454 = vmatpush.msra.mxu0 %v912
    %7455 = vmatpush.msra.mxu0 %v904
    %7456 = vmatpush.msra.mxu0 %v896
    %7457 = vmatmul.f32.gmra.mxu0 %v7258
    %v7458 = vpop.f32.mrf.mxu0
    %v7459 = vadd.f32 %v7439, %v7458
    %7460 = vdwg.mxu0
    %7461 = vmatpush.msra.mxu0 %v1144
    %7462 = vmatpush.msra.mxu0 %v1136
    %7463 = vmatpush.msra.mxu0 %v1128
    %7464 = vmatpush.msra.mxu0 %v1120
    %7465 = vmatpush.msra.mxu0 %v1112
    %7466 = vmatpush.msra.mxu0 %v1104
    %7467 = vmatpush.msra.mxu0 %v1096
    %7468 = vmatpush.msra.mxu0 %v1088
    %7469 = vmatpush.msra.mxu0 %v1080
    %7470 = vmatpush.msra.mxu0 %v1072
    %7471 = vmatpush.msra.mxu0 %v1064
    %7472 = vmatpush.msra.mxu0 %v1056
    %7473 = vmatpush.msra.mxu0 %v1048
    %7474 = vmatpush.msra.mxu0 %v1040
    %7475 = vmatpush.msra.mxu0 %v1032
    %7476 = vmatpush.msra.mxu0 %v1024
    %7477 = vmatmul.f32.gmra.mxu0 %v6832
    %v7478 = vpop.f32.mrf.mxu0
    %v7479 = vadd.f32 %v7459, %v7478
    %7480 = vdwg.mxu0
    %7481 = vmatpush.msra.mxu0 %v1272
    %7482 = vmatpush.msra.mxu0 %v1264
    %7483 = vmatpush.msra.mxu0 %v1256
    %7484 = vmatpush.msra.mxu0 %v1248
    %7485 = vmatpush.msra.mxu0 %v1240
    %7486 = vmatpush.msra.mxu0 %v1232
    %7487 = vmatpush.msra.mxu0 %v1224
    %7488 = vmatpush.msra.mxu0 %v1216
    %7489 = vmatpush.msra.mxu0 %v1208
    %7490 = vmatpush.msra.mxu0 %v1200
    %7491 = vmatpush.msra.mxu0 %v1192
    %7492 = vmatpush.msra.mxu0 %v1184
    %7493 = vmatpush.msra.mxu0 %v1176
    %7494 = vmatpush.msra.mxu0 %v1168
    %7495 = vmatpush.msra.mxu0 %v1160
    %7496 = vmatpush.msra.mxu0 %v1152
    %7497 = vmatmul.f32.gmra.mxu0 %v6833
    %v7498 = vpop.f32.mrf.mxu0
    %v7499 = vadd.f32 %v7479, %v7498
    %7500 = vdwg.mxu0
    %7501 = vmatpush.msra.mxu0 %v889
    %7502 = vmatpush.msra.mxu0 %v881
    %7503 = vmatpush.msra.mxu0 %v873
    %7504 = vmatpush.msra.mxu0 %v865
    %7505 = vmatpush.msra.mxu0 %v857
    %7506 = vmatpush.msra.mxu0 %v849
    %7507 = vmatpush.msra.mxu0 %v841
    %7508 = vmatpush.msra.mxu0 %v833
    %7509 = vmatpush.msra.mxu0 %v825
    %7510 = vmatpush.msra.mxu0 %v817
    %7511 = vmatpush.msra.mxu0 %v809
    %7512 = vmatpush.msra.mxu0 %v801
    %7513 = vmatpush.msra.mxu0 %v793
    %7514 = vmatpush.msra.mxu0 %v785
    %7515 = vmatpush.msra.mxu0 %v777
    %7516 = vmatpush.msra.mxu0 %v769
    %7517 = vmatmul.f32.gmra.mxu0 %v7257
    %v7518 = vpop.f32.mrf.mxu0
    %v7519 = vadd.f32 %v1283, %v7518
    %7520 = vdwg.mxu0
    %7521 = vmatpush.msra.mxu0 %v1017
    %7522 = vmatpush.msra.mxu0 %v1009
    %7523 = vmatpush.msra.mxu0 %v1001
    %7524 = vmatpush.msra.mxu0 %v993
    %7525 = vmatpush.msra.mxu0 %v985
    %7526 = vmatpush.msra.mxu0 %v977
    %7527 = vmatpush.msra.mxu0 %v969
    %7528 = vmatpush.msra.mxu0 %v961
    %7529 = vmatpush.msra.mxu0 %v953
    %7530 = vmatpush.msra.mxu0 %v945
    %7531 = vmatpush.msra.mxu0 %v937
    %7532 = vmatpush.msra.mxu0 %v929
    %7533 = vmatpush.msra.mxu0 %v921
    %7534 = vmatpush.msra.mxu0 %v913
    %7535 = vmatpush.msra.mxu0 %v905
    %7536 = vmatpush.msra.mxu0 %v897
    %7537 = vmatmul.f32.gmra.mxu0 %v7258
    %v7538 = vpop.f32.mrf.mxu0
    %v7539 = vadd.f32 %v7519, %v7538
    %7540 = vdwg.mxu0
    %7541 = vmatpush.msra.mxu0 %v1145
    %7542 = vmatpush.msra.mxu0 %v1137
    %7543 = vmatpush.msra.mxu0 %v1129
    %7544 = vmatpush.msra.mxu0 %v1121
    %7545 = vmatpush.msra.mxu0 %v1113
    %7546 = vmatpush.msra.mxu0 %v1105
    %7547 = vmatpush.msra.mxu0 %v1097
    %7548 = vmatpush.msra.mxu0 %v1089
    %7549 = vmatpush.msra.mxu0 %v1081
    %7550 = vmatpush.msra.mxu0 %v1073
    %7551 = vmatpush.msra.mxu0 %v1065
    %7552 = vmatpush.msra.mxu0 %v1057
    %7553 = vmatpush.msra.mxu0 %v1049
    %7554 = vmatpush.msra.mxu0 %v1041
    %7555 = vmatpush.msra.mxu0 %v1033
    %7556 = vmatpush.msra.mxu0 %v1025
    %7557 = vmatmul.f32.gmra.mxu0 %v6832
    %v7558 = vpop.f32.mrf.mxu0
    %v7559 = vadd.f32 %v7539, %v7558
    %7560 = vdwg.mxu0
    %7561 = vmatpush.msra.mxu0 %v1273
    %7562 = vmatpush.msra.mxu0 %v1265
    %7563 = vmatpush.msra.mxu0 %v1257
    %7564 = vmatpush.msra.mxu0 %v1249
    %7565 = vmatpush.msra.mxu0 %v1241
    %7566 = vmatpush.msra.mxu0 %v1233
    %7567 = vmatpush.msra.mxu0 %v1225
    %7568 = vmatpush.msra.mxu0 %v1217
    %7569 = vmatpush.msra.mxu0 %v1209
    %7570 = vmatpush.msra.mxu0 %v1201
    %7571 = vmatpush.msra.mxu0 %v1193
    %7572 = vmatpush.msra.mxu0 %v1185
    %7573 = vmatpush.msra.mxu0 %v1177
    %7574 = vmatpush.msra.mxu0 %v1169
    %7575 = vmatpush.msra.mxu0 %v1161
    %7576 = vmatpush.msra.mxu0 %v1153
    %7577 = vmatmul.f32.gmra.mxu0 %v6833
    %v7578 = vpop.f32.mrf.mxu0
    %v7579 = vadd.f32 %v7559, %v7578
    %7580 = vdwg.mxu0
    %7581 = vmatpush.msra.mxu0 %v890
    %7582 = vmatpush.msra.mxu0 %v882
    %7583 = vmatpush.msra.mxu0 %v874
    %7584 = vmatpush.msra.mxu0 %v866
    %7585 = vmatpush.msra.mxu0 %v858
    %7586 = vmatpush.msra.mxu0 %v850
    %7587 = vmatpush.msra.mxu0 %v842
    %7588 = vmatpush.msra.mxu0 %v834
    %7589 = vmatpush.msra.mxu0 %v826
    %7590 = vmatpush.msra.mxu0 %v818
    %7591 = vmatpush.msra.mxu0 %v810
    %7592 = vmatpush.msra.mxu0 %v802
    %7593 = vmatpush.msra.mxu0 %v794
    %7594 = vmatpush.msra.mxu0 %v786
    %7595 = vmatpush.msra.mxu0 %v778
    %7596 = vmatpush.msra.mxu0 %v770
    %7597 = vmatmul.f32.gmra.mxu0 %v7257
    %v7598 = vpop.f32.mrf.mxu0
    %v7599 = vadd.f32 %v1284, %v7598
    %7600 = vdwg.mxu0
    %7601 = vmatpush.msra.mxu0 %v1018
    %7602 = vmatpush.msra.mxu0 %v1010
    %7603 = vmatpush.msra.mxu0 %v1002
    %7604 = vmatpush.msra.mxu0 %v994
    %7605 = vmatpush.msra.mxu0 %v986
    %7606 = vmatpush.msra.mxu0 %v978
    %7607 = vmatpush.msra.mxu0 %v970
    %7608 = vmatpush.msra.mxu0 %v962
    %7609 = vmatpush.msra.mxu0 %v954
    %7610 = vmatpush.msra.mxu0 %v946
    %7611 = vmatpush.msra.mxu0 %v938
    %7612 = vmatpush.msra.mxu0 %v930
    %7613 = vmatpush.msra.mxu0 %v922
    %7614 = vmatpush.msra.mxu0 %v914
    %7615 = vmatpush.msra.mxu0 %v906
    %7616 = vmatpush.msra.mxu0 %v898
    %7617 = vmatmul.f32.gmra.mxu0 %v7258
    %v7618 = vpop.f32.mrf.mxu0
    %v7619 = vadd.f32 %v7599, %v7618
    %7620 = vdwg.mxu0
    %7621 = vmatpush.msra.mxu0 %v1146
    %7622 = vmatpush.msra.mxu0 %v1138
    %7623 = vmatpush.msra.mxu0 %v1130
    %7624 = vmatpush.msra.mxu0 %v1122
    %7625 = vmatpush.msra.mxu0 %v1114
    %7626 = vmatpush.msra.mxu0 %v1106
    %7627 = vmatpush.msra.mxu0 %v1098
    %7628 = vmatpush.msra.mxu0 %v1090
    %7629 = vmatpush.msra.mxu0 %v1082
    %7630 = vmatpush.msra.mxu0 %v1074
    %7631 = vmatpush.msra.mxu0 %v1066
    %7632 = vmatpush.msra.mxu0 %v1058
    %7633 = vmatpush.msra.mxu0 %v1050
    %7634 = vmatpush.msra.mxu0 %v1042
    %7635 = vmatpush.msra.mxu0 %v1034
    %7636 = vmatpush.msra.mxu0 %v1026
    %7637 = vmatmul.f32.gmra.mxu0 %v6832
    %v7638 = vpop.f32.mrf.mxu0
    %v7639 = vadd.f32 %v7619, %v7638
    %7640 = vdwg.mxu0
    %7641 = vmatpush.msra.mxu0 %v1274
    %7642 = vmatpush.msra.mxu0 %v1266
    %7643 = vmatpush.msra.mxu0 %v1258
    %7644 = vmatpush.msra.mxu0 %v1250
    %7645 = vmatpush.msra.mxu0 %v1242
    %7646 = vmatpush.msra.mxu0 %v1234
    %7647 = vmatpush.msra.mxu0 %v1226
    %7648 = vmatpush.msra.mxu0 %v1218
    %7649 = vmatpush.msra.mxu0 %v1210
    %7650 = vmatpush.msra.mxu0 %v1202
    %7651 = vmatpush.msra.mxu0 %v1194
    %7652 = vmatpush.msra.mxu0 %v1186
    %7653 = vmatpush.msra.mxu0 %v1178
    %7654 = vmatpush.msra.mxu0 %v1170
    %7655 = vmatpush.msra.mxu0 %v1162
    %7656 = vmatpush.msra.mxu0 %v1154
    %7657 = vmatmul.f32.gmra.mxu0 %v6833
    %v7658 = vpop.f32.mrf.mxu0
    %v7659 = vadd.f32 %v7639, %v7658
    %7660 = vdwg.mxu0
    %7661 = vmatpush.msra.mxu0 %v891
    %7662 = vmatpush.msra.mxu0 %v883
    %7663 = vmatpush.msra.mxu0 %v875
    %7664 = vmatpush.msra.mxu0 %v867
    %7665 = vmatpush.msra.mxu0 %v859
    %7666 = vmatpush.msra.mxu0 %v851
    %7667 = vmatpush.msra.mxu0 %v843
    %7668 = vmatpush.msra.mxu0 %v835
    %7669 = vmatpush.msra.mxu0 %v827
    %7670 = vmatpush.msra.mxu0 %v819
    %7671 = vmatpush.msra.mxu0 %v811
    %7672 = vmatpush.msra.mxu0 %v803
    %7673 = vmatpush.msra.mxu0 %v795
    %7674 = vmatpush.msra.mxu0 %v787
    %7675 = vmatpush.msra.mxu0 %v779
    %7676 = vmatpush.msra.mxu0 %v771
    %7677 = vmatmul.f32.gmra.mxu0 %v7257
    %v7678 = vpop.f32.mrf.mxu0
    %v7679 = vadd.f32 %v1285, %v7678
    %7680 = vdwg.mxu0
    %7681 = vmatpush.msra.mxu0 %v1019
    %7682 = vmatpush.msra.mxu0 %v1011
    %7683 = vmatpush.msra.mxu0 %v1003
    %7684 = vmatpush.msra.mxu0 %v995
    %7685 = vmatpush.msra.mxu0 %v987
    %7686 = vmatpush.msra.mxu0 %v979
    %7687 = vmatpush.msra.mxu0 %v971
    %7688 = vmatpush.msra.mxu0 %v963
    %7689 = vmatpush.msra.mxu0 %v955
    %7690 = vmatpush.msra.mxu0 %v947
    %7691 = vmatpush.msra.mxu0 %v939
    %7692 = vmatpush.msra.mxu0 %v931
    %7693 = vmatpush.msra.mxu0 %v923
    %7694 = vmatpush.msra.mxu0 %v915
    %7695 = vmatpush.msra.mxu0 %v907
    %7696 = vmatpush.msra.mxu0 %v899
    %7697 = vmatmul.f32.gmra.mxu0 %v7258
    %v7698 = vpop.f32.mrf.mxu0
    %v7699 = vadd.f32 %v7679, %v7698
    %7700 = vdwg.mxu0
    %7701 = vmatpush.msra.mxu0 %v1147
    %7702 = vmatpush.msra.mxu0 %v1139
    %7703 = vmatpush.msra.mxu0 %v1131
    %7704 = vmatpush.msra.mxu0 %v1123
    %7705 = vmatpush.msra.mxu0 %v1115
    %7706 = vmatpush.msra.mxu0 %v1107
    %7707 = vmatpush.msra.mxu0 %v1099
    %7708 = vmatpush.msra.mxu0 %v1091
    %7709 = vmatpush.msra.mxu0 %v1083
    %7710 = vmatpush.msra.mxu0 %v1075
    %7711 = vmatpush.msra.mxu0 %v1067
    %7712 = vmatpush.msra.mxu0 %v1059
    %7713 = vmatpush.msra.mxu0 %v1051
    %7714 = vmatpush.msra.mxu0 %v1043
    %7715 = vmatpush.msra.mxu0 %v1035
    %7716 = vmatpush.msra.mxu0 %v1027
    %7717 = vmatmul.f32.gmra.mxu0 %v6832
    %v7718 = vpop.f32.mrf.mxu0
    %v7719 = vadd.f32 %v7699, %v7718
    %7720 = vdwg.mxu0
    %7721 = vmatpush.msra.mxu0 %v1275
    %7722 = vmatpush.msra.mxu0 %v1267
    %7723 = vmatpush.msra.mxu0 %v1259
    %7724 = vmatpush.msra.mxu0 %v1251
    %7725 = vmatpush.msra.mxu0 %v1243
    %7726 = vmatpush.msra.mxu0 %v1235
    %7727 = vmatpush.msra.mxu0 %v1227
    %7728 = vmatpush.msra.mxu0 %v1219
    %7729 = vmatpush.msra.mxu0 %v1211
    %7730 = vmatpush.msra.mxu0 %v1203
    %7731 = vmatpush.msra.mxu0 %v1195
    %7732 = vmatpush.msra.mxu0 %v1187
    %7733 = vmatpush.msra.mxu0 %v1179
    %7734 = vmatpush.msra.mxu0 %v1171
    %7735 = vmatpush.msra.mxu0 %v1163
    %7736 = vmatpush.msra.mxu0 %v1155
    %7737 = vmatmul.f32.gmra.mxu0 %v6833
    %v7738 = vpop.f32.mrf.mxu0
    %v7739 = vadd.f32 %v7719, %v7738
    %7740 = vdwg.mxu0
    %7741 = vmatpush.msra.mxu0 %v892
    %7742 = vmatpush.msra.mxu0 %v884
    %7743 = vmatpush.msra.mxu0 %v876
    %7744 = vmatpush.msra.mxu0 %v868
    %7745 = vmatpush.msra.mxu0 %v860
    %7746 = vmatpush.msra.mxu0 %v852
    %7747 = vmatpush.msra.mxu0 %v844
    %7748 = vmatpush.msra.mxu0 %v836
    %7749 = vmatpush.msra.mxu0 %v828
    %7750 = vmatpush.msra.mxu0 %v820
    %7751 = vmatpush.msra.mxu0 %v812
    %7752 = vmatpush.msra.mxu0 %v804
    %7753 = vmatpush.msra.mxu0 %v796
    %7754 = vmatpush.msra.mxu0 %v788
    %7755 = vmatpush.msra.mxu0 %v780
    %7756 = vmatpush.msra.mxu0 %v772
    %7757 = vmatmul.f32.gmra.mxu0 %v7257
    %v7758 = vpop.f32.mrf.mxu0
    %v7759 = vadd.f32 %v1286, %v7758
    %7760 = vdwg.mxu0
    %7761 = vmatpush.msra.mxu0 %v1020
    %7762 = vmatpush.msra.mxu0 %v1012
    %7763 = vmatpush.msra.mxu0 %v1004
    %7764 = vmatpush.msra.mxu0 %v996
    %7765 = vmatpush.msra.mxu0 %v988
    %7766 = vmatpush.msra.mxu0 %v980
    %7767 = vmatpush.msra.mxu0 %v972
    %7768 = vmatpush.msra.mxu0 %v964
    %7769 = vmatpush.msra.mxu0 %v956
    %7770 = vmatpush.msra.mxu0 %v948
    %7771 = vmatpush.msra.mxu0 %v940
    %7772 = vmatpush.msra.mxu0 %v932
    %7773 = vmatpush.msra.mxu0 %v924
    %7774 = vmatpush.msra.mxu0 %v916
    %7775 = vmatpush.msra.mxu0 %v908
    %7776 = vmatpush.msra.mxu0 %v900
    %7777 = vmatmul.f32.gmra.mxu0 %v7258
    %v7778 = vpop.f32.mrf.mxu0
    %v7779 = vadd.f32 %v7759, %v7778
    %7780 = vdwg.mxu0
    %7781 = vmatpush.msra.mxu0 %v1148
    %7782 = vmatpush.msra.mxu0 %v1140
    %7783 = vmatpush.msra.mxu0 %v1132
    %7784 = vmatpush.msra.mxu0 %v1124
    %7785 = vmatpush.msra.mxu0 %v1116
    %7786 = vmatpush.msra.mxu0 %v1108
    %7787 = vmatpush.msra.mxu0 %v1100
    %7788 = vmatpush.msra.mxu0 %v1092
    %7789 = vmatpush.msra.mxu0 %v1084
    %7790 = vmatpush.msra.mxu0 %v1076
    %7791 = vmatpush.msra.mxu0 %v1068
    %7792 = vmatpush.msra.mxu0 %v1060
    %7793 = vmatpush.msra.mxu0 %v1052
    %7794 = vmatpush.msra.mxu0 %v1044
    %7795 = vmatpush.msra.mxu0 %v1036
    %7796 = vmatpush.msra.mxu0 %v1028
    %7797 = vmatmul.f32.gmra.mxu0 %v6832
    %v7798 = vpop.f32.mrf.mxu0
    %v7799 = vadd.f32 %v7779, %v7798
    %7800 = vdwg.mxu0
    %7801 = vmatpush.msra.mxu0 %v1276
    %7802 = vmatpush.msra.mxu0 %v1268
    %7803 = vmatpush.msra.mxu0 %v1260
    %7804 = vmatpush.msra.mxu0 %v1252
    %7805 = vmatpush.msra.mxu0 %v1244
    %7806 = vmatpush.msra.mxu0 %v1236
    %7807 = vmatpush.msra.mxu0 %v1228
    %7808 = vmatpush.msra.mxu0 %v1220
    %7809 = vmatpush.msra.mxu0 %v1212
    %7810 = vmatpush.msra.mxu0 %v1204
    %7811 = vmatpush.msra.mxu0 %v1196
    %7812 = vmatpush.msra.mxu0 %v1188
    %7813 = vmatpush.msra.mxu0 %v1180
    %7814 = vmatpush.msra.mxu0 %v1172
    %7815 = vmatpush.msra.mxu0 %v1164
    %7816 = vmatpush.msra.mxu0 %v1156
    %7817 = vmatmul.f32.gmra.mxu0 %v6833
    %v7818 = vpop.f32.mrf.mxu0
    %v7819 = vadd.f32 %v7799, %v7818
    %7820 = vdwg.mxu0
    %7821 = vmatpush.msra.mxu0 %v893
    %7822 = vmatpush.msra.mxu0 %v885
    %7823 = vmatpush.msra.mxu0 %v877
    %7824 = vmatpush.msra.mxu0 %v869
    %7825 = vmatpush.msra.mxu0 %v861
    %7826 = vmatpush.msra.mxu0 %v853
    %7827 = vmatpush.msra.mxu0 %v845
    %7828 = vmatpush.msra.mxu0 %v837
    %7829 = vmatpush.msra.mxu0 %v829
    %7830 = vmatpush.msra.mxu0 %v821
    %7831 = vmatpush.msra.mxu0 %v813
    %7832 = vmatpush.msra.mxu0 %v805
    %7833 = vmatpush.msra.mxu0 %v797
    %7834 = vmatpush.msra.mxu0 %v789
    %7835 = vmatpush.msra.mxu0 %v781
    %7836 = vmatpush.msra.mxu0 %v773
    %7837 = vmatmul.f32.gmra.mxu0 %v7257
    %v7838 = vpop.f32.mrf.mxu0
    %v7839 = vadd.f32 %v1287, %v7838
    %7840 = vdwg.mxu0
    %7841 = vmatpush.msra.mxu0 %v1021
    %7842 = vmatpush.msra.mxu0 %v1013
    %7843 = vmatpush.msra.mxu0 %v1005
    %7844 = vmatpush.msra.mxu0 %v997
    %7845 = vmatpush.msra.mxu0 %v989
    %7846 = vmatpush.msra.mxu0 %v981
    %7847 = vmatpush.msra.mxu0 %v973
    %7848 = vmatpush.msra.mxu0 %v965
    %7849 = vmatpush.msra.mxu0 %v957
    %7850 = vmatpush.msra.mxu0 %v949
    %7851 = vmatpush.msra.mxu0 %v941
    %7852 = vmatpush.msra.mxu0 %v933
    %7853 = vmatpush.msra.mxu0 %v925
    %7854 = vmatpush.msra.mxu0 %v917
    %7855 = vmatpush.msra.mxu0 %v909
    %7856 = vmatpush.msra.mxu0 %v901
    %7857 = vmatmul.f32.gmra.mxu0 %v7258
    %v7858 = vpop.f32.mrf.mxu0
    %v7859 = vadd.f32 %v7839, %v7858
    %7860 = vdwg.mxu0
    %7861 = vmatpush.msra.mxu0 %v1149
    %7862 = vmatpush.msra.mxu0 %v1141
    %7863 = vmatpush.msra.mxu0 %v1133
    %7864 = vmatpush.msra.mxu0 %v1125
    %7865 = vmatpush.msra.mxu0 %v1117
    %7866 = vmatpush.msra.mxu0 %v1109
    %7867 = vmatpush.msra.mxu0 %v1101
    %7868 = vmatpush.msra.mxu0 %v1093
    %7869 = vmatpush.msra.mxu0 %v1085
    %7870 = vmatpush.msra.mxu0 %v1077
    %7871 = vmatpush.msra.mxu0 %v1069
    %7872 = vmatpush.msra.mxu0 %v1061
    %7873 = vmatpush.msra.mxu0 %v1053
    %7874 = vmatpush.msra.mxu0 %v1045
    %7875 = vmatpush.msra.mxu0 %v1037
    %7876 = vmatpush.msra.mxu0 %v1029
    %7877 = vmatmul.f32.gmra.mxu0 %v6832
    %v7878 = vpop.f32.mrf.mxu0
    %v7879 = vadd.f32 %v7859, %v7878
    %7880 = vdwg.mxu0
    %7881 = vmatpush.msra.mxu0 %v1277
    %7882 = vmatpush.msra.mxu0 %v1269
    %7883 = vmatpush.msra.mxu0 %v1261
    %7884 = vmatpush.msra.mxu0 %v1253
    %7885 = vmatpush.msra.mxu0 %v1245
    %7886 = vmatpush.msra.mxu0 %v1237
    %7887 = vmatpush.msra.mxu0 %v1229
    %7888 = vmatpush.msra.mxu0 %v1221
    %7889 = vmatpush.msra.mxu0 %v1213
    %7890 = vmatpush.msra.mxu0 %v1205
    %7891 = vmatpush.msra.mxu0 %v1197
    %7892 = vmatpush.msra.mxu0 %v1189
    %7893 = vmatpush.msra.mxu0 %v1181
    %7894 = vmatpush.msra.mxu0 %v1173
    %7895 = vmatpush.msra.mxu0 %v1165
    %7896 = vmatpush.msra.mxu0 %v1157
    %7897 = vmatmul.f32.gmra.mxu0 %v6833
    %v7898 = vpop.f32.mrf.mxu0
    %v7899 = vadd.f32 %v7879, %v7898
    %7900 = vdwg.mxu0
    %v7901 = vxor.u32 %v7339, 2147483648
    %v7902 = vxor.u32 %v7419, 2147483648
    %v7903 = vmul.f32 %v7901, 1.442695
    %v7904 = vpow.pop %v7903
    %v7905 = vmul.f32 %v7902, 1.442695
    %v7906 = vpow.pop %v7905
    %v7907 = vadd.f32 %v7904, 1.0
    %v7908 = vadd.f32 %v7906, 1.0
    %v7909 = vrcp.pop %v7907
    %v7910 = vmul.f32 %v7907, %v7909
    %v7911 = vsub.f32 1.0, %v7910
    %v7912 = vmul.f32 %v7909, %v7911
    %v7913 = vadd.f32 %v7909, %v7912
    %vm7914 = vweird.f32 %v7907
    %vm7915 = vweird.f32 %v7909
    %vm7916 = vmor %vm7914, %vm7915
    %v7917 = vsel %vm7916, %v7909, %v7913
    %v7918 = vand.u32 2147483647, %v7907
    %vm7919 = vcmp.eq.f32.partialorder %v7918, 8.507059e+37
    %v7920 = vand.u32 %v7907, 2147483648
    %v7921 = vor.u32 1.1754944e-38, %v7920
    %v7922 = vsel %vm7919, %v7921, %v7917
    %v7923 = vmul.f32 1.0, %v7922
    %v7924 = vrcp.pop %v7908
    %v7925 = vmul.f32 %v7908, %v7924
    %v7926 = vsub.f32 1.0, %v7925
    %v7927 = vmul.f32 %v7924, %v7926
    %v7928 = vadd.f32 %v7924, %v7927
    %vm7929 = vweird.f32 %v7908
    %vm7930 = vweird.f32 %v7924
    %vm7931 = vmor %vm7929, %vm7930
    %v7932 = vsel %vm7931, %v7924, %v7928
    %v7933 = vand.u32 2147483647, %v7908
    %vm7934 = vcmp.eq.f32.partialorder %v7933, 8.507059e+37
    %v7935 = vand.u32 %v7908, 2147483648
    %v7936 = vor.u32 1.1754944e-38, %v7935
    %v7937 = vsel %vm7934, %v7936, %v7932
    %v7938 = vmul.f32 1.0, %v7937
    %v7939 = vxor.u32 %v7499, 2147483648
    %v7940 = vxor.u32 %v7579, 2147483648
    %v7941 = vmul.f32 %v7939, 1.442695
    %v7942 = vpow.pop %v7941
    %v7943 = vmul.f32 %v7940, 1.442695
    %v7944 = vpow.pop %v7943
    %v7945 = vadd.f32 %v7942, 1.0
    %v7946 = vadd.f32 %v7944, 1.0
    %v7947 = vrcp.pop %v7945
    %v7948 = vmul.f32 %v7945, %v7947
    %v7949 = vsub.f32 1.0, %v7948
    %v7950 = vmul.f32 %v7947, %v7949
    %v7951 = vadd.f32 %v7947, %v7950
    %vm7952 = vweird.f32 %v7945
    %vm7953 = vweird.f32 %v7947
    %vm7954 = vmor %vm7952, %vm7953
    %v7955 = vsel %vm7954, %v7947, %v7951
    %v7956 = vand.u32 2147483647, %v7945
    %vm7957 = vcmp.eq.f32.partialorder %v7956, 8.507059e+37
    %v7958 = vand.u32 %v7945, 2147483648
    %v7959 = vor.u32 1.1754944e-38, %v7958
    %v7960 = vsel %vm7957, %v7959, %v7955
    %v7961 = vmul.f32 1.0, %v7960
    %v7962 = vrcp.pop %v7946
    %v7963 = vmul.f32 %v7946, %v7962
    %v7964 = vsub.f32 1.0, %v7963
    %v7965 = vmul.f32 %v7962, %v7964
    %v7966 = vadd.f32 %v7962, %v7965
    %vm7967 = vweird.f32 %v7946
    %vm7968 = vweird.f32 %v7962
    %vm7969 = vmor %vm7967, %vm7968
    %v7970 = vsel %vm7969, %v7962, %v7966
    %v7971 = vand.u32 2147483647, %v7946
    %vm7972 = vcmp.eq.f32.partialorder %v7971, 8.507059e+37
    %v7973 = vand.u32 %v7946, 2147483648
    %v7974 = vor.u32 1.1754944e-38, %v7973
    %v7975 = vsel %vm7972, %v7974, %v7970
    %v7976 = vmul.f32 1.0, %v7975
    %v7977 = vtanh.pop %v7659
    %v7978 = vtanh.pop %v7739
    %v7979 = vxor.u32 %v7819, 2147483648
    %v7980 = vxor.u32 %v7899, 2147483648
    %v7981 = vmul.f32 %v7979, 1.442695
    %v7982 = vpow.pop %v7981
    %v7983 = vmul.f32 %v7980, 1.442695
    %v7984 = vpow.pop %v7983
    %v7985 = vadd.f32 %v7982, 1.0
    %v7986 = vadd.f32 %v7984, 1.0
    %v7987 = vrcp.pop %v7985
    %v7988 = vmul.f32 %v7985, %v7987
    %v7989 = vsub.f32 1.0, %v7988
    %v7990 = vmul.f32 %v7987, %v7989
    %v7991 = vadd.f32 %v7987, %v7990
    %vm7992 = vweird.f32 %v7985
    %vm7993 = vweird.f32 %v7987
    %vm7994 = vmor %vm7992, %vm7993
    %v7995 = vsel %vm7994, %v7987, %v7991
    %v7996 = vand.u32 2147483647, %v7985
    %vm7997 = vcmp.eq.f32.partialorder %v7996, 8.507059e+37
    %v7998 = vand.u32 %v7985, 2147483648
    %v7999 = vor.u32 1.1754944e-38, %v7998
    %v8000 = vsel %vm7997, %v7999, %v7995
    %v8001 = vmul.f32 1.0, %v8000
    %v8002 = vrcp.pop %v7986
    %v8003 = vmul.f32 %v7986, %v8002
    %v8004 = vsub.f32 1.0, %v8003
    %v8005 = vmul.f32 %v8002, %v8004
    %v8006 = vadd.f32 %v8002, %v8005
    %vm8007 = vweird.f32 %v7986
    %vm8008 = vweird.f32 %v8002
    %vm8009 = vmor %vm8007, %vm8008
    %v8010 = vsel %vm8009, %v8002, %v8006
    %v8011 = vand.u32 2147483647, %v7986
    %vm8012 = vcmp.eq.f32.partialorder %v8011, 8.507059e+37
    %v8013 = vand.u32 %v7986, 2147483648
    %v8014 = vor.u32 1.1754944e-38, %v8013
    %v8015 = vsel %vm8012, %v8014, %v8010
    %v8016 = vmul.f32 1.0, %v8015
    %v8017 = vmul.f32 %v7961, %v6828
    %v8018 = vmul.f32 %v7976, %v6829
    %v8019 = vmul.f32 %v7923, %v7977
    %v8020 = vmul.f32 %v7938, %v7978
    %v8021 = vadd.f32 %v8017, %v8019
    %v8022 = vadd.f32 %v8018, %v8020
    %v8023 = vtanh.pop %v8021
    %v8024 = vtanh.pop %v8022
    %v8025 = vmul.f32 %v8001, %v8023
    %v8026 = vmul.f32 %v8016, %v8024
    %s8027 = scalar_lea.vmem [#allocation3], 96
    %v8028 = vld [vmem:[%s8027] sm:$0xff]
    %v8029 = vld [vmem:[%s8027 + $0x8] sm:$0xff]
    %8030 = vst [vmem:[#allocation1] ss:$4 sm:$0xff] %v7254
    %v8031 = vld.sshfl [vmem:[#allocation1] sm:$0xff pattern:$0x73625140]
    %v8032 = vld.sshfl [vmem:[#allocation1 + $0x8] sm:$0xff pattern:$0x73625140]
    %8035 = vmatpush.msra.mxu0 %v208
    %8036 = vmatpush.msra.mxu0 %v200
    %8037 = vmatpush.msra.mxu0 %v192
    %8038 = vmatpush.msra.mxu0 %v184
    %8039 = vmatpush.msra.mxu0 %v176
    %8040 = vmatpush.msra.mxu0 %v168
    %8041 = vmatpush.msra.mxu0 %v160
    %8042 = vmatpush.msra.mxu0 %v152
    %8043 = vmatpush.msra.mxu0 %v144
    %8044 = vmatpush.msra.mxu0 %v136
    %8045 = vmatpush.msra.mxu0 %v128
    %8046 = vmatpush.msra.mxu0 %v120
    %8047 = vmatpush.msra.mxu0 %v112
    %8048 = vmatpush.msra.mxu0 %v104
    %8049 = vmatpush.msra.mxu0 %v96
    %8050 = vmatpush.msra.mxu0 %v88
    %8051 = vmatmul.f32.gmra.mxu0 %v8031
    %v8052 = vpop.f32.mrf.mxu0
    %v8053 = vadd.f32 0.0, %v8052
    %8054 = vdwg.mxu0
    %8055 = vmatpush.msra.mxu0 %v336
    %8056 = vmatpush.msra.mxu0 %v328
    %8057 = vmatpush.msra.mxu0 %v320
    %8058 = vmatpush.msra.mxu0 %v312
    %8059 = vmatpush.msra.mxu0 %v304
    %8060 = vmatpush.msra.mxu0 %v296
    %8061 = vmatpush.msra.mxu0 %v288
    %8062 = vmatpush.msra.mxu0 %v280
    %8063 = vmatpush.msra.mxu0 %v272
    %8064 = vmatpush.msra.mxu0 %v264
    %8065 = vmatpush.msra.mxu0 %v256
    %8066 = vmatpush.msra.mxu0 %v248
    %8067 = vmatpush.msra.mxu0 %v240
    %8068 = vmatpush.msra.mxu0 %v232
    %8069 = vmatpush.msra.mxu0 %v224
    %8070 = vmatpush.msra.mxu0 %v216
    %8071 = vmatmul.f32.gmra.mxu0 %v8032
    %v8072 = vpop.f32.mrf.mxu0
    %v8073 = vadd.f32 %v8053, %v8072
    %8074 = vdwg.mxu0
    %8075 = vmatpush.msra.mxu0 %v209
    %8076 = vmatpush.msra.mxu0 %v201
    %8077 = vmatpush.msra.mxu0 %v193
    %8078 = vmatpush.msra.mxu0 %v185
    %8079 = vmatpush.msra.mxu0 %v177
    %8080 = vmatpush.msra.mxu0 %v169
    %8081 = vmatpush.msra.mxu0 %v161
    %8082 = vmatpush.msra.mxu0 %v153
    %8083 = vmatpush.msra.mxu0 %v145
    %8084 = vmatpush.msra.mxu0 %v137
    %8085 = vmatpush.msra.mxu0 %v129
    %8086 = vmatpush.msra.mxu0 %v121
    %8087 = vmatpush.msra.mxu0 %v113
    %8088 = vmatpush.msra.mxu0 %v105
    %8089 = vmatpush.msra.mxu0 %v97
    %8090 = vmatpush.msra.mxu0 %v89
    %8091 = vmatmul.f32.gmra.mxu0 %v8031
    %v8092 = vpop.f32.mrf.mxu0
    %v8093 = vadd.f32 0.0, %v8092
    %8094 = vdwg.mxu0
    %8095 = vmatpush.msra.mxu0 %v337
    %8096 = vmatpush.msra.mxu0 %v329
    %8097 = vmatpush.msra.mxu0 %v321
    %8098 = vmatpush.msra.mxu0 %v313
    %8099 = vmatpush.msra.mxu0 %v305
    %8100 = vmatpush.msra.mxu0 %v297
    %8101 = vmatpush.msra.mxu0 %v289
    %8102 = vmatpush.msra.mxu0 %v281
    %8103 = vmatpush.msra.mxu0 %v273
    %8104 = vmatpush.msra.mxu0 %v265
    %8105 = vmatpush.msra.mxu0 %v257
    %8106 = vmatpush.msra.mxu0 %v249
    %8107 = vmatpush.msra.mxu0 %v241
    %8108 = vmatpush.msra.mxu0 %v233
    %8109 = vmatpush.msra.mxu0 %v225
    %8110 = vmatpush.msra.mxu0 %v217
    %8111 = vmatmul.f32.gmra.mxu0 %v8032
    %v8112 = vpop.f32.mrf.mxu0
    %v8113 = vadd.f32 %v8093, %v8112
    %8114 = vdwg.mxu0
    %8115 = vmatpush.msra.mxu0 %v210
    %8116 = vmatpush.msra.mxu0 %v202
    %8117 = vmatpush.msra.mxu0 %v194
    %8118 = vmatpush.msra.mxu0 %v186
    %8119 = vmatpush.msra.mxu0 %v178
    %8120 = vmatpush.msra.mxu0 %v170
    %8121 = vmatpush.msra.mxu0 %v162
    %8122 = vmatpush.msra.mxu0 %v154
    %8123 = vmatpush.msra.mxu0 %v146
    %8124 = vmatpush.msra.mxu0 %v138
    %8125 = vmatpush.msra.mxu0 %v130
    %8126 = vmatpush.msra.mxu0 %v122
    %8127 = vmatpush.msra.mxu0 %v114
    %8128 = vmatpush.msra.mxu0 %v106
    %8129 = vmatpush.msra.mxu0 %v98
    %8130 = vmatpush.msra.mxu0 %v90
    %8131 = vmatmul.f32.gmra.mxu0 %v8031
    %v8132 = vpop.f32.mrf.mxu0
    %v8133 = vadd.f32 0.0, %v8132
    %8134 = vdwg.mxu0
    %8135 = vmatpush.msra.mxu0 %v338
    %8136 = vmatpush.msra.mxu0 %v330
    %8137 = vmatpush.msra.mxu0 %v322
    %8138 = vmatpush.msra.mxu0 %v314
    %8139 = vmatpush.msra.mxu0 %v306
    %8140 = vmatpush.msra.mxu0 %v298
    %8141 = vmatpush.msra.mxu0 %v290
    %8142 = vmatpush.msra.mxu0 %v282
    %8143 = vmatpush.msra.mxu0 %v274
    %8144 = vmatpush.msra.mxu0 %v266
    %8145 = vmatpush.msra.mxu0 %v258
    %8146 = vmatpush.msra.mxu0 %v250
    %8147 = vmatpush.msra.mxu0 %v242
    %8148 = vmatpush.msra.mxu0 %v234
    %8149 = vmatpush.msra.mxu0 %v226
    %8150 = vmatpush.msra.mxu0 %v218
    %8151 = vmatmul.f32.gmra.mxu0 %v8032
    %v8152 = vpop.f32.mrf.mxu0
    %v8153 = vadd.f32 %v8133, %v8152
    %8154 = vdwg.mxu0
    %8155 = vmatpush.msra.mxu0 %v211
    %8156 = vmatpush.msra.mxu0 %v203
    %8157 = vmatpush.msra.mxu0 %v195
    %8158 = vmatpush.msra.mxu0 %v187
    %8159 = vmatpush.msra.mxu0 %v179
    %8160 = vmatpush.msra.mxu0 %v171
    %8161 = vmatpush.msra.mxu0 %v163
    %8162 = vmatpush.msra.mxu0 %v155
    %8163 = vmatpush.msra.mxu0 %v147
    %8164 = vmatpush.msra.mxu0 %v139
    %8165 = vmatpush.msra.mxu0 %v131
    %8166 = vmatpush.msra.mxu0 %v123
    %8167 = vmatpush.msra.mxu0 %v115
    %8168 = vmatpush.msra.mxu0 %v107
    %8169 = vmatpush.msra.mxu0 %v99
    %8170 = vmatpush.msra.mxu0 %v91
    %8171 = vmatmul.f32.gmra.mxu0 %v8031
    %v8172 = vpop.f32.mrf.mxu0
    %v8173 = vadd.f32 0.0, %v8172
    %8174 = vdwg.mxu0
    %8175 = vmatpush.msra.mxu0 %v339
    %8176 = vmatpush.msra.mxu0 %v331
    %8177 = vmatpush.msra.mxu0 %v323
    %8178 = vmatpush.msra.mxu0 %v315
    %8179 = vmatpush.msra.mxu0 %v307
    %8180 = vmatpush.msra.mxu0 %v299
    %8181 = vmatpush.msra.mxu0 %v291
    %8182 = vmatpush.msra.mxu0 %v283
    %8183 = vmatpush.msra.mxu0 %v275
    %8184 = vmatpush.msra.mxu0 %v267
    %8185 = vmatpush.msra.mxu0 %v259
    %8186 = vmatpush.msra.mxu0 %v251
    %8187 = vmatpush.msra.mxu0 %v243
    %8188 = vmatpush.msra.mxu0 %v235
    %8189 = vmatpush.msra.mxu0 %v227
    %8190 = vmatpush.msra.mxu0 %v219
    %8191 = vmatmul.f32.gmra.mxu0 %v8032
    %v8192 = vpop.f32.mrf.mxu0
    %v8193 = vadd.f32 %v8173, %v8192
    %8194 = vdwg.mxu0
    %8195 = vmatpush.msra.mxu0 %v212
    %8196 = vmatpush.msra.mxu0 %v204
    %8197 = vmatpush.msra.mxu0 %v196
    %8198 = vmatpush.msra.mxu0 %v188
    %8199 = vmatpush.msra.mxu0 %v180
    %8200 = vmatpush.msra.mxu0 %v172
    %8201 = vmatpush.msra.mxu0 %v164
    %8202 = vmatpush.msra.mxu0 %v156
    %8203 = vmatpush.msra.mxu0 %v148
    %8204 = vmatpush.msra.mxu0 %v140
    %8205 = vmatpush.msra.mxu0 %v132
    %8206 = vmatpush.msra.mxu0 %v124
    %8207 = vmatpush.msra.mxu0 %v116
    %8208 = vmatpush.msra.mxu0 %v108
    %8209 = vmatpush.msra.mxu0 %v100
    %8210 = vmatpush.msra.mxu0 %v92
    %8211 = vmatmul.f32.gmra.mxu0 %v8031
    %v8212 = vpop.f32.mrf.mxu0
    %v8213 = vadd.f32 0.0, %v8212
    %8214 = vdwg.mxu0
    %8215 = vmatpush.msra.mxu0 %v340
    %8216 = vmatpush.msra.mxu0 %v332
    %8217 = vmatpush.msra.mxu0 %v324
    %8218 = vmatpush.msra.mxu0 %v316
    %8219 = vmatpush.msra.mxu0 %v308
    %8220 = vmatpush.msra.mxu0 %v300
    %8221 = vmatpush.msra.mxu0 %v292
    %8222 = vmatpush.msra.mxu0 %v284
    %8223 = vmatpush.msra.mxu0 %v276
    %8224 = vmatpush.msra.mxu0 %v268
    %8225 = vmatpush.msra.mxu0 %v260
    %8226 = vmatpush.msra.mxu0 %v252
    %8227 = vmatpush.msra.mxu0 %v244
    %8228 = vmatpush.msra.mxu0 %v236
    %8229 = vmatpush.msra.mxu0 %v228
    %8230 = vmatpush.msra.mxu0 %v220
    %8231 = vmatmul.f32.gmra.mxu0 %v8032
    %v8232 = vpop.f32.mrf.mxu0
    %v8233 = vadd.f32 %v8213, %v8232
    %8234 = vdwg.mxu0
    %8235 = vmatpush.msra.mxu0 %v213
    %8236 = vmatpush.msra.mxu0 %v205
    %8237 = vmatpush.msra.mxu0 %v197
    %8238 = vmatpush.msra.mxu0 %v189
    %8239 = vmatpush.msra.mxu0 %v181
    %8240 = vmatpush.msra.mxu0 %v173
    %8241 = vmatpush.msra.mxu0 %v165
    %8242 = vmatpush.msra.mxu0 %v157
    %8243 = vmatpush.msra.mxu0 %v149
    %8244 = vmatpush.msra.mxu0 %v141
    %8245 = vmatpush.msra.mxu0 %v133
    %8246 = vmatpush.msra.mxu0 %v125
    %8247 = vmatpush.msra.mxu0 %v117
    %8248 = vmatpush.msra.mxu0 %v109
    %8249 = vmatpush.msra.mxu0 %v101
    %8250 = vmatpush.msra.mxu0 %v93
    %8251 = vmatmul.f32.gmra.mxu0 %v8031
    %v8252 = vpop.f32.mrf.mxu0
    %v8253 = vadd.f32 0.0, %v8252
    %8254 = vdwg.mxu0
    %8255 = vmatpush.msra.mxu0 %v341
    %8256 = vmatpush.msra.mxu0 %v333
    %8257 = vmatpush.msra.mxu0 %v325
    %8258 = vmatpush.msra.mxu0 %v317
    %8259 = vmatpush.msra.mxu0 %v309
    %8260 = vmatpush.msra.mxu0 %v301
    %8261 = vmatpush.msra.mxu0 %v293
    %8262 = vmatpush.msra.mxu0 %v285
    %8263 = vmatpush.msra.mxu0 %v277
    %8264 = vmatpush.msra.mxu0 %v269
    %8265 = vmatpush.msra.mxu0 %v261
    %8266 = vmatpush.msra.mxu0 %v253
    %8267 = vmatpush.msra.mxu0 %v245
    %8268 = vmatpush.msra.mxu0 %v237
    %8269 = vmatpush.msra.mxu0 %v229
    %8270 = vmatpush.msra.mxu0 %v221
    %8271 = vmatmul.f32.gmra.mxu0 %v8032
    %v8272 = vpop.f32.mrf.mxu0
    %v8273 = vadd.f32 %v8253, %v8272
    %8274 = vdwg.mxu0
    %8275 = vmatpush.msra.mxu0 %v214
    %8276 = vmatpush.msra.mxu0 %v206
    %8277 = vmatpush.msra.mxu0 %v198
    %8278 = vmatpush.msra.mxu0 %v190
    %8279 = vmatpush.msra.mxu0 %v182
    %8280 = vmatpush.msra.mxu0 %v174
    %8281 = vmatpush.msra.mxu0 %v166
    %8282 = vmatpush.msra.mxu0 %v158
    %8283 = vmatpush.msra.mxu0 %v150
    %8284 = vmatpush.msra.mxu0 %v142
    %8285 = vmatpush.msra.mxu0 %v134
    %8286 = vmatpush.msra.mxu0 %v126
    %8287 = vmatpush.msra.mxu0 %v118
    %8288 = vmatpush.msra.mxu0 %v110
    %8289 = vmatpush.msra.mxu0 %v102
    %8290 = vmatpush.msra.mxu0 %v94
    %8291 = vmatmul.f32.gmra.mxu0 %v8031
    %v8292 = vpop.f32.mrf.mxu0
    %v8293 = vadd.f32 0.0, %v8292
    %8294 = vdwg.mxu0
    %8295 = vmatpush.msra.mxu0 %v342
    %8296 = vmatpush.msra.mxu0 %v334
    %8297 = vmatpush.msra.mxu0 %v326
    %8298 = vmatpush.msra.mxu0 %v318
    %8299 = vmatpush.msra.mxu0 %v310
    %8300 = vmatpush.msra.mxu0 %v302
    %8301 = vmatpush.msra.mxu0 %v294
    %8302 = vmatpush.msra.mxu0 %v286
    %8303 = vmatpush.msra.mxu0 %v278
    %8304 = vmatpush.msra.mxu0 %v270
    %8305 = vmatpush.msra.mxu0 %v262
    %8306 = vmatpush.msra.mxu0 %v254
    %8307 = vmatpush.msra.mxu0 %v246
    %8308 = vmatpush.msra.mxu0 %v238
    %8309 = vmatpush.msra.mxu0 %v230
    %8310 = vmatpush.msra.mxu0 %v222
    %8311 = vmatmul.f32.gmra.mxu0 %v8032
    %v8312 = vpop.f32.mrf.mxu0
    %v8313 = vadd.f32 %v8293, %v8312
    %8314 = vdwg.mxu0
    %8315 = vmatpush.msra.mxu0 %v215
    %8316 = vmatpush.msra.mxu0 %v207
    %8317 = vmatpush.msra.mxu0 %v199
    %8318 = vmatpush.msra.mxu0 %v191
    %8319 = vmatpush.msra.mxu0 %v183
    %8320 = vmatpush.msra.mxu0 %v175
    %8321 = vmatpush.msra.mxu0 %v167
    %8322 = vmatpush.msra.mxu0 %v159
    %8323 = vmatpush.msra.mxu0 %v151
    %8324 = vmatpush.msra.mxu0 %v143
    %8325 = vmatpush.msra.mxu0 %v135
    %8326 = vmatpush.msra.mxu0 %v127
    %8327 = vmatpush.msra.mxu0 %v119
    %8328 = vmatpush.msra.mxu0 %v111
    %8329 = vmatpush.msra.mxu0 %v103
    %8330 = vmatpush.msra.mxu0 %v95
    %8331 = vmatmul.f32.gmra.mxu0 %v8031
    %v8332 = vpop.f32.mrf.mxu0
    %v8333 = vadd.f32 0.0, %v8332
    %8334 = vdwg.mxu0
    %8335 = vmatpush.msra.mxu0 %v343
    %8336 = vmatpush.msra.mxu0 %v335
    %8337 = vmatpush.msra.mxu0 %v327
    %8338 = vmatpush.msra.mxu0 %v319
    %8339 = vmatpush.msra.mxu0 %v311
    %8340 = vmatpush.msra.mxu0 %v303
    %8341 = vmatpush.msra.mxu0 %v295
    %8342 = vmatpush.msra.mxu0 %v287
    %8343 = vmatpush.msra.mxu0 %v279
    %8344 = vmatpush.msra.mxu0 %v271
    %8345 = vmatpush.msra.mxu0 %v263
    %8346 = vmatpush.msra.mxu0 %v255
    %8347 = vmatpush.msra.mxu0 %v247
    %8348 = vmatpush.msra.mxu0 %v239
    %8349 = vmatpush.msra.mxu0 %v231
    %8350 = vmatpush.msra.mxu0 %v223
    %8351 = vmatmul.f32.gmra.mxu0 %v8032
    %v8352 = vpop.f32.mrf.mxu0
    %v8353 = vadd.f32 %v8333, %v8352
    %8354 = vdwg.mxu0
    %v8363 = vrot.slane %v8113, 6
    %v8364 = vrot.slane %v8153, 4
    %v8365 = vrot.slane %v8193, 2
    %v8366 = vrot.slane %v8273, 6
    %v8367 = vrot.slane %v8313, 4
    %v8368 = vrot.slane %v8353, 2
    %v8369 = vsel %vm678, %v8073, %v8363
    %v8370 = vsel %vm680, %v8364, %v8365
    %v8371 = vsel %vm682, %v8369, %v8370
    %v8372 = vsel %vm678, %v8233, %v8366
    %v8373 = vsel %vm680, %v8367, %v8368
    %v8374 = vsel %vm682, %v8372, %v8373
    %v8377 = vadd.f32 %v8028, %v8371
    %v8378 = vadd.f32 %v8029, %v8374
    %v8379 = vxor.u32 %v8377, 2147483648
    %v8380 = vmul.f32 %v8379, 1.442695
    %v8381 = vpow.pop %v8380
    %v8382 = vadd.f32 %v8381, 1.0
    %v8383 = vrcp.pop %v8382
    %v8384 = vmul.f32 %v8382, %v8383
    %v8385 = vsub.f32 1.0, %v8384
    %v8386 = vmul.f32 %v8383, %v8385
    %v8387 = vadd.f32 %v8383, %v8386
    %vm8388 = vweird.f32 %v8382
    %vm8389 = vweird.f32 %v8383
    %vm8390 = vmor %vm8388, %vm8389
    %v8391 = vsel %vm8390, %v8383, %v8387
    %v8392 = vand.u32 2147483647, %v8382
    %vm8393 = vcmp.eq.f32.partialorder %v8392, 8.507059e+37
    %v8394 = vand.u32 %v8382, 2147483648
    %v8395 = vor.u32 1.1754944e-38, %v8394
    %v8396 = vsel %vm8393, %v8395, %v8391
    %v8397 = vmul.f32 1.0, %v8396
    %v8399 = vrot.slane %v8377, 4
    %v8401 = vxor.u32 %v8399, 2147483648
    %v8402 = vmul.f32 %v8401, 1.442695
    %v8403 = vpow.pop %v8402
    %v8404 = vadd.f32 %v8403, 1.0
    %v8405 = vrcp.pop %v8404
    %v8406 = vmul.f32 %v8404, %v8405
    %v8407 = vsub.f32 1.0, %v8406
    %v8408 = vmul.f32 %v8405, %v8407
    %v8409 = vadd.f32 %v8405, %v8408
    %vm8410 = vweird.f32 %v8404
    %vm8411 = vweird.f32 %v8405
    %vm8412 = vmor %vm8410, %vm8411
    %v8413 = vsel %vm8412, %v8405, %v8409
    %v8414 = vand.u32 2147483647, %v8404
    %vm8415 = vcmp.eq.f32.partialorder %v8414, 8.507059e+37
    %v8416 = vand.u32 %v8404, 2147483648
    %v8417 = vor.u32 1.1754944e-38, %v8416
    %v8418 = vsel %vm8415, %v8417, %v8413
    %v8419 = vmul.f32 1.0, %v8418
    %v8420 = vtanh.pop %v8378
    %v8422 = vrot.slane %v8378, 4
    %v8424 = vxor.u32 %v8422, 2147483648
    %v8425 = vmul.f32 %v8424, 1.442695
    %v8426 = vpow.pop %v8425
    %v8427 = vadd.f32 %v8426, 1.0
    %v8428 = vrcp.pop %v8427
    %v8429 = vmul.f32 %v8427, %v8428
    %v8430 = vsub.f32 1.0, %v8429
    %v8431 = vmul.f32 %v8428, %v8430
    %v8432 = vadd.f32 %v8428, %v8431
    %vm8433 = vweird.f32 %v8427
    %vm8434 = vweird.f32 %v8428
    %vm8435 = vmor %vm8433, %vm8434
    %v8436 = vsel %vm8435, %v8428, %v8432
    %v8437 = vand.u32 2147483647, %v8427
    %vm8438 = vcmp.eq.f32.partialorder %v8437, 8.507059e+37
    %v8439 = vand.u32 %v8427, 2147483648
    %v8440 = vor.u32 1.1754944e-38, %v8439
    %v8441 = vsel %vm8438, %v8440, %v8436
    %v8442 = vmul.f32 1.0, %v8441
    %v8443 = vmul.f32 %v8419, %v7252
    %v8444 = vmul.f32 %v8397, %v8420
    %v8445 = vadd.f32 %v8443, %v8444
    %v8446 = vtanh.pop %v8445
    %v8447 = vmul.f32 %v8442, %v8446
    %8449 = vst [vmem:[#allocation1] ss:$4 sm:$0xff] %v8447
    %v8450 = vld.sshfl [vmem:[#allocation1] sm:$0xff pattern:$0x73625140]
    %v8451 = vld.sshfl [vmem:[#allocation1 + $0x8] sm:$0xff pattern:$0x73625140]
    %8454 = vmatpush.msra.mxu0 %v886
    %8455 = vmatpush.msra.mxu0 %v878
    %8456 = vmatpush.msra.mxu0 %v870
    %8457 = vmatpush.msra.mxu0 %v862
    %8458 = vmatpush.msra.mxu0 %v854
    %8459 = vmatpush.msra.mxu0 %v846
    %8460 = vmatpush.msra.mxu0 %v838
    %8461 = vmatpush.msra.mxu0 %v830
    %8462 = vmatpush.msra.mxu0 %v822
    %8463 = vmatpush.msra.mxu0 %v814
    %8464 = vmatpush.msra.mxu0 %v806
    %8465 = vmatpush.msra.mxu0 %v798
    %8466 = vmatpush.msra.mxu0 %v790
    %8467 = vmatpush.msra.mxu0 %v782
    %8468 = vmatpush.msra.mxu0 %v774
    %8469 = vmatpush.msra.mxu0 %v766
    %8470 = vmatmul.f32.gmra.mxu0 %v8450
    %v8471 = vpop.f32.mrf.mxu0
    %v8472 = vadd.f32 %v1280, %v8471
    %8473 = vdwg.mxu0
    %8474 = vmatpush.msra.mxu0 %v1014
    %8475 = vmatpush.msra.mxu0 %v1006
    %8476 = vmatpush.msra.mxu0 %v998
    %8477 = vmatpush.msra.mxu0 %v990
    %8478 = vmatpush.msra.mxu0 %v982
    %8479 = vmatpush.msra.mxu0 %v974
    %8480 = vmatpush.msra.mxu0 %v966
    %8481 = vmatpush.msra.mxu0 %v958
    %8482 = vmatpush.msra.mxu0 %v950
    %8483 = vmatpush.msra.mxu0 %v942
    %8484 = vmatpush.msra.mxu0 %v934
    %8485 = vmatpush.msra.mxu0 %v926
    %8486 = vmatpush.msra.mxu0 %v918
    %8487 = vmatpush.msra.mxu0 %v910
    %8488 = vmatpush.msra.mxu0 %v902
    %8489 = vmatpush.msra.mxu0 %v894
    %8490 = vmatmul.f32.gmra.mxu0 %v8451
    %v8491 = vpop.f32.mrf.mxu0
    %v8492 = vadd.f32 %v8472, %v8491
    %8493 = vdwg.mxu0
    %8494 = vmatpush.msra.mxu0 %v1142
    %8495 = vmatpush.msra.mxu0 %v1134
    %8496 = vmatpush.msra.mxu0 %v1126
    %8497 = vmatpush.msra.mxu0 %v1118
    %8498 = vmatpush.msra.mxu0 %v1110
    %8499 = vmatpush.msra.mxu0 %v1102
    %8500 = vmatpush.msra.mxu0 %v1094
    %8501 = vmatpush.msra.mxu0 %v1086
    %8502 = vmatpush.msra.mxu0 %v1078
    %8503 = vmatpush.msra.mxu0 %v1070
    %8504 = vmatpush.msra.mxu0 %v1062
    %8505 = vmatpush.msra.mxu0 %v1054
    %8506 = vmatpush.msra.mxu0 %v1046
    %8507 = vmatpush.msra.mxu0 %v1038
    %8508 = vmatpush.msra.mxu0 %v1030
    %8509 = vmatpush.msra.mxu0 %v1022
    %8510 = vmatmul.f32.gmra.mxu0 %v8025
    %v8511 = vpop.f32.mrf.mxu0
    %v8512 = vadd.f32 %v8492, %v8511
    %8513 = vdwg.mxu0
    %8514 = vmatpush.msra.mxu0 %v1270
    %8515 = vmatpush.msra.mxu0 %v1262
    %8516 = vmatpush.msra.mxu0 %v1254
    %8517 = vmatpush.msra.mxu0 %v1246
    %8518 = vmatpush.msra.mxu0 %v1238
    %8519 = vmatpush.msra.mxu0 %v1230
    %8520 = vmatpush.msra.mxu0 %v1222
    %8521 = vmatpush.msra.mxu0 %v1214
    %8522 = vmatpush.msra.mxu0 %v1206
    %8523 = vmatpush.msra.mxu0 %v1198
    %8524 = vmatpush.msra.mxu0 %v1190
    %8525 = vmatpush.msra.mxu0 %v1182
    %8526 = vmatpush.msra.mxu0 %v1174
    %8527 = vmatpush.msra.mxu0 %v1166
    %8528 = vmatpush.msra.mxu0 %v1158
    %8529 = vmatpush.msra.mxu0 %v1150
    %8530 = vmatmul.f32.gmra.mxu0 %v8026
    %v8531 = vpop.f32.mrf.mxu0
    %v8532 = vadd.f32 %v8512, %v8531
    %8533 = vdwg.mxu0
    %8534 = vmatpush.msra.mxu0 %v887
    %8535 = vmatpush.msra.mxu0 %v879
    %8536 = vmatpush.msra.mxu0 %v871
    %8537 = vmatpush.msra.mxu0 %v863
    %8538 = vmatpush.msra.mxu0 %v855
    %8539 = vmatpush.msra.mxu0 %v847
    %8540 = vmatpush.msra.mxu0 %v839
    %8541 = vmatpush.msra.mxu0 %v831
    %8542 = vmatpush.msra.mxu0 %v823
    %8543 = vmatpush.msra.mxu0 %v815
    %8544 = vmatpush.msra.mxu0 %v807
    %8545 = vmatpush.msra.mxu0 %v799
    %8546 = vmatpush.msra.mxu0 %v791
    %8547 = vmatpush.msra.mxu0 %v783
    %8548 = vmatpush.msra.mxu0 %v775
    %8549 = vmatpush.msra.mxu0 %v767
    %8550 = vmatmul.f32.gmra.mxu0 %v8450
    %v8551 = vpop.f32.mrf.mxu0
    %v8552 = vadd.f32 %v1281, %v8551
    %8553 = vdwg.mxu0
    %8554 = vmatpush.msra.mxu0 %v1015
    %8555 = vmatpush.msra.mxu0 %v1007
    %8556 = vmatpush.msra.mxu0 %v999
    %8557 = vmatpush.msra.mxu0 %v991
    %8558 = vmatpush.msra.mxu0 %v983
    %8559 = vmatpush.msra.mxu0 %v975
    %8560 = vmatpush.msra.mxu0 %v967
    %8561 = vmatpush.msra.mxu0 %v959
    %8562 = vmatpush.msra.mxu0 %v951
    %8563 = vmatpush.msra.mxu0 %v943
    %8564 = vmatpush.msra.mxu0 %v935
    %8565 = vmatpush.msra.mxu0 %v927
    %8566 = vmatpush.msra.mxu0 %v919
    %8567 = vmatpush.msra.mxu0 %v911
    %8568 = vmatpush.msra.mxu0 %v903
    %8569 = vmatpush.msra.mxu0 %v895
    %8570 = vmatmul.f32.gmra.mxu0 %v8451
    %v8571 = vpop.f32.mrf.mxu0
    %v8572 = vadd.f32 %v8552, %v8571
    %8573 = vdwg.mxu0
    %8574 = vmatpush.msra.mxu0 %v1143
    %8575 = vmatpush.msra.mxu0 %v1135
    %8576 = vmatpush.msra.mxu0 %v1127
    %8577 = vmatpush.msra.mxu0 %v1119
    %8578 = vmatpush.msra.mxu0 %v1111
    %8579 = vmatpush.msra.mxu0 %v1103
    %8580 = vmatpush.msra.mxu0 %v1095
    %8581 = vmatpush.msra.mxu0 %v1087
    %8582 = vmatpush.msra.mxu0 %v1079
    %8583 = vmatpush.msra.mxu0 %v1071
    %8584 = vmatpush.msra.mxu0 %v1063
    %8585 = vmatpush.msra.mxu0 %v1055
    %8586 = vmatpush.msra.mxu0 %v1047
    %8587 = vmatpush.msra.mxu0 %v1039
    %8588 = vmatpush.msra.mxu0 %v1031
    %8589 = vmatpush.msra.mxu0 %v1023
    %8590 = vmatmul.f32.gmra.mxu0 %v8025
    %v8591 = vpop.f32.mrf.mxu0
    %v8592 = vadd.f32 %v8572, %v8591
    %8593 = vdwg.mxu0
    %8594 = vmatpush.msra.mxu0 %v1271
    %8595 = vmatpush.msra.mxu0 %v1263
    %8596 = vmatpush.msra.mxu0 %v1255
    %8597 = vmatpush.msra.mxu0 %v1247
    %8598 = vmatpush.msra.mxu0 %v1239
    %8599 = vmatpush.msra.mxu0 %v1231
    %8600 = vmatpush.msra.mxu0 %v1223
    %8601 = vmatpush.msra.mxu0 %v1215
    %8602 = vmatpush.msra.mxu0 %v1207
    %8603 = vmatpush.msra.mxu0 %v1199
    %8604 = vmatpush.msra.mxu0 %v1191
    %8605 = vmatpush.msra.mxu0 %v1183
    %8606 = vmatpush.msra.mxu0 %v1175
    %8607 = vmatpush.msra.mxu0 %v1167
    %8608 = vmatpush.msra.mxu0 %v1159
    %8609 = vmatpush.msra.mxu0 %v1151
    %8610 = vmatmul.f32.gmra.mxu0 %v8026
    %v8611 = vpop.f32.mrf.mxu0
    %v8612 = vadd.f32 %v8592, %v8611
    %8613 = vdwg.mxu0
    %8614 = vmatpush.msra.mxu0 %v888
    %8615 = vmatpush.msra.mxu0 %v880
    %8616 = vmatpush.msra.mxu0 %v872
    %8617 = vmatpush.msra.mxu0 %v864
    %8618 = vmatpush.msra.mxu0 %v856
    %8619 = vmatpush.msra.mxu0 %v848
    %8620 = vmatpush.msra.mxu0 %v840
    %8621 = vmatpush.msra.mxu0 %v832
    %8622 = vmatpush.msra.mxu0 %v824
    %8623 = vmatpush.msra.mxu0 %v816
    %8624 = vmatpush.msra.mxu0 %v808
    %8625 = vmatpush.msra.mxu0 %v800
    %8626 = vmatpush.msra.mxu0 %v792
    %8627 = vmatpush.msra.mxu0 %v784
    %8628 = vmatpush.msra.mxu0 %v776
    %8629 = vmatpush.msra.mxu0 %v768
    %8630 = vmatmul.f32.gmra.mxu0 %v8450
    %v8631 = vpop.f32.mrf.mxu0
    %v8632 = vadd.f32 %v1282, %v8631
    %8633 = vdwg.mxu0
    %8634 = vmatpush.msra.mxu0 %v1016
    %8635 = vmatpush.msra.mxu0 %v1008
    %8636 = vmatpush.msra.mxu0 %v1000
    %8637 = vmatpush.msra.mxu0 %v992
    %8638 = vmatpush.msra.mxu0 %v984
    %8639 = vmatpush.msra.mxu0 %v976
    %8640 = vmatpush.msra.mxu0 %v968
    %8641 = vmatpush.msra.mxu0 %v960
    %8642 = vmatpush.msra.mxu0 %v952
    %8643 = vmatpush.msra.mxu0 %v944
    %8644 = vmatpush.msra.mxu0 %v936
    %8645 = vmatpush.msra.mxu0 %v928
    %8646 = vmatpush.msra.mxu0 %v920
    %8647 = vmatpush.msra.mxu0 %v912
    %8648 = vmatpush.msra.mxu0 %v904
    %8649 = vmatpush.msra.mxu0 %v896
    %8650 = vmatmul.f32.gmra.mxu0 %v8451
    %v8651 = vpop.f32.mrf.mxu0
    %v8652 = vadd.f32 %v8632, %v8651
    %8653 = vdwg.mxu0
    %8654 = vmatpush.msra.mxu0 %v1144
    %8655 = vmatpush.msra.mxu0 %v1136
    %8656 = vmatpush.msra.mxu0 %v1128
    %8657 = vmatpush.msra.mxu0 %v1120
    %8658 = vmatpush.msra.mxu0 %v1112
    %8659 = vmatpush.msra.mxu0 %v1104
    %8660 = vmatpush.msra.mxu0 %v1096
    %8661 = vmatpush.msra.mxu0 %v1088
    %8662 = vmatpush.msra.mxu0 %v1080
    %8663 = vmatpush.msra.mxu0 %v1072
    %8664 = vmatpush.msra.mxu0 %v1064
    %8665 = vmatpush.msra.mxu0 %v1056
    %8666 = vmatpush.msra.mxu0 %v1048
    %8667 = vmatpush.msra.mxu0 %v1040
    %8668 = vmatpush.msra.mxu0 %v1032
    %8669 = vmatpush.msra.mxu0 %v1024
    %8670 = vmatmul.f32.gmra.mxu0 %v8025
    %v8671 = vpop.f32.mrf.mxu0
    %v8672 = vadd.f32 %v8652, %v8671
    %8673 = vdwg.mxu0
    %8674 = vmatpush.msra.mxu0 %v1272
    %8675 = vmatpush.msra.mxu0 %v1264
    %8676 = vmatpush.msra.mxu0 %v1256
    %8677 = vmatpush.msra.mxu0 %v1248
    %8678 = vmatpush.msra.mxu0 %v1240
    %8679 = vmatpush.msra.mxu0 %v1232
    %8680 = vmatpush.msra.mxu0 %v1224
    %8681 = vmatpush.msra.mxu0 %v1216
    %8682 = vmatpush.msra.mxu0 %v1208
    %8683 = vmatpush.msra.mxu0 %v1200
    %8684 = vmatpush.msra.mxu0 %v1192
    %8685 = vmatpush.msra.mxu0 %v1184
    %8686 = vmatpush.msra.mxu0 %v1176
    %8687 = vmatpush.msra.mxu0 %v1168
    %8688 = vmatpush.msra.mxu0 %v1160
    %8689 = vmatpush.msra.mxu0 %v1152
    %8690 = vmatmul.f32.gmra.mxu0 %v8026
    %v8691 = vpop.f32.mrf.mxu0
    %v8692 = vadd.f32 %v8672, %v8691
    %8693 = vdwg.mxu0
    %8694 = vmatpush.msra.mxu0 %v889
    %8695 = vmatpush.msra.mxu0 %v881
    %8696 = vmatpush.msra.mxu0 %v873
    %8697 = vmatpush.msra.mxu0 %v865
    %8698 = vmatpush.msra.mxu0 %v857
    %8699 = vmatpush.msra.mxu0 %v849
    %8700 = vmatpush.msra.mxu0 %v841
    %8701 = vmatpush.msra.mxu0 %v833
    %8702 = vmatpush.msra.mxu0 %v825
    %8703 = vmatpush.msra.mxu0 %v817
    %8704 = vmatpush.msra.mxu0 %v809
    %8705 = vmatpush.msra.mxu0 %v801
    %8706 = vmatpush.msra.mxu0 %v793
    %8707 = vmatpush.msra.mxu0 %v785
    %8708 = vmatpush.msra.mxu0 %v777
    %8709 = vmatpush.msra.mxu0 %v769
    %8710 = vmatmul.f32.gmra.mxu0 %v8450
    %v8711 = vpop.f32.mrf.mxu0
    %v8712 = vadd.f32 %v1283, %v8711
    %8713 = vdwg.mxu0
    %8714 = vmatpush.msra.mxu0 %v1017
    %8715 = vmatpush.msra.mxu0 %v1009
    %8716 = vmatpush.msra.mxu0 %v1001
    %8717 = vmatpush.msra.mxu0 %v993
    %8718 = vmatpush.msra.mxu0 %v985
    %8719 = vmatpush.msra.mxu0 %v977
    %8720 = vmatpush.msra.mxu0 %v969
    %8721 = vmatpush.msra.mxu0 %v961
    %8722 = vmatpush.msra.mxu0 %v953
    %8723 = vmatpush.msra.mxu0 %v945
    %8724 = vmatpush.msra.mxu0 %v937
    %8725 = vmatpush.msra.mxu0 %v929
    %8726 = vmatpush.msra.mxu0 %v921
    %8727 = vmatpush.msra.mxu0 %v913
    %8728 = vmatpush.msra.mxu0 %v905
    %8729 = vmatpush.msra.mxu0 %v897
    %8730 = vmatmul.f32.gmra.mxu0 %v8451
    %v8731 = vpop.f32.mrf.mxu0
    %v8732 = vadd.f32 %v8712, %v8731
    %8733 = vdwg.mxu0
    %8734 = vmatpush.msra.mxu0 %v1145
    %8735 = vmatpush.msra.mxu0 %v1137
    %8736 = vmatpush.msra.mxu0 %v1129
    %8737 = vmatpush.msra.mxu0 %v1121
    %8738 = vmatpush.msra.mxu0 %v1113
    %8739 = vmatpush.msra.mxu0 %v1105
    %8740 = vmatpush.msra.mxu0 %v1097
    %8741 = vmatpush.msra.mxu0 %v1089
    %8742 = vmatpush.msra.mxu0 %v1081
    %8743 = vmatpush.msra.mxu0 %v1073
    %8744 = vmatpush.msra.mxu0 %v1065
    %8745 = vmatpush.msra.mxu0 %v1057
    %8746 = vmatpush.msra.mxu0 %v1049
    %8747 = vmatpush.msra.mxu0 %v1041
    %8748 = vmatpush.msra.mxu0 %v1033
    %8749 = vmatpush.msra.mxu0 %v1025
    %8750 = vmatmul.f32.gmra.mxu0 %v8025
    %v8751 = vpop.f32.mrf.mxu0
    %v8752 = vadd.f32 %v8732, %v8751
    %8753 = vdwg.mxu0
    %8754 = vmatpush.msra.mxu0 %v1273
    %8755 = vmatpush.msra.mxu0 %v1265
    %8756 = vmatpush.msra.mxu0 %v1257
    %8757 = vmatpush.msra.mxu0 %v1249
    %8758 = vmatpush.msra.mxu0 %v1241
    %8759 = vmatpush.msra.mxu0 %v1233
    %8760 = vmatpush.msra.mxu0 %v1225
    %8761 = vmatpush.msra.mxu0 %v1217
    %8762 = vmatpush.msra.mxu0 %v1209
    %8763 = vmatpush.msra.mxu0 %v1201
    %8764 = vmatpush.msra.mxu0 %v1193
    %8765 = vmatpush.msra.mxu0 %v1185
    %8766 = vmatpush.msra.mxu0 %v1177
    %8767 = vmatpush.msra.mxu0 %v1169
    %8768 = vmatpush.msra.mxu0 %v1161
    %8769 = vmatpush.msra.mxu0 %v1153
    %8770 = vmatmul.f32.gmra.mxu0 %v8026
    %v8771 = vpop.f32.mrf.mxu0
    %v8772 = vadd.f32 %v8752, %v8771
    %8773 = vdwg.mxu0
    %8774 = vmatpush.msra.mxu0 %v890
    %8775 = vmatpush.msra.mxu0 %v882
    %8776 = vmatpush.msra.mxu0 %v874
    %8777 = vmatpush.msra.mxu0 %v866
    %8778 = vmatpush.msra.mxu0 %v858
    %8779 = vmatpush.msra.mxu0 %v850
    %8780 = vmatpush.msra.mxu0 %v842
    %8781 = vmatpush.msra.mxu0 %v834
    %8782 = vmatpush.msra.mxu0 %v826
    %8783 = vmatpush.msra.mxu0 %v818
    %8784 = vmatpush.msra.mxu0 %v810
    %8785 = vmatpush.msra.mxu0 %v802
    %8786 = vmatpush.msra.mxu0 %v794
    %8787 = vmatpush.msra.mxu0 %v786
    %8788 = vmatpush.msra.mxu0 %v778
    %8789 = vmatpush.msra.mxu0 %v770
    %8790 = vmatmul.f32.gmra.mxu0 %v8450
    %v8791 = vpop.f32.mrf.mxu0
    %v8792 = vadd.f32 %v1284, %v8791
    %8793 = vdwg.mxu0
    %8794 = vmatpush.msra.mxu0 %v1018
    %8795 = vmatpush.msra.mxu0 %v1010
    %8796 = vmatpush.msra.mxu0 %v1002
    %8797 = vmatpush.msra.mxu0 %v994
    %8798 = vmatpush.msra.mxu0 %v986
    %8799 = vmatpush.msra.mxu0 %v978
    %8800 = vmatpush.msra.mxu0 %v970
    %8801 = vmatpush.msra.mxu0 %v962
    %8802 = vmatpush.msra.mxu0 %v954
    %8803 = vmatpush.msra.mxu0 %v946
    %8804 = vmatpush.msra.mxu0 %v938
    %8805 = vmatpush.msra.mxu0 %v930
    %8806 = vmatpush.msra.mxu0 %v922
    %8807 = vmatpush.msra.mxu0 %v914
    %8808 = vmatpush.msra.mxu0 %v906
    %8809 = vmatpush.msra.mxu0 %v898
    %8810 = vmatmul.f32.gmra.mxu0 %v8451
    %v8811 = vpop.f32.mrf.mxu0
    %v8812 = vadd.f32 %v8792, %v8811
    %8813 = vdwg.mxu0
    %8814 = vmatpush.msra.mxu0 %v1146
    %8815 = vmatpush.msra.mxu0 %v1138
    %8816 = vmatpush.msra.mxu0 %v1130
    %8817 = vmatpush.msra.mxu0 %v1122
    %8818 = vmatpush.msra.mxu0 %v1114
    %8819 = vmatpush.msra.mxu0 %v1106
    %8820 = vmatpush.msra.mxu0 %v1098
    %8821 = vmatpush.msra.mxu0 %v1090
    %8822 = vmatpush.msra.mxu0 %v1082
    %8823 = vmatpush.msra.mxu0 %v1074
    %8824 = vmatpush.msra.mxu0 %v1066
    %8825 = vmatpush.msra.mxu0 %v1058
    %8826 = vmatpush.msra.mxu0 %v1050
    %8827 = vmatpush.msra.mxu0 %v1042
    %8828 = vmatpush.msra.mxu0 %v1034
    %8829 = vmatpush.msra.mxu0 %v1026
    %8830 = vmatmul.f32.gmra.mxu0 %v8025
    %v8831 = vpop.f32.mrf.mxu0
    %v8832 = vadd.f32 %v8812, %v8831
    %8833 = vdwg.mxu0
    %8834 = vmatpush.msra.mxu0 %v1274
    %8835 = vmatpush.msra.mxu0 %v1266
    %8836 = vmatpush.msra.mxu0 %v1258
    %8837 = vmatpush.msra.mxu0 %v1250
    %8838 = vmatpush.msra.mxu0 %v1242
    %8839 = vmatpush.msra.mxu0 %v1234
    %8840 = vmatpush.msra.mxu0 %v1226
    %8841 = vmatpush.msra.mxu0 %v1218
    %8842 = vmatpush.msra.mxu0 %v1210
    %8843 = vmatpush.msra.mxu0 %v1202
    %8844 = vmatpush.msra.mxu0 %v1194
    %8845 = vmatpush.msra.mxu0 %v1186
    %8846 = vmatpush.msra.mxu0 %v1178
    %8847 = vmatpush.msra.mxu0 %v1170
    %8848 = vmatpush.msra.mxu0 %v1162
    %8849 = vmatpush.msra.mxu0 %v1154
    %8850 = vmatmul.f32.gmra.mxu0 %v8026
    %v8851 = vpop.f32.mrf.mxu0
    %v8852 = vadd.f32 %v8832, %v8851
    %8853 = vdwg.mxu0
    %8854 = vmatpush.msra.mxu0 %v891
    %8855 = vmatpush.msra.mxu0 %v883
    %8856 = vmatpush.msra.mxu0 %v875
    %8857 = vmatpush.msra.mxu0 %v867
    %8858 = vmatpush.msra.mxu0 %v859
    %8859 = vmatpush.msra.mxu0 %v851
    %8860 = vmatpush.msra.mxu0 %v843
    %8861 = vmatpush.msra.mxu0 %v835
    %8862 = vmatpush.msra.mxu0 %v827
    %8863 = vmatpush.msra.mxu0 %v819
    %8864 = vmatpush.msra.mxu0 %v811
    %8865 = vmatpush.msra.mxu0 %v803
    %8866 = vmatpush.msra.mxu0 %v795
    %8867 = vmatpush.msra.mxu0 %v787
    %8868 = vmatpush.msra.mxu0 %v779
    %8869 = vmatpush.msra.mxu0 %v771
    %8870 = vmatmul.f32.gmra.mxu0 %v8450
    %v8871 = vpop.f32.mrf.mxu0
    %v8872 = vadd.f32 %v1285, %v8871
    %8873 = vdwg.mxu0
    %8874 = vmatpush.msra.mxu0 %v1019
    %8875 = vmatpush.msra.mxu0 %v1011
    %8876 = vmatpush.msra.mxu0 %v1003
    %8877 = vmatpush.msra.mxu0 %v995
    %8878 = vmatpush.msra.mxu0 %v987
    %8879 = vmatpush.msra.mxu0 %v979
    %8880 = vmatpush.msra.mxu0 %v971
    %8881 = vmatpush.msra.mxu0 %v963
    %8882 = vmatpush.msra.mxu0 %v955
    %8883 = vmatpush.msra.mxu0 %v947
    %8884 = vmatpush.msra.mxu0 %v939
    %8885 = vmatpush.msra.mxu0 %v931
    %8886 = vmatpush.msra.mxu0 %v923
    %8887 = vmatpush.msra.mxu0 %v915
    %8888 = vmatpush.msra.mxu0 %v907
    %8889 = vmatpush.msra.mxu0 %v899
    %8890 = vmatmul.f32.gmra.mxu0 %v8451
    %v8891 = vpop.f32.mrf.mxu0
    %v8892 = vadd.f32 %v8872, %v8891
    %8893 = vdwg.mxu0
    %8894 = vmatpush.msra.mxu0 %v1147
    %8895 = vmatpush.msra.mxu0 %v1139
    %8896 = vmatpush.msra.mxu0 %v1131
    %8897 = vmatpush.msra.mxu0 %v1123
    %8898 = vmatpush.msra.mxu0 %v1115
    %8899 = vmatpush.msra.mxu0 %v1107
    %8900 = vmatpush.msra.mxu0 %v1099
    %8901 = vmatpush.msra.mxu0 %v1091
    %8902 = vmatpush.msra.mxu0 %v1083
    %8903 = vmatpush.msra.mxu0 %v1075
    %8904 = vmatpush.msra.mxu0 %v1067
    %8905 = vmatpush.msra.mxu0 %v1059
    %8906 = vmatpush.msra.mxu0 %v1051
    %8907 = vmatpush.msra.mxu0 %v1043
    %8908 = vmatpush.msra.mxu0 %v1035
    %8909 = vmatpush.msra.mxu0 %v1027
    %8910 = vmatmul.f32.gmra.mxu0 %v8025
    %v8911 = vpop.f32.mrf.mxu0
    %v8912 = vadd.f32 %v8892, %v8911
    %8913 = vdwg.mxu0
    %8914 = vmatpush.msra.mxu0 %v1275
    %8915 = vmatpush.msra.mxu0 %v1267
    %8916 = vmatpush.msra.mxu0 %v1259
    %8917 = vmatpush.msra.mxu0 %v1251
    %8918 = vmatpush.msra.mxu0 %v1243
    %8919 = vmatpush.msra.mxu0 %v1235
    %8920 = vmatpush.msra.mxu0 %v1227
    %8921 = vmatpush.msra.mxu0 %v1219
    %8922 = vmatpush.msra.mxu0 %v1211
    %8923 = vmatpush.msra.mxu0 %v1203
    %8924 = vmatpush.msra.mxu0 %v1195
    %8925 = vmatpush.msra.mxu0 %v1187
    %8926 = vmatpush.msra.mxu0 %v1179
    %8927 = vmatpush.msra.mxu0 %v1171
    %8928 = vmatpush.msra.mxu0 %v1163
    %8929 = vmatpush.msra.mxu0 %v1155
    %8930 = vmatmul.f32.gmra.mxu0 %v8026
    %v8931 = vpop.f32.mrf.mxu0
    %v8932 = vadd.f32 %v8912, %v8931
    %8933 = vdwg.mxu0
    %8934 = vmatpush.msra.mxu0 %v892
    %8935 = vmatpush.msra.mxu0 %v884
    %8936 = vmatpush.msra.mxu0 %v876
    %8937 = vmatpush.msra.mxu0 %v868
    %8938 = vmatpush.msra.mxu0 %v860
    %8939 = vmatpush.msra.mxu0 %v852
    %8940 = vmatpush.msra.mxu0 %v844
    %8941 = vmatpush.msra.mxu0 %v836
    %8942 = vmatpush.msra.mxu0 %v828
    %8943 = vmatpush.msra.mxu0 %v820
    %8944 = vmatpush.msra.mxu0 %v812
    %8945 = vmatpush.msra.mxu0 %v804
    %8946 = vmatpush.msra.mxu0 %v796
    %8947 = vmatpush.msra.mxu0 %v788
    %8948 = vmatpush.msra.mxu0 %v780
    %8949 = vmatpush.msra.mxu0 %v772
    %8950 = vmatmul.f32.gmra.mxu0 %v8450
    %v8951 = vpop.f32.mrf.mxu0
    %v8952 = vadd.f32 %v1286, %v8951
    %8953 = vdwg.mxu0
    %8954 = vmatpush.msra.mxu0 %v1020
    %8955 = vmatpush.msra.mxu0 %v1012
    %8956 = vmatpush.msra.mxu0 %v1004
    %8957 = vmatpush.msra.mxu0 %v996
    %8958 = vmatpush.msra.mxu0 %v988
    %8959 = vmatpush.msra.mxu0 %v980
    %8960 = vmatpush.msra.mxu0 %v972
    %8961 = vmatpush.msra.mxu0 %v964
    %8962 = vmatpush.msra.mxu0 %v956
    %8963 = vmatpush.msra.mxu0 %v948
    %8964 = vmatpush.msra.mxu0 %v940
    %8965 = vmatpush.msra.mxu0 %v932
    %8966 = vmatpush.msra.mxu0 %v924
    %8967 = vmatpush.msra.mxu0 %v916
    %8968 = vmatpush.msra.mxu0 %v908
    %8969 = vmatpush.msra.mxu0 %v900
    %8970 = vmatmul.f32.gmra.mxu0 %v8451
    %v8971 = vpop.f32.mrf.mxu0
    %v8972 = vadd.f32 %v8952, %v8971
    %8973 = vdwg.mxu0
    %8974 = vmatpush.msra.mxu0 %v1148
    %8975 = vmatpush.msra.mxu0 %v1140
    %8976 = vmatpush.msra.mxu0 %v1132
    %8977 = vmatpush.msra.mxu0 %v1124
    %8978 = vmatpush.msra.mxu0 %v1116
    %8979 = vmatpush.msra.mxu0 %v1108
    %8980 = vmatpush.msra.mxu0 %v1100
    %8981 = vmatpush.msra.mxu0 %v1092
    %8982 = vmatpush.msra.mxu0 %v1084
    %8983 = vmatpush.msra.mxu0 %v1076
    %8984 = vmatpush.msra.mxu0 %v1068
    %8985 = vmatpush.msra.mxu0 %v1060
    %8986 = vmatpush.msra.mxu0 %v1052
    %8987 = vmatpush.msra.mxu0 %v1044
    %8988 = vmatpush.msra.mxu0 %v1036
    %8989 = vmatpush.msra.mxu0 %v1028
    %8990 = vmatmul.f32.gmra.mxu0 %v8025
    %v8991 = vpop.f32.mrf.mxu0
    %v8992 = vadd.f32 %v8972, %v8991
    %8993 = vdwg.mxu0
    %8994 = vmatpush.msra.mxu0 %v1276
    %8995 = vmatpush.msra.mxu0 %v1268
    %8996 = vmatpush.msra.mxu0 %v1260
    %8997 = vmatpush.msra.mxu0 %v1252
    %8998 = vmatpush.msra.mxu0 %v1244
    %8999 = vmatpush.msra.mxu0 %v1236
    %9000 = vmatpush.msra.mxu0 %v1228
    %9001 = vmatpush.msra.mxu0 %v1220
    %9002 = vmatpush.msra.mxu0 %v1212
    %9003 = vmatpush.msra.mxu0 %v1204
    %9004 = vmatpush.msra.mxu0 %v1196
    %9005 = vmatpush.msra.mxu0 %v1188
    %9006 = vmatpush.msra.mxu0 %v1180
    %9007 = vmatpush.msra.mxu0 %v1172
    %9008 = vmatpush.msra.mxu0 %v1164
    %9009 = vmatpush.msra.mxu0 %v1156
    %9010 = vmatmul.f32.gmra.mxu0 %v8026
    %v9011 = vpop.f32.mrf.mxu0
    %v9012 = vadd.f32 %v8992, %v9011
    %9013 = vdwg.mxu0
    %9014 = vmatpush.msra.mxu0 %v893
    %9015 = vmatpush.msra.mxu0 %v885
    %9016 = vmatpush.msra.mxu0 %v877
    %9017 = vmatpush.msra.mxu0 %v869
    %9018 = vmatpush.msra.mxu0 %v861
    %9019 = vmatpush.msra.mxu0 %v853
    %9020 = vmatpush.msra.mxu0 %v845
    %9021 = vmatpush.msra.mxu0 %v837
    %9022 = vmatpush.msra.mxu0 %v829
    %9023 = vmatpush.msra.mxu0 %v821
    %9024 = vmatpush.msra.mxu0 %v813
    %9025 = vmatpush.msra.mxu0 %v805
    %9026 = vmatpush.msra.mxu0 %v797
    %9027 = vmatpush.msra.mxu0 %v789
    %9028 = vmatpush.msra.mxu0 %v781
    %9029 = vmatpush.msra.mxu0 %v773
    %9030 = vmatmul.f32.gmra.mxu0 %v8450
    %v9031 = vpop.f32.mrf.mxu0
    %v9032 = vadd.f32 %v1287, %v9031
    %9033 = vdwg.mxu0
    %9034 = vmatpush.msra.mxu0 %v1021
    %9035 = vmatpush.msra.mxu0 %v1013
    %9036 = vmatpush.msra.mxu0 %v1005
    %9037 = vmatpush.msra.mxu0 %v997
    %9038 = vmatpush.msra.mxu0 %v989
    %9039 = vmatpush.msra.mxu0 %v981
    %9040 = vmatpush.msra.mxu0 %v973
    %9041 = vmatpush.msra.mxu0 %v965
    %9042 = vmatpush.msra.mxu0 %v957
    %9043 = vmatpush.msra.mxu0 %v949
    %9044 = vmatpush.msra.mxu0 %v941
    %9045 = vmatpush.msra.mxu0 %v933
    %9046 = vmatpush.msra.mxu0 %v925
    %9047 = vmatpush.msra.mxu0 %v917
    %9048 = vmatpush.msra.mxu0 %v909
    %9049 = vmatpush.msra.mxu0 %v901
    %9050 = vmatmul.f32.gmra.mxu0 %v8451
    %v9051 = vpop.f32.mrf.mxu0
    %v9052 = vadd.f32 %v9032, %v9051
    %9053 = vdwg.mxu0
    %9054 = vmatpush.msra.mxu0 %v1149
    %9055 = vmatpush.msra.mxu0 %v1141
    %9056 = vmatpush.msra.mxu0 %v1133
    %9057 = vmatpush.msra.mxu0 %v1125
    %9058 = vmatpush.msra.mxu0 %v1117
    %9059 = vmatpush.msra.mxu0 %v1109
    %9060 = vmatpush.msra.mxu0 %v1101
    %9061 = vmatpush.msra.mxu0 %v1093
    %9062 = vmatpush.msra.mxu0 %v1085
    %9063 = vmatpush.msra.mxu0 %v1077
    %9064 = vmatpush.msra.mxu0 %v1069
    %9065 = vmatpush.msra.mxu0 %v1061
    %9066 = vmatpush.msra.mxu0 %v1053
    %9067 = vmatpush.msra.mxu0 %v1045
    %9068 = vmatpush.msra.mxu0 %v1037
    %9069 = vmatpush.msra.mxu0 %v1029
    %9070 = vmatmul.f32.gmra.mxu0 %v8025
    %v9071 = vpop.f32.mrf.mxu0
    %v9072 = vadd.f32 %v9052, %v9071
    %9073 = vdwg.mxu0
    %9074 = vmatpush.msra.mxu0 %v1277
    %9075 = vmatpush.msra.mxu0 %v1269
    %9076 = vmatpush.msra.mxu0 %v1261
    %9077 = vmatpush.msra.mxu0 %v1253
    %9078 = vmatpush.msra.mxu0 %v1245
    %9079 = vmatpush.msra.mxu0 %v1237
    %9080 = vmatpush.msra.mxu0 %v1229
    %9081 = vmatpush.msra.mxu0 %v1221
    %9082 = vmatpush.msra.mxu0 %v1213
    %9083 = vmatpush.msra.mxu0 %v1205
    %9084 = vmatpush.msra.mxu0 %v1197
    %9085 = vmatpush.msra.mxu0 %v1189
    %9086 = vmatpush.msra.mxu0 %v1181
    %9087 = vmatpush.msra.mxu0 %v1173
    %9088 = vmatpush.msra.mxu0 %v1165
    %9089 = vmatpush.msra.mxu0 %v1157
    %9090 = vmatmul.f32.gmra.mxu0 %v8026
    %v9091 = vpop.f32.mrf.mxu0
    %v9092 = vadd.f32 %v9072, %v9091
    %9093 = vdwg.mxu0
    %v9094 = vxor.u32 %v8532, 2147483648
    %v9095 = vxor.u32 %v8612, 2147483648
    %v9096 = vmul.f32 %v9094, 1.442695
    %v9097 = vpow.pop %v9096
    %v9098 = vmul.f32 %v9095, 1.442695
    %v9099 = vpow.pop %v9098
    %v9100 = vadd.f32 %v9097, 1.0
    %v9101 = vadd.f32 %v9099, 1.0
    %v9102 = vrcp.pop %v9100
    %v9103 = vmul.f32 %v9100, %v9102
    %v9104 = vsub.f32 1.0, %v9103
    %v9105 = vmul.f32 %v9102, %v9104
    %v9106 = vadd.f32 %v9102, %v9105
    %vm9107 = vweird.f32 %v9100
    %vm9108 = vweird.f32 %v9102
    %vm9109 = vmor %vm9107, %vm9108
    %v9110 = vsel %vm9109, %v9102, %v9106
    %v9111 = vand.u32 2147483647, %v9100
    %vm9112 = vcmp.eq.f32.partialorder %v9111, 8.507059e+37
    %v9113 = vand.u32 %v9100, 2147483648
    %v9114 = vor.u32 1.1754944e-38, %v9113
    %v9115 = vsel %vm9112, %v9114, %v9110
    %v9116 = vmul.f32 1.0, %v9115
    %v9117 = vrcp.pop %v9101
    %v9118 = vmul.f32 %v9101, %v9117
    %v9119 = vsub.f32 1.0, %v9118
    %v9120 = vmul.f32 %v9117, %v9119
    %v9121 = vadd.f32 %v9117, %v9120
    %vm9122 = vweird.f32 %v9101
    %vm9123 = vweird.f32 %v9117
    %vm9124 = vmor %vm9122, %vm9123
    %v9125 = vsel %vm9124, %v9117, %v9121
    %v9126 = vand.u32 2147483647, %v9101
    %vm9127 = vcmp.eq.f32.partialorder %v9126, 8.507059e+37
    %v9128 = vand.u32 %v9101, 2147483648
    %v9129 = vor.u32 1.1754944e-38, %v9128
    %v9130 = vsel %vm9127, %v9129, %v9125
    %v9131 = vmul.f32 1.0, %v9130
    %v9132 = vxor.u32 %v8692, 2147483648
    %v9133 = vxor.u32 %v8772, 2147483648
    %v9134 = vmul.f32 %v9132, 1.442695
    %v9135 = vpow.pop %v9134
    %v9136 = vmul.f32 %v9133, 1.442695
    %v9137 = vpow.pop %v9136
    %v9138 = vadd.f32 %v9135, 1.0
    %v9139 = vadd.f32 %v9137, 1.0
    %v9140 = vrcp.pop %v9138
    %v9141 = vmul.f32 %v9138, %v9140
    %v9142 = vsub.f32 1.0, %v9141
    %v9143 = vmul.f32 %v9140, %v9142
    %v9144 = vadd.f32 %v9140, %v9143
    %vm9145 = vweird.f32 %v9138
    %vm9146 = vweird.f32 %v9140
    %vm9147 = vmor %vm9145, %vm9146
    %v9148 = vsel %vm9147, %v9140, %v9144
    %v9149 = vand.u32 2147483647, %v9138
    %vm9150 = vcmp.eq.f32.partialorder %v9149, 8.507059e+37
    %v9151 = vand.u32 %v9138, 2147483648
    %v9152 = vor.u32 1.1754944e-38, %v9151
    %v9153 = vsel %vm9150, %v9152, %v9148
    %v9154 = vmul.f32 1.0, %v9153
    %v9155 = vrcp.pop %v9139
    %v9156 = vmul.f32 %v9139, %v9155
    %v9157 = vsub.f32 1.0, %v9156
    %v9158 = vmul.f32 %v9155, %v9157
    %v9159 = vadd.f32 %v9155, %v9158
    %vm9160 = vweird.f32 %v9139
    %vm9161 = vweird.f32 %v9155
    %vm9162 = vmor %vm9160, %vm9161
    %v9163 = vsel %vm9162, %v9155, %v9159
    %v9164 = vand.u32 2147483647, %v9139
    %vm9165 = vcmp.eq.f32.partialorder %v9164, 8.507059e+37
    %v9166 = vand.u32 %v9139, 2147483648
    %v9167 = vor.u32 1.1754944e-38, %v9166
    %v9168 = vsel %vm9165, %v9167, %v9163
    %v9169 = vmul.f32 1.0, %v9168
    %v9170 = vtanh.pop %v8852
    %v9171 = vtanh.pop %v8932
    %v9172 = vxor.u32 %v9012, 2147483648
    %v9173 = vxor.u32 %v9092, 2147483648
    %v9174 = vmul.f32 %v9172, 1.442695
    %v9175 = vpow.pop %v9174
    %v9176 = vmul.f32 %v9173, 1.442695
    %v9177 = vpow.pop %v9176
    %v9178 = vadd.f32 %v9175, 1.0
    %v9179 = vadd.f32 %v9177, 1.0
    %v9180 = vrcp.pop %v9178
    %v9181 = vmul.f32 %v9178, %v9180
    %v9182 = vsub.f32 1.0, %v9181
    %v9183 = vmul.f32 %v9180, %v9182
    %v9184 = vadd.f32 %v9180, %v9183
    %vm9185 = vweird.f32 %v9178
    %vm9186 = vweird.f32 %v9180
    %vm9187 = vmor %vm9185, %vm9186
    %v9188 = vsel %vm9187, %v9180, %v9184
    %v9189 = vand.u32 2147483647, %v9178
    %vm9190 = vcmp.eq.f32.partialorder %v9189, 8.507059e+37
    %v9191 = vand.u32 %v9178, 2147483648
    %v9192 = vor.u32 1.1754944e-38, %v9191
    %v9193 = vsel %vm9190, %v9192, %v9188
    %v9194 = vmul.f32 1.0, %v9193
    %v9195 = vrcp.pop %v9179
    %v9196 = vmul.f32 %v9179, %v9195
    %v9197 = vsub.f32 1.0, %v9196
    %v9198 = vmul.f32 %v9195, %v9197
    %v9199 = vadd.f32 %v9195, %v9198
    %vm9200 = vweird.f32 %v9179
    %vm9201 = vweird.f32 %v9195
    %vm9202 = vmor %vm9200, %vm9201
    %v9203 = vsel %vm9202, %v9195, %v9199
    %v9204 = vand.u32 2147483647, %v9179
    %vm9205 = vcmp.eq.f32.partialorder %v9204, 8.507059e+37
    %v9206 = vand.u32 %v9179, 2147483648
    %v9207 = vor.u32 1.1754944e-38, %v9206
    %v9208 = vsel %vm9205, %v9207, %v9203
    %v9209 = vmul.f32 1.0, %v9208
    %v9210 = vmul.f32 %v9154, %v8021
    %v9211 = vmul.f32 %v9169, %v8022
    %v9212 = vmul.f32 %v9116, %v9170
    %v9213 = vmul.f32 %v9131, %v9171
    %v9214 = vadd.f32 %v9210, %v9212
    %v9215 = vadd.f32 %v9211, %v9213
    %v9216 = vtanh.pop %v9214
    %v9217 = vtanh.pop %v9215
    %v9218 = vmul.f32 %v9194, %v9216
    %v9219 = vmul.f32 %v9209, %v9217
    %s9220 = scalar_lea.vmem [#allocation3], 112
    %v9221 = vld [vmem:[%s9220] sm:$0xff]
    %v9222 = vld [vmem:[%s9220 + $0x8] sm:$0xff]
    %9223 = vst [vmem:[#allocation1] ss:$4 sm:$0xff] %v8447
    %v9224 = vld.sshfl [vmem:[#allocation1] sm:$0xff pattern:$0x73625140]
    %v9225 = vld.sshfl [vmem:[#allocation1 + $0x8] sm:$0xff pattern:$0x73625140]
    %9228 = vmatpush.msra.mxu0 %v208
    %9229 = vmatpush.msra.mxu0 %v200
    %9230 = vmatpush.msra.mxu0 %v192
    %9231 = vmatpush.msra.mxu0 %v184
    %9232 = vmatpush.msra.mxu0 %v176
    %9233 = vmatpush.msra.mxu0 %v168
    %9234 = vmatpush.msra.mxu0 %v160
    %9235 = vmatpush.msra.mxu0 %v152
    %9236 = vmatpush.msra.mxu0 %v144
    %9237 = vmatpush.msra.mxu0 %v136
    %9238 = vmatpush.msra.mxu0 %v128
    %9239 = vmatpush.msra.mxu0 %v120
    %9240 = vmatpush.msra.mxu0 %v112
    %9241 = vmatpush.msra.mxu0 %v104
    %9242 = vmatpush.msra.mxu0 %v96
    %9243 = vmatpush.msra.mxu0 %v88
    %9244 = vmatmul.f32.gmra.mxu0 %v9224
    %v9245 = vpop.f32.mrf.mxu0
    %v9246 = vadd.f32 0.0, %v9245
    %9247 = vdwg.mxu0
    %9248 = vmatpush.msra.mxu0 %v336
    %9249 = vmatpush.msra.mxu0 %v328
    %9250 = vmatpush.msra.mxu0 %v320
    %9251 = vmatpush.msra.mxu0 %v312
    %9252 = vmatpush.msra.mxu0 %v304
    %9253 = vmatpush.msra.mxu0 %v296
    %9254 = vmatpush.msra.mxu0 %v288
    %9255 = vmatpush.msra.mxu0 %v280
    %9256 = vmatpush.msra.mxu0 %v272
    %9257 = vmatpush.msra.mxu0 %v264
    %9258 = vmatpush.msra.mxu0 %v256
    %9259 = vmatpush.msra.mxu0 %v248
    %9260 = vmatpush.msra.mxu0 %v240
    %9261 = vmatpush.msra.mxu0 %v232
    %9262 = vmatpush.msra.mxu0 %v224
    %9263 = vmatpush.msra.mxu0 %v216
    %9264 = vmatmul.f32.gmra.mxu0 %v9225
    %v9265 = vpop.f32.mrf.mxu0
    %v9266 = vadd.f32 %v9246, %v9265
    %9267 = vdwg.mxu0
    %9268 = vmatpush.msra.mxu0 %v209
    %9269 = vmatpush.msra.mxu0 %v201
    %9270 = vmatpush.msra.mxu0 %v193
    %9271 = vmatpush.msra.mxu0 %v185
    %9272 = vmatpush.msra.mxu0 %v177
    %9273 = vmatpush.msra.mxu0 %v169
    %9274 = vmatpush.msra.mxu0 %v161
    %9275 = vmatpush.msra.mxu0 %v153
    %9276 = vmatpush.msra.mxu0 %v145
    %9277 = vmatpush.msra.mxu0 %v137
    %9278 = vmatpush.msra.mxu0 %v129
    %9279 = vmatpush.msra.mxu0 %v121
    %9280 = vmatpush.msra.mxu0 %v113
    %9281 = vmatpush.msra.mxu0 %v105
    %9282 = vmatpush.msra.mxu0 %v97
    %9283 = vmatpush.msra.mxu0 %v89
    %9284 = vmatmul.f32.gmra.mxu0 %v9224
    %v9285 = vpop.f32.mrf.mxu0
    %v9286 = vadd.f32 0.0, %v9285
    %9287 = vdwg.mxu0
    %9288 = vmatpush.msra.mxu0 %v337
    %9289 = vmatpush.msra.mxu0 %v329
    %9290 = vmatpush.msra.mxu0 %v321
    %9291 = vmatpush.msra.mxu0 %v313
    %9292 = vmatpush.msra.mxu0 %v305
    %9293 = vmatpush.msra.mxu0 %v297
    %9294 = vmatpush.msra.mxu0 %v289
    %9295 = vmatpush.msra.mxu0 %v281
    %9296 = vmatpush.msra.mxu0 %v273
    %9297 = vmatpush.msra.mxu0 %v265
    %9298 = vmatpush.msra.mxu0 %v257
    %9299 = vmatpush.msra.mxu0 %v249
    %9300 = vmatpush.msra.mxu0 %v241
    %9301 = vmatpush.msra.mxu0 %v233
    %9302 = vmatpush.msra.mxu0 %v225
    %9303 = vmatpush.msra.mxu0 %v217
    %9304 = vmatmul.f32.gmra.mxu0 %v9225
    %v9305 = vpop.f32.mrf.mxu0
    %v9306 = vadd.f32 %v9286, %v9305
    %9307 = vdwg.mxu0
    %9308 = vmatpush.msra.mxu0 %v210
    %9309 = vmatpush.msra.mxu0 %v202
    %9310 = vmatpush.msra.mxu0 %v194
    %9311 = vmatpush.msra.mxu0 %v186
    %9312 = vmatpush.msra.mxu0 %v178
    %9313 = vmatpush.msra.mxu0 %v170
    %9314 = vmatpush.msra.mxu0 %v162
    %9315 = vmatpush.msra.mxu0 %v154
    %9316 = vmatpush.msra.mxu0 %v146
    %9317 = vmatpush.msra.mxu0 %v138
    %9318 = vmatpush.msra.mxu0 %v130
    %9319 = vmatpush.msra.mxu0 %v122
    %9320 = vmatpush.msra.mxu0 %v114
    %9321 = vmatpush.msra.mxu0 %v106
    %9322 = vmatpush.msra.mxu0 %v98
    %9323 = vmatpush.msra.mxu0 %v90
    %9324 = vmatmul.f32.gmra.mxu0 %v9224
    %v9325 = vpop.f32.mrf.mxu0
    %v9326 = vadd.f32 0.0, %v9325
    %9327 = vdwg.mxu0
    %9328 = vmatpush.msra.mxu0 %v338
    %9329 = vmatpush.msra.mxu0 %v330
    %9330 = vmatpush.msra.mxu0 %v322
    %9331 = vmatpush.msra.mxu0 %v314
    %9332 = vmatpush.msra.mxu0 %v306
    %9333 = vmatpush.msra.mxu0 %v298
    %9334 = vmatpush.msra.mxu0 %v290
    %9335 = vmatpush.msra.mxu0 %v282
    %9336 = vmatpush.msra.mxu0 %v274
    %9337 = vmatpush.msra.mxu0 %v266
    %9338 = vmatpush.msra.mxu0 %v258
    %9339 = vmatpush.msra.mxu0 %v250
    %9340 = vmatpush.msra.mxu0 %v242
    %9341 = vmatpush.msra.mxu0 %v234
    %9342 = vmatpush.msra.mxu0 %v226
    %9343 = vmatpush.msra.mxu0 %v218
    %9344 = vmatmul.f32.gmra.mxu0 %v9225
    %v9345 = vpop.f32.mrf.mxu0
    %v9346 = vadd.f32 %v9326, %v9345
    %9347 = vdwg.mxu0
    %9348 = vmatpush.msra.mxu0 %v211
    %9349 = vmatpush.msra.mxu0 %v203
    %9350 = vmatpush.msra.mxu0 %v195
    %9351 = vmatpush.msra.mxu0 %v187
    %9352 = vmatpush.msra.mxu0 %v179
    %9353 = vmatpush.msra.mxu0 %v171
    %9354 = vmatpush.msra.mxu0 %v163
    %9355 = vmatpush.msra.mxu0 %v155
    %9356 = vmatpush.msra.mxu0 %v147
    %9357 = vmatpush.msra.mxu0 %v139
    %9358 = vmatpush.msra.mxu0 %v131
    %9359 = vmatpush.msra.mxu0 %v123
    %9360 = vmatpush.msra.mxu0 %v115
    %9361 = vmatpush.msra.mxu0 %v107
    %9362 = vmatpush.msra.mxu0 %v99
    %9363 = vmatpush.msra.mxu0 %v91
    %9364 = vmatmul.f32.gmra.mxu0 %v9224
    %v9365 = vpop.f32.mrf.mxu0
    %v9366 = vadd.f32 0.0, %v9365
    %9367 = vdwg.mxu0
    %9368 = vmatpush.msra.mxu0 %v339
    %9369 = vmatpush.msra.mxu0 %v331
    %9370 = vmatpush.msra.mxu0 %v323
    %9371 = vmatpush.msra.mxu0 %v315
    %9372 = vmatpush.msra.mxu0 %v307
    %9373 = vmatpush.msra.mxu0 %v299
    %9374 = vmatpush.msra.mxu0 %v291
    %9375 = vmatpush.msra.mxu0 %v283
    %9376 = vmatpush.msra.mxu0 %v275
    %9377 = vmatpush.msra.mxu0 %v267
    %9378 = vmatpush.msra.mxu0 %v259
    %9379 = vmatpush.msra.mxu0 %v251
    %9380 = vmatpush.msra.mxu0 %v243
    %9381 = vmatpush.msra.mxu0 %v235
    %9382 = vmatpush.msra.mxu0 %v227
    %9383 = vmatpush.msra.mxu0 %v219
    %9384 = vmatmul.f32.gmra.mxu0 %v9225
    %v9385 = vpop.f32.mrf.mxu0
    %v9386 = vadd.f32 %v9366, %v9385
    %9387 = vdwg.mxu0
    %9388 = vmatpush.msra.mxu0 %v212
    %9389 = vmatpush.msra.mxu0 %v204
    %9390 = vmatpush.msra.mxu0 %v196
    %9391 = vmatpush.msra.mxu0 %v188
    %9392 = vmatpush.msra.mxu0 %v180
    %9393 = vmatpush.msra.mxu0 %v172
    %9394 = vmatpush.msra.mxu0 %v164
    %9395 = vmatpush.msra.mxu0 %v156
    %9396 = vmatpush.msra.mxu0 %v148
    %9397 = vmatpush.msra.mxu0 %v140
    %9398 = vmatpush.msra.mxu0 %v132
    %9399 = vmatpush.msra.mxu0 %v124
    %9400 = vmatpush.msra.mxu0 %v116
    %9401 = vmatpush.msra.mxu0 %v108
    %9402 = vmatpush.msra.mxu0 %v100
    %9403 = vmatpush.msra.mxu0 %v92
    %9404 = vmatmul.f32.gmra.mxu0 %v9224
    %v9405 = vpop.f32.mrf.mxu0
    %v9406 = vadd.f32 0.0, %v9405
    %9407 = vdwg.mxu0
    %9408 = vmatpush.msra.mxu0 %v340
    %9409 = vmatpush.msra.mxu0 %v332
    %9410 = vmatpush.msra.mxu0 %v324
    %9411 = vmatpush.msra.mxu0 %v316
    %9412 = vmatpush.msra.mxu0 %v308
    %9413 = vmatpush.msra.mxu0 %v300
    %9414 = vmatpush.msra.mxu0 %v292
    %9415 = vmatpush.msra.mxu0 %v284
    %9416 = vmatpush.msra.mxu0 %v276
    %9417 = vmatpush.msra.mxu0 %v268
    %9418 = vmatpush.msra.mxu0 %v260
    %9419 = vmatpush.msra.mxu0 %v252
    %9420 = vmatpush.msra.mxu0 %v244
    %9421 = vmatpush.msra.mxu0 %v236
    %9422 = vmatpush.msra.mxu0 %v228
    %9423 = vmatpush.msra.mxu0 %v220
    %9424 = vmatmul.f32.gmra.mxu0 %v9225
    %v9425 = vpop.f32.mrf.mxu0
    %v9426 = vadd.f32 %v9406, %v9425
    %9427 = vdwg.mxu0
    %9428 = vmatpush.msra.mxu0 %v213
    %9429 = vmatpush.msra.mxu0 %v205
    %9430 = vmatpush.msra.mxu0 %v197
    %9431 = vmatpush.msra.mxu0 %v189
    %9432 = vmatpush.msra.mxu0 %v181
    %9433 = vmatpush.msra.mxu0 %v173
    %9434 = vmatpush.msra.mxu0 %v165
    %9435 = vmatpush.msra.mxu0 %v157
    %9436 = vmatpush.msra.mxu0 %v149
    %9437 = vmatpush.msra.mxu0 %v141
    %9438 = vmatpush.msra.mxu0 %v133
    %9439 = vmatpush.msra.mxu0 %v125
    %9440 = vmatpush.msra.mxu0 %v117
    %9441 = vmatpush.msra.mxu0 %v109
    %9442 = vmatpush.msra.mxu0 %v101
    %9443 = vmatpush.msra.mxu0 %v93
    %9444 = vmatmul.f32.gmra.mxu0 %v9224
    %v9445 = vpop.f32.mrf.mxu0
    %v9446 = vadd.f32 0.0, %v9445
    %9447 = vdwg.mxu0
    %9448 = vmatpush.msra.mxu0 %v341
    %9449 = vmatpush.msra.mxu0 %v333
    %9450 = vmatpush.msra.mxu0 %v325
    %9451 = vmatpush.msra.mxu0 %v317
    %9452 = vmatpush.msra.mxu0 %v309
    %9453 = vmatpush.msra.mxu0 %v301
    %9454 = vmatpush.msra.mxu0 %v293
    %9455 = vmatpush.msra.mxu0 %v285
    %9456 = vmatpush.msra.mxu0 %v277
    %9457 = vmatpush.msra.mxu0 %v269
    %9458 = vmatpush.msra.mxu0 %v261
    %9459 = vmatpush.msra.mxu0 %v253
    %9460 = vmatpush.msra.mxu0 %v245
    %9461 = vmatpush.msra.mxu0 %v237
    %9462 = vmatpush.msra.mxu0 %v229
    %9463 = vmatpush.msra.mxu0 %v221
    %9464 = vmatmul.f32.gmra.mxu0 %v9225
    %v9465 = vpop.f32.mrf.mxu0
    %v9466 = vadd.f32 %v9446, %v9465
    %9467 = vdwg.mxu0
    %9468 = vmatpush.msra.mxu0 %v214
    %9469 = vmatpush.msra.mxu0 %v206
    %9470 = vmatpush.msra.mxu0 %v198
    %9471 = vmatpush.msra.mxu0 %v190
    %9472 = vmatpush.msra.mxu0 %v182
    %9473 = vmatpush.msra.mxu0 %v174
    %9474 = vmatpush.msra.mxu0 %v166
    %9475 = vmatpush.msra.mxu0 %v158
    %9476 = vmatpush.msra.mxu0 %v150
    %9477 = vmatpush.msra.mxu0 %v142
    %9478 = vmatpush.msra.mxu0 %v134
    %9479 = vmatpush.msra.mxu0 %v126
    %9480 = vmatpush.msra.mxu0 %v118
    %9481 = vmatpush.msra.mxu0 %v110
    %9482 = vmatpush.msra.mxu0 %v102
    %9483 = vmatpush.msra.mxu0 %v94
    %9484 = vmatmul.f32.gmra.mxu0 %v9224
    %v9485 = vpop.f32.mrf.mxu0
    %v9486 = vadd.f32 0.0, %v9485
    %9487 = vdwg.mxu0
    %9488 = vmatpush.msra.mxu0 %v342
    %9489 = vmatpush.msra.mxu0 %v334
    %9490 = vmatpush.msra.mxu0 %v326
    %9491 = vmatpush.msra.mxu0 %v318
    %9492 = vmatpush.msra.mxu0 %v310
    %9493 = vmatpush.msra.mxu0 %v302
    %9494 = vmatpush.msra.mxu0 %v294
    %9495 = vmatpush.msra.mxu0 %v286
    %9496 = vmatpush.msra.mxu0 %v278
    %9497 = vmatpush.msra.mxu0 %v270
    %9498 = vmatpush.msra.mxu0 %v262
    %9499 = vmatpush.msra.mxu0 %v254
    %9500 = vmatpush.msra.mxu0 %v246
    %9501 = vmatpush.msra.mxu0 %v238
    %9502 = vmatpush.msra.mxu0 %v230
    %9503 = vmatpush.msra.mxu0 %v222
    %9504 = vmatmul.f32.gmra.mxu0 %v9225
    %v9505 = vpop.f32.mrf.mxu0
    %v9506 = vadd.f32 %v9486, %v9505
    %9507 = vdwg.mxu0
    %9508 = vmatpush.msra.mxu0 %v215
    %9509 = vmatpush.msra.mxu0 %v207
    %9510 = vmatpush.msra.mxu0 %v199
    %9511 = vmatpush.msra.mxu0 %v191
    %9512 = vmatpush.msra.mxu0 %v183
    %9513 = vmatpush.msra.mxu0 %v175
    %9514 = vmatpush.msra.mxu0 %v167
    %9515 = vmatpush.msra.mxu0 %v159
    %9516 = vmatpush.msra.mxu0 %v151
    %9517 = vmatpush.msra.mxu0 %v143
    %9518 = vmatpush.msra.mxu0 %v135
    %9519 = vmatpush.msra.mxu0 %v127
    %9520 = vmatpush.msra.mxu0 %v119
    %9521 = vmatpush.msra.mxu0 %v111
    %9522 = vmatpush.msra.mxu0 %v103
    %9523 = vmatpush.msra.mxu0 %v95
    %9524 = vmatmul.f32.gmra.mxu0 %v9224
    %v9525 = vpop.f32.mrf.mxu0
    %v9526 = vadd.f32 0.0, %v9525
    %9527 = vdwg.mxu0
    %9528 = vmatpush.msra.mxu0 %v343
    %9529 = vmatpush.msra.mxu0 %v335
    %9530 = vmatpush.msra.mxu0 %v327
    %9531 = vmatpush.msra.mxu0 %v319
    %9532 = vmatpush.msra.mxu0 %v311
    %9533 = vmatpush.msra.mxu0 %v303
    %9534 = vmatpush.msra.mxu0 %v295
    %9535 = vmatpush.msra.mxu0 %v287
    %9536 = vmatpush.msra.mxu0 %v279
    %9537 = vmatpush.msra.mxu0 %v271
    %9538 = vmatpush.msra.mxu0 %v263
    %9539 = vmatpush.msra.mxu0 %v255
    %9540 = vmatpush.msra.mxu0 %v247
    %9541 = vmatpush.msra.mxu0 %v239
    %9542 = vmatpush.msra.mxu0 %v231
    %9543 = vmatpush.msra.mxu0 %v223
    %9544 = vmatmul.f32.gmra.mxu0 %v9225
    %v9545 = vpop.f32.mrf.mxu0
    %v9546 = vadd.f32 %v9526, %v9545
    %9547 = vdwg.mxu0
    %v9556 = vrot.slane %v9306, 6
    %v9557 = vrot.slane %v9346, 4
    %v9558 = vrot.slane %v9386, 2
    %v9559 = vrot.slane %v9466, 6
    %v9560 = vrot.slane %v9506, 4
    %v9561 = vrot.slane %v9546, 2
    %v9562 = vsel %vm678, %v9266, %v9556
    %v9563 = vsel %vm680, %v9557, %v9558
    %v9564 = vsel %vm682, %v9562, %v9563
    %v9565 = vsel %vm678, %v9426, %v9559
    %v9566 = vsel %vm680, %v9560, %v9561
    %v9567 = vsel %vm682, %v9565, %v9566
    %v9570 = vadd.f32 %v9221, %v9564
    %v9571 = vadd.f32 %v9222, %v9567
    %v9572 = vxor.u32 %v9570, 2147483648
    %v9573 = vmul.f32 %v9572, 1.442695
    %v9574 = vpow.pop %v9573
    %v9575 = vadd.f32 %v9574, 1.0
    %v9576 = vrcp.pop %v9575
    %v9577 = vmul.f32 %v9575, %v9576
    %v9578 = vsub.f32 1.0, %v9577
    %v9579 = vmul.f32 %v9576, %v9578
    %v9580 = vadd.f32 %v9576, %v9579
    %vm9581 = vweird.f32 %v9575
    %vm9582 = vweird.f32 %v9576
    %vm9583 = vmor %vm9581, %vm9582
    %v9584 = vsel %vm9583, %v9576, %v9580
    %v9585 = vand.u32 2147483647, %v9575
    %vm9586 = vcmp.eq.f32.partialorder %v9585, 8.507059e+37
    %v9587 = vand.u32 %v9575, 2147483648
    %v9588 = vor.u32 1.1754944e-38, %v9587
    %v9589 = vsel %vm9586, %v9588, %v9584
    %v9590 = vmul.f32 1.0, %v9589
    %v9592 = vrot.slane %v9570, 4
    %v9594 = vxor.u32 %v9592, 2147483648
    %v9595 = vmul.f32 %v9594, 1.442695
    %v9596 = vpow.pop %v9595
    %v9597 = vadd.f32 %v9596, 1.0
    %v9598 = vrcp.pop %v9597
    %v9599 = vmul.f32 %v9597, %v9598
    %v9600 = vsub.f32 1.0, %v9599
    %v9601 = vmul.f32 %v9598, %v9600
    %v9602 = vadd.f32 %v9598, %v9601
    %vm9603 = vweird.f32 %v9597
    %vm9604 = vweird.f32 %v9598
    %vm9605 = vmor %vm9603, %vm9604
    %v9606 = vsel %vm9605, %v9598, %v9602
    %v9607 = vand.u32 2147483647, %v9597
    %vm9608 = vcmp.eq.f32.partialorder %v9607, 8.507059e+37
    %v9609 = vand.u32 %v9597, 2147483648
    %v9610 = vor.u32 1.1754944e-38, %v9609
    %v9611 = vsel %vm9608, %v9610, %v9606
    %v9612 = vmul.f32 1.0, %v9611
    %v9613 = vtanh.pop %v9571
    %v9615 = vrot.slane %v9571, 4
    %v9617 = vxor.u32 %v9615, 2147483648
    %v9618 = vmul.f32 %v9617, 1.442695
    %v9619 = vpow.pop %v9618
    %v9620 = vadd.f32 %v9619, 1.0
    %v9621 = vrcp.pop %v9620
    %v9622 = vmul.f32 %v9620, %v9621
    %v9623 = vsub.f32 1.0, %v9622
    %v9624 = vmul.f32 %v9621, %v9623
    %v9625 = vadd.f32 %v9621, %v9624
    %vm9626 = vweird.f32 %v9620
    %vm9627 = vweird.f32 %v9621
    %vm9628 = vmor %vm9626, %vm9627
    %v9629 = vsel %vm9628, %v9621, %v9625
    %v9630 = vand.u32 2147483647, %v9620
    %vm9631 = vcmp.eq.f32.partialorder %v9630, 8.507059e+37
    %v9632 = vand.u32 %v9620, 2147483648
    %v9633 = vor.u32 1.1754944e-38, %v9632
    %v9634 = vsel %vm9631, %v9633, %v9629
    %v9635 = vmul.f32 1.0, %v9634
    %v9636 = vmul.f32 %v9612, %v8445
    %v9637 = vmul.f32 %v9590, %v9613
    %v9638 = vadd.f32 %v9636, %v9637
    %v9639 = vtanh.pop %v9638
    %v9640 = vmul.f32 %v9635, %v9639
    %9642 = vst [vmem:[#allocation1] ss:$4 sm:$0xff] %v9640
    %v9643 = vld.sshfl [vmem:[#allocation1] sm:$0xff pattern:$0x73625140]
    %v9644 = vld.sshfl [vmem:[#allocation1 + $0x8] sm:$0xff pattern:$0x73625140]
    %9647 = vmatpush.msra.mxu0 %v886
    %9648 = vmatpush.msra.mxu0 %v878
    %9649 = vmatpush.msra.mxu0 %v870
    %9650 = vmatpush.msra.mxu0 %v862
    %9651 = vmatpush.msra.mxu0 %v854
    %9652 = vmatpush.msra.mxu0 %v846
    %9653 = vmatpush.msra.mxu0 %v838
    %9654 = vmatpush.msra.mxu0 %v830
    %9655 = vmatpush.msra.mxu0 %v822
    %9656 = vmatpush.msra.mxu0 %v814
    %9657 = vmatpush.msra.mxu0 %v806
    %9658 = vmatpush.msra.mxu0 %v798
    %9659 = vmatpush.msra.mxu0 %v790
    %9660 = vmatpush.msra.mxu0 %v782
    %9661 = vmatpush.msra.mxu0 %v774
    %9662 = vmatpush.msra.mxu0 %v766
    %9663 = vmatmul.f32.gmra.mxu0 %v9643
    %v9664 = vpop.f32.mrf.mxu0
    %v9665 = vadd.f32 %v1280, %v9664
    %9666 = vdwg.mxu0
    %9667 = vmatpush.msra.mxu0 %v1014
    %9668 = vmatpush.msra.mxu0 %v1006
    %9669 = vmatpush.msra.mxu0 %v998
    %9670 = vmatpush.msra.mxu0 %v990
    %9671 = vmatpush.msra.mxu0 %v982
    %9672 = vmatpush.msra.mxu0 %v974
    %9673 = vmatpush.msra.mxu0 %v966
    %9674 = vmatpush.msra.mxu0 %v958
    %9675 = vmatpush.msra.mxu0 %v950
    %9676 = vmatpush.msra.mxu0 %v942
    %9677 = vmatpush.msra.mxu0 %v934
    %9678 = vmatpush.msra.mxu0 %v926
    %9679 = vmatpush.msra.mxu0 %v918
    %9680 = vmatpush.msra.mxu0 %v910
    %9681 = vmatpush.msra.mxu0 %v902
    %9682 = vmatpush.msra.mxu0 %v894
    %9683 = vmatmul.f32.gmra.mxu0 %v9644
    %v9684 = vpop.f32.mrf.mxu0
    %v9685 = vadd.f32 %v9665, %v9684
    %9686 = vdwg.mxu0
    %9687 = vmatpush.msra.mxu0 %v1142
    %9688 = vmatpush.msra.mxu0 %v1134
    %9689 = vmatpush.msra.mxu0 %v1126
    %9690 = vmatpush.msra.mxu0 %v1118
    %9691 = vmatpush.msra.mxu0 %v1110
    %9692 = vmatpush.msra.mxu0 %v1102
    %9693 = vmatpush.msra.mxu0 %v1094
    %9694 = vmatpush.msra.mxu0 %v1086
    %9695 = vmatpush.msra.mxu0 %v1078
    %9696 = vmatpush.msra.mxu0 %v1070
    %9697 = vmatpush.msra.mxu0 %v1062
    %9698 = vmatpush.msra.mxu0 %v1054
    %9699 = vmatpush.msra.mxu0 %v1046
    %9700 = vmatpush.msra.mxu0 %v1038
    %9701 = vmatpush.msra.mxu0 %v1030
    %9702 = vmatpush.msra.mxu0 %v1022
    %9703 = vmatmul.f32.gmra.mxu0 %v9218
    %v9704 = vpop.f32.mrf.mxu0
    %v9705 = vadd.f32 %v9685, %v9704
    %9706 = vdwg.mxu0
    %9707 = vmatpush.msra.mxu0 %v1270
    %9708 = vmatpush.msra.mxu0 %v1262
    %9709 = vmatpush.msra.mxu0 %v1254
    %9710 = vmatpush.msra.mxu0 %v1246
    %9711 = vmatpush.msra.mxu0 %v1238
    %9712 = vmatpush.msra.mxu0 %v1230
    %9713 = vmatpush.msra.mxu0 %v1222
    %9714 = vmatpush.msra.mxu0 %v1214
    %9715 = vmatpush.msra.mxu0 %v1206
    %9716 = vmatpush.msra.mxu0 %v1198
    %9717 = vmatpush.msra.mxu0 %v1190
    %9718 = vmatpush.msra.mxu0 %v1182
    %9719 = vmatpush.msra.mxu0 %v1174
    %9720 = vmatpush.msra.mxu0 %v1166
    %9721 = vmatpush.msra.mxu0 %v1158
    %9722 = vmatpush.msra.mxu0 %v1150
    %9723 = vmatmul.f32.gmra.mxu0 %v9219
    %v9724 = vpop.f32.mrf.mxu0
    %v9725 = vadd.f32 %v9705, %v9724
    %9726 = vdwg.mxu0
    %9727 = vmatpush.msra.mxu0 %v887
    %9728 = vmatpush.msra.mxu0 %v879
    %9729 = vmatpush.msra.mxu0 %v871
    %9730 = vmatpush.msra.mxu0 %v863
    %9731 = vmatpush.msra.mxu0 %v855
    %9732 = vmatpush.msra.mxu0 %v847
    %9733 = vmatpush.msra.mxu0 %v839
    %9734 = vmatpush.msra.mxu0 %v831
    %9735 = vmatpush.msra.mxu0 %v823
    %9736 = vmatpush.msra.mxu0 %v815
    %9737 = vmatpush.msra.mxu0 %v807
    %9738 = vmatpush.msra.mxu0 %v799
    %9739 = vmatpush.msra.mxu0 %v791
    %9740 = vmatpush.msra.mxu0 %v783
    %9741 = vmatpush.msra.mxu0 %v775
    %9742 = vmatpush.msra.mxu0 %v767
    %9743 = vmatmul.f32.gmra.mxu0 %v9643
    %v9744 = vpop.f32.mrf.mxu0
    %v9745 = vadd.f32 %v1281, %v9744
    %9746 = vdwg.mxu0
    %9747 = vmatpush.msra.mxu0 %v1015
    %9748 = vmatpush.msra.mxu0 %v1007
    %9749 = vmatpush.msra.mxu0 %v999
    %9750 = vmatpush.msra.mxu0 %v991
    %9751 = vmatpush.msra.mxu0 %v983
    %9752 = vmatpush.msra.mxu0 %v975
    %9753 = vmatpush.msra.mxu0 %v967
    %9754 = vmatpush.msra.mxu0 %v959
    %9755 = vmatpush.msra.mxu0 %v951
    %9756 = vmatpush.msra.mxu0 %v943
    %9757 = vmatpush.msra.mxu0 %v935
    %9758 = vmatpush.msra.mxu0 %v927
    %9759 = vmatpush.msra.mxu0 %v919
    %9760 = vmatpush.msra.mxu0 %v911
    %9761 = vmatpush.msra.mxu0 %v903
    %9762 = vmatpush.msra.mxu0 %v895
    %9763 = vmatmul.f32.gmra.mxu0 %v9644
    %v9764 = vpop.f32.mrf.mxu0
    %v9765 = vadd.f32 %v9745, %v9764
    %9766 = vdwg.mxu0
    %9767 = vmatpush.msra.mxu0 %v1143
    %9768 = vmatpush.msra.mxu0 %v1135
    %9769 = vmatpush.msra.mxu0 %v1127
    %9770 = vmatpush.msra.mxu0 %v1119
    %9771 = vmatpush.msra.mxu0 %v1111
    %9772 = vmatpush.msra.mxu0 %v1103
    %9773 = vmatpush.msra.mxu0 %v1095
    %9774 = vmatpush.msra.mxu0 %v1087
    %9775 = vmatpush.msra.mxu0 %v1079
    %9776 = vmatpush.msra.mxu0 %v1071
    %9777 = vmatpush.msra.mxu0 %v1063
    %9778 = vmatpush.msra.mxu0 %v1055
    %9779 = vmatpush.msra.mxu0 %v1047
    %9780 = vmatpush.msra.mxu0 %v1039
    %9781 = vmatpush.msra.mxu0 %v1031
    %9782 = vmatpush.msra.mxu0 %v1023
    %9783 = vmatmul.f32.gmra.mxu0 %v9218
    %v9784 = vpop.f32.mrf.mxu0
    %v9785 = vadd.f32 %v9765, %v9784
    %9786 = vdwg.mxu0
    %9787 = vmatpush.msra.mxu0 %v1271
    %9788 = vmatpush.msra.mxu0 %v1263
    %9789 = vmatpush.msra.mxu0 %v1255
    %9790 = vmatpush.msra.mxu0 %v1247
    %9791 = vmatpush.msra.mxu0 %v1239
    %9792 = vmatpush.msra.mxu0 %v1231
    %9793 = vmatpush.msra.mxu0 %v1223
    %9794 = vmatpush.msra.mxu0 %v1215
    %9795 = vmatpush.msra.mxu0 %v1207
    %9796 = vmatpush.msra.mxu0 %v1199
    %9797 = vmatpush.msra.mxu0 %v1191
    %9798 = vmatpush.msra.mxu0 %v1183
    %9799 = vmatpush.msra.mxu0 %v1175
    %9800 = vmatpush.msra.mxu0 %v1167
    %9801 = vmatpush.msra.mxu0 %v1159
    %9802 = vmatpush.msra.mxu0 %v1151
    %9803 = vmatmul.f32.gmra.mxu0 %v9219
    %v9804 = vpop.f32.mrf.mxu0
    %v9805 = vadd.f32 %v9785, %v9804
    %9806 = vdwg.mxu0
    %9807 = vmatpush.msra.mxu0 %v888
    %9808 = vmatpush.msra.mxu0 %v880
    %9809 = vmatpush.msra.mxu0 %v872
    %9810 = vmatpush.msra.mxu0 %v864
    %9811 = vmatpush.msra.mxu0 %v856
    %9812 = vmatpush.msra.mxu0 %v848
    %9813 = vmatpush.msra.mxu0 %v840
    %9814 = vmatpush.msra.mxu0 %v832
    %9815 = vmatpush.msra.mxu0 %v824
    %9816 = vmatpush.msra.mxu0 %v816
    %9817 = vmatpush.msra.mxu0 %v808
    %9818 = vmatpush.msra.mxu0 %v800
    %9819 = vmatpush.msra.mxu0 %v792
    %9820 = vmatpush.msra.mxu0 %v784
    %9821 = vmatpush.msra.mxu0 %v776
    %9822 = vmatpush.msra.mxu0 %v768
    %9823 = vmatmul.f32.gmra.mxu0 %v9643
    %v9824 = vpop.f32.mrf.mxu0
    %v9825 = vadd.f32 %v1282, %v9824
    %9826 = vdwg.mxu0
    %9827 = vmatpush.msra.mxu0 %v1016
    %9828 = vmatpush.msra.mxu0 %v1008
    %9829 = vmatpush.msra.mxu0 %v1000
    %9830 = vmatpush.msra.mxu0 %v992
    %9831 = vmatpush.msra.mxu0 %v984
    %9832 = vmatpush.msra.mxu0 %v976
    %9833 = vmatpush.msra.mxu0 %v968
    %9834 = vmatpush.msra.mxu0 %v960
    %9835 = vmatpush.msra.mxu0 %v952
    %9836 = vmatpush.msra.mxu0 %v944
    %9837 = vmatpush.msra.mxu0 %v936
    %9838 = vmatpush.msra.mxu0 %v928
    %9839 = vmatpush.msra.mxu0 %v920
    %9840 = vmatpush.msra.mxu0 %v912
    %9841 = vmatpush.msra.mxu0 %v904
    %9842 = vmatpush.msra.mxu0 %v896
    %9843 = vmatmul.f32.gmra.mxu0 %v9644
    %v9844 = vpop.f32.mrf.mxu0
    %v9845 = vadd.f32 %v9825, %v9844
    %9846 = vdwg.mxu0
    %9847 = vmatpush.msra.mxu0 %v1144
    %9848 = vmatpush.msra.mxu0 %v1136
    %9849 = vmatpush.msra.mxu0 %v1128
    %9850 = vmatpush.msra.mxu0 %v1120
    %9851 = vmatpush.msra.mxu0 %v1112
    %9852 = vmatpush.msra.mxu0 %v1104
    %9853 = vmatpush.msra.mxu0 %v1096
    %9854 = vmatpush.msra.mxu0 %v1088
    %9855 = vmatpush.msra.mxu0 %v1080
    %9856 = vmatpush.msra.mxu0 %v1072
    %9857 = vmatpush.msra.mxu0 %v1064
    %9858 = vmatpush.msra.mxu0 %v1056
    %9859 = vmatpush.msra.mxu0 %v1048
    %9860 = vmatpush.msra.mxu0 %v1040
    %9861 = vmatpush.msra.mxu0 %v1032
    %9862 = vmatpush.msra.mxu0 %v1024
    %9863 = vmatmul.f32.gmra.mxu0 %v9218
    %v9864 = vpop.f32.mrf.mxu0
    %v9865 = vadd.f32 %v9845, %v9864
    %9866 = vdwg.mxu0
    %9867 = vmatpush.msra.mxu0 %v1272
    %9868 = vmatpush.msra.mxu0 %v1264
    %9869 = vmatpush.msra.mxu0 %v1256
    %9870 = vmatpush.msra.mxu0 %v1248
    %9871 = vmatpush.msra.mxu0 %v1240
    %9872 = vmatpush.msra.mxu0 %v1232
    %9873 = vmatpush.msra.mxu0 %v1224
    %9874 = vmatpush.msra.mxu0 %v1216
    %9875 = vmatpush.msra.mxu0 %v1208
    %9876 = vmatpush.msra.mxu0 %v1200
    %9877 = vmatpush.msra.mxu0 %v1192
    %9878 = vmatpush.msra.mxu0 %v1184
    %9879 = vmatpush.msra.mxu0 %v1176
    %9880 = vmatpush.msra.mxu0 %v1168
    %9881 = vmatpush.msra.mxu0 %v1160
    %9882 = vmatpush.msra.mxu0 %v1152
    %9883 = vmatmul.f32.gmra.mxu0 %v9219
    %v9884 = vpop.f32.mrf.mxu0
    %v9885 = vadd.f32 %v9865, %v9884
    %9886 = vdwg.mxu0
    %9887 = vmatpush.msra.mxu0 %v889
    %9888 = vmatpush.msra.mxu0 %v881
    %9889 = vmatpush.msra.mxu0 %v873
    %9890 = vmatpush.msra.mxu0 %v865
    %9891 = vmatpush.msra.mxu0 %v857
    %9892 = vmatpush.msra.mxu0 %v849
    %9893 = vmatpush.msra.mxu0 %v841
    %9894 = vmatpush.msra.mxu0 %v833
    %9895 = vmatpush.msra.mxu0 %v825
    %9896 = vmatpush.msra.mxu0 %v817
    %9897 = vmatpush.msra.mxu0 %v809
    %9898 = vmatpush.msra.mxu0 %v801
    %9899 = vmatpush.msra.mxu0 %v793
    %9900 = vmatpush.msra.mxu0 %v785
    %9901 = vmatpush.msra.mxu0 %v777
    %9902 = vmatpush.msra.mxu0 %v769
    %9903 = vmatmul.f32.gmra.mxu0 %v9643
    %v9904 = vpop.f32.mrf.mxu0
    %v9905 = vadd.f32 %v1283, %v9904
    %9906 = vdwg.mxu0
    %9907 = vmatpush.msra.mxu0 %v1017
    %9908 = vmatpush.msra.mxu0 %v1009
    %9909 = vmatpush.msra.mxu0 %v1001
    %9910 = vmatpush.msra.mxu0 %v993
    %9911 = vmatpush.msra.mxu0 %v985
    %9912 = vmatpush.msra.mxu0 %v977
    %9913 = vmatpush.msra.mxu0 %v969
    %9914 = vmatpush.msra.mxu0 %v961
    %9915 = vmatpush.msra.mxu0 %v953
    %9916 = vmatpush.msra.mxu0 %v945
    %9917 = vmatpush.msra.mxu0 %v937
    %9918 = vmatpush.msra.mxu0 %v929
    %9919 = vmatpush.msra.mxu0 %v921
    %9920 = vmatpush.msra.mxu0 %v913
    %9921 = vmatpush.msra.mxu0 %v905
    %9922 = vmatpush.msra.mxu0 %v897
    %9923 = vmatmul.f32.gmra.mxu0 %v9644
    %v9924 = vpop.f32.mrf.mxu0
    %v9925 = vadd.f32 %v9905, %v9924
    %9926 = vdwg.mxu0
    %9927 = vmatpush.msra.mxu0 %v1145
    %9928 = vmatpush.msra.mxu0 %v1137
    %9929 = vmatpush.msra.mxu0 %v1129
    %9930 = vmatpush.msra.mxu0 %v1121
    %9931 = vmatpush.msra.mxu0 %v1113
    %9932 = vmatpush.msra.mxu0 %v1105
    %9933 = vmatpush.msra.mxu0 %v1097
    %9934 = vmatpush.msra.mxu0 %v1089
    %9935 = vmatpush.msra.mxu0 %v1081
    %9936 = vmatpush.msra.mxu0 %v1073
    %9937 = vmatpush.msra.mxu0 %v1065
    %9938 = vmatpush.msra.mxu0 %v1057
    %9939 = vmatpush.msra.mxu0 %v1049
    %9940 = vmatpush.msra.mxu0 %v1041
    %9941 = vmatpush.msra.mxu0 %v1033
    %9942 = vmatpush.msra.mxu0 %v1025
    %9943 = vmatmul.f32.gmra.mxu0 %v9218
    %v9944 = vpop.f32.mrf.mxu0
    %v9945 = vadd.f32 %v9925, %v9944
    %9946 = vdwg.mxu0
    %9947 = vmatpush.msra.mxu0 %v1273
    %9948 = vmatpush.msra.mxu0 %v1265
    %9949 = vmatpush.msra.mxu0 %v1257
    %9950 = vmatpush.msra.mxu0 %v1249
    %9951 = vmatpush.msra.mxu0 %v1241
    %9952 = vmatpush.msra.mxu0 %v1233
    %9953 = vmatpush.msra.mxu0 %v1225
    %9954 = vmatpush.msra.mxu0 %v1217
    %9955 = vmatpush.msra.mxu0 %v1209
    %9956 = vmatpush.msra.mxu0 %v1201
    %9957 = vmatpush.msra.mxu0 %v1193
    %9958 = vmatpush.msra.mxu0 %v1185
    %9959 = vmatpush.msra.mxu0 %v1177
    %9960 = vmatpush.msra.mxu0 %v1169
    %9961 = vmatpush.msra.mxu0 %v1161
    %9962 = vmatpush.msra.mxu0 %v1153
    %9963 = vmatmul.f32.gmra.mxu0 %v9219
    %v9964 = vpop.f32.mrf.mxu0
    %v9965 = vadd.f32 %v9945, %v9964
    %9966 = vdwg.mxu0
    %9967 = vmatpush.msra.mxu0 %v890
    %9968 = vmatpush.msra.mxu0 %v882
    %9969 = vmatpush.msra.mxu0 %v874
    %9970 = vmatpush.msra.mxu0 %v866
    %9971 = vmatpush.msra.mxu0 %v858
    %9972 = vmatpush.msra.mxu0 %v850
    %9973 = vmatpush.msra.mxu0 %v842
    %9974 = vmatpush.msra.mxu0 %v834
    %9975 = vmatpush.msra.mxu0 %v826
    %9976 = vmatpush.msra.mxu0 %v818
    %9977 = vmatpush.msra.mxu0 %v810
    %9978 = vmatpush.msra.mxu0 %v802
    %9979 = vmatpush.msra.mxu0 %v794
    %9980 = vmatpush.msra.mxu0 %v786
    %9981 = vmatpush.msra.mxu0 %v778
    %9982 = vmatpush.msra.mxu0 %v770
    %9983 = vmatmul.f32.gmra.mxu0 %v9643
    %v9984 = vpop.f32.mrf.mxu0
    %v9985 = vadd.f32 %v1284, %v9984
    %9986 = vdwg.mxu0
    %9987 = vmatpush.msra.mxu0 %v1018
    %9988 = vmatpush.msra.mxu0 %v1010
    %9989 = vmatpush.msra.mxu0 %v1002
    %9990 = vmatpush.msra.mxu0 %v994
    %9991 = vmatpush.msra.mxu0 %v986
    %9992 = vmatpush.msra.mxu0 %v978
    %9993 = vmatpush.msra.mxu0 %v970
    %9994 = vmatpush.msra.mxu0 %v962
    %9995 = vmatpush.msra.mxu0 %v954
    %9996 = vmatpush.msra.mxu0 %v946
    %9997 = vmatpush.msra.mxu0 %v938
    %9998 = vmatpush.msra.mxu0 %v930
    %9999 = vmatpush.msra.mxu0 %v922
    %10000 = vmatpush.msra.mxu0 %v914
    %10001 = vmatpush.msra.mxu0 %v906
    %10002 = vmatpush.msra.mxu0 %v898
    %10003 = vmatmul.f32.gmra.mxu0 %v9644
    %v10004 = vpop.f32.mrf.mxu0
    %v10005 = vadd.f32 %v9985, %v10004
    %10006 = vdwg.mxu0
    %10007 = vmatpush.msra.mxu0 %v1146
    %10008 = vmatpush.msra.mxu0 %v1138
    %10009 = vmatpush.msra.mxu0 %v1130
    %10010 = vmatpush.msra.mxu0 %v1122
    %10011 = vmatpush.msra.mxu0 %v1114
    %10012 = vmatpush.msra.mxu0 %v1106
    %10013 = vmatpush.msra.mxu0 %v1098
    %10014 = vmatpush.msra.mxu0 %v1090
    %10015 = vmatpush.msra.mxu0 %v1082
    %10016 = vmatpush.msra.mxu0 %v1074
    %10017 = vmatpush.msra.mxu0 %v1066
    %10018 = vmatpush.msra.mxu0 %v1058
    %10019 = vmatpush.msra.mxu0 %v1050
    %10020 = vmatpush.msra.mxu0 %v1042
    %10021 = vmatpush.msra.mxu0 %v1034
    %10022 = vmatpush.msra.mxu0 %v1026
    %10023 = vmatmul.f32.gmra.mxu0 %v9218
    %v10024 = vpop.f32.mrf.mxu0
    %v10025 = vadd.f32 %v10005, %v10024
    %10026 = vdwg.mxu0
    %10027 = vmatpush.msra.mxu0 %v1274
    %10028 = vmatpush.msra.mxu0 %v1266
    %10029 = vmatpush.msra.mxu0 %v1258
    %10030 = vmatpush.msra.mxu0 %v1250
    %10031 = vmatpush.msra.mxu0 %v1242
    %10032 = vmatpush.msra.mxu0 %v1234
    %10033 = vmatpush.msra.mxu0 %v1226
    %10034 = vmatpush.msra.mxu0 %v1218
    %10035 = vmatpush.msra.mxu0 %v1210
    %10036 = vmatpush.msra.mxu0 %v1202
    %10037 = vmatpush.msra.mxu0 %v1194
    %10038 = vmatpush.msra.mxu0 %v1186
    %10039 = vmatpush.msra.mxu0 %v1178
    %10040 = vmatpush.msra.mxu0 %v1170
    %10041 = vmatpush.msra.mxu0 %v1162
    %10042 = vmatpush.msra.mxu0 %v1154
    %10043 = vmatmul.f32.gmra.mxu0 %v9219
    %v10044 = vpop.f32.mrf.mxu0
    %v10045 = vadd.f32 %v10025, %v10044
    %10046 = vdwg.mxu0
    %10047 = vmatpush.msra.mxu0 %v891
    %10048 = vmatpush.msra.mxu0 %v883
    %10049 = vmatpush.msra.mxu0 %v875
    %10050 = vmatpush.msra.mxu0 %v867
    %10051 = vmatpush.msra.mxu0 %v859
    %10052 = vmatpush.msra.mxu0 %v851
    %10053 = vmatpush.msra.mxu0 %v843
    %10054 = vmatpush.msra.mxu0 %v835
    %10055 = vmatpush.msra.mxu0 %v827
    %10056 = vmatpush.msra.mxu0 %v819
    %10057 = vmatpush.msra.mxu0 %v811
    %10058 = vmatpush.msra.mxu0 %v803
    %10059 = vmatpush.msra.mxu0 %v795
    %10060 = vmatpush.msra.mxu0 %v787
    %10061 = vmatpush.msra.mxu0 %v779
    %10062 = vmatpush.msra.mxu0 %v771
    %10063 = vmatmul.f32.gmra.mxu0 %v9643
    %v10064 = vpop.f32.mrf.mxu0
    %v10065 = vadd.f32 %v1285, %v10064
    %10066 = vdwg.mxu0
    %10067 = vmatpush.msra.mxu0 %v1019
    %10068 = vmatpush.msra.mxu0 %v1011
    %10069 = vmatpush.msra.mxu0 %v1003
    %10070 = vmatpush.msra.mxu0 %v995
    %10071 = vmatpush.msra.mxu0 %v987
    %10072 = vmatpush.msra.mxu0 %v979
    %10073 = vmatpush.msra.mxu0 %v971
    %10074 = vmatpush.msra.mxu0 %v963
    %10075 = vmatpush.msra.mxu0 %v955
    %10076 = vmatpush.msra.mxu0 %v947
    %10077 = vmatpush.msra.mxu0 %v939
    %10078 = vmatpush.msra.mxu0 %v931
    %10079 = vmatpush.msra.mxu0 %v923
    %10080 = vmatpush.msra.mxu0 %v915
    %10081 = vmatpush.msra.mxu0 %v907
    %10082 = vmatpush.msra.mxu0 %v899
    %10083 = vmatmul.f32.gmra.mxu0 %v9644
    %v10084 = vpop.f32.mrf.mxu0
    %v10085 = vadd.f32 %v10065, %v10084
    %10086 = vdwg.mxu0
    %10087 = vmatpush.msra.mxu0 %v1147
    %10088 = vmatpush.msra.mxu0 %v1139
    %10089 = vmatpush.msra.mxu0 %v1131
    %10090 = vmatpush.msra.mxu0 %v1123
    %10091 = vmatpush.msra.mxu0 %v1115
    %10092 = vmatpush.msra.mxu0 %v1107
    %10093 = vmatpush.msra.mxu0 %v1099
    %10094 = vmatpush.msra.mxu0 %v1091
    %10095 = vmatpush.msra.mxu0 %v1083
    %10096 = vmatpush.msra.mxu0 %v1075
    %10097 = vmatpush.msra.mxu0 %v1067
    %10098 = vmatpush.msra.mxu0 %v1059
    %10099 = vmatpush.msra.mxu0 %v1051
    %10100 = vmatpush.msra.mxu0 %v1043
    %10101 = vmatpush.msra.mxu0 %v1035
    %10102 = vmatpush.msra.mxu0 %v1027
    %10103 = vmatmul.f32.gmra.mxu0 %v9218
    %v10104 = vpop.f32.mrf.mxu0
    %v10105 = vadd.f32 %v10085, %v10104
    %10106 = vdwg.mxu0
    %10107 = vmatpush.msra.mxu0 %v1275
    %10108 = vmatpush.msra.mxu0 %v1267
    %10109 = vmatpush.msra.mxu0 %v1259
    %10110 = vmatpush.msra.mxu0 %v1251
    %10111 = vmatpush.msra.mxu0 %v1243
    %10112 = vmatpush.msra.mxu0 %v1235
    %10113 = vmatpush.msra.mxu0 %v1227
    %10114 = vmatpush.msra.mxu0 %v1219
    %10115 = vmatpush.msra.mxu0 %v1211
    %10116 = vmatpush.msra.mxu0 %v1203
    %10117 = vmatpush.msra.mxu0 %v1195
    %10118 = vmatpush.msra.mxu0 %v1187
    %10119 = vmatpush.msra.mxu0 %v1179
    %10120 = vmatpush.msra.mxu0 %v1171
    %10121 = vmatpush.msra.mxu0 %v1163
    %10122 = vmatpush.msra.mxu0 %v1155
    %10123 = vmatmul.f32.gmra.mxu0 %v9219
    %v10124 = vpop.f32.mrf.mxu0
    %v10125 = vadd.f32 %v10105, %v10124
    %10126 = vdwg.mxu0
    %10127 = vmatpush.msra.mxu0 %v892
    %10128 = vmatpush.msra.mxu0 %v884
    %10129 = vmatpush.msra.mxu0 %v876
    %10130 = vmatpush.msra.mxu0 %v868
    %10131 = vmatpush.msra.mxu0 %v860
    %10132 = vmatpush.msra.mxu0 %v852
    %10133 = vmatpush.msra.mxu0 %v844
    %10134 = vmatpush.msra.mxu0 %v836
    %10135 = vmatpush.msra.mxu0 %v828
    %10136 = vmatpush.msra.mxu0 %v820
    %10137 = vmatpush.msra.mxu0 %v812
    %10138 = vmatpush.msra.mxu0 %v804
    %10139 = vmatpush.msra.mxu0 %v796
    %10140 = vmatpush.msra.mxu0 %v788
    %10141 = vmatpush.msra.mxu0 %v780
    %10142 = vmatpush.msra.mxu0 %v772
    %10143 = vmatmul.f32.gmra.mxu0 %v9643
    %v10144 = vpop.f32.mrf.mxu0
    %v10145 = vadd.f32 %v1286, %v10144
    %10146 = vdwg.mxu0
    %10147 = vmatpush.msra.mxu0 %v1020
    %10148 = vmatpush.msra.mxu0 %v1012
    %10149 = vmatpush.msra.mxu0 %v1004
    %10150 = vmatpush.msra.mxu0 %v996
    %10151 = vmatpush.msra.mxu0 %v988
    %10152 = vmatpush.msra.mxu0 %v980
    %10153 = vmatpush.msra.mxu0 %v972
    %10154 = vmatpush.msra.mxu0 %v964
    %10155 = vmatpush.msra.mxu0 %v956
    %10156 = vmatpush.msra.mxu0 %v948
    %10157 = vmatpush.msra.mxu0 %v940
    %10158 = vmatpush.msra.mxu0 %v932
    %10159 = vmatpush.msra.mxu0 %v924
    %10160 = vmatpush.msra.mxu0 %v916
    %10161 = vmatpush.msra.mxu0 %v908
    %10162 = vmatpush.msra.mxu0 %v900
    %10163 = vmatmul.f32.gmra.mxu0 %v9644
    %v10164 = vpop.f32.mrf.mxu0
    %v10165 = vadd.f32 %v10145, %v10164
    %10166 = vdwg.mxu0
    %10167 = vmatpush.msra.mxu0 %v1148
    %10168 = vmatpush.msra.mxu0 %v1140
    %10169 = vmatpush.msra.mxu0 %v1132
    %10170 = vmatpush.msra.mxu0 %v1124
    %10171 = vmatpush.msra.mxu0 %v1116
    %10172 = vmatpush.msra.mxu0 %v1108
    %10173 = vmatpush.msra.mxu0 %v1100
    %10174 = vmatpush.msra.mxu0 %v1092
    %10175 = vmatpush.msra.mxu0 %v1084
    %10176 = vmatpush.msra.mxu0 %v1076
    %10177 = vmatpush.msra.mxu0 %v1068
    %10178 = vmatpush.msra.mxu0 %v1060
    %10179 = vmatpush.msra.mxu0 %v1052
    %10180 = vmatpush.msra.mxu0 %v1044
    %10181 = vmatpush.msra.mxu0 %v1036
    %10182 = vmatpush.msra.mxu0 %v1028
    %10183 = vmatmul.f32.gmra.mxu0 %v9218
    %v10184 = vpop.f32.mrf.mxu0
    %v10185 = vadd.f32 %v10165, %v10184
    %10186 = vdwg.mxu0
    %10187 = vmatpush.msra.mxu0 %v1276
    %10188 = vmatpush.msra.mxu0 %v1268
    %10189 = vmatpush.msra.mxu0 %v1260
    %10190 = vmatpush.msra.mxu0 %v1252
    %10191 = vmatpush.msra.mxu0 %v1244
    %10192 = vmatpush.msra.mxu0 %v1236
    %10193 = vmatpush.msra.mxu0 %v1228
    %10194 = vmatpush.msra.mxu0 %v1220
    %10195 = vmatpush.msra.mxu0 %v1212
    %10196 = vmatpush.msra.mxu0 %v1204
    %10197 = vmatpush.msra.mxu0 %v1196
    %10198 = vmatpush.msra.mxu0 %v1188
    %10199 = vmatpush.msra.mxu0 %v1180
    %10200 = vmatpush.msra.mxu0 %v1172
    %10201 = vmatpush.msra.mxu0 %v1164
    %10202 = vmatpush.msra.mxu0 %v1156
    %10203 = vmatmul.f32.gmra.mxu0 %v9219
    %v10204 = vpop.f32.mrf.mxu0
    %v10205 = vadd.f32 %v10185, %v10204
    %10206 = vdwg.mxu0
    %10207 = vmatpush.msra.mxu0 %v893
    %10208 = vmatpush.msra.mxu0 %v885
    %10209 = vmatpush.msra.mxu0 %v877
    %10210 = vmatpush.msra.mxu0 %v869
    %10211 = vmatpush.msra.mxu0 %v861
    %10212 = vmatpush.msra.mxu0 %v853
    %10213 = vmatpush.msra.mxu0 %v845
    %10214 = vmatpush.msra.mxu0 %v837
    %10215 = vmatpush.msra.mxu0 %v829
    %10216 = vmatpush.msra.mxu0 %v821
    %10217 = vmatpush.msra.mxu0 %v813
    %10218 = vmatpush.msra.mxu0 %v805
    %10219 = vmatpush.msra.mxu0 %v797
    %10220 = vmatpush.msra.mxu0 %v789
    %10221 = vmatpush.msra.mxu0 %v781
    %10222 = vmatpush.msra.mxu0 %v773
    %10223 = vmatmul.f32.gmra.mxu0 %v9643
    %v10224 = vpop.f32.mrf.mxu0
    %v10225 = vadd.f32 %v1287, %v10224
    %10226 = vdwg.mxu0
    %10227 = vmatpush.msra.mxu0 %v1021
    %10228 = vmatpush.msra.mxu0 %v1013
    %10229 = vmatpush.msra.mxu0 %v1005
    %10230 = vmatpush.msra.mxu0 %v997
    %10231 = vmatpush.msra.mxu0 %v989
    %10232 = vmatpush.msra.mxu0 %v981
    %10233 = vmatpush.msra.mxu0 %v973
    %10234 = vmatpush.msra.mxu0 %v965
    %10235 = vmatpush.msra.mxu0 %v957
    %10236 = vmatpush.msra.mxu0 %v949
    %10237 = vmatpush.msra.mxu0 %v941
    %10238 = vmatpush.msra.mxu0 %v933
    %10239 = vmatpush.msra.mxu0 %v925
    %10240 = vmatpush.msra.mxu0 %v917
    %10241 = vmatpush.msra.mxu0 %v909
    %10242 = vmatpush.msra.mxu0 %v901
    %10243 = vmatmul.f32.gmra.mxu0 %v9644
    %v10244 = vpop.f32.mrf.mxu0
    %v10245 = vadd.f32 %v10225, %v10244
    %10246 = vdwg.mxu0
    %10247 = vmatpush.msra.mxu0 %v1149
    %10248 = vmatpush.msra.mxu0 %v1141
    %10249 = vmatpush.msra.mxu0 %v1133
    %10250 = vmatpush.msra.mxu0 %v1125
    %10251 = vmatpush.msra.mxu0 %v1117
    %10252 = vmatpush.msra.mxu0 %v1109
    %10253 = vmatpush.msra.mxu0 %v1101
    %10254 = vmatpush.msra.mxu0 %v1093
    %10255 = vmatpush.msra.mxu0 %v1085
    %10256 = vmatpush.msra.mxu0 %v1077
    %10257 = vmatpush.msra.mxu0 %v1069
    %10258 = vmatpush.msra.mxu0 %v1061
    %10259 = vmatpush.msra.mxu0 %v1053
    %10260 = vmatpush.msra.mxu0 %v1045
    %10261 = vmatpush.msra.mxu0 %v1037
    %10262 = vmatpush.msra.mxu0 %v1029
    %10263 = vmatmul.f32.gmra.mxu0 %v9218
    %v10264 = vpop.f32.mrf.mxu0
    %v10265 = vadd.f32 %v10245, %v10264
    %10266 = vdwg.mxu0
    %10267 = vmatpush.msra.mxu0 %v1277
    %10268 = vmatpush.msra.mxu0 %v1269
    %10269 = vmatpush.msra.mxu0 %v1261
    %10270 = vmatpush.msra.mxu0 %v1253
    %10271 = vmatpush.msra.mxu0 %v1245
    %10272 = vmatpush.msra.mxu0 %v1237
    %10273 = vmatpush.msra.mxu0 %v1229
    %10274 = vmatpush.msra.mxu0 %v1221
    %10275 = vmatpush.msra.mxu0 %v1213
    %10276 = vmatpush.msra.mxu0 %v1205
    %10277 = vmatpush.msra.mxu0 %v1197
    %10278 = vmatpush.msra.mxu0 %v1189
    %10279 = vmatpush.msra.mxu0 %v1181
    %10280 = vmatpush.msra.mxu0 %v1173
    %10281 = vmatpush.msra.mxu0 %v1165
    %10282 = vmatpush.msra.mxu0 %v1157
    %10283 = vmatmul.f32.gmra.mxu0 %v9219
    %v10284 = vpop.f32.mrf.mxu0
    %v10285 = vadd.f32 %v10265, %v10284
    %10286 = vdwg.mxu0
    %v10287 = vxor.u32 %v9725, 2147483648
    %v10288 = vxor.u32 %v9805, 2147483648
    %v10289 = vmul.f32 %v10287, 1.442695
    %v10290 = vpow.pop %v10289
    %v10291 = vmul.f32 %v10288, 1.442695
    %v10292 = vpow.pop %v10291
    %v10293 = vadd.f32 %v10290, 1.0
    %v10294 = vadd.f32 %v10292, 1.0
    %v10295 = vrcp.pop %v10293
    %v10296 = vmul.f32 %v10293, %v10295
    %v10297 = vsub.f32 1.0, %v10296
    %v10298 = vmul.f32 %v10295, %v10297
    %v10299 = vadd.f32 %v10295, %v10298
    %vm10300 = vweird.f32 %v10293
    %vm10301 = vweird.f32 %v10295
    %vm10302 = vmor %vm10300, %vm10301
    %v10303 = vsel %vm10302, %v10295, %v10299
    %v10304 = vand.u32 2147483647, %v10293
    %vm10305 = vcmp.eq.f32.partialorder %v10304, 8.507059e+37
    %v10306 = vand.u32 %v10293, 2147483648
    %v10307 = vor.u32 1.1754944e-38, %v10306
    %v10308 = vsel %vm10305, %v10307, %v10303
    %v10309 = vmul.f32 1.0, %v10308
    %v10310 = vrcp.pop %v10294
    %v10311 = vmul.f32 %v10294, %v10310
    %v10312 = vsub.f32 1.0, %v10311
    %v10313 = vmul.f32 %v10310, %v10312
    %v10314 = vadd.f32 %v10310, %v10313
    %vm10315 = vweird.f32 %v10294
    %vm10316 = vweird.f32 %v10310
    %vm10317 = vmor %vm10315, %vm10316
    %v10318 = vsel %vm10317, %v10310, %v10314
    %v10319 = vand.u32 2147483647, %v10294
    %vm10320 = vcmp.eq.f32.partialorder %v10319, 8.507059e+37
    %v10321 = vand.u32 %v10294, 2147483648
    %v10322 = vor.u32 1.1754944e-38, %v10321
    %v10323 = vsel %vm10320, %v10322, %v10318
    %v10324 = vmul.f32 1.0, %v10323
    %v10325 = vxor.u32 %v9885, 2147483648
    %v10326 = vxor.u32 %v9965, 2147483648
    %v10327 = vmul.f32 %v10325, 1.442695
    %v10328 = vpow.pop %v10327
    %v10329 = vmul.f32 %v10326, 1.442695
    %v10330 = vpow.pop %v10329
    %v10331 = vadd.f32 %v10328, 1.0
    %v10332 = vadd.f32 %v10330, 1.0
    %v10333 = vrcp.pop %v10331
    %v10334 = vmul.f32 %v10331, %v10333
    %v10335 = vsub.f32 1.0, %v10334
    %v10336 = vmul.f32 %v10333, %v10335
    %v10337 = vadd.f32 %v10333, %v10336
    %vm10338 = vweird.f32 %v10331
    %vm10339 = vweird.f32 %v10333
    %vm10340 = vmor %vm10338, %vm10339
    %v10341 = vsel %vm10340, %v10333, %v10337
    %v10342 = vand.u32 2147483647, %v10331
    %vm10343 = vcmp.eq.f32.partialorder %v10342, 8.507059e+37
    %v10344 = vand.u32 %v10331, 2147483648
    %v10345 = vor.u32 1.1754944e-38, %v10344
    %v10346 = vsel %vm10343, %v10345, %v10341
    %v10347 = vmul.f32 1.0, %v10346
    %v10348 = vrcp.pop %v10332
    %v10349 = vmul.f32 %v10332, %v10348
    %v10350 = vsub.f32 1.0, %v10349
    %v10351 = vmul.f32 %v10348, %v10350
    %v10352 = vadd.f32 %v10348, %v10351
    %vm10353 = vweird.f32 %v10332
    %vm10354 = vweird.f32 %v10348
    %vm10355 = vmor %vm10353, %vm10354
    %v10356 = vsel %vm10355, %v10348, %v10352
    %v10357 = vand.u32 2147483647, %v10332
    %vm10358 = vcmp.eq.f32.partialorder %v10357, 8.507059e+37
    %v10359 = vand.u32 %v10332, 2147483648
    %v10360 = vor.u32 1.1754944e-38, %v10359
    %v10361 = vsel %vm10358, %v10360, %v10356
    %v10362 = vmul.f32 1.0, %v10361
    %v10363 = vtanh.pop %v10045
    %v10364 = vtanh.pop %v10125
    %v10365 = vxor.u32 %v10205, 2147483648
    %v10366 = vxor.u32 %v10285, 2147483648
    %v10367 = vmul.f32 %v10365, 1.442695
    %v10368 = vpow.pop %v10367
    %v10369 = vmul.f32 %v10366, 1.442695
    %v10370 = vpow.pop %v10369
    %v10371 = vadd.f32 %v10368, 1.0
    %v10372 = vadd.f32 %v10370, 1.0
    %v10373 = vrcp.pop %v10371
    %v10374 = vmul.f32 %v10371, %v10373
    %v10375 = vsub.f32 1.0, %v10374
    %v10376 = vmul.f32 %v10373, %v10375
    %v10377 = vadd.f32 %v10373, %v10376
    %vm10378 = vweird.f32 %v10371
    %vm10379 = vweird.f32 %v10373
    %vm10380 = vmor %vm10378, %vm10379
    %v10381 = vsel %vm10380, %v10373, %v10377
    %v10382 = vand.u32 2147483647, %v10371
    %vm10383 = vcmp.eq.f32.partialorder %v10382, 8.507059e+37
    %v10384 = vand.u32 %v10371, 2147483648
    %v10385 = vor.u32 1.1754944e-38, %v10384
    %v10386 = vsel %vm10383, %v10385, %v10381
    %v10387 = vmul.f32 1.0, %v10386
    %v10388 = vrcp.pop %v10372
    %v10389 = vmul.f32 %v10372, %v10388
    %v10390 = vsub.f32 1.0, %v10389
    %v10391 = vmul.f32 %v10388, %v10390
    %v10392 = vadd.f32 %v10388, %v10391
    %vm10393 = vweird.f32 %v10372
    %vm10394 = vweird.f32 %v10388
    %vm10395 = vmor %vm10393, %vm10394
    %v10396 = vsel %vm10395, %v10388, %v10392
    %v10397 = vand.u32 2147483647, %v10372
    %vm10398 = vcmp.eq.f32.partialorder %v10397, 8.507059e+37
    %v10399 = vand.u32 %v10372, 2147483648
    %v10400 = vor.u32 1.1754944e-38, %v10399
    %v10401 = vsel %vm10398, %v10400, %v10396
    %v10402 = vmul.f32 1.0, %v10401
    %v10403 = vmul.f32 %v10347, %v9214
    %v10404 = vmul.f32 %v10362, %v9215
    %v10405 = vmul.f32 %v10309, %v10363
    %v10406 = vmul.f32 %v10324, %v10364
    %v10407 = vadd.f32 %v10403, %v10405
    %v10408 = vadd.f32 %v10404, %v10406
    %v10409 = vtanh.pop %v10407
    %v10410 = vtanh.pop %v10408
    %v10411 = vmul.f32 %v10387, %v10409
    %v10412 = vmul.f32 %v10402, %v10410
    %v10413 = vld [vmem:[%s4] sm:$0xff]
    %v10414 = vld [vmem:[%s4 + $0x8] sm:$0xff]
    %v10415 = vld [vmem:[%s4 + $0x10] sm:$0xff]
    %v10416 = vld [vmem:[%s4 + $0x18] sm:$0xff]
    %v10417 = vld [vmem:[%s4 + $0x20] sm:$0xff]
    %v10418 = vld [vmem:[%s4 + $0x28] sm:$0xff]
    %v10419 = vld [vmem:[%s4 + $0x30] sm:$0xff]
    %v10420 = vld [vmem:[%s4 + $0x38] sm:$0xff]
    %v10421 = vld [vmem:[%s4 + $0x40] sm:$0xff]
    %v10422 = vld [vmem:[%s4 + $0x48] sm:$0xff]
    %v10423 = vld [vmem:[%s4 + $0x50] sm:$0xff]
    %v10424 = vld [vmem:[%s4 + $0x58] sm:$0xff]
    %v10425 = vld [vmem:[%s4 + $0x60] sm:$0xff]
    %v10426 = vld [vmem:[%s4 + $0x68] sm:$0xff]
    %v10427 = vld [vmem:[%s4 + $0x70] sm:$0xff]
    %v10428 = vld [vmem:[%s4 + $0x78] sm:$0xff]
    %v10429 = vld [vmem:[%s4 + $0x80] sm:$0xff]
    %v10430 = vld [vmem:[%s4 + $0x88] sm:$0xff]
    %v10431 = vld [vmem:[%s4 + $0x90] sm:$0xff]
    %v10432 = vld [vmem:[%s4 + $0x98] sm:$0xff]
    %v10433 = vld [vmem:[%s4 + $0xa0] sm:$0xff]
    %v10434 = vld [vmem:[%s4 + $0xa8] sm:$0xff]
    %v10435 = vld [vmem:[%s4 + $0xb0] sm:$0xff]
    %v10436 = vld [vmem:[%s4 + $0xb8] sm:$0xff]
    %v10437 = vld [vmem:[%s4 + $0xc0] sm:$0xff]
    %v10438 = vld [vmem:[%s4 + $0xc8] sm:$0xff]
    %v10439 = vld [vmem:[%s4 + $0xd0] sm:$0xff]
    %v10440 = vld [vmem:[%s4 + $0xd8] sm:$0xff]
    %v10441 = vld [vmem:[%s4 + $0xe0] sm:$0xff]
    %v10442 = vld [vmem:[%s4 + $0xe8] sm:$0xff]
    %v10443 = vld [vmem:[%s4 + $0xf0] sm:$0xff]
    %v10444 = vld [vmem:[%s4 + $0xf8] sm:$0xff]
    %v10445 = vld [vmem:[#allocation2] sm:$0x1]
    %v10447 = vperm.slane %v10445, 0
    %10449 = vmatpush.msra.mxu0 %v10428
    %10450 = vmatpush.msra.mxu0 %v10427
    %10451 = vmatpush.msra.mxu0 %v10426
    %10452 = vmatpush.msra.mxu0 %v10425
    %10453 = vmatpush.msra.mxu0 %v10424
    %10454 = vmatpush.msra.mxu0 %v10423
    %10455 = vmatpush.msra.mxu0 %v10422
    %10456 = vmatpush.msra.mxu0 %v10421
    %10457 = vmatpush.msra.mxu0 %v10420
    %10458 = vmatpush.msra.mxu0 %v10419
    %10459 = vmatpush.msra.mxu0 %v10418
    %10460 = vmatpush.msra.mxu0 %v10417
    %10461 = vmatpush.msra.mxu0 %v10416
    %10462 = vmatpush.msra.mxu0 %v10415
    %10463 = vmatpush.msra.mxu0 %v10414
    %10464 = vmatpush.msra.mxu0 %v10413
    %10465 = vmatmul.f32.gmra.mxu0 %v10411
    %v10466 = vpop.f32.mrf.mxu0
    %v10467 = vadd.f32 %v10447, %v10466
    %10468 = vdwg.mxu0
    %10469 = vmatpush.msra.mxu0 %v10444
    %10470 = vmatpush.msra.mxu0 %v10443
    %10471 = vmatpush.msra.mxu0 %v10442
    %10472 = vmatpush.msra.mxu0 %v10441
    %10473 = vmatpush.msra.mxu0 %v10440
    %10474 = vmatpush.msra.mxu0 %v10439
    %10475 = vmatpush.msra.mxu0 %v10438
    %10476 = vmatpush.msra.mxu0 %v10437
    %10477 = vmatpush.msra.mxu0 %v10436
    %10478 = vmatpush.msra.mxu0 %v10435
    %10479 = vmatpush.msra.mxu0 %v10434
    %10480 = vmatpush.msra.mxu0 %v10433
    %10481 = vmatpush.msra.mxu0 %v10432
    %10482 = vmatpush.msra.mxu0 %v10431
    %10483 = vmatpush.msra.mxu0 %v10430
    %10484 = vmatpush.msra.mxu0 %v10429
    %10485 = vmatmul.f32.gmra.mxu0 %v10412
    %v10486 = vpop.f32.mrf.mxu0
    %v10487 = vadd.f32 %v10467, %v10486
    %10488 = vdwg.mxu0
    %vm10489 = vcmask 1024
    %10490 = vst.msk [vmem:[%s6] sm:$0x3] %vm10489, %v10487
    // Predicated region
    $region42: #{tpu_custom_call.1} parent=1 // pred_check
      _
    $region43: #{tpu_custom_call.1} parent=1 // pred_check_branch
      %10492 = sbr.rel (0) target = $region45
    $region44: #{tpu_custom_call.1} parent=1 // pred_region
      _
    $region45: #{tpu_custom_call.1} parent=1 // pred_fallthru
      _
    // Predicated region
    $region46: #{tpu_custom_call.1} parent=1 // pred_check
      _
    $region47: #{tpu_custom_call.1} parent=1 // pred_check_branch
      %10494 = sbr.rel (0) target = $region49
    $region48: #{tpu_custom_call.1} parent=1 // pred_region
      _
    $region49: #{tpu_custom_call.1} parent=1 // pred_fallthru
      _
    %10495 = vsyncpa [#allocation4], 1
    %10496 = vsyncpa [#allocation6], 1
    %10497 = vsyncpa [#allocation9], 1

</llo_original>
